<compile_context>
chip_gen: v5e
topology: v5e:2x2
jax: 0.10.0
libtpu: 0.0.40
codegen_flags: <defaults>
</compile_context>

<pallas_src>
import functools
from math import sqrt

import jax
import jax.numpy as jnp
from jax.experimental import pallas as pl
from jax.experimental.pallas import tpu as pltpu


# ----------------------------------------------------------------------------
# Pallas kernel: full Recurrent_block for one batch image
# ----------------------------------------------------------------------------
def _recurrent_block_kernel(x_ref, w_ref, scale_ref, shift_ref, o_ref, xpad_ref,
                            *, H, W, C, t):
    # Zero the padded scratch once; the 1-pixel ring stays zero for every conv.
    xpad_ref[...] = jnp.zeros_like(xpad_ref)

    x = x_ref[0]                 # [H, W, C] f32 — resident for the residual adds
    scale = scale_ref[...]       # [1, C] f32 (folded BN gamma/var)
    shift = shift_ref[...]       # [1, C] f32 (folded BN beta/mean + conv bias)

    def conv_bn_relu(inp):       # inp: [H, W, C] f32 (current conv input)
        # write the interior; ring stays zero => implicit padding=1
        xpad_ref[1:H + 1, 1:W + 1, :] = inp
        acc = jnp.zeros((H * W, C), jnp.float32)
        for kh in range(3):
            for kw in range(3):
                patch = xpad_ref[kh:kh + H, kw:kw + W, :]
                patch = patch.reshape(H * W, C).astype(jnp.bfloat16)   # bf16 MXU operand
                acc = acc + jnp.dot(patch, w_ref[kh * 3 + kw],
                                    preferred_element_type=jnp.float32)
        y = jnp.maximum(acc * scale + shift, 0.0)                      # f32 epilogue
        return y.reshape(H, W, C)

    # PyTorch loop:  for i in range(t): if i == 0: x1 = conv(x);  x1 = conv(x + x1)
    x1 = conv_bn_relu(x)
    for _ in range(t):
        x1 = conv_bn_relu(x + x1)

    o_ref[0] = x1.astype(o_ref.dtype)


def recurrent_block_nhwc(x, w9, scale, shift, *, t=2):
    """x: [N,H,W,C] f32, w9: [9,C,C] bf16 (3x3 taps, HWIO order), scale/shift: [1,C] f32."""
    N, H, W, C = x.shape
    assert w9.shape == (9, C, C) and scale.shape == (1, C) and shift.shape == (1, C)

    # Per-call VMEM budget: double-buffered IO + weights + padded scratch + temps,
    # floored at the 32 MiB default and capped at 48 MiB (v7x has only 64 MiB).
    x_blk = H * W * C * 4
    w_bytes = 9 * C * C * 2
    scr_bytes = (H + 2) * (W + 2) * C * 4
    est = 2 * 2 * x_blk + 2 * w_bytes + scr_bytes + 8 * x_blk
    vmem_limit = min(48 * 1024 * 1024, max(32 * 1024 * 1024, 2 * est))

    kernel = functools.partial(_recurrent_block_kernel, H=H, W=W, C=C, t=t)
    return pl.pallas_call(
        kernel,
        out_shape=jax.ShapeDtypeStruct((N, H, W, C), jnp.float32),
        grid_spec=pltpu.PrefetchScalarGridSpec(
            num_scalar_prefetch=0,
            grid=(N,),                                               # batch-parallel
            in_specs=[
                pl.BlockSpec((1, H, W, C), lambda n: (n, 0, 0, 0)),  # x
                pl.BlockSpec((9, C, C), lambda n: (0, 0, 0)),        # bf16 conv taps
                pl.BlockSpec((1, C), lambda n: (0, 0)),              # folded scale
                pl.BlockSpec((1, C), lambda n: (0, 0)),              # folded shift
            ],
            out_specs=pl.BlockSpec((1, H, W, C), lambda n: (n, 0, 0, 0)),
            scratch_shapes=[pltpu.VMEM((H + 2, W + 2, C), jnp.float32)],
        ),
        compiler_params=pltpu.CompilerParams(
            dimension_semantics=("parallel",),
            vmem_limit_bytes=vmem_limit,
        ),
    )(x, w9, scale, shift)


@functools.partial(jax.jit, static_argnames=("t",))
def recurrent_block_nchw(x_nchw, w9, scale, shift, t=2):
    # NCHW (PyTorch convention) -> NHWC (C on the 128-lane axis) -> NCHW
    x = jnp.transpose(x_nchw, (0, 2, 3, 1)).astype(jnp.float32)
    y = recurrent_block_nhwc(x, w9, scale, shift, t=t)
    return jnp.transpose(y, (0, 3, 1, 2))


# ----------------------------------------------------------------------------
# Pure-JAX reference (same bf16-operand / f32-accumulate recipe)
# ----------------------------------------------------------------------------
def recurrent_block_ref_nchw(x_nchw, w9, scale, shift, t=2):
    C = x_nchw.shape[1]
    x = jnp.transpose(x_nchw, (0, 2, 3, 1)).astype(jnp.float32)
    w = w9.reshape(3, 3, C, C)                  # bf16 HWIO
    sc = scale.reshape(1, 1, 1, C)
    sh = shift.reshape(1, 1, 1, C)

    def conv_bn_relu(inp):
        z = jax.lax.conv_general_dilated(
            inp.astype(jnp.bfloat16), w,
            window_strides=(1, 1), padding=((1, 1), (1, 1)),
            dimension_numbers=("NHWC", "HWIO", "NHWC"),
            preferred_element_type=jnp.float32)
        return jnp.maximum(z * sc + sh, 0.0)

    x1 = conv_bn_relu(x)
    for _ in range(t):
        x1 = conv_bn_relu(x + x1)
    return jnp.transpose(x1, (0, 3, 1, 2))


# ----------------------------------------------------------------------------
# Deterministic synthetic parameters (bias + eval-mode BN pre-folded, bf16 taps)
# ----------------------------------------------------------------------------
def make_recurrent_block_params(key, ch_out):
    kw_, kb_, kg_, kbe_, km_, kv_ = jax.random.split(key, 6)
    bound = 1.0 / sqrt(ch_out * 3 * 3)
    w = jax.random.uniform(kw_, (3, 3, ch_out, ch_out), jnp.float32, -bound, bound)  # HWIO
    b = jax.random.uniform(kb_, (ch_out,), jnp.float32, -bound, bound)
    gamma = jax.random.uniform(kg_, (ch_out,), jnp.float32, 0.5, 1.5)
    beta = 0.1 * jax.random.normal(kbe_, (ch_out,), jnp.float32)
    mean = 0.1 * jax.random.normal(km_, (ch_out,), jnp.float32)
    var = jax.random.uniform(kv_, (ch_out,), jnp.float32, 0.5, 1.5)

    s = gamma / jnp.sqrt(var + 1e-5)                              # eval-mode BN fold
    scale = s.reshape(1, ch_out).astype(jnp.float32)
    shift = (beta - s * mean + s * b).reshape(1, ch_out).astype(jnp.float32)
    w9 = w.reshape(9, ch_out, ch_out).astype(jnp.bfloat16)        # pre-pack + pre-cast once
    return w9, scale, shift


# ----------------------------------------------------------------------------
if __name__ == "__main__":
    key = jax.random.PRNGKey(0)
    k_param, k_input = jax.random.split(key)

    # Small shapes consistent with the module: Recurrent_block(ch_out=64, t=2)
    N, C, H, W, t = 2, 64, 16, 16, 2
    w9, scale, shift = make_recurrent_block_params(k_param, C)
    x = jax.random.normal(k_input, (N, C, H, W), jnp.float32)     # NCHW like PyTorch

    out = recurrent_block_nchw(x, w9, scale, shift, t=t)
    out = jax.block_until_ready(out)

    assert out.shape == (N, C, H, W), out.shape
    assert bool(jnp.all(jnp.isfinite(out)))

    ref = recurrent_block_ref_nchw(x, w9, scale, shift, t=t)
    rel_err = jnp.max(jnp.abs(out - ref)) / (jnp.max(jnp.abs(ref)) + 1e-6)
    assert float(rel_err) < 2e-2, float(rel_err)

    print("KERNEL_OK")
</pallas_src>

<mosaic_0001>
module attributes {stable_mosaic.version = 11 : i64} {
  func.func @_recurrent_block_kernel(%arg0: i32, %arg1: memref<1x16x16x64xf32, #tpu.memory_space<vmem>>, %arg2: memref<9x64x64xbf16, #tpu.memory_space<vmem>>, %arg3: memref<1x64xf32, #tpu.memory_space<vmem>>, %arg4: memref<1x64xf32, #tpu.memory_space<vmem>>, %arg5: memref<1x16x16x64xf32, #tpu.memory_space<vmem>>, %arg6: memref<18x18x64xf32, #tpu.memory_space<vmem>>) attributes {dimension_semantics = [#tpu.dimension_semantics<parallel>], iteration_bounds = array<i64: 2>, scalar_prefetch = 0 : i64, scratch_operands = 1 : i64, tpu.core_type = #tpu.core_type<tc>, window_params = [{transform_indices = @transform_0, window_bounds = array<i64: 1, 16, 16, 64>}, {pipeline_mode = #tpu.pipeline_mode<synchronous>, transform_indices = @transform_1, window_bounds = array<i64: 9, 64, 64>}, {pipeline_mode = #tpu.pipeline_mode<synchronous>, transform_indices = @transform_2, window_bounds = array<i64: 1, 64>}, {pipeline_mode = #tpu.pipeline_mode<synchronous>, transform_indices = @transform_3, window_bounds = array<i64: 1, 64>}, {transform_indices = @transform_4, window_bounds = array<i64: 1, 16, 16, 64>}]} {
    %cst = arith.constant 0.000000e+00 : f32
    %0 = vector.broadcast %cst : f32 to vector<18x18x64xf32>
    %c0 = arith.constant 0 : index
    %c0_0 = arith.constant 0 : index
    %c0_1 = arith.constant 0 : index
    %1 = vector.load %arg6[%c0, %c0_0, %c0_1] : memref<18x18x64xf32, #tpu.memory_space<vmem>>, vector<18x18x64xf32>
    tpu.vector_store %arg6[%c0, %c0_0, %c0_1], %0 {strides = array<i32>} : memref<18x18x64xf32, #tpu.memory_space<vmem>>, vector<18x18x64xf32>,
    %c0_2 = arith.constant 0 : index
    %c0_3 = arith.constant 0 : index
    %c0_4 = arith.constant 0 : index
    %c0_5 = arith.constant 0 : index
    %2 = vector.load %arg1[%c0_2, %c0_3, %c0_4, %c0_5] : memref<1x16x16x64xf32, #tpu.memory_space<vmem>>, vector<1x16x16x64xf32>
    %3 = vector.shape_cast %2 : vector<1x16x16x64xf32> to vector<16x16x64xf32>
    %c0_6 = arith.constant 0 : index
    %c0_7 = arith.constant 0 : index
    %4 = vector.load %arg3[%c0_6, %c0_7] : memref<1x64xf32, #tpu.memory_space<vmem>>, vector<1x64xf32>
    %c0_8 = arith.constant 0 : index
    %c0_9 = arith.constant 0 : index
    %5 = vector.load %arg4[%c0_8, %c0_9] : memref<1x64xf32, #tpu.memory_space<vmem>>, vector<1x64xf32>
    %c1 = arith.constant 1 : index
    %c1_10 = arith.constant 1 : index
    %c0_11 = arith.constant 0 : index
    %6 = vector.load %arg6[%c1, %c1_10, %c0_11] : memref<18x18x64xf32, #tpu.memory_space<vmem>>, vector<16x16x64xf32>
    tpu.vector_store %arg6[%c1, %c1_10, %c0_11], %3 {strides = array<i32>} : memref<18x18x64xf32, #tpu.memory_space<vmem>>, vector<16x16x64xf32>,
    %cst_12 = arith.constant 0.000000e+00 : f32
    %7 = vector.broadcast %cst_12 : f32 to vector<256x64xf32>
    %c0_13 = arith.constant 0 : index
    %c0_14 = arith.constant 0 : index
    %c0_15 = arith.constant 0 : index
    %8 = vector.load %arg6[%c0_13, %c0_14, %c0_15] : memref<18x18x64xf32, #tpu.memory_space<vmem>>, vector<16x16x64xf32>
    %9 = vector.shape_cast %8 : vector<16x16x64xf32> to vector<256x64xf32>
    %10 = arith.truncf %9 : vector<256x64xf32> to vector<256x64xbf16>
    %c0_16 = arith.constant 0 : index
    %c0_17 = arith.constant 0 : index
    %c0_18 = arith.constant 0 : index
    %11 = vector.load %arg2[%c0_16, %c0_17, %c0_18] : memref<9x64x64xbf16, #tpu.memory_space<vmem>>, vector<1x64x64xbf16>
    %12 = vector.shape_cast %11 : vector<1x64x64xbf16> to vector<64x64xbf16>
    %cst_19 = arith.constant dense<0.000000e+00> : vector<256x64xf32>
    %13 = tpu.matmul %10, %12, %cst_19 {dimension_numbers = #tpu.dot_dimension_numbers<[1], [0], [0], [1], [0, 0, 1, 1], [], []>} : vector<256x64xbf16>, vector<64x64xbf16>, vector<256x64xf32> -> vector<256x64xf32>
    %14 = arith.addf %7, %13 : vector<256x64xf32>
    %c0_20 = arith.constant 0 : index
    %c1_21 = arith.constant 1 : index
    %c0_22 = arith.constant 0 : index
    %15 = vector.load %arg6[%c0_20, %c1_21, %c0_22] : memref<18x18x64xf32, #tpu.memory_space<vmem>>, vector<16x16x64xf32>
    %16 = vector.shape_cast %15 : vector<16x16x64xf32> to vector<256x64xf32>
    %17 = arith.truncf %16 : vector<256x64xf32> to vector<256x64xbf16>
    %c1_23 = arith.constant 1 : index
    %c0_24 = arith.constant 0 : index
    %c0_25 = arith.constant 0 : index
    %18 = vector.load %arg2[%c1_23, %c0_24, %c0_25] : memref<9x64x64xbf16, #tpu.memory_space<vmem>>, vector<1x64x64xbf16>
    %19 = vector.shape_cast %18 : vector<1x64x64xbf16> to vector<64x64xbf16>
    %cst_26 = arith.constant dense<0.000000e+00> : vector<256x64xf32>
    %20 = tpu.matmul %17, %19, %cst_26 {dimension_numbers = #tpu.dot_dimension_numbers<[1], [0], [0], [1], [0, 0, 1, 1], [], []>} : vector<256x64xbf16>, vector<64x64xbf16>, vector<256x64xf32> -> vector<256x64xf32>
    %21 = arith.addf %14, %20 : vector<256x64xf32>
    %c0_27 = arith.constant 0 : index
    %c2 = arith.constant 2 : index
    %c0_28 = arith.constant 0 : index
    %22 = vector.load %arg6[%c0_27, %c2, %c0_28] : memref<18x18x64xf32, #tpu.memory_space<vmem>>, vector<16x16x64xf32>
    %23 = vector.shape_cast %22 : vector<16x16x64xf32> to vector<256x64xf32>
    %24 = arith.truncf %23 : vector<256x64xf32> to vector<256x64xbf16>
    %c2_29 = arith.constant 2 : index
    %c0_30 = arith.constant 0 : index
    %c0_31 = arith.constant 0 : index
    %25 = vector.load %arg2[%c2_29, %c0_30, %c0_31] : memref<9x64x64xbf16, #tpu.memory_space<vmem>>, vector<1x64x64xbf16>
    %26 = vector.shape_cast %25 : vector<1x64x64xbf16> to vector<64x64xbf16>
    %cst_32 = arith.constant dense<0.000000e+00> : vector<256x64xf32>
    %27 = tpu.matmul %24, %26, %cst_32 {dimension_numbers = #tpu.dot_dimension_numbers<[1], [0], [0], [1], [0, 0, 1, 1], [], []>} : vector<256x64xbf16>, vector<64x64xbf16>, vector<256x64xf32> -> vector<256x64xf32>
    %28 = arith.addf %21, %27 : vector<256x64xf32>
    %c1_33 = arith.constant 1 : index
    %c0_34 = arith.constant 0 : index
    %c0_35 = arith.constant 0 : index
    %29 = vector.load %arg6[%c1_33, %c0_34, %c0_35] : memref<18x18x64xf32, #tpu.memory_space<vmem>>, vector<16x16x64xf32>
    %30 = vector.shape_cast %29 : vector<16x16x64xf32> to vector<256x64xf32>
    %31 = arith.truncf %30 : vector<256x64xf32> to vector<256x64xbf16>
    %c3 = arith.constant 3 : index
    %c0_36 = arith.constant 0 : index
    %c0_37 = arith.constant 0 : index
    %32 = vector.load %arg2[%c3, %c0_36, %c0_37] : memref<9x64x64xbf16, #tpu.memory_space<vmem>>, vector<1x64x64xbf16>
    %33 = vector.shape_cast %32 : vector<1x64x64xbf16> to vector<64x64xbf16>
    %cst_38 = arith.constant dense<0.000000e+00> : vector<256x64xf32>
    %34 = tpu.matmul %31, %33, %cst_38 {dimension_numbers = #tpu.dot_dimension_numbers<[1], [0], [0], [1], [0, 0, 1, 1], [], []>} : vector<256x64xbf16>, vector<64x64xbf16>, vector<256x64xf32> -> vector<256x64xf32>
    %35 = arith.addf %28, %34 : vector<256x64xf32>
    %c1_39 = arith.constant 1 : index
    %c1_40 = arith.constant 1 : index
    %c0_41 = arith.constant 0 : index
    %36 = vector.load %arg6[%c1_39, %c1_40, %c0_41] : memref<18x18x64xf32, #tpu.memory_space<vmem>>, vector<16x16x64xf32>
    %37 = vector.shape_cast %36 : vector<16x16x64xf32> to vector<256x64xf32>
    %38 = arith.truncf %37 : vector<256x64xf32> to vector<256x64xbf16>
    %c4 = arith.constant 4 : index
    %c0_42 = arith.constant 0 : index
    %c0_43 = arith.constant 0 : index
    %39 = vector.load %arg2[%c4, %c0_42, %c0_43] : memref<9x64x64xbf16, #tpu.memory_space<vmem>>, vector<1x64x64xbf16>
    %40 = vector.shape_cast %39 : vector<1x64x64xbf16> to vector<64x64xbf16>
    %cst_44 = arith.constant dense<0.000000e+00> : vector<256x64xf32>
    %41 = tpu.matmul %38, %40, %cst_44 {dimension_numbers = #tpu.dot_dimension_numbers<[1], [0], [0], [1], [0, 0, 1, 1], [], []>} : vector<256x64xbf16>, vector<64x64xbf16>, vector<256x64xf32> -> vector<256x64xf32>
    %42 = arith.addf %35, %41 : vector<256x64xf32>
    %c1_45 = arith.constant 1 : index
    %c2_46 = arith.constant 2 : index
    %c0_47 = arith.constant 0 : index
    %43 = vector.load %arg6[%c1_45, %c2_46, %c0_47] : memref<18x18x64xf32, #tpu.memory_space<vmem>>, vector<16x16x64xf32>
    %44 = vector.shape_cast %43 : vector<16x16x64xf32> to vector<256x64xf32>
    %45 = arith.truncf %44 : vector<256x64xf32> to vector<256x64xbf16>
    %c5 = arith.constant 5 : index
    %c0_48 = arith.constant 0 : index
    %c0_49 = arith.constant 0 : index
    %46 = vector.load %arg2[%c5, %c0_48, %c0_49] : memref<9x64x64xbf16, #tpu.memory_space<vmem>>, vector<1x64x64xbf16>
    %47 = vector.shape_cast %46 : vector<1x64x64xbf16> to vector<64x64xbf16>
    %cst_50 = arith.constant dense<0.000000e+00> : vector<256x64xf32>
    %48 = tpu.matmul %45, %47, %cst_50 {dimension_numbers = #tpu.dot_dimension_numbers<[1], [0], [0], [1], [0, 0, 1, 1], [], []>} : vector<256x64xbf16>, vector<64x64xbf16>, vector<256x64xf32> -> vector<256x64xf32>
    %49 = arith.addf %42, %48 : vector<256x64xf32>
    %c2_51 = arith.constant 2 : index
    %c0_52 = arith.constant 0 : index
    %c0_53 = arith.constant 0 : index
    %50 = vector.load %arg6[%c2_51, %c0_52, %c0_53] : memref<18x18x64xf32, #tpu.memory_space<vmem>>, vector<16x16x64xf32>
    %51 = vector.shape_cast %50 : vector<16x16x64xf32> to vector<256x64xf32>
    %52 = arith.truncf %51 : vector<256x64xf32> to vector<256x64xbf16>
    %c6 = arith.constant 6 : index
    %c0_54 = arith.constant 0 : index
    %c0_55 = arith.constant 0 : index
    %53 = vector.load %arg2[%c6, %c0_54, %c0_55] : memref<9x64x64xbf16, #tpu.memory_space<vmem>>, vector<1x64x64xbf16>
    %54 = vector.shape_cast %53 : vector<1x64x64xbf16> to vector<64x64xbf16>
    %cst_56 = arith.constant dense<0.000000e+00> : vector<256x64xf32>
    %55 = tpu.matmul %52, %54, %cst_56 {dimension_numbers = #tpu.dot_dimension_numbers<[1], [0], [0], [1], [0, 0, 1, 1], [], []>} : vector<256x64xbf16>, vector<64x64xbf16>, vector<256x64xf32> -> vector<256x64xf32>
    %56 = arith.addf %49, %55 : vector<256x64xf32>
    %c2_57 = arith.constant 2 : index
    %c1_58 = arith.constant 1 : index
    %c0_59 = arith.constant 0 : index
    %57 = vector.load %arg6[%c2_57, %c1_58, %c0_59] : memref<18x18x64xf32, #tpu.memory_space<vmem>>, vector<16x16x64xf32>
    %58 = vector.shape_cast %57 : vector<16x16x64xf32> to vector<256x64xf32>
    %59 = arith.truncf %58 : vector<256x64xf32> to vector<256x64xbf16>
    %c7 = arith.constant 7 : index
    %c0_60 = arith.constant 0 : index
    %c0_61 = arith.constant 0 : index
    %60 = vector.load %arg2[%c7, %c0_60, %c0_61] : memref<9x64x64xbf16, #tpu.memory_space<vmem>>, vector<1x64x64xbf16>
    %61 = vector.shape_cast %60 : vector<1x64x64xbf16> to vector<64x64xbf16>
    %cst_62 = arith.constant dense<0.000000e+00> : vector<256x64xf32>
    %62 = tpu.matmul %59, %61, %cst_62 {dimension_numbers = #tpu.dot_dimension_numbers<[1], [0], [0], [1], [0, 0, 1, 1], [], []>} : vector<256x64xbf16>, vector<64x64xbf16>, vector<256x64xf32> -> vector<256x64xf32>
    %63 = arith.addf %56, %62 : vector<256x64xf32>
    %c2_63 = arith.constant 2 : index
    %c2_64 = arith.constant 2 : index
    %c0_65 = arith.constant 0 : index
    %64 = vector.load %arg6[%c2_63, %c2_64, %c0_65] : memref<18x18x64xf32, #tpu.memory_space<vmem>>, vector<16x16x64xf32>
    %65 = vector.shape_cast %64 : vector<16x16x64xf32> to vector<256x64xf32>
    %66 = arith.truncf %65 : vector<256x64xf32> to vector<256x64xbf16>
    %c8 = arith.constant 8 : index
    %c0_66 = arith.constant 0 : index
    %c0_67 = arith.constant 0 : index
    %67 = vector.load %arg2[%c8, %c0_66, %c0_67] : memref<9x64x64xbf16, #tpu.memory_space<vmem>>, vector<1x64x64xbf16>
    %68 = vector.shape_cast %67 : vector<1x64x64xbf16> to vector<64x64xbf16>
    %cst_68 = arith.constant dense<0.000000e+00> : vector<256x64xf32>
    %69 = tpu.matmul %66, %68, %cst_68 {dimension_numbers = #tpu.dot_dimension_numbers<[1], [0], [0], [1], [0, 0, 1, 1], [], []>} : vector<256x64xbf16>, vector<64x64xbf16>, vector<256x64xf32> -> vector<256x64xf32>
    %70 = arith.addf %63, %69 : vector<256x64xf32>
    %71 = vector.broadcast %4 : vector<1x64xf32> to vector<256x64xf32>
    %72 = arith.mulf %70, %71 : vector<256x64xf32>
    %73 = vector.broadcast %5 : vector<1x64xf32> to vector<256x64xf32>
    %74 = arith.addf %72, %73 : vector<256x64xf32>
    %cst_69 = arith.constant 0.000000e+00 : f32
    %75 = vector.broadcast %cst_69 : f32 to vector<256x64xf32>
    %76 = arith.maximumf %74, %75 : vector<256x64xf32>
    %77 = vector.shape_cast %76 : vector<256x64xf32> to vector<16x16x64xf32>
    %78 = arith.addf %3, %77 : vector<16x16x64xf32>
    %c1_70 = arith.constant 1 : index
    %c1_71 = arith.constant 1 : index
    %c0_72 = arith.constant 0 : index
    %79 = vector.load %arg6[%c1_70, %c1_71, %c0_72] : memref<18x18x64xf32, #tpu.memory_space<vmem>>, vector<16x16x64xf32>
    tpu.vector_store %arg6[%c1_70, %c1_71, %c0_72], %78 {strides = array<i32>} : memref<18x18x64xf32, #tpu.memory_space<vmem>>, vector<16x16x64xf32>,
    %cst_73 = arith.constant 0.000000e+00 : f32
    %80 = vector.broadcast %cst_73 : f32 to vector<256x64xf32>
    %c0_74 = arith.constant 0 : index
    %c0_75 = arith.constant 0 : index
    %c0_76 = arith.constant 0 : index
    %81 = vector.load %arg6[%c0_74, %c0_75, %c0_76] : memref<18x18x64xf32, #tpu.memory_space<vmem>>, vector<16x16x64xf32>
    %82 = vector.shape_cast %81 : vector<16x16x64xf32> to vector<256x64xf32>
    %83 = arith.truncf %82 : vector<256x64xf32> to vector<256x64xbf16>
    %c0_77 = arith.constant 0 : index
    %c0_78 = arith.constant 0 : index
    %c0_79 = arith.constant 0 : index
    %84 = vector.load %arg2[%c0_77, %c0_78, %c0_79] : memref<9x64x64xbf16, #tpu.memory_space<vmem>>, vector<1x64x64xbf16>
    %85 = vector.shape_cast %84 : vector<1x64x64xbf16> to vector<64x64xbf16>
    %cst_80 = arith.constant dense<0.000000e+00> : vector<256x64xf32>
    %86 = tpu.matmul %83, %85, %cst_80 {dimension_numbers = #tpu.dot_dimension_numbers<[1], [0], [0], [1], [0, 0, 1, 1], [], []>} : vector<256x64xbf16>, vector<64x64xbf16>, vector<256x64xf32> -> vector<256x64xf32>
    %87 = arith.addf %80, %86 : vector<256x64xf32>
    %c0_81 = arith.constant 0 : index
    %c1_82 = arith.constant 1 : index
    %c0_83 = arith.constant 0 : index
    %88 = vector.load %arg6[%c0_81, %c1_82, %c0_83] : memref<18x18x64xf32, #tpu.memory_space<vmem>>, vector<16x16x64xf32>
    %89 = vector.shape_cast %88 : vector<16x16x64xf32> to vector<256x64xf32>
    %90 = arith.truncf %89 : vector<256x64xf32> to vector<256x64xbf16>
    %c1_84 = arith.constant 1 : index
    %c0_85 = arith.constant 0 : index
    %c0_86 = arith.constant 0 : index
    %91 = vector.load %arg2[%c1_84, %c0_85, %c0_86] : memref<9x64x64xbf16, #tpu.memory_space<vmem>>, vector<1x64x64xbf16>
    %92 = vector.shape_cast %91 : vector<1x64x64xbf16> to vector<64x64xbf16>
    %cst_87 = arith.constant dense<0.000000e+00> : vector<256x64xf32>
    %93 = tpu.matmul %90, %92, %cst_87 {dimension_numbers = #tpu.dot_dimension_numbers<[1], [0], [0], [1], [0, 0, 1, 1], [], []>} : vector<256x64xbf16>, vector<64x64xbf16>, vector<256x64xf32> -> vector<256x64xf32>
    %94 = arith.addf %87, %93 : vector<256x64xf32>
    %c0_88 = arith.constant 0 : index
    %c2_89 = arith.constant 2 : index
    %c0_90 = arith.constant 0 : index
    %95 = vector.load %arg6[%c0_88, %c2_89, %c0_90] : memref<18x18x64xf32, #tpu.memory_space<vmem>>, vector<16x16x64xf32>
    %96 = vector.shape_cast %95 : vector<16x16x64xf32> to vector<256x64xf32>
    %97 = arith.truncf %96 : vector<256x64xf32> to vector<256x64xbf16>
    %c2_91 = arith.constant 2 : index
    %c0_92 = arith.constant 0 : index
    %c0_93 = arith.constant 0 : index
    %98 = vector.load %arg2[%c2_91, %c0_92, %c0_93] : memref<9x64x64xbf16, #tpu.memory_space<vmem>>, vector<1x64x64xbf16>
    %99 = vector.shape_cast %98 : vector<1x64x64xbf16> to vector<64x64xbf16>
    %cst_94 = arith.constant dense<0.000000e+00> : vector<256x64xf32>
    %100 = tpu.matmul %97, %99, %cst_94 {dimension_numbers = #tpu.dot_dimension_numbers<[1], [0], [0], [1], [0, 0, 1, 1], [], []>} : vector<256x64xbf16>, vector<64x64xbf16>, vector<256x64xf32> -> vector<256x64xf32>
    %101 = arith.addf %94, %100 : vector<256x64xf32>
    %c1_95 = arith.constant 1 : index
    %c0_96 = arith.constant 0 : index
    %c0_97 = arith.constant 0 : index
    %102 = vector.load %arg6[%c1_95, %c0_96, %c0_97] : memref<18x18x64xf32, #tpu.memory_space<vmem>>, vector<16x16x64xf32>
    %103 = vector.shape_cast %102 : vector<16x16x64xf32> to vector<256x64xf32>
    %104 = arith.truncf %103 : vector<256x64xf32> to vector<256x64xbf16>
    %c3_98 = arith.constant 3 : index
    %c0_99 = arith.constant 0 : index
    %c0_100 = arith.constant 0 : index
    %105 = vector.load %arg2[%c3_98, %c0_99, %c0_100] : memref<9x64x64xbf16, #tpu.memory_space<vmem>>, vector<1x64x64xbf16>
    %106 = vector.shape_cast %105 : vector<1x64x64xbf16> to vector<64x64xbf16>
    %cst_101 = arith.constant dense<0.000000e+00> : vector<256x64xf32>
    %107 = tpu.matmul %104, %106, %cst_101 {dimension_numbers = #tpu.dot_dimension_numbers<[1], [0], [0], [1], [0, 0, 1, 1], [], []>} : vector<256x64xbf16>, vector<64x64xbf16>, vector<256x64xf32> -> vector<256x64xf32>
    %108 = arith.addf %101, %107 : vector<256x64xf32>
    %c1_102 = arith.constant 1 : index
    %c1_103 = arith.constant 1 : index
    %c0_104 = arith.constant 0 : index
    %109 = vector.load %arg6[%c1_102, %c1_103, %c0_104] : memref<18x18x64xf32, #tpu.memory_space<vmem>>, vector<16x16x64xf32>
    %110 = vector.shape_cast %109 : vector<16x16x64xf32> to vector<256x64xf32>
    %111 = arith.truncf %110 : vector<256x64xf32> to vector<256x64xbf16>
    %c4_105 = arith.constant 4 : index
    %c0_106 = arith.constant 0 : index
    %c0_107 = arith.constant 0 : index
    %112 = vector.load %arg2[%c4_105, %c0_106, %c0_107] : memref<9x64x64xbf16, #tpu.memory_space<vmem>>, vector<1x64x64xbf16>
    %113 = vector.shape_cast %112 : vector<1x64x64xbf16> to vector<64x64xbf16>
    %cst_108 = arith.constant dense<0.000000e+00> : vector<256x64xf32>
    %114 = tpu.matmul %111, %113, %cst_108 {dimension_numbers = #tpu.dot_dimension_numbers<[1], [0], [0], [1], [0, 0, 1, 1], [], []>} : vector<256x64xbf16>, vector<64x64xbf16>, vector<256x64xf32> -> vector<256x64xf32>
    %115 = arith.addf %108, %114 : vector<256x64xf32>
    %c1_109 = arith.constant 1 : index
    %c2_110 = arith.constant 2 : index
    %c0_111 = arith.constant 0 : index
    %116 = vector.load %arg6[%c1_109, %c2_110, %c0_111] : memref<18x18x64xf32, #tpu.memory_space<vmem>>, vector<16x16x64xf32>
    %117 = vector.shape_cast %116 : vector<16x16x64xf32> to vector<256x64xf32>
    %118 = arith.truncf %117 : vector<256x64xf32> to vector<256x64xbf16>
    %c5_112 = arith.constant 5 : index
    %c0_113 = arith.constant 0 : index
    %c0_114 = arith.constant 0 : index
    %119 = vector.load %arg2[%c5_112, %c0_113, %c0_114] : memref<9x64x64xbf16, #tpu.memory_space<vmem>>, vector<1x64x64xbf16>
    %120 = vector.shape_cast %119 : vector<1x64x64xbf16> to vector<64x64xbf16>
    %cst_115 = arith.constant dense<0.000000e+00> : vector<256x64xf32>
    %121 = tpu.matmul %118, %120, %cst_115 {dimension_numbers = #tpu.dot_dimension_numbers<[1], [0], [0], [1], [0, 0, 1, 1], [], []>} : vector<256x64xbf16>, vector<64x64xbf16>, vector<256x64xf32> -> vector<256x64xf32>
    %122 = arith.addf %115, %121 : vector<256x64xf32>
    %c2_116 = arith.constant 2 : index
    %c0_117 = arith.constant 0 : index
    %c0_118 = arith.constant 0 : index
    %123 = vector.load %arg6[%c2_116, %c0_117, %c0_118] : memref<18x18x64xf32, #tpu.memory_space<vmem>>, vector<16x16x64xf32>
    %124 = vector.shape_cast %123 : vector<16x16x64xf32> to vector<256x64xf32>
    %125 = arith.truncf %124 : vector<256x64xf32> to vector<256x64xbf16>
    %c6_119 = arith.constant 6 : index
    %c0_120 = arith.constant 0 : index
    %c0_121 = arith.constant 0 : index
    %126 = vector.load %arg2[%c6_119, %c0_120, %c0_121] : memref<9x64x64xbf16, #tpu.memory_space<vmem>>, vector<1x64x64xbf16>
    %127 = vector.shape_cast %126 : vector<1x64x64xbf16> to vector<64x64xbf16>
    %cst_122 = arith.constant dense<0.000000e+00> : vector<256x64xf32>
    %128 = tpu.matmul %125, %127, %cst_122 {dimension_numbers = #tpu.dot_dimension_numbers<[1], [0], [0], [1], [0, 0, 1, 1], [], []>} : vector<256x64xbf16>, vector<64x64xbf16>, vector<256x64xf32> -> vector<256x64xf32>
    %129 = arith.addf %122, %128 : vector<256x64xf32>
    %c2_123 = arith.constant 2 : index
    %c1_124 = arith.constant 1 : index
    %c0_125 = arith.constant 0 : index
    %130 = vector.load %arg6[%c2_123, %c1_124, %c0_125] : memref<18x18x64xf32, #tpu.memory_space<vmem>>, vector<16x16x64xf32>
    %131 = vector.shape_cast %130 : vector<16x16x64xf32> to vector<256x64xf32>
    %132 = arith.truncf %131 : vector<256x64xf32> to vector<256x64xbf16>
    %c7_126 = arith.constant 7 : index
    %c0_127 = arith.constant 0 : index
    %c0_128 = arith.constant 0 : index
    %133 = vector.load %arg2[%c7_126, %c0_127, %c0_128] : memref<9x64x64xbf16, #tpu.memory_space<vmem>>, vector<1x64x64xbf16>
    %134 = vector.shape_cast %133 : vector<1x64x64xbf16> to vector<64x64xbf16>
    %cst_129 = arith.constant dense<0.000000e+00> : vector<256x64xf32>
    %135 = tpu.matmul %132, %134, %cst_129 {dimension_numbers = #tpu.dot_dimension_numbers<[1], [0], [0], [1], [0, 0, 1, 1], [], []>} : vector<256x64xbf16>, vector<64x64xbf16>, vector<256x64xf32> -> vector<256x64xf32>
    %136 = arith.addf %129, %135 : vector<256x64xf32>
    %c2_130 = arith.constant 2 : index
    %c2_131 = arith.constant 2 : index
    %c0_132 = arith.constant 0 : index
    %137 = vector.load %arg6[%c2_130, %c2_131, %c0_132] : memref<18x18x64xf32, #tpu.memory_space<vmem>>, vector<16x16x64xf32>
    %138 = vector.shape_cast %137 : vector<16x16x64xf32> to vector<256x64xf32>
    %139 = arith.truncf %138 : vector<256x64xf32> to vector<256x64xbf16>
    %c8_133 = arith.constant 8 : index
    %c0_134 = arith.constant 0 : index
    %c0_135 = arith.constant 0 : index
    %140 = vector.load %arg2[%c8_133, %c0_134, %c0_135] : memref<9x64x64xbf16, #tpu.memory_space<vmem>>, vector<1x64x64xbf16>
    %141 = vector.shape_cast %140 : vector<1x64x64xbf16> to vector<64x64xbf16>
    %cst_136 = arith.constant dense<0.000000e+00> : vector<256x64xf32>
    %142 = tpu.matmul %139, %141, %cst_136 {dimension_numbers = #tpu.dot_dimension_numbers<[1], [0], [0], [1], [0, 0, 1, 1], [], []>} : vector<256x64xbf16>, vector<64x64xbf16>, vector<256x64xf32> -> vector<256x64xf32>
    %143 = arith.addf %136, %142 : vector<256x64xf32>
    %144 = vector.broadcast %4 : vector<1x64xf32> to vector<256x64xf32>
    %145 = arith.mulf %143, %144 : vector<256x64xf32>
    %146 = vector.broadcast %5 : vector<1x64xf32> to vector<256x64xf32>
    %147 = arith.addf %145, %146 : vector<256x64xf32>
    %cst_137 = arith.constant 0.000000e+00 : f32
    %148 = vector.broadcast %cst_137 : f32 to vector<256x64xf32>
    %149 = arith.maximumf %147, %148 : vector<256x64xf32>
    %150 = vector.shape_cast %149 : vector<256x64xf32> to vector<16x16x64xf32>
    %151 = arith.addf %3, %150 : vector<16x16x64xf32>
    %c1_138 = arith.constant 1 : index
    %c1_139 = arith.constant 1 : index
    %c0_140 = arith.constant 0 : index
    %152 = vector.load %arg6[%c1_138, %c1_139, %c0_140] : memref<18x18x64xf32, #tpu.memory_space<vmem>>, vector<16x16x64xf32>
    tpu.vector_store %arg6[%c1_138, %c1_139, %c0_140], %151 {strides = array<i32>} : memref<18x18x64xf32, #tpu.memory_space<vmem>>, vector<16x16x64xf32>,
    %cst_141 = arith.constant 0.000000e+00 : f32
    %153 = vector.broadcast %cst_141 : f32 to vector<256x64xf32>
    %c0_142 = arith.constant 0 : index
    %c0_143 = arith.constant 0 : index
    %c0_144 = arith.constant 0 : index
    %154 = vector.load %arg6[%c0_142, %c0_143, %c0_144] : memref<18x18x64xf32, #tpu.memory_space<vmem>>, vector<16x16x64xf32>
    %155 = vector.shape_cast %154 : vector<16x16x64xf32> to vector<256x64xf32>
    %156 = arith.truncf %155 : vector<256x64xf32> to vector<256x64xbf16>
    %c0_145 = arith.constant 0 : index
    %c0_146 = arith.constant 0 : index
    %c0_147 = arith.constant 0 : index
    %157 = vector.load %arg2[%c0_145, %c0_146, %c0_147] : memref<9x64x64xbf16, #tpu.memory_space<vmem>>, vector<1x64x64xbf16>
    %158 = vector.shape_cast %157 : vector<1x64x64xbf16> to vector<64x64xbf16>
    %cst_148 = arith.constant dense<0.000000e+00> : vector<256x64xf32>
    %159 = tpu.matmul %156, %158, %cst_148 {dimension_numbers = #tpu.dot_dimension_numbers<[1], [0], [0], [1], [0, 0, 1, 1], [], []>} : vector<256x64xbf16>, vector<64x64xbf16>, vector<256x64xf32> -> vector<256x64xf32>
    %160 = arith.addf %153, %159 : vector<256x64xf32>
    %c0_149 = arith.constant 0 : index
    %c1_150 = arith.constant 1 : index
    %c0_151 = arith.constant 0 : index
    %161 = vector.load %arg6[%c0_149, %c1_150, %c0_151] : memref<18x18x64xf32, #tpu.memory_space<vmem>>, vector<16x16x64xf32>
    %162 = vector.shape_cast %161 : vector<16x16x64xf32> to vector<256x64xf32>
    %163 = arith.truncf %162 : vector<256x64xf32> to vector<256x64xbf16>
    %c1_152 = arith.constant 1 : index
    %c0_153 = arith.constant 0 : index
    %c0_154 = arith.constant 0 : index
    %164 = vector.load %arg2[%c1_152, %c0_153, %c0_154] : memref<9x64x64xbf16, #tpu.memory_space<vmem>>, vector<1x64x64xbf16>
    %165 = vector.shape_cast %164 : vector<1x64x64xbf16> to vector<64x64xbf16>
    %cst_155 = arith.constant dense<0.000000e+00> : vector<256x64xf32>
    %166 = tpu.matmul %163, %165, %cst_155 {dimension_numbers = #tpu.dot_dimension_numbers<[1], [0], [0], [1], [0, 0, 1, 1], [], []>} : vector<256x64xbf16>, vector<64x64xbf16>, vector<256x64xf32> -> vector<256x64xf32>
    %167 = arith.addf %160, %166 : vector<256x64xf32>
    %c0_156 = arith.constant 0 : index
    %c2_157 = arith.constant 2 : index
    %c0_158 = arith.constant 0 : index
    %168 = vector.load %arg6[%c0_156, %c2_157, %c0_158] : memref<18x18x64xf32, #tpu.memory_space<vmem>>, vector<16x16x64xf32>
    %169 = vector.shape_cast %168 : vector<16x16x64xf32> to vector<256x64xf32>
    %170 = arith.truncf %169 : vector<256x64xf32> to vector<256x64xbf16>
    %c2_159 = arith.constant 2 : index
    %c0_160 = arith.constant 0 : index
    %c0_161 = arith.constant 0 : index
    %171 = vector.load %arg2[%c2_159, %c0_160, %c0_161] : memref<9x64x64xbf16, #tpu.memory_space<vmem>>, vector<1x64x64xbf16>
    %172 = vector.shape_cast %171 : vector<1x64x64xbf16> to vector<64x64xbf16>
    %cst_162 = arith.constant dense<0.000000e+00> : vector<256x64xf32>
    %173 = tpu.matmul %170, %172, %cst_162 {dimension_numbers = #tpu.dot_dimension_numbers<[1], [0], [0], [1], [0, 0, 1, 1], [], []>} : vector<256x64xbf16>, vector<64x64xbf16>, vector<256x64xf32> -> vector<256x64xf32>
    %174 = arith.addf %167, %173 : vector<256x64xf32>
    %c1_163 = arith.constant 1 : index
    %c0_164 = arith.constant 0 : index
    %c0_165 = arith.constant 0 : index
    %175 = vector.load %arg6[%c1_163, %c0_164, %c0_165] : memref<18x18x64xf32, #tpu.memory_space<vmem>>, vector<16x16x64xf32>
    %176 = vector.shape_cast %175 : vector<16x16x64xf32> to vector<256x64xf32>
    %177 = arith.truncf %176 : vector<256x64xf32> to vector<256x64xbf16>
    %c3_166 = arith.constant 3 : index
    %c0_167 = arith.constant 0 : index
    %c0_168 = arith.constant 0 : index
    %178 = vector.load %arg2[%c3_166, %c0_167, %c0_168] : memref<9x64x64xbf16, #tpu.memory_space<vmem>>, vector<1x64x64xbf16>
    %179 = vector.shape_cast %178 : vector<1x64x64xbf16> to vector<64x64xbf16>
    %cst_169 = arith.constant dense<0.000000e+00> : vector<256x64xf32>
    %180 = tpu.matmul %177, %179, %cst_169 {dimension_numbers = #tpu.dot_dimension_numbers<[1], [0], [0], [1], [0, 0, 1, 1], [], []>} : vector<256x64xbf16>, vector<64x64xbf16>, vector<256x64xf32> -> vector<256x64xf32>
    %181 = arith.addf %174, %180 : vector<256x64xf32>
    %c1_170 = arith.constant 1 : index
    %c1_171 = arith.constant 1 : index
    %c0_172 = arith.constant 0 : index
    %182 = vector.load %arg6[%c1_170, %c1_171, %c0_172] : memref<18x18x64xf32, #tpu.memory_space<vmem>>, vector<16x16x64xf32>
    %183 = vector.shape_cast %182 : vector<16x16x64xf32> to vector<256x64xf32>
    %184 = arith.truncf %183 : vector<256x64xf32> to vector<256x64xbf16>
    %c4_173 = arith.constant 4 : index
    %c0_174 = arith.constant 0 : index
    %c0_175 = arith.constant 0 : index
    %185 = vector.load %arg2[%c4_173, %c0_174, %c0_175] : memref<9x64x64xbf16, #tpu.memory_space<vmem>>, vector<1x64x64xbf16>
    %186 = vector.shape_cast %185 : vector<1x64x64xbf16> to vector<64x64xbf16>
    %cst_176 = arith.constant dense<0.000000e+00> : vector<256x64xf32>
    %187 = tpu.matmul %184, %186, %cst_176 {dimension_numbers = #tpu.dot_dimension_numbers<[1], [0], [0], [1], [0, 0, 1, 1], [], []>} : vector<256x64xbf16>, vector<64x64xbf16>, vector<256x64xf32> -> vector<256x64xf32>
    %188 = arith.addf %181, %187 : vector<256x64xf32>
    %c1_177 = arith.constant 1 : index
    %c2_178 = arith.constant 2 : index
    %c0_179 = arith.constant 0 : index
    %189 = vector.load %arg6[%c1_177, %c2_178, %c0_179] : memref<18x18x64xf32, #tpu.memory_space<vmem>>, vector<16x16x64xf32>
    %190 = vector.shape_cast %189 : vector<16x16x64xf32> to vector<256x64xf32>
    %191 = arith.truncf %190 : vector<256x64xf32> to vector<256x64xbf16>
    %c5_180 = arith.constant 5 : index
    %c0_181 = arith.constant 0 : index
    %c0_182 = arith.constant 0 : index
    %192 = vector.load %arg2[%c5_180, %c0_181, %c0_182] : memref<9x64x64xbf16, #tpu.memory_space<vmem>>, vector<1x64x64xbf16>
    %193 = vector.shape_cast %192 : vector<1x64x64xbf16> to vector<64x64xbf16>
    %cst_183 = arith.constant dense<0.000000e+00> : vector<256x64xf32>
    %194 = tpu.matmul %191, %193, %cst_183 {dimension_numbers = #tpu.dot_dimension_numbers<[1], [0], [0], [1], [0, 0, 1, 1], [], []>} : vector<256x64xbf16>, vector<64x64xbf16>, vector<256x64xf32> -> vector<256x64xf32>
    %195 = arith.addf %188, %194 : vector<256x64xf32>
    %c2_184 = arith.constant 2 : index
    %c0_185 = arith.constant 0 : index
    %c0_186 = arith.constant 0 : index
    %196 = vector.load %arg6[%c2_184, %c0_185, %c0_186] : memref<18x18x64xf32, #tpu.memory_space<vmem>>, vector<16x16x64xf32>
    %197 = vector.shape_cast %196 : vector<16x16x64xf32> to vector<256x64xf32>
    %198 = arith.truncf %197 : vector<256x64xf32> to vector<256x64xbf16>
    %c6_187 = arith.constant 6 : index
    %c0_188 = arith.constant 0 : index
    %c0_189 = arith.constant 0 : index
    %199 = vector.load %arg2[%c6_187, %c0_188, %c0_189] : memref<9x64x64xbf16, #tpu.memory_space<vmem>>, vector<1x64x64xbf16>
    %200 = vector.shape_cast %199 : vector<1x64x64xbf16> to vector<64x64xbf16>
    %cst_190 = arith.constant dense<0.000000e+00> : vector<256x64xf32>
    %201 = tpu.matmul %198, %200, %cst_190 {dimension_numbers = #tpu.dot_dimension_numbers<[1], [0], [0], [1], [0, 0, 1, 1], [], []>} : vector<256x64xbf16>, vector<64x64xbf16>, vector<256x64xf32> -> vector<256x64xf32>
    %202 = arith.addf %195, %201 : vector<256x64xf32>
    %c2_191 = arith.constant 2 : index
    %c1_192 = arith.constant 1 : index
    %c0_193 = arith.constant 0 : index
    %203 = vector.load %arg6[%c2_191, %c1_192, %c0_193] : memref<18x18x64xf32, #tpu.memory_space<vmem>>, vector<16x16x64xf32>
    %204 = vector.shape_cast %203 : vector<16x16x64xf32> to vector<256x64xf32>
    %205 = arith.truncf %204 : vector<256x64xf32> to vector<256x64xbf16>
    %c7_194 = arith.constant 7 : index
    %c0_195 = arith.constant 0 : index
    %c0_196 = arith.constant 0 : index
    %206 = vector.load %arg2[%c7_194, %c0_195, %c0_196] : memref<9x64x64xbf16, #tpu.memory_space<vmem>>, vector<1x64x64xbf16>
    %207 = vector.shape_cast %206 : vector<1x64x64xbf16> to vector<64x64xbf16>
    %cst_197 = arith.constant dense<0.000000e+00> : vector<256x64xf32>
    %208 = tpu.matmul %205, %207, %cst_197 {dimension_numbers = #tpu.dot_dimension_numbers<[1], [0], [0], [1], [0, 0, 1, 1], [], []>} : vector<256x64xbf16>, vector<64x64xbf16>, vector<256x64xf32> -> vector<256x64xf32>
    %209 = arith.addf %202, %208 : vector<256x64xf32>
    %c2_198 = arith.constant 2 : index
    %c2_199 = arith.constant 2 : index
    %c0_200 = arith.constant 0 : index
    %210 = vector.load %arg6[%c2_198, %c2_199, %c0_200] : memref<18x18x64xf32, #tpu.memory_space<vmem>>, vector<16x16x64xf32>
    %211 = vector.shape_cast %210 : vector<16x16x64xf32> to vector<256x64xf32>
    %212 = arith.truncf %211 : vector<256x64xf32> to vector<256x64xbf16>
    %c8_201 = arith.constant 8 : index
    %c0_202 = arith.constant 0 : index
    %c0_203 = arith.constant 0 : index
    %213 = vector.load %arg2[%c8_201, %c0_202, %c0_203] : memref<9x64x64xbf16, #tpu.memory_space<vmem>>, vector<1x64x64xbf16>
    %214 = vector.shape_cast %213 : vector<1x64x64xbf16> to vector<64x64xbf16>
    %cst_204 = arith.constant dense<0.000000e+00> : vector<256x64xf32>
    %215 = tpu.matmul %212, %214, %cst_204 {dimension_numbers = #tpu.dot_dimension_numbers<[1], [0], [0], [1], [0, 0, 1, 1], [], []>} : vector<256x64xbf16>, vector<64x64xbf16>, vector<256x64xf32> -> vector<256x64xf32>
    %216 = arith.addf %209, %215 : vector<256x64xf32>
    %217 = vector.broadcast %4 : vector<1x64xf32> to vector<256x64xf32>
    %218 = arith.mulf %216, %217 : vector<256x64xf32>
    %219 = vector.broadcast %5 : vector<1x64xf32> to vector<256x64xf32>
    %220 = arith.addf %218, %219 : vector<256x64xf32>
    %cst_205 = arith.constant 0.000000e+00 : f32
    %221 = vector.broadcast %cst_205 : f32 to vector<256x64xf32>
    %222 = arith.maximumf %220, %221 : vector<256x64xf32>
    %223 = vector.shape_cast %222 : vector<256x64xf32> to vector<16x16x64xf32>
    %c0_206 = arith.constant 0 : index
    %c0_207 = arith.constant 0 : index
    %c0_208 = arith.constant 0 : index
    %c0_209 = arith.constant 0 : index
    %224 = vector.load %arg5[%c0_206, %c0_207, %c0_208, %c0_209] : memref<1x16x16x64xf32, #tpu.memory_space<vmem>>, vector<1x16x16x64xf32>
    %225 = vector.shape_cast %224 : vector<1x16x16x64xf32> to vector<16x16x64xf32>
    %226 = vector.shape_cast %223 : vector<16x16x64xf32> to vector<1x16x16x64xf32>
    tpu.vector_store %arg5[%c0_206, %c0_207, %c0_208, %c0_209], %226 {strides = array<i32>} : memref<1x16x16x64xf32, #tpu.memory_space<vmem>>, vector<1x16x16x64xf32>,
    return
  }
  func.func @transform_0(%arg0: i32) -> (i32, i32, i32, i32) {
    %c0_i32 = arith.constant 0 : i32
    %c0_i32_0 = arith.constant 0 : i32
    %c0_i32_1 = arith.constant 0 : i32
    %c0_i32_2 = arith.constant 0 : i32
    return %arg0, %c0_i32, %c0_i32_0, %c0_i32_1 : i32, i32, i32, i32
  }
  func.func @transform_1(%arg0: i32) -> (i32, i32, i32) {
    %c0_i32 = arith.constant 0 : i32
    %c0_i32_0 = arith.constant 0 : i32
    %c0_i32_1 = arith.constant 0 : i32
    %c0_i32_2 = arith.constant 0 : i32
    return %c0_i32, %c0_i32_0, %c0_i32_1 : i32, i32, i32
  }
  func.func @transform_2(%arg0: i32) -> (i32, i32) {
    %c0_i32 = arith.constant 0 : i32
    %c0_i32_0 = arith.constant 0 : i32
    %c0_i32_1 = arith.constant 0 : i32
    return %c0_i32, %c0_i32_0 : i32, i32
  }
  func.func @transform_3(%arg0: i32) -> (i32, i32) {
    %c0_i32 = arith.constant 0 : i32
    %c0_i32_0 = arith.constant 0 : i32
    %c0_i32_1 = arith.constant 0 : i32
    return %c0_i32, %c0_i32_0 : i32, i32
  }
  func.func @transform_4(%arg0: i32) -> (i32, i32, i32, i32) {
    %c0_i32 = arith.constant 0 : i32
    %c0_i32_0 = arith.constant 0 : i32
    %c0_i32_1 = arith.constant 0 : i32
    %c0_i32_2 = arith.constant 0 : i32
    return %arg0, %c0_i32, %c0_i32_0, %c0_i32_1 : i32, i32, i32, i32
  }
}

</mosaic_0001>

<llo_original>
// kernel: recurrent_block_nchw.1
$region0: #{recurrent_block_nchw.1}
  #allocation0 [shape = 'u32[]', space=smem, size = 0x4, offset = 0x4, fixed_abs, tag = 'smem constant byte address 0x4 - core index']
  #allocation1 [shape = 'u32[72,128]{1,0:T(1,128)}', space=vmem, size = 0x9000, scoped, tag = 'internal scratch']
  #allocation2 [shape = 'f32[18,18,64]{2,1,0:T(8,128)}', space=vmem, size = 0x36000, scoped, tag = 'scratch operand']
  %s0 = inlined_call_operand.hbm [shape: f32[2,16,16,64], index: 0, kind: input, shape index: {}]
  %s1 = inlined_call_operand.hbm [shape: bf16[9,64,64], index: 1, kind: input, shape index: {}]
  %s2 = inlined_call_operand.vmem [shape: f32[1,64], index: 2, kind: input, shape index: {}]
  %s3 = inlined_call_operand.vmem [shape: f32[1,64], index: 3, kind: input, shape index: {}]
  %s4 = inlined_call_operand.hbm [shape: f32[2,16,16,64], index: 4, kind: output, shape index: {}]
  %s5 = sld [smem:[#allocation0]]
  $region57: #{recurrent_block_nchw.1} parent=0
    _
  %s7 = ssub.s32 1, %s5
  %s8 = scalar_select 0, %s7, %s5
  $region1: #{recurrent_block_nchw.1} parent=0
    #allocation3 [shape = 'u8[262144]{0}', space=vmem, size = 0x40000, scoped, tag = 'input window, operand 0']
    #allocation4 [shape = 's32[2]{0}', space=sflag, size = 0x8, scoped, tag = 'scoped memory for recurrent_block_nchw.1']
    #allocation5 [shape = 's32[2]{0}', space=sflag, size = 0x8, scoped, tag = 'scoped memory for recurrent_block_nchw.1']
    #allocation6 [shape = 'u8[147456]{0}', space=vmem, size = 0x24000, scoped, tag = 'input window, operand 1, single buffered']
    #allocation7 [shape = 's32[1]{0}', space=sflag, size = 0x4, scoped, tag = 'scoped memory for recurrent_block_nchw.1']
    #allocation8 [shape = 'u8[262144]{0}', space=vmem, size = 0x40000, scoped, tag = 'output window, operand 0']
    %9 = vsyncpa [#allocation4], 0
    %s10 = scalar_lea.sflag [#allocation4], 1
    %11 = vsyncpa %s10, 0
    %12 = vsyncpa [#allocation7], 0
    %13 = vsyncpa [#allocation5], 0
    %s14 = scalar_lea.sflag [#allocation5], 1
    %15 = vsyncpa %s14, 0
    loop: start=0, step=1, limit=4
    $region2: #{recurrent_block_nchw.1} parent=1 // loop_pre_header
      _
    $region3: #{recurrent_block_nchw.1} parent=1 // loop_header
      %s17 = sphi 0, %s21
      %p18 = scmp.ge.s32.totalorder %s17, 4
      %s27 = sphi 0, %s29
      %s30 = sphi 0, %s27
      %s31 = sphi 0, %s30
      %s47 = sphi 0, %s31
      %s51 = sphi 0, %s51
      %s53 = sphi 0, %s51
      %s54 = sphi 0, %s53
      %s68 = sphi 0, %s54
      %s72 = sphi 0, %s72
      %s74 = sphi 0, %s72
      %s75 = sphi 0, %s74
      %s89 = sphi 0, %s75
      %s93 = sphi 0, %s93
      %s95 = sphi 0, %s93
      %s96 = sphi 0, %s95
      %s110 = sphi 0, %s96
      %s116 = sphi 0, %s118
      %s119 = sphi 0, %s116
      %s120 = sphi 0, %s119
      %s136 = sphi 0, %s120
    $region4: #{recurrent_block_nchw.1} parent=1 // loop_header_branch
      %20 = sbr.rel (%p18) target = $region8
    $region5: #{recurrent_block_nchw.1} parent=1 // loop_body
      %s22 = ssub.s32 %s17, 1
      %s23 = ssub.s32 %s17, 2
      %s24 = sadd.s32 %s17, 1
      %s25 = ssub.s32 %s17, %s24
      %p26 = scmp.eq.s32.totalorder %s25, 0
      %s28 = sadd.s32 %s27, 1
      %s29 = scalar_select %p26, %s27, %s28
      %p32 = pneg %p26
      %p33 = scmp.eq.s32.totalorder %s17, 1
      %p34 = por %p32, %p33
      %p35 = scmp.ne.s32.totalorder %s27, %s30
      %p36 = scmp.eq.s32.totalorder %s17, 0
      %p37 = por %p35, %p36
      %p38 = scmp.ne.s32.totalorder %s27, %s30
      %p39 = scmp.eq.s32.totalorder %s22, 1
      %p40 = por %p38, %p39
      %p41 = scmp.ne.s32.totalorder %s30, %s31
      %p42 = scmp.eq.s32.totalorder %s22, 0
      %p43 = por %p41, %p42
      %p44 = scmp.ne.s32.totalorder %s30, %s31
      %p45 = scmp.eq.s32.totalorder %s23, 1
      %p46 = por %p44, %p45
      %p48 = scmp.ne.s32.totalorder %s31, %s47
      %p49 = scmp.eq.s32.totalorder %s23, 0
      %p50 = por %p48, %p49
      %s52 = sadd.s32 %s51, 1
      %p55 = scmp.eq.s32.totalorder %s17, 1
      %p56 = scmp.ne.s32.totalorder %s51, %s53
      %p57 = scmp.eq.s32.totalorder %s17, 0
      %p58 = por %p56, %p57
      %p59 = scmp.ne.s32.totalorder %s51, %s53
      %p60 = scmp.eq.s32.totalorder %s22, 1
      %p61 = por %p59, %p60
      %p62 = scmp.ne.s32.totalorder %s53, %s54
      %p63 = scmp.eq.s32.totalorder %s22, 0
      %p64 = por %p62, %p63
      %p65 = scmp.ne.s32.totalorder %s53, %s54
      %p66 = scmp.eq.s32.totalorder %s23, 1
      %p67 = por %p65, %p66
      %p69 = scmp.ne.s32.totalorder %s54, %s68
      %p70 = scmp.eq.s32.totalorder %s23, 0
      %p71 = por %p69, %p70
      %s73 = sadd.s32 %s72, 1
      %p76 = scmp.eq.s32.totalorder %s17, 1
      %p77 = scmp.ne.s32.totalorder %s72, %s74
      %p78 = scmp.eq.s32.totalorder %s17, 0
      %p79 = por %p77, %p78
      %p80 = scmp.ne.s32.totalorder %s72, %s74
      %p81 = scmp.eq.s32.totalorder %s22, 1
      %p82 = por %p80, %p81
      %p83 = scmp.ne.s32.totalorder %s74, %s75
      %p84 = scmp.eq.s32.totalorder %s22, 0
      %p85 = por %p83, %p84
      %p86 = scmp.ne.s32.totalorder %s74, %s75
      %p87 = scmp.eq.s32.totalorder %s23, 1
      %p88 = por %p86, %p87
      %p90 = scmp.ne.s32.totalorder %s75, %s89
      %p91 = scmp.eq.s32.totalorder %s23, 0
      %p92 = por %p90, %p91
      %s94 = sadd.s32 %s93, 1
      %p97 = scmp.eq.s32.totalorder %s17, 1
      %p98 = scmp.ne.s32.totalorder %s93, %s95
      %p99 = scmp.eq.s32.totalorder %s17, 0
      %p100 = por %p98, %p99
      %p101 = scmp.ne.s32.totalorder %s93, %s95
      %p102 = scmp.eq.s32.totalorder %s22, 1
      %p103 = por %p101, %p102
      %p104 = scmp.ne.s32.totalorder %s95, %s96
      %p105 = scmp.eq.s32.totalorder %s22, 0
      %p106 = por %p104, %p105
      %p107 = scmp.ne.s32.totalorder %s95, %s96
      %p108 = scmp.eq.s32.totalorder %s23, 1
      %p109 = por %p107, %p108
      %p111 = scmp.ne.s32.totalorder %s96, %s110
      %p112 = scmp.eq.s32.totalorder %s23, 0
      %p113 = por %p111, %p112
      %s114 = ssub.s32 %s17, %s24
      %p115 = scmp.eq.s32.totalorder %s114, 0
      %s117 = sadd.s32 %s116, 1
      %s118 = scalar_select %p115, %s116, %s117
      %p121 = pneg %p115
      %p122 = scmp.eq.s32.totalorder %s17, 1
      %p123 = por %p121, %p122
      %p124 = scmp.ne.s32.totalorder %s116, %s119
      %p125 = scmp.eq.s32.totalorder %s17, 0
      %p126 = por %p124, %p125
      %p127 = scmp.ne.s32.totalorder %s116, %s119
      %p128 = scmp.eq.s32.totalorder %s22, 1
      %p129 = por %p127, %p128
      %p130 = scmp.ne.s32.totalorder %s119, %s120
      %p131 = scmp.eq.s32.totalorder %s22, 0
      %p132 = por %p130, %p131
      %p133 = scmp.ne.s32.totalorder %s119, %s120
      %p134 = scmp.eq.s32.totalorder %s23, 1
      %p135 = por %p133, %p134
      %p137 = scmp.ne.s32.totalorder %s120, %s136
      %p138 = scmp.eq.s32.totalorder %s23, 0
      %p139 = por %p137, %p138
      %p140 = scmp.le.s32.totalorder 1, %s17
      %p141 = scmp.lt.s32.totalorder %s17, 3
      %p142 = pnand %p140, %p141
      %p143 = pneg %p142
      // Predicated region
      $region9: #{recurrent_block_nchw.1} parent=5 // pred_check
        _
      $region10: #{recurrent_block_nchw.1} parent=5 // pred_check_branch
        %145 = sbr.rel (%p142) target = $region12
      $region11: #{recurrent_block_nchw.1} parent=5 // pred_region
        %s146 = ssub.s32 %s17, 1
        // Predicated region
        $region13: #{recurrent_block_nchw.1} parent=11 // pred_check
          %p147 = pneg %p64
        $region14: #{recurrent_block_nchw.1} parent=11 // pred_check_branch
          %149 = sbr.rel (%p147) target = $region16
        $region15: #{recurrent_block_nchw.1} parent=11 // pred_region
          %151 = vsyncadd [#allocation7], 0
          %s152 = sshll.u32 %s1, 4
          %s153 = int_to_ptr.hbm [resolvable:$true] %s152
          %s154 = sshll.u32 [#allocation6], 4
          %s155 = int_to_ptr.vmem [resolvable:$true] %s154
          %160 = dma.hbm_to_vmem [thread:$0]  %s153, 4608, %s155, [#allocation7], 64, 64, 4
        $region16: #{recurrent_block_nchw.1} parent=11 // pred_fallthru
          _
        // Predicated region
        $region17: #{recurrent_block_nchw.1} parent=11 // pred_check
          %p161 = pneg %p85
        $region18: #{recurrent_block_nchw.1} parent=11 // pred_check_branch
          %163 = sbr.rel (%p161) target = $region20
        $region19: #{recurrent_block_nchw.1} parent=11 // pred_region
          _
        $region20: #{recurrent_block_nchw.1} parent=11 // pred_fallthru
          _
        // Predicated region
        $region21: #{recurrent_block_nchw.1} parent=11 // pred_check
          %p164 = pneg %p106
        $region22: #{recurrent_block_nchw.1} parent=11 // pred_check_branch
          %166 = sbr.rel (%p164) target = $region24
        $region23: #{recurrent_block_nchw.1} parent=11 // pred_region
          _
        $region24: #{recurrent_block_nchw.1} parent=11 // pred_fallthru
          _
      $region12: #{recurrent_block_nchw.1} parent=5 // pred_fallthru
        _
      %p167 = scmp.lt.s32.totalorder %s17, 2
      // Predicated region
      $region25: #{recurrent_block_nchw.1} parent=5 // pred_check
        %p168 = pneg %p167
      $region26: #{recurrent_block_nchw.1} parent=5 // pred_check_branch
        %170 = sbr.rel (%p168) target = $region28
      $region27: #{recurrent_block_nchw.1} parent=5 // pred_region
        // Predicated region
        $region29: #{recurrent_block_nchw.1} parent=27 // pred_check
          %p171 = pneg %p37
        $region30: #{recurrent_block_nchw.1} parent=27 // pred_check_branch
          %173 = sbr.rel (%p171) target = $region32
        $region31: #{recurrent_block_nchw.1} parent=27 // pred_region
          %s174 = sand.u32 %s27, 1
          %s175 = scalar_lea.sflag [#allocation4], %s174
          %s176 = sand.u32 %s27, 1
          %s177 = smul.addr %s176, 256
          %s178 = scalar_lea.vmem [#allocation3], %s177
          %180 = vsyncadd %s175, 0
          %s181 = smul.addr %s17, 32
          %s182 = smul.addr %s181, 8
          %s183 = scalar_lea.hbm %s0, %s182
          %s184 = sshll.u32 %s183, 4
          %s185 = int_to_ptr.hbm [resolvable:$true] %s184
          %s186 = sshll.u32 %s178, 4
          %s187 = int_to_ptr.vmem [resolvable:$true] %s186
          %192 = dma.hbm_to_vmem [thread:$0]  %s185, 4096, %s187, %s175, 128, 128, 8
        $region32: #{recurrent_block_nchw.1} parent=27 // pred_fallthru
          _
      $region28: #{recurrent_block_nchw.1} parent=5 // pred_fallthru
        _
      %p193 = scmp.le.s32.totalorder 1, %s17
      %p194 = scmp.lt.s32.totalorder %s17, 3
      %p195 = pnand %p193, %p194
      %p196 = pneg %p195
      // Predicated region
      $region33: #{recurrent_block_nchw.1} parent=5 // pred_check
        _
      $region34: #{recurrent_block_nchw.1} parent=5 // pred_check_branch
        %198 = sbr.rel (%p195) target = $region36
      $region35: #{recurrent_block_nchw.1} parent=5 // pred_region
        %s199 = ssub.s32 %s17, 1
        %s200 = sand.u32 %s30, 1
        %s201 = scalar_lea.sflag [#allocation4], %s200
        %s202 = sand.u32 %s30, 1
        %s203 = smul.addr %s202, 256
        %s204 = scalar_lea.vmem [#allocation3], %s203
        // Predicated region
        $region37: #{recurrent_block_nchw.1} parent=35 // pred_check
          %p205 = pneg %p43
        $region38: #{recurrent_block_nchw.1} parent=35 // pred_check_branch
          %207 = sbr.rel (%p205) target = $region40
        $region39: #{recurrent_block_nchw.1} parent=35 // pred_region
          %209 = dma.done %s201, 4096
        $region40: #{recurrent_block_nchw.1} parent=35 // pred_fallthru
          _
        // Predicated region
        $region41: #{recurrent_block_nchw.1} parent=35 // pred_check
          %p210 = pneg %p64
        $region42: #{recurrent_block_nchw.1} parent=35 // pred_check_branch
          %212 = sbr.rel (%p210) target = $region44
        $region43: #{recurrent_block_nchw.1} parent=35 // pred_region
          %214 = dma.done [#allocation7], 4608
        $region44: #{recurrent_block_nchw.1} parent=35 // pred_fallthru
          _
        %s215 = sand.u32 %s30, 1
        %s216 = scalar_lea.sflag [#allocation4], %s215
        %s217 = sand.u32 %s30, 1
        %s218 = smul.addr %s217, 256
        %s219 = scalar_lea.vmem [#allocation3], %s218
        %p220 = pneg %p43
        %p221 = pneg %p40
        %p222 = pneg %p64
        %p223 = pneg %p61
        %p224 = pneg %p85
        %p225 = pneg %p82
        %p226 = pneg %p106
        %p227 = pneg %p103
        %p228 = pneg %p132
        %p229 = pneg %p129
        %s230 = sand.u32 %s119, 1
        %s231 = scalar_lea.sflag [#allocation5], %s230
        %s232 = sand.u32 %s119, 1
        %s233 = smul.addr %s232, 256
        %s234 = scalar_lea.vmem [#allocation8], %s233
        %vm236 = vcmask 523264
        %237 = vst.msk [vmem:[#allocation2] sm:$0xff] %vm236, 0.0
        %238 = vst.msk [vmem:[#allocation2 + $0x8] sm:$0xff] %vm236, 0.0
        %vm239 = vcmask 517120
        %240 = vst.msk [vmem:[#allocation2 + $0x10] sm:$0x3] %vm239, 0.0
        %241 = vst.msk [vmem:[#allocation2 + $0x18] sm:$0xff] %vm236, 0.0
        %242 = vst.msk [vmem:[#allocation2 + $0x20] sm:$0xff] %vm236, 0.0
        %243 = vst.msk [vmem:[#allocation2 + $0x28] sm:$0x3] %vm239, 0.0
        %244 = vst.msk [vmem:[#allocation2 + $0x30] sm:$0xff] %vm236, 0.0
        %245 = vst.msk [vmem:[#allocation2 + $0x38] sm:$0xff] %vm236, 0.0
        %246 = vst.msk [vmem:[#allocation2 + $0x40] sm:$0x3] %vm239, 0.0
        %247 = vst.msk [vmem:[#allocation2 + $0x48] sm:$0xff] %vm236, 0.0
        %248 = vst.msk [vmem:[#allocation2 + $0x50] sm:$0xff] %vm236, 0.0
        %249 = vst.msk [vmem:[#allocation2 + $0x58] sm:$0x3] %vm239, 0.0
        %250 = vst.msk [vmem:[#allocation2 + $0x60] sm:$0xff] %vm236, 0.0
        %251 = vst.msk [vmem:[#allocation2 + $0x68] sm:$0xff] %vm236, 0.0
        %252 = vst.msk [vmem:[#allocation2 + $0x70] sm:$0x3] %vm239, 0.0
        %253 = vst.msk [vmem:[#allocation2 + $0x78] sm:$0xff] %vm236, 0.0
        %254 = vst.msk [vmem:[#allocation2 + $0x80] sm:$0xff] %vm236, 0.0
        %255 = vst.msk [vmem:[#allocation2 + $0x88] sm:$0x3] %vm239, 0.0
        %256 = vst.msk [vmem:[#allocation2 + $0x90] sm:$0xff] %vm236, 0.0
        %257 = vst.msk [vmem:[#allocation2 + $0x98] sm:$0xff] %vm236, 0.0
        %258 = vst.msk [vmem:[#allocation2 + $0xa0] sm:$0x3] %vm239, 0.0
        %259 = vst.msk [vmem:[#allocation2 + $0xa8] sm:$0xff] %vm236, 0.0
        %260 = vst.msk [vmem:[#allocation2 + $0xb0] sm:$0xff] %vm236, 0.0
        %261 = vst.msk [vmem:[#allocation2 + $0xb8] sm:$0x3] %vm239, 0.0
        %262 = vst.msk [vmem:[#allocation2 + $0xc0] sm:$0xff] %vm236, 0.0
        %263 = vst.msk [vmem:[#allocation2 + $0xc8] sm:$0xff] %vm236, 0.0
        %264 = vst.msk [vmem:[#allocation2 + $0xd0] sm:$0x3] %vm239, 0.0
        %265 = vst.msk [vmem:[#allocation2 + $0xd8] sm:$0xff] %vm236, 0.0
        %266 = vst.msk [vmem:[#allocation2 + $0xe0] sm:$0xff] %vm236, 0.0
        %267 = vst.msk [vmem:[#allocation2 + $0xe8] sm:$0x3] %vm239, 0.0
        %268 = vst.msk [vmem:[#allocation2 + $0xf0] sm:$0xff] %vm236, 0.0
        %269 = vst.msk [vmem:[#allocation2 + $0xf8] sm:$0xff] %vm236, 0.0
        %270 = vst.msk [vmem:[#allocation2 + $0x100] sm:$0x3] %vm239, 0.0
        %271 = vst.msk [vmem:[#allocation2 + $0x108] sm:$0xff] %vm236, 0.0
        %272 = vst.msk [vmem:[#allocation2 + $0x110] sm:$0xff] %vm236, 0.0
        %273 = vst.msk [vmem:[#allocation2 + $0x118] sm:$0x3] %vm239, 0.0
        %274 = vst.msk [vmem:[#allocation2 + $0x120] sm:$0xff] %vm236, 0.0
        %275 = vst.msk [vmem:[#allocation2 + $0x128] sm:$0xff] %vm236, 0.0
        %276 = vst.msk [vmem:[#allocation2 + $0x130] sm:$0x3] %vm239, 0.0
        %277 = vst.msk [vmem:[#allocation2 + $0x138] sm:$0xff] %vm236, 0.0
        %278 = vst.msk [vmem:[#allocation2 + $0x140] sm:$0xff] %vm236, 0.0
        %279 = vst.msk [vmem:[#allocation2 + $0x148] sm:$0x3] %vm239, 0.0
        %280 = vst.msk [vmem:[#allocation2 + $0x150] sm:$0xff] %vm236, 0.0
        %281 = vst.msk [vmem:[#allocation2 + $0x158] sm:$0xff] %vm236, 0.0
        %282 = vst.msk [vmem:[#allocation2 + $0x160] sm:$0x3] %vm239, 0.0
        %283 = vst.msk [vmem:[#allocation2 + $0x168] sm:$0xff] %vm236, 0.0
        %284 = vst.msk [vmem:[#allocation2 + $0x170] sm:$0xff] %vm236, 0.0
        %285 = vst.msk [vmem:[#allocation2 + $0x178] sm:$0x3] %vm239, 0.0
        %286 = vst.msk [vmem:[#allocation2 + $0x180] sm:$0xff] %vm236, 0.0
        %287 = vst.msk [vmem:[#allocation2 + $0x188] sm:$0xff] %vm236, 0.0
        %288 = vst.msk [vmem:[#allocation2 + $0x190] sm:$0x3] %vm239, 0.0
        %289 = vst.msk [vmem:[#allocation2 + $0x198] sm:$0xff] %vm236, 0.0
        %290 = vst.msk [vmem:[#allocation2 + $0x1a0] sm:$0xff] %vm236, 0.0
        %291 = vst.msk [vmem:[#allocation2 + $0x1a8] sm:$0x3] %vm239, 0.0
        %v292 = vld [vmem:[%s204] sm:$0xff]
        %v293 = vld [vmem:[%s204 + $0x8] sm:$0xff]
        %v294 = vld [vmem:[%s204 + $0x10] sm:$0xff]
        %v295 = vld [vmem:[%s204 + $0x18] sm:$0xff]
        %v296 = vld [vmem:[%s204 + $0x20] sm:$0xff]
        %v297 = vld [vmem:[%s204 + $0x28] sm:$0xff]
        %v298 = vld [vmem:[%s204 + $0x30] sm:$0xff]
        %v299 = vld [vmem:[%s204 + $0x38] sm:$0xff]
        %v300 = vld [vmem:[%s204 + $0x40] sm:$0xff]
        %v301 = vld [vmem:[%s204 + $0x48] sm:$0xff]
        %v302 = vld [vmem:[%s204 + $0x50] sm:$0xff]
        %v303 = vld [vmem:[%s204 + $0x58] sm:$0xff]
        %v304 = vld [vmem:[%s204 + $0x60] sm:$0xff]
        %v305 = vld [vmem:[%s204 + $0x68] sm:$0xff]
        %v306 = vld [vmem:[%s204 + $0x70] sm:$0xff]
        %v307 = vld [vmem:[%s204 + $0x78] sm:$0xff]
        %v308 = vld [vmem:[%s204 + $0x80] sm:$0xff]
        %v309 = vld [vmem:[%s204 + $0x88] sm:$0xff]
        %v310 = vld [vmem:[%s204 + $0x90] sm:$0xff]
        %v311 = vld [vmem:[%s204 + $0x98] sm:$0xff]
        %v312 = vld [vmem:[%s204 + $0xa0] sm:$0xff]
        %v313 = vld [vmem:[%s204 + $0xa8] sm:$0xff]
        %v314 = vld [vmem:[%s204 + $0xb0] sm:$0xff]
        %v315 = vld [vmem:[%s204 + $0xb8] sm:$0xff]
        %v316 = vld [vmem:[%s204 + $0xc0] sm:$0xff]
        %v317 = vld [vmem:[%s204 + $0xc8] sm:$0xff]
        %v318 = vld [vmem:[%s204 + $0xd0] sm:$0xff]
        %v319 = vld [vmem:[%s204 + $0xd8] sm:$0xff]
        %v320 = vld [vmem:[%s204 + $0xe0] sm:$0xff]
        %v321 = vld [vmem:[%s204 + $0xe8] sm:$0xff]
        %v322 = vld [vmem:[%s204 + $0xf0] sm:$0xff]
        %v323 = vld [vmem:[%s204 + $0xf8] sm:$0xff]
        %v324 = vld [vmem:[%s2] sm:$0x1]
        %v325 = vld [vmem:[%s3] sm:$0x1]
        %s326 = scalar_lea.vmem [#allocation2], 24
        %327 = vst.msk [vmem:[%s326 + $0x1] sm:$0xff] %vm236, %v292
        %328 = vst.msk [vmem:[%s326 + $0x9] sm:$0xff] %vm236, %v293
        %329 = vst.msk [vmem:[%s326 + $0x19] sm:$0xff] %vm236, %v294
        %330 = vst.msk [vmem:[%s326 + $0x21] sm:$0xff] %vm236, %v295
        %331 = vst.msk [vmem:[%s326 + $0x31] sm:$0xff] %vm236, %v296
        %332 = vst.msk [vmem:[%s326 + $0x39] sm:$0xff] %vm236, %v297
        %333 = vst.msk [vmem:[%s326 + $0x49] sm:$0xff] %vm236, %v298
        %334 = vst.msk [vmem:[%s326 + $0x51] sm:$0xff] %vm236, %v299
        %335 = vst.msk [vmem:[%s326 + $0x61] sm:$0xff] %vm236, %v300
        %336 = vst.msk [vmem:[%s326 + $0x69] sm:$0xff] %vm236, %v301
        %337 = vst.msk [vmem:[%s326 + $0x79] sm:$0xff] %vm236, %v302
        %338 = vst.msk [vmem:[%s326 + $0x81] sm:$0xff] %vm236, %v303
        %339 = vst.msk [vmem:[%s326 + $0x91] sm:$0xff] %vm236, %v304
        %340 = vst.msk [vmem:[%s326 + $0x99] sm:$0xff] %vm236, %v305
        %341 = vst.msk [vmem:[%s326 + $0xa9] sm:$0xff] %vm236, %v306
        %342 = vst.msk [vmem:[%s326 + $0xb1] sm:$0xff] %vm236, %v307
        %343 = vst.msk [vmem:[%s326 + $0xc1] sm:$0xff] %vm236, %v308
        %344 = vst.msk [vmem:[%s326 + $0xc9] sm:$0xff] %vm236, %v309
        %345 = vst.msk [vmem:[%s326 + $0xd9] sm:$0xff] %vm236, %v310
        %346 = vst.msk [vmem:[%s326 + $0xe1] sm:$0xff] %vm236, %v311
        %347 = vst.msk [vmem:[%s326 + $0xf1] sm:$0xff] %vm236, %v312
        %348 = vst.msk [vmem:[%s326 + $0xf9] sm:$0xff] %vm236, %v313
        %349 = vst.msk [vmem:[%s326 + $0x109] sm:$0xff] %vm236, %v314
        %350 = vst.msk [vmem:[%s326 + $0x111] sm:$0xff] %vm236, %v315
        %351 = vst.msk [vmem:[%s326 + $0x121] sm:$0xff] %vm236, %v316
        %352 = vst.msk [vmem:[%s326 + $0x129] sm:$0xff] %vm236, %v317
        %353 = vst.msk [vmem:[%s326 + $0x139] sm:$0xff] %vm236, %v318
        %354 = vst.msk [vmem:[%s326 + $0x141] sm:$0xff] %vm236, %v319
        %355 = vst.msk [vmem:[%s326 + $0x151] sm:$0xff] %vm236, %v320
        %356 = vst.msk [vmem:[%s326 + $0x159] sm:$0xff] %vm236, %v321
        %357 = vst.msk [vmem:[%s326 + $0x169] sm:$0xff] %vm236, %v322
        %358 = vst.msk [vmem:[%s326 + $0x171] sm:$0xff] %vm236, %v323
        %v359 = vld [vmem:[#allocation2] sm:$0xff]
        %v360 = vld [vmem:[#allocation2 + $0x8] sm:$0xff]
        %v361 = vld [vmem:[#allocation2 + $0x18] sm:$0xff]
        %v362 = vld [vmem:[#allocation2 + $0x20] sm:$0xff]
        %v363 = vld [vmem:[#allocation2 + $0x30] sm:$0xff]
        %v364 = vld [vmem:[#allocation2 + $0x38] sm:$0xff]
        %v365 = vld [vmem:[#allocation2 + $0x48] sm:$0xff]
        %v366 = vld [vmem:[#allocation2 + $0x50] sm:$0xff]
        %v367 = vld [vmem:[#allocation2 + $0x60] sm:$0xff]
        %v368 = vld [vmem:[#allocation2 + $0x68] sm:$0xff]
        %v369 = vld [vmem:[#allocation2 + $0x78] sm:$0xff]
        %v370 = vld [vmem:[#allocation2 + $0x80] sm:$0xff]
        %v371 = vld [vmem:[#allocation2 + $0x90] sm:$0xff]
        %v372 = vld [vmem:[#allocation2 + $0x98] sm:$0xff]
        %v373 = vld [vmem:[#allocation2 + $0xa8] sm:$0xff]
        %v374 = vld [vmem:[#allocation2 + $0xb0] sm:$0xff]
        %v375 = vld [vmem:[#allocation2 + $0xc0] sm:$0xff]
        %v376 = vld [vmem:[#allocation2 + $0xc8] sm:$0xff]
        %v377 = vld [vmem:[#allocation2 + $0xd8] sm:$0xff]
        %v378 = vld [vmem:[#allocation2 + $0xe0] sm:$0xff]
        %v379 = vld [vmem:[#allocation2 + $0xf0] sm:$0xff]
        %v380 = vld [vmem:[#allocation2 + $0xf8] sm:$0xff]
        %v381 = vld [vmem:[#allocation2 + $0x108] sm:$0xff]
        %v382 = vld [vmem:[#allocation2 + $0x110] sm:$0xff]
        %v383 = vld [vmem:[#allocation2 + $0x120] sm:$0xff]
        %v384 = vld [vmem:[#allocation2 + $0x128] sm:$0xff]
        %v385 = vld [vmem:[#allocation2 + $0x138] sm:$0xff]
        %v386 = vld [vmem:[#allocation2 + $0x140] sm:$0xff]
        %v387 = vld [vmem:[#allocation2 + $0x150] sm:$0xff]
        %v388 = vld [vmem:[#allocation2 + $0x158] sm:$0xff]
        %v389 = vld [vmem:[#allocation2 + $0x168] sm:$0xff]
        %v390 = vld [vmem:[#allocation2 + $0x170] sm:$0xff]
        %v391 = vpack.c.bf16 %v360, %v359
        %v392 = vpack.c.bf16 %v362, %v361
        %v393 = vpack.c.bf16 %v364, %v363
        %v394 = vpack.c.bf16 %v366, %v365
        %v395 = vpack.c.bf16 %v368, %v367
        %v396 = vpack.c.bf16 %v370, %v369
        %v397 = vpack.c.bf16 %v372, %v371
        %v398 = vpack.c.bf16 %v374, %v373
        %v399 = vpack.c.bf16 %v376, %v375
        %v400 = vpack.c.bf16 %v378, %v377
        %v401 = vpack.c.bf16 %v380, %v379
        %v402 = vpack.c.bf16 %v382, %v381
        %v403 = vpack.c.bf16 %v384, %v383
        %v404 = vpack.c.bf16 %v386, %v385
        %v405 = vpack.c.bf16 %v388, %v387
        %v406 = vpack.c.bf16 %v390, %v389
        %v407 = vld [vmem:[#allocation6] sm:$0xf]
        %v408 = vld [vmem:[#allocation6 + $0x4] sm:$0xf]
        %v409 = vld [vmem:[#allocation6 + $0x8] sm:$0xf]
        %v410 = vld [vmem:[#allocation6 + $0xc] sm:$0xf]
        %v411 = vld [vmem:[#allocation6 + $0x10] sm:$0xf]
        %v412 = vld [vmem:[#allocation6 + $0x14] sm:$0xf]
        %v413 = vld [vmem:[#allocation6 + $0x18] sm:$0xf]
        %v414 = vld [vmem:[#allocation6 + $0x1c] sm:$0xf]
        %v415 = vld [vmem:[#allocation2 + $0x1] sm:$0xff]
        %v416 = vld [vmem:[#allocation2 + $0x9] sm:$0xff]
        %v417 = vld [vmem:[#allocation2 + $0x19] sm:$0xff]
        %v418 = vld [vmem:[#allocation2 + $0x21] sm:$0xff]
        %v419 = vld [vmem:[#allocation2 + $0x31] sm:$0xff]
        %v420 = vld [vmem:[#allocation2 + $0x39] sm:$0xff]
        %v421 = vld [vmem:[#allocation2 + $0x49] sm:$0xff]
        %v422 = vld [vmem:[#allocation2 + $0x51] sm:$0xff]
        %v423 = vld [vmem:[#allocation2 + $0x61] sm:$0xff]
        %v424 = vld [vmem:[#allocation2 + $0x69] sm:$0xff]
        %v425 = vld [vmem:[#allocation2 + $0x79] sm:$0xff]
        %v426 = vld [vmem:[#allocation2 + $0x81] sm:$0xff]
        %v427 = vld [vmem:[#allocation2 + $0x91] sm:$0xff]
        %v428 = vld [vmem:[#allocation2 + $0x99] sm:$0xff]
        %v429 = vld [vmem:[#allocation2 + $0xa9] sm:$0xff]
        %v430 = vld [vmem:[#allocation2 + $0xb1] sm:$0xff]
        %v431 = vld [vmem:[#allocation2 + $0xc1] sm:$0xff]
        %v432 = vld [vmem:[#allocation2 + $0xc9] sm:$0xff]
        %v433 = vld [vmem:[#allocation2 + $0xd9] sm:$0xff]
        %v434 = vld [vmem:[#allocation2 + $0xe1] sm:$0xff]
        %v435 = vld [vmem:[#allocation2 + $0xf1] sm:$0xff]
        %v436 = vld [vmem:[#allocation2 + $0xf9] sm:$0xff]
        %v437 = vld [vmem:[#allocation2 + $0x109] sm:$0xff]
        %v438 = vld [vmem:[#allocation2 + $0x111] sm:$0xff]
        %v439 = vld [vmem:[#allocation2 + $0x121] sm:$0xff]
        %v440 = vld [vmem:[#allocation2 + $0x129] sm:$0xff]
        %v441 = vld [vmem:[#allocation2 + $0x139] sm:$0xff]
        %v442 = vld [vmem:[#allocation2 + $0x141] sm:$0xff]
        %v443 = vld [vmem:[#allocation2 + $0x151] sm:$0xff]
        %v444 = vld [vmem:[#allocation2 + $0x159] sm:$0xff]
        %v445 = vld [vmem:[#allocation2 + $0x169] sm:$0xff]
        %v446 = vld [vmem:[#allocation2 + $0x171] sm:$0xff]
        %v447 = vpack.c.bf16 %v416, %v415
        %v448 = vpack.c.bf16 %v418, %v417
        %v449 = vpack.c.bf16 %v420, %v419
        %v450 = vpack.c.bf16 %v422, %v421
        %v451 = vpack.c.bf16 %v424, %v423
        %v452 = vpack.c.bf16 %v426, %v425
        %v453 = vpack.c.bf16 %v428, %v427
        %v454 = vpack.c.bf16 %v430, %v429
        %v455 = vpack.c.bf16 %v432, %v431
        %v456 = vpack.c.bf16 %v434, %v433
        %v457 = vpack.c.bf16 %v436, %v435
        %v458 = vpack.c.bf16 %v438, %v437
        %v459 = vpack.c.bf16 %v440, %v439
        %v460 = vpack.c.bf16 %v442, %v441
        %v461 = vpack.c.bf16 %v444, %v443
        %v462 = vpack.c.bf16 %v446, %v445
        %s463 = scalar_lea.vmem [#allocation6], 32
        %v464 = vld [vmem:[%s463] sm:$0xf]
        %v465 = vld [vmem:[%s463 + $0x4] sm:$0xf]
        %v466 = vld [vmem:[%s463 + $0x8] sm:$0xf]
        %v467 = vld [vmem:[%s463 + $0xc] sm:$0xf]
        %v468 = vld [vmem:[%s463 + $0x10] sm:$0xf]
        %v469 = vld [vmem:[%s463 + $0x14] sm:$0xf]
        %v470 = vld [vmem:[%s463 + $0x18] sm:$0xf]
        %v471 = vld [vmem:[%s463 + $0x1c] sm:$0xf]
        %v480 = vunpack.c.l.b16 %v464
        %v481 = vunpack.c.l.b16 %v465
        %v482 = vunpack.c.l.b16 %v466
        %v483 = vunpack.c.l.b16 %v467
        %v484 = vunpack.c.l.b16 %v468
        %v485 = vunpack.c.l.b16 %v469
        %v486 = vunpack.c.l.b16 %v470
        %v487 = vunpack.c.l.b16 %v471
        %v488 = vpack.c.b16 %v481, %v480
        %v489 = vpack.c.b16 %v483, %v482
        %v490 = vpack.c.b16 %v485, %v484
        %v491 = vpack.c.b16 %v487, %v486
        %v497 = vsel %vm236, %v447, 0
        %v500 = vsel %vm236, %v448, 0
        %v503 = vsel %vm236, %v449, 0
        %v506 = vsel %vm236, %v450, 0
        %v509 = vsel %vm236, %v451, 0
        %v512 = vsel %vm236, %v452, 0
        %v515 = vsel %vm236, %v453, 0
        %v518 = vsel %vm236, %v454, 0
        %v521 = vsel %vm236, %v455, 0
        %v524 = vsel %vm236, %v456, 0
        %v527 = vsel %vm236, %v457, 0
        %v530 = vsel %vm236, %v458, 0
        %v533 = vsel %vm236, %v459, 0
        %v536 = vsel %vm236, %v460, 0
        %v539 = vsel %vm236, %v461, 0
        %v542 = vsel %vm236, %v462, 0
        %544 = vmatpush.bf16.msra.mxu0 0
        %545 = vmatpush.bf16.msra.mxu0 0
        %546 = vmatpush.bf16.msra.mxu0 0
        %547 = vmatpush.bf16.msra.mxu0 0
        %548 = vmatpush.bf16.msra.mxu0 %v491
        %549 = vmatpush.bf16.msra.mxu0 %v490
        %550 = vmatpush.bf16.msra.mxu0 %v489
        %551 = vmatpush.bf16.msra.mxu0 %v488
        %552 = vmatmul.bf16.gmra.mxu0 %v497
        %v553 = vpop.f32.mrf.mxu0
        %v554 = vadd.f32 0.0, %v553
        %v555 = vpop.f32.mrf.mxu0
        %v556 = vadd.f32 0.0, %v555
        %557 = vmatmul.bf16.gmra.mxu0 %v500
        %v558 = vpop.f32.mrf.mxu0
        %v559 = vadd.f32 0.0, %v558
        %v560 = vpop.f32.mrf.mxu0
        %v561 = vadd.f32 0.0, %v560
        %562 = vmatmul.bf16.gmra.mxu0 %v503
        %v563 = vpop.f32.mrf.mxu0
        %v564 = vadd.f32 0.0, %v563
        %v565 = vpop.f32.mrf.mxu0
        %v566 = vadd.f32 0.0, %v565
        %567 = vmatmul.bf16.gmra.mxu0 %v506
        %v568 = vpop.f32.mrf.mxu0
        %v569 = vadd.f32 0.0, %v568
        %v570 = vpop.f32.mrf.mxu0
        %v571 = vadd.f32 0.0, %v570
        %572 = vmatmul.bf16.gmra.mxu0 %v509
        %v573 = vpop.f32.mrf.mxu0
        %v574 = vadd.f32 0.0, %v573
        %v575 = vpop.f32.mrf.mxu0
        %v576 = vadd.f32 0.0, %v575
        %577 = vmatmul.bf16.gmra.mxu0 %v512
        %v578 = vpop.f32.mrf.mxu0
        %v579 = vadd.f32 0.0, %v578
        %v580 = vpop.f32.mrf.mxu0
        %v581 = vadd.f32 0.0, %v580
        %582 = vmatmul.bf16.gmra.mxu0 %v515
        %v583 = vpop.f32.mrf.mxu0
        %v584 = vadd.f32 0.0, %v583
        %v585 = vpop.f32.mrf.mxu0
        %v586 = vadd.f32 0.0, %v585
        %587 = vmatmul.bf16.gmra.mxu0 %v518
        %v588 = vpop.f32.mrf.mxu0
        %v589 = vadd.f32 0.0, %v588
        %v590 = vpop.f32.mrf.mxu0
        %v591 = vadd.f32 0.0, %v590
        %592 = vmatmul.bf16.gmra.mxu0 %v521
        %v593 = vpop.f32.mrf.mxu0
        %v594 = vadd.f32 0.0, %v593
        %v595 = vpop.f32.mrf.mxu0
        %v596 = vadd.f32 0.0, %v595
        %597 = vmatmul.bf16.gmra.mxu0 %v524
        %v598 = vpop.f32.mrf.mxu0
        %v599 = vadd.f32 0.0, %v598
        %v600 = vpop.f32.mrf.mxu0
        %v601 = vadd.f32 0.0, %v600
        %602 = vmatmul.bf16.gmra.mxu0 %v527
        %v603 = vpop.f32.mrf.mxu0
        %v604 = vadd.f32 0.0, %v603
        %v605 = vpop.f32.mrf.mxu0
        %v606 = vadd.f32 0.0, %v605
        %607 = vmatmul.bf16.gmra.mxu0 %v530
        %v608 = vpop.f32.mrf.mxu0
        %v609 = vadd.f32 0.0, %v608
        %v610 = vpop.f32.mrf.mxu0
        %v611 = vadd.f32 0.0, %v610
        %612 = vmatmul.bf16.gmra.mxu0 %v533
        %v613 = vpop.f32.mrf.mxu0
        %v614 = vadd.f32 0.0, %v613
        %v615 = vpop.f32.mrf.mxu0
        %v616 = vadd.f32 0.0, %v615
        %617 = vmatmul.bf16.gmra.mxu0 %v536
        %v618 = vpop.f32.mrf.mxu0
        %v619 = vadd.f32 0.0, %v618
        %v620 = vpop.f32.mrf.mxu0
        %v621 = vadd.f32 0.0, %v620
        %622 = vmatmul.bf16.gmra.mxu0 %v539
        %v623 = vpop.f32.mrf.mxu0
        %v624 = vadd.f32 0.0, %v623
        %v625 = vpop.f32.mrf.mxu0
        %v626 = vadd.f32 0.0, %v625
        %627 = vmatmul.bf16.gmra.mxu0 %v542
        %v628 = vpop.f32.mrf.mxu0
        %v629 = vadd.f32 0.0, %v628
        %v630 = vpop.f32.mrf.mxu0
        %v631 = vadd.f32 0.0, %v630
        %632 = vdwg.mxu0
        %v641 = vunpack.c.l.b16 %v407
        %v642 = vunpack.c.l.b16 %v408
        %v643 = vunpack.c.l.b16 %v409
        %v644 = vunpack.c.l.b16 %v410
        %v645 = vunpack.c.l.b16 %v411
        %v646 = vunpack.c.l.b16 %v412
        %v647 = vunpack.c.l.b16 %v413
        %v648 = vunpack.c.l.b16 %v414
        %v649 = vpack.c.b16 %v642, %v641
        %v650 = vpack.c.b16 %v644, %v643
        %v651 = vpack.c.b16 %v646, %v645
        %v652 = vpack.c.b16 %v648, %v647
        %v658 = vsel %vm236, %v391, 0
        %v661 = vsel %vm236, %v392, 0
        %v664 = vsel %vm236, %v393, 0
        %v667 = vsel %vm236, %v394, 0
        %v670 = vsel %vm236, %v395, 0
        %v673 = vsel %vm236, %v396, 0
        %v676 = vsel %vm236, %v397, 0
        %v679 = vsel %vm236, %v398, 0
        %v682 = vsel %vm236, %v399, 0
        %v685 = vsel %vm236, %v400, 0
        %v688 = vsel %vm236, %v401, 0
        %v691 = vsel %vm236, %v402, 0
        %v694 = vsel %vm236, %v403, 0
        %v697 = vsel %vm236, %v404, 0
        %v700 = vsel %vm236, %v405, 0
        %v703 = vsel %vm236, %v406, 0
        %705 = vmatpush.bf16.msra.mxu0 0
        %706 = vmatpush.bf16.msra.mxu0 0
        %707 = vmatpush.bf16.msra.mxu0 0
        %708 = vmatpush.bf16.msra.mxu0 0
        %709 = vmatpush.bf16.msra.mxu0 %v652
        %710 = vmatpush.bf16.msra.mxu0 %v651
        %711 = vmatpush.bf16.msra.mxu0 %v650
        %712 = vmatpush.bf16.msra.mxu0 %v649
        %713 = vmatmul.bf16.gmra.mxu0 %v658
        %v714 = vpop.f32.mrf.mxu0
        %v715 = vadd.f32 %v554, %v714
        %v716 = vpop.f32.mrf.mxu0
        %v717 = vadd.f32 %v556, %v716
        %718 = vmatmul.bf16.gmra.mxu0 %v661
        %v719 = vpop.f32.mrf.mxu0
        %v720 = vadd.f32 %v559, %v719
        %v721 = vpop.f32.mrf.mxu0
        %v722 = vadd.f32 %v561, %v721
        %723 = vmatmul.bf16.gmra.mxu0 %v664
        %v724 = vpop.f32.mrf.mxu0
        %v725 = vadd.f32 %v564, %v724
        %v726 = vpop.f32.mrf.mxu0
        %v727 = vadd.f32 %v566, %v726
        %728 = vmatmul.bf16.gmra.mxu0 %v667
        %v729 = vpop.f32.mrf.mxu0
        %v730 = vadd.f32 %v569, %v729
        %v731 = vpop.f32.mrf.mxu0
        %v732 = vadd.f32 %v571, %v731
        %733 = vmatmul.bf16.gmra.mxu0 %v670
        %v734 = vpop.f32.mrf.mxu0
        %v735 = vadd.f32 %v574, %v734
        %v736 = vpop.f32.mrf.mxu0
        %v737 = vadd.f32 %v576, %v736
        %738 = vmatmul.bf16.gmra.mxu0 %v673
        %v739 = vpop.f32.mrf.mxu0
        %v740 = vadd.f32 %v579, %v739
        %v741 = vpop.f32.mrf.mxu0
        %v742 = vadd.f32 %v581, %v741
        %743 = vmatmul.bf16.gmra.mxu0 %v676
        %v744 = vpop.f32.mrf.mxu0
        %v745 = vadd.f32 %v584, %v744
        %v746 = vpop.f32.mrf.mxu0
        %v747 = vadd.f32 %v586, %v746
        %748 = vmatmul.bf16.gmra.mxu0 %v679
        %v749 = vpop.f32.mrf.mxu0
        %v750 = vadd.f32 %v589, %v749
        %v751 = vpop.f32.mrf.mxu0
        %v752 = vadd.f32 %v591, %v751
        %753 = vmatmul.bf16.gmra.mxu0 %v682
        %v754 = vpop.f32.mrf.mxu0
        %v755 = vadd.f32 %v594, %v754
        %v756 = vpop.f32.mrf.mxu0
        %v757 = vadd.f32 %v596, %v756
        %758 = vmatmul.bf16.gmra.mxu0 %v685
        %v759 = vpop.f32.mrf.mxu0
        %v760 = vadd.f32 %v599, %v759
        %v761 = vpop.f32.mrf.mxu0
        %v762 = vadd.f32 %v601, %v761
        %763 = vmatmul.bf16.gmra.mxu0 %v688
        %v764 = vpop.f32.mrf.mxu0
        %v765 = vadd.f32 %v604, %v764
        %v766 = vpop.f32.mrf.mxu0
        %v767 = vadd.f32 %v606, %v766
        %768 = vmatmul.bf16.gmra.mxu0 %v691
        %v769 = vpop.f32.mrf.mxu0
        %v770 = vadd.f32 %v609, %v769
        %v771 = vpop.f32.mrf.mxu0
        %v772 = vadd.f32 %v611, %v771
        %773 = vmatmul.bf16.gmra.mxu0 %v694
        %v774 = vpop.f32.mrf.mxu0
        %v775 = vadd.f32 %v614, %v774
        %v776 = vpop.f32.mrf.mxu0
        %v777 = vadd.f32 %v616, %v776
        %778 = vmatmul.bf16.gmra.mxu0 %v697
        %v779 = vpop.f32.mrf.mxu0
        %v780 = vadd.f32 %v619, %v779
        %v781 = vpop.f32.mrf.mxu0
        %v782 = vadd.f32 %v621, %v781
        %783 = vmatmul.bf16.gmra.mxu0 %v700
        %v784 = vpop.f32.mrf.mxu0
        %v785 = vadd.f32 %v624, %v784
        %v786 = vpop.f32.mrf.mxu0
        %v787 = vadd.f32 %v626, %v786
        %788 = vmatmul.bf16.gmra.mxu0 %v703
        %v789 = vpop.f32.mrf.mxu0
        %v790 = vadd.f32 %v629, %v789
        %v791 = vpop.f32.mrf.mxu0
        %v792 = vadd.f32 %v631, %v791
        %793 = vdwg.mxu0
        %v794 = vld [vmem:[#allocation2 + $0x2] sm:$0xff]
        %v795 = vld [vmem:[#allocation2 + $0xa] sm:$0xff]
        %v796 = vld [vmem:[#allocation2 + $0x1a] sm:$0xff]
        %v797 = vld [vmem:[#allocation2 + $0x22] sm:$0xff]
        %v798 = vld [vmem:[#allocation2 + $0x32] sm:$0xff]
        %v799 = vld [vmem:[#allocation2 + $0x3a] sm:$0xff]
        %v800 = vld [vmem:[#allocation2 + $0x4a] sm:$0xff]
        %v801 = vld [vmem:[#allocation2 + $0x52] sm:$0xff]
        %v802 = vld [vmem:[#allocation2 + $0x62] sm:$0xff]
        %v803 = vld [vmem:[#allocation2 + $0x6a] sm:$0xff]
        %v804 = vld [vmem:[#allocation2 + $0x7a] sm:$0xff]
        %v805 = vld [vmem:[#allocation2 + $0x82] sm:$0xff]
        %v806 = vld [vmem:[#allocation2 + $0x92] sm:$0xff]
        %v807 = vld [vmem:[#allocation2 + $0x9a] sm:$0xff]
        %v808 = vld [vmem:[#allocation2 + $0xaa] sm:$0xff]
        %v809 = vld [vmem:[#allocation2 + $0xb2] sm:$0xff]
        %v810 = vld [vmem:[#allocation2 + $0xc2] sm:$0xff]
        %v811 = vld [vmem:[#allocation2 + $0xca] sm:$0xff]
        %v812 = vld [vmem:[#allocation2 + $0xda] sm:$0xff]
        %v813 = vld [vmem:[#allocation2 + $0xe2] sm:$0xff]
        %v814 = vld [vmem:[#allocation2 + $0xf2] sm:$0xff]
        %v815 = vld [vmem:[#allocation2 + $0xfa] sm:$0xff]
        %v816 = vld [vmem:[#allocation2 + $0x10a] sm:$0xff]
        %v817 = vld [vmem:[#allocation2 + $0x112] sm:$0xff]
        %v818 = vld [vmem:[#allocation2 + $0x122] sm:$0xff]
        %v819 = vld [vmem:[#allocation2 + $0x12a] sm:$0xff]
        %v820 = vld [vmem:[#allocation2 + $0x13a] sm:$0xff]
        %v821 = vld [vmem:[#allocation2 + $0x142] sm:$0xff]
        %v822 = vld [vmem:[#allocation2 + $0x152] sm:$0xff]
        %v823 = vld [vmem:[#allocation2 + $0x15a] sm:$0xff]
        %v824 = vld [vmem:[#allocation2 + $0x16a] sm:$0xff]
        %v825 = vld [vmem:[#allocation2 + $0x172] sm:$0xff]
        %v826 = vpack.c.bf16 %v795, %v794
        %v827 = vpack.c.bf16 %v797, %v796
        %v828 = vpack.c.bf16 %v799, %v798
        %v829 = vpack.c.bf16 %v801, %v800
        %v830 = vpack.c.bf16 %v803, %v802
        %v831 = vpack.c.bf16 %v805, %v804
        %v832 = vpack.c.bf16 %v807, %v806
        %v833 = vpack.c.bf16 %v809, %v808
        %v834 = vpack.c.bf16 %v811, %v810
        %v835 = vpack.c.bf16 %v813, %v812
        %v836 = vpack.c.bf16 %v815, %v814
        %v837 = vpack.c.bf16 %v817, %v816
        %v838 = vpack.c.bf16 %v819, %v818
        %v839 = vpack.c.bf16 %v821, %v820
        %v840 = vpack.c.bf16 %v823, %v822
        %v841 = vpack.c.bf16 %v825, %v824
        %s842 = scalar_lea.vmem [#allocation6], 64
        %v843 = vld [vmem:[%s842] sm:$0xf]
        %v844 = vld [vmem:[%s842 + $0x4] sm:$0xf]
        %v845 = vld [vmem:[%s842 + $0x8] sm:$0xf]
        %v846 = vld [vmem:[%s842 + $0xc] sm:$0xf]
        %v847 = vld [vmem:[%s842 + $0x10] sm:$0xf]
        %v848 = vld [vmem:[%s842 + $0x14] sm:$0xf]
        %v849 = vld [vmem:[%s842 + $0x18] sm:$0xf]
        %v850 = vld [vmem:[%s842 + $0x1c] sm:$0xf]
        %v859 = vunpack.c.l.b16 %v843
        %v860 = vunpack.c.l.b16 %v844
        %v861 = vunpack.c.l.b16 %v845
        %v862 = vunpack.c.l.b16 %v846
        %v863 = vunpack.c.l.b16 %v847
        %v864 = vunpack.c.l.b16 %v848
        %v865 = vunpack.c.l.b16 %v849
        %v866 = vunpack.c.l.b16 %v850
        %v867 = vpack.c.b16 %v860, %v859
        %v868 = vpack.c.b16 %v862, %v861
        %v869 = vpack.c.b16 %v864, %v863
        %v870 = vpack.c.b16 %v866, %v865
        %v876 = vsel %vm236, %v826, 0
        %v879 = vsel %vm236, %v827, 0
        %v882 = vsel %vm236, %v828, 0
        %v885 = vsel %vm236, %v829, 0
        %v888 = vsel %vm236, %v830, 0
        %v891 = vsel %vm236, %v831, 0
        %v894 = vsel %vm236, %v832, 0
        %v897 = vsel %vm236, %v833, 0
        %v900 = vsel %vm236, %v834, 0
        %v903 = vsel %vm236, %v835, 0
        %v906 = vsel %vm236, %v836, 0
        %v909 = vsel %vm236, %v837, 0
        %v912 = vsel %vm236, %v838, 0
        %v915 = vsel %vm236, %v839, 0
        %v918 = vsel %vm236, %v840, 0
        %v921 = vsel %vm236, %v841, 0
        %923 = vmatpush.bf16.msra.mxu0 0
        %924 = vmatpush.bf16.msra.mxu0 0
        %925 = vmatpush.bf16.msra.mxu0 0
        %926 = vmatpush.bf16.msra.mxu0 0
        %927 = vmatpush.bf16.msra.mxu0 %v870
        %928 = vmatpush.bf16.msra.mxu0 %v869
        %929 = vmatpush.bf16.msra.mxu0 %v868
        %930 = vmatpush.bf16.msra.mxu0 %v867
        %931 = vmatmul.bf16.gmra.mxu0 %v876
        %v932 = vpop.f32.mrf.mxu0
        %v933 = vadd.f32 0.0, %v932
        %v934 = vpop.f32.mrf.mxu0
        %v935 = vadd.f32 0.0, %v934
        %936 = vmatmul.bf16.gmra.mxu0 %v879
        %v937 = vpop.f32.mrf.mxu0
        %v938 = vadd.f32 0.0, %v937
        %v939 = vpop.f32.mrf.mxu0
        %v940 = vadd.f32 0.0, %v939
        %941 = vmatmul.bf16.gmra.mxu0 %v882
        %v942 = vpop.f32.mrf.mxu0
        %v943 = vadd.f32 0.0, %v942
        %v944 = vpop.f32.mrf.mxu0
        %v945 = vadd.f32 0.0, %v944
        %946 = vmatmul.bf16.gmra.mxu0 %v885
        %v947 = vpop.f32.mrf.mxu0
        %v948 = vadd.f32 0.0, %v947
        %v949 = vpop.f32.mrf.mxu0
        %v950 = vadd.f32 0.0, %v949
        %951 = vmatmul.bf16.gmra.mxu0 %v888
        %v952 = vpop.f32.mrf.mxu0
        %v953 = vadd.f32 0.0, %v952
        %v954 = vpop.f32.mrf.mxu0
        %v955 = vadd.f32 0.0, %v954
        %956 = vmatmul.bf16.gmra.mxu0 %v891
        %v957 = vpop.f32.mrf.mxu0
        %v958 = vadd.f32 0.0, %v957
        %v959 = vpop.f32.mrf.mxu0
        %v960 = vadd.f32 0.0, %v959
        %961 = vmatmul.bf16.gmra.mxu0 %v894
        %v962 = vpop.f32.mrf.mxu0
        %v963 = vadd.f32 0.0, %v962
        %v964 = vpop.f32.mrf.mxu0
        %v965 = vadd.f32 0.0, %v964
        %966 = vmatmul.bf16.gmra.mxu0 %v897
        %v967 = vpop.f32.mrf.mxu0
        %v968 = vadd.f32 0.0, %v967
        %v969 = vpop.f32.mrf.mxu0
        %v970 = vadd.f32 0.0, %v969
        %971 = vmatmul.bf16.gmra.mxu0 %v900
        %v972 = vpop.f32.mrf.mxu0
        %v973 = vadd.f32 0.0, %v972
        %v974 = vpop.f32.mrf.mxu0
        %v975 = vadd.f32 0.0, %v974
        %976 = vmatmul.bf16.gmra.mxu0 %v903
        %v977 = vpop.f32.mrf.mxu0
        %v978 = vadd.f32 0.0, %v977
        %v979 = vpop.f32.mrf.mxu0
        %v980 = vadd.f32 0.0, %v979
        %981 = vmatmul.bf16.gmra.mxu0 %v906
        %v982 = vpop.f32.mrf.mxu0
        %v983 = vadd.f32 0.0, %v982
        %v984 = vpop.f32.mrf.mxu0
        %v985 = vadd.f32 0.0, %v984
        %986 = vmatmul.bf16.gmra.mxu0 %v909
        %v987 = vpop.f32.mrf.mxu0
        %v988 = vadd.f32 0.0, %v987
        %v989 = vpop.f32.mrf.mxu0
        %v990 = vadd.f32 0.0, %v989
        %991 = vmatmul.bf16.gmra.mxu0 %v912
        %v992 = vpop.f32.mrf.mxu0
        %v993 = vadd.f32 0.0, %v992
        %v994 = vpop.f32.mrf.mxu0
        %v995 = vadd.f32 0.0, %v994
        %996 = vmatmul.bf16.gmra.mxu0 %v915
        %v997 = vpop.f32.mrf.mxu0
        %v998 = vadd.f32 0.0, %v997
        %v999 = vpop.f32.mrf.mxu0
        %v1000 = vadd.f32 0.0, %v999
        %1001 = vmatmul.bf16.gmra.mxu0 %v918
        %v1002 = vpop.f32.mrf.mxu0
        %v1003 = vadd.f32 0.0, %v1002
        %v1004 = vpop.f32.mrf.mxu0
        %v1005 = vadd.f32 0.0, %v1004
        %1006 = vmatmul.bf16.gmra.mxu0 %v921
        %v1007 = vpop.f32.mrf.mxu0
        %v1008 = vadd.f32 0.0, %v1007
        %v1009 = vpop.f32.mrf.mxu0
        %v1010 = vadd.f32 0.0, %v1009
        %1011 = vdwg.mxu0
        %v1012 = vadd.f32 %v715, %v933
        %v1013 = vadd.f32 %v717, %v935
        %v1014 = vadd.f32 %v720, %v938
        %v1015 = vadd.f32 %v722, %v940
        %v1016 = vadd.f32 %v725, %v943
        %v1017 = vadd.f32 %v727, %v945
        %v1018 = vadd.f32 %v730, %v948
        %v1019 = vadd.f32 %v732, %v950
        %v1020 = vadd.f32 %v735, %v953
        %v1021 = vadd.f32 %v737, %v955
        %v1022 = vadd.f32 %v740, %v958
        %v1023 = vadd.f32 %v742, %v960
        %v1024 = vadd.f32 %v745, %v963
        %v1025 = vadd.f32 %v747, %v965
        %v1026 = vadd.f32 %v750, %v968
        %v1027 = vadd.f32 %v752, %v970
        %v1028 = vadd.f32 %v755, %v973
        %v1029 = vadd.f32 %v757, %v975
        %v1030 = vadd.f32 %v760, %v978
        %v1031 = vadd.f32 %v762, %v980
        %v1032 = vadd.f32 %v765, %v983
        %v1033 = vadd.f32 %v767, %v985
        %v1034 = vadd.f32 %v770, %v988
        %v1035 = vadd.f32 %v772, %v990
        %v1036 = vadd.f32 %v775, %v993
        %v1037 = vadd.f32 %v777, %v995
        %v1038 = vadd.f32 %v780, %v998
        %v1039 = vadd.f32 %v782, %v1000
        %v1040 = vadd.f32 %v785, %v1003
        %v1041 = vadd.f32 %v787, %v1005
        %v1042 = vadd.f32 %v790, %v1008
        %v1043 = vadd.f32 %v792, %v1010
        %v1044 = vld [vmem:[%s326] sm:$0xff]
        %v1045 = vld [vmem:[%s326 + $0x8] sm:$0xff]
        %v1046 = vld [vmem:[%s326 + $0x18] sm:$0xff]
        %v1047 = vld [vmem:[%s326 + $0x20] sm:$0xff]
        %v1048 = vld [vmem:[%s326 + $0x30] sm:$0xff]
        %v1049 = vld [vmem:[%s326 + $0x38] sm:$0xff]
        %v1050 = vld [vmem:[%s326 + $0x48] sm:$0xff]
        %v1051 = vld [vmem:[%s326 + $0x50] sm:$0xff]
        %v1052 = vld [vmem:[%s326 + $0x60] sm:$0xff]
        %v1053 = vld [vmem:[%s326 + $0x68] sm:$0xff]
        %v1054 = vld [vmem:[%s326 + $0x78] sm:$0xff]
        %v1055 = vld [vmem:[%s326 + $0x80] sm:$0xff]
        %v1056 = vld [vmem:[%s326 + $0x90] sm:$0xff]
        %v1057 = vld [vmem:[%s326 + $0x98] sm:$0xff]
        %v1058 = vld [vmem:[%s326 + $0xa8] sm:$0xff]
        %v1059 = vld [vmem:[%s326 + $0xb0] sm:$0xff]
        %v1060 = vld [vmem:[%s326 + $0xc0] sm:$0xff]
        %v1061 = vld [vmem:[%s326 + $0xc8] sm:$0xff]
        %v1062 = vld [vmem:[%s326 + $0xd8] sm:$0xff]
        %v1063 = vld [vmem:[%s326 + $0xe0] sm:$0xff]
        %v1064 = vld [vmem:[%s326 + $0xf0] sm:$0xff]
        %v1065 = vld [vmem:[%s326 + $0xf8] sm:$0xff]
        %v1066 = vld [vmem:[%s326 + $0x108] sm:$0xff]
        %v1067 = vld [vmem:[%s326 + $0x110] sm:$0xff]
        %v1068 = vld [vmem:[%s326 + $0x120] sm:$0xff]
        %v1069 = vld [vmem:[%s326 + $0x128] sm:$0xff]
        %v1070 = vld [vmem:[%s326 + $0x138] sm:$0xff]
        %v1071 = vld [vmem:[%s326 + $0x140] sm:$0xff]
        %v1072 = vld [vmem:[%s326 + $0x150] sm:$0xff]
        %v1073 = vld [vmem:[%s326 + $0x158] sm:$0xff]
        %v1074 = vld [vmem:[%s326 + $0x168] sm:$0xff]
        %v1075 = vld [vmem:[%s326 + $0x170] sm:$0xff]
        %v1076 = vpack.c.bf16 %v1045, %v1044
        %v1077 = vpack.c.bf16 %v1047, %v1046
        %v1078 = vpack.c.bf16 %v1049, %v1048
        %v1079 = vpack.c.bf16 %v1051, %v1050
        %v1080 = vpack.c.bf16 %v1053, %v1052
        %v1081 = vpack.c.bf16 %v1055, %v1054
        %v1082 = vpack.c.bf16 %v1057, %v1056
        %v1083 = vpack.c.bf16 %v1059, %v1058
        %v1084 = vpack.c.bf16 %v1061, %v1060
        %v1085 = vpack.c.bf16 %v1063, %v1062
        %v1086 = vpack.c.bf16 %v1065, %v1064
        %v1087 = vpack.c.bf16 %v1067, %v1066
        %v1088 = vpack.c.bf16 %v1069, %v1068
        %v1089 = vpack.c.bf16 %v1071, %v1070
        %v1090 = vpack.c.bf16 %v1073, %v1072
        %v1091 = vpack.c.bf16 %v1075, %v1074
        %s1092 = scalar_lea.vmem [#allocation6], 96
        %v1093 = vld [vmem:[%s1092] sm:$0xf]
        %v1094 = vld [vmem:[%s1092 + $0x4] sm:$0xf]
        %v1095 = vld [vmem:[%s1092 + $0x8] sm:$0xf]
        %v1096 = vld [vmem:[%s1092 + $0xc] sm:$0xf]
        %v1097 = vld [vmem:[%s1092 + $0x10] sm:$0xf]
        %v1098 = vld [vmem:[%s1092 + $0x14] sm:$0xf]
        %v1099 = vld [vmem:[%s1092 + $0x18] sm:$0xf]
        %v1100 = vld [vmem:[%s1092 + $0x1c] sm:$0xf]
        %v1109 = vunpack.c.l.b16 %v1093
        %v1110 = vunpack.c.l.b16 %v1094
        %v1111 = vunpack.c.l.b16 %v1095
        %v1112 = vunpack.c.l.b16 %v1096
        %v1113 = vunpack.c.l.b16 %v1097
        %v1114 = vunpack.c.l.b16 %v1098
        %v1115 = vunpack.c.l.b16 %v1099
        %v1116 = vunpack.c.l.b16 %v1100
        %v1117 = vpack.c.b16 %v1110, %v1109
        %v1118 = vpack.c.b16 %v1112, %v1111
        %v1119 = vpack.c.b16 %v1114, %v1113
        %v1120 = vpack.c.b16 %v1116, %v1115
        %v1126 = vsel %vm236, %v1076, 0
        %v1129 = vsel %vm236, %v1077, 0
        %v1132 = vsel %vm236, %v1078, 0
        %v1135 = vsel %vm236, %v1079, 0
        %v1138 = vsel %vm236, %v1080, 0
        %v1141 = vsel %vm236, %v1081, 0
        %v1144 = vsel %vm236, %v1082, 0
        %v1147 = vsel %vm236, %v1083, 0
        %v1150 = vsel %vm236, %v1084, 0
        %v1153 = vsel %vm236, %v1085, 0
        %v1156 = vsel %vm236, %v1086, 0
        %v1159 = vsel %vm236, %v1087, 0
        %v1162 = vsel %vm236, %v1088, 0
        %v1165 = vsel %vm236, %v1089, 0
        %v1168 = vsel %vm236, %v1090, 0
        %v1171 = vsel %vm236, %v1091, 0
        %1173 = vmatpush.bf16.msra.mxu0 0
        %1174 = vmatpush.bf16.msra.mxu0 0
        %1175 = vmatpush.bf16.msra.mxu0 0
        %1176 = vmatpush.bf16.msra.mxu0 0
        %1177 = vmatpush.bf16.msra.mxu0 %v1120
        %1178 = vmatpush.bf16.msra.mxu0 %v1119
        %1179 = vmatpush.bf16.msra.mxu0 %v1118
        %1180 = vmatpush.bf16.msra.mxu0 %v1117
        %1181 = vmatmul.bf16.gmra.mxu0 %v1126
        %v1182 = vpop.f32.mrf.mxu0
        %v1183 = vadd.f32 0.0, %v1182
        %v1184 = vpop.f32.mrf.mxu0
        %v1185 = vadd.f32 0.0, %v1184
        %1186 = vmatmul.bf16.gmra.mxu0 %v1129
        %v1187 = vpop.f32.mrf.mxu0
        %v1188 = vadd.f32 0.0, %v1187
        %v1189 = vpop.f32.mrf.mxu0
        %v1190 = vadd.f32 0.0, %v1189
        %1191 = vmatmul.bf16.gmra.mxu0 %v1132
        %v1192 = vpop.f32.mrf.mxu0
        %v1193 = vadd.f32 0.0, %v1192
        %v1194 = vpop.f32.mrf.mxu0
        %v1195 = vadd.f32 0.0, %v1194
        %1196 = vmatmul.bf16.gmra.mxu0 %v1135
        %v1197 = vpop.f32.mrf.mxu0
        %v1198 = vadd.f32 0.0, %v1197
        %v1199 = vpop.f32.mrf.mxu0
        %v1200 = vadd.f32 0.0, %v1199
        %1201 = vmatmul.bf16.gmra.mxu0 %v1138
        %v1202 = vpop.f32.mrf.mxu0
        %v1203 = vadd.f32 0.0, %v1202
        %v1204 = vpop.f32.mrf.mxu0
        %v1205 = vadd.f32 0.0, %v1204
        %1206 = vmatmul.bf16.gmra.mxu0 %v1141
        %v1207 = vpop.f32.mrf.mxu0
        %v1208 = vadd.f32 0.0, %v1207
        %v1209 = vpop.f32.mrf.mxu0
        %v1210 = vadd.f32 0.0, %v1209
        %1211 = vmatmul.bf16.gmra.mxu0 %v1144
        %v1212 = vpop.f32.mrf.mxu0
        %v1213 = vadd.f32 0.0, %v1212
        %v1214 = vpop.f32.mrf.mxu0
        %v1215 = vadd.f32 0.0, %v1214
        %1216 = vmatmul.bf16.gmra.mxu0 %v1147
        %v1217 = vpop.f32.mrf.mxu0
        %v1218 = vadd.f32 0.0, %v1217
        %v1219 = vpop.f32.mrf.mxu0
        %v1220 = vadd.f32 0.0, %v1219
        %1221 = vmatmul.bf16.gmra.mxu0 %v1150
        %v1222 = vpop.f32.mrf.mxu0
        %v1223 = vadd.f32 0.0, %v1222
        %v1224 = vpop.f32.mrf.mxu0
        %v1225 = vadd.f32 0.0, %v1224
        %1226 = vmatmul.bf16.gmra.mxu0 %v1153
        %v1227 = vpop.f32.mrf.mxu0
        %v1228 = vadd.f32 0.0, %v1227
        %v1229 = vpop.f32.mrf.mxu0
        %v1230 = vadd.f32 0.0, %v1229
        %1231 = vmatmul.bf16.gmra.mxu0 %v1156
        %v1232 = vpop.f32.mrf.mxu0
        %v1233 = vadd.f32 0.0, %v1232
        %v1234 = vpop.f32.mrf.mxu0
        %v1235 = vadd.f32 0.0, %v1234
        %1236 = vmatmul.bf16.gmra.mxu0 %v1159
        %v1237 = vpop.f32.mrf.mxu0
        %v1238 = vadd.f32 0.0, %v1237
        %v1239 = vpop.f32.mrf.mxu0
        %v1240 = vadd.f32 0.0, %v1239
        %1241 = vmatmul.bf16.gmra.mxu0 %v1162
        %v1242 = vpop.f32.mrf.mxu0
        %v1243 = vadd.f32 0.0, %v1242
        %v1244 = vpop.f32.mrf.mxu0
        %v1245 = vadd.f32 0.0, %v1244
        %1246 = vmatmul.bf16.gmra.mxu0 %v1165
        %v1247 = vpop.f32.mrf.mxu0
        %v1248 = vadd.f32 0.0, %v1247
        %v1249 = vpop.f32.mrf.mxu0
        %v1250 = vadd.f32 0.0, %v1249
        %1251 = vmatmul.bf16.gmra.mxu0 %v1168
        %v1252 = vpop.f32.mrf.mxu0
        %v1253 = vadd.f32 0.0, %v1252
        %v1254 = vpop.f32.mrf.mxu0
        %v1255 = vadd.f32 0.0, %v1254
        %1256 = vmatmul.bf16.gmra.mxu0 %v1171
        %v1257 = vpop.f32.mrf.mxu0
        %v1258 = vadd.f32 0.0, %v1257
        %v1259 = vpop.f32.mrf.mxu0
        %v1260 = vadd.f32 0.0, %v1259
        %1261 = vdwg.mxu0
        %v1262 = vadd.f32 %v1012, %v1183
        %v1263 = vadd.f32 %v1013, %v1185
        %v1264 = vadd.f32 %v1014, %v1188
        %v1265 = vadd.f32 %v1015, %v1190
        %v1266 = vadd.f32 %v1016, %v1193
        %v1267 = vadd.f32 %v1017, %v1195
        %v1268 = vadd.f32 %v1018, %v1198
        %v1269 = vadd.f32 %v1019, %v1200
        %v1270 = vadd.f32 %v1020, %v1203
        %v1271 = vadd.f32 %v1021, %v1205
        %v1272 = vadd.f32 %v1022, %v1208
        %v1273 = vadd.f32 %v1023, %v1210
        %v1274 = vadd.f32 %v1024, %v1213
        %v1275 = vadd.f32 %v1025, %v1215
        %v1276 = vadd.f32 %v1026, %v1218
        %v1277 = vadd.f32 %v1027, %v1220
        %v1278 = vadd.f32 %v1028, %v1223
        %v1279 = vadd.f32 %v1029, %v1225
        %v1280 = vadd.f32 %v1030, %v1228
        %v1281 = vadd.f32 %v1031, %v1230
        %v1282 = vadd.f32 %v1032, %v1233
        %v1283 = vadd.f32 %v1033, %v1235
        %v1284 = vadd.f32 %v1034, %v1238
        %v1285 = vadd.f32 %v1035, %v1240
        %v1286 = vadd.f32 %v1036, %v1243
        %v1287 = vadd.f32 %v1037, %v1245
        %v1288 = vadd.f32 %v1038, %v1248
        %v1289 = vadd.f32 %v1039, %v1250
        %v1290 = vadd.f32 %v1040, %v1253
        %v1291 = vadd.f32 %v1041, %v1255
        %v1292 = vadd.f32 %v1042, %v1258
        %v1293 = vadd.f32 %v1043, %v1260
        %v1294 = vld [vmem:[%s326 + $0x1] sm:$0xff]
        %v1295 = vld [vmem:[%s326 + $0x9] sm:$0xff]
        %v1296 = vld [vmem:[%s326 + $0x19] sm:$0xff]
        %v1297 = vld [vmem:[%s326 + $0x21] sm:$0xff]
        %v1298 = vld [vmem:[%s326 + $0x31] sm:$0xff]
        %v1299 = vld [vmem:[%s326 + $0x39] sm:$0xff]
        %v1300 = vld [vmem:[%s326 + $0x49] sm:$0xff]
        %v1301 = vld [vmem:[%s326 + $0x51] sm:$0xff]
        %v1302 = vld [vmem:[%s326 + $0x61] sm:$0xff]
        %v1303 = vld [vmem:[%s326 + $0x69] sm:$0xff]
        %v1304 = vld [vmem:[%s326 + $0x79] sm:$0xff]
        %v1305 = vld [vmem:[%s326 + $0x81] sm:$0xff]
        %v1306 = vld [vmem:[%s326 + $0x91] sm:$0xff]
        %v1307 = vld [vmem:[%s326 + $0x99] sm:$0xff]
        %v1308 = vld [vmem:[%s326 + $0xa9] sm:$0xff]
        %v1309 = vld [vmem:[%s326 + $0xb1] sm:$0xff]
        %v1310 = vld [vmem:[%s326 + $0xc1] sm:$0xff]
        %v1311 = vld [vmem:[%s326 + $0xc9] sm:$0xff]
        %v1312 = vld [vmem:[%s326 + $0xd9] sm:$0xff]
        %v1313 = vld [vmem:[%s326 + $0xe1] sm:$0xff]
        %v1314 = vld [vmem:[%s326 + $0xf1] sm:$0xff]
        %v1315 = vld [vmem:[%s326 + $0xf9] sm:$0xff]
        %v1316 = vld [vmem:[%s326 + $0x109] sm:$0xff]
        %v1317 = vld [vmem:[%s326 + $0x111] sm:$0xff]
        %v1318 = vld [vmem:[%s326 + $0x121] sm:$0xff]
        %v1319 = vld [vmem:[%s326 + $0x129] sm:$0xff]
        %v1320 = vld [vmem:[%s326 + $0x139] sm:$0xff]
        %v1321 = vld [vmem:[%s326 + $0x141] sm:$0xff]
        %v1322 = vld [vmem:[%s326 + $0x151] sm:$0xff]
        %v1323 = vld [vmem:[%s326 + $0x159] sm:$0xff]
        %v1324 = vld [vmem:[%s326 + $0x169] sm:$0xff]
        %v1325 = vld [vmem:[%s326 + $0x171] sm:$0xff]
        %v1326 = vpack.c.bf16 %v1295, %v1294
        %v1327 = vpack.c.bf16 %v1297, %v1296
        %v1328 = vpack.c.bf16 %v1299, %v1298
        %v1329 = vpack.c.bf16 %v1301, %v1300
        %v1330 = vpack.c.bf16 %v1303, %v1302
        %v1331 = vpack.c.bf16 %v1305, %v1304
        %v1332 = vpack.c.bf16 %v1307, %v1306
        %v1333 = vpack.c.bf16 %v1309, %v1308
        %v1334 = vpack.c.bf16 %v1311, %v1310
        %v1335 = vpack.c.bf16 %v1313, %v1312
        %v1336 = vpack.c.bf16 %v1315, %v1314
        %v1337 = vpack.c.bf16 %v1317, %v1316
        %v1338 = vpack.c.bf16 %v1319, %v1318
        %v1339 = vpack.c.bf16 %v1321, %v1320
        %v1340 = vpack.c.bf16 %v1323, %v1322
        %v1341 = vpack.c.bf16 %v1325, %v1324
        %s1342 = scalar_lea.vmem [#allocation6], 128
        %v1343 = vld [vmem:[%s1342] sm:$0xf]
        %v1344 = vld [vmem:[%s1342 + $0x4] sm:$0xf]
        %v1345 = vld [vmem:[%s1342 + $0x8] sm:$0xf]
        %v1346 = vld [vmem:[%s1342 + $0xc] sm:$0xf]
        %v1347 = vld [vmem:[%s1342 + $0x10] sm:$0xf]
        %v1348 = vld [vmem:[%s1342 + $0x14] sm:$0xf]
        %v1349 = vld [vmem:[%s1342 + $0x18] sm:$0xf]
        %v1350 = vld [vmem:[%s1342 + $0x1c] sm:$0xf]
        %v1359 = vunpack.c.l.b16 %v1343
        %v1360 = vunpack.c.l.b16 %v1344
        %v1361 = vunpack.c.l.b16 %v1345
        %v1362 = vunpack.c.l.b16 %v1346
        %v1363 = vunpack.c.l.b16 %v1347
        %v1364 = vunpack.c.l.b16 %v1348
        %v1365 = vunpack.c.l.b16 %v1349
        %v1366 = vunpack.c.l.b16 %v1350
        %v1367 = vpack.c.b16 %v1360, %v1359
        %v1368 = vpack.c.b16 %v1362, %v1361
        %v1369 = vpack.c.b16 %v1364, %v1363
        %v1370 = vpack.c.b16 %v1366, %v1365
        %v1376 = vsel %vm236, %v1326, 0
        %v1379 = vsel %vm236, %v1327, 0
        %v1382 = vsel %vm236, %v1328, 0
        %v1385 = vsel %vm236, %v1329, 0
        %v1388 = vsel %vm236, %v1330, 0
        %v1391 = vsel %vm236, %v1331, 0
        %v1394 = vsel %vm236, %v1332, 0
        %v1397 = vsel %vm236, %v1333, 0
        %v1400 = vsel %vm236, %v1334, 0
        %v1403 = vsel %vm236, %v1335, 0
        %v1406 = vsel %vm236, %v1336, 0
        %v1409 = vsel %vm236, %v1337, 0
        %v1412 = vsel %vm236, %v1338, 0
        %v1415 = vsel %vm236, %v1339, 0
        %v1418 = vsel %vm236, %v1340, 0
        %v1421 = vsel %vm236, %v1341, 0
        %1423 = vmatpush.bf16.msra.mxu0 0
        %1424 = vmatpush.bf16.msra.mxu0 0
        %1425 = vmatpush.bf16.msra.mxu0 0
        %1426 = vmatpush.bf16.msra.mxu0 0
        %1427 = vmatpush.bf16.msra.mxu0 %v1370
        %1428 = vmatpush.bf16.msra.mxu0 %v1369
        %1429 = vmatpush.bf16.msra.mxu0 %v1368
        %1430 = vmatpush.bf16.msra.mxu0 %v1367
        %1431 = vmatmul.bf16.gmra.mxu0 %v1376
        %v1432 = vpop.f32.mrf.mxu0
        %v1433 = vadd.f32 0.0, %v1432
        %v1434 = vpop.f32.mrf.mxu0
        %v1435 = vadd.f32 0.0, %v1434
        %1436 = vmatmul.bf16.gmra.mxu0 %v1379
        %v1437 = vpop.f32.mrf.mxu0
        %v1438 = vadd.f32 0.0, %v1437
        %v1439 = vpop.f32.mrf.mxu0
        %v1440 = vadd.f32 0.0, %v1439
        %1441 = vmatmul.bf16.gmra.mxu0 %v1382
        %v1442 = vpop.f32.mrf.mxu0
        %v1443 = vadd.f32 0.0, %v1442
        %v1444 = vpop.f32.mrf.mxu0
        %v1445 = vadd.f32 0.0, %v1444
        %1446 = vmatmul.bf16.gmra.mxu0 %v1385
        %v1447 = vpop.f32.mrf.mxu0
        %v1448 = vadd.f32 0.0, %v1447
        %v1449 = vpop.f32.mrf.mxu0
        %v1450 = vadd.f32 0.0, %v1449
        %1451 = vmatmul.bf16.gmra.mxu0 %v1388
        %v1452 = vpop.f32.mrf.mxu0
        %v1453 = vadd.f32 0.0, %v1452
        %v1454 = vpop.f32.mrf.mxu0
        %v1455 = vadd.f32 0.0, %v1454
        %1456 = vmatmul.bf16.gmra.mxu0 %v1391
        %v1457 = vpop.f32.mrf.mxu0
        %v1458 = vadd.f32 0.0, %v1457
        %v1459 = vpop.f32.mrf.mxu0
        %v1460 = vadd.f32 0.0, %v1459
        %1461 = vmatmul.bf16.gmra.mxu0 %v1394
        %v1462 = vpop.f32.mrf.mxu0
        %v1463 = vadd.f32 0.0, %v1462
        %v1464 = vpop.f32.mrf.mxu0
        %v1465 = vadd.f32 0.0, %v1464
        %1466 = vmatmul.bf16.gmra.mxu0 %v1397
        %v1467 = vpop.f32.mrf.mxu0
        %v1468 = vadd.f32 0.0, %v1467
        %v1469 = vpop.f32.mrf.mxu0
        %v1470 = vadd.f32 0.0, %v1469
        %1471 = vmatmul.bf16.gmra.mxu0 %v1400
        %v1472 = vpop.f32.mrf.mxu0
        %v1473 = vadd.f32 0.0, %v1472
        %v1474 = vpop.f32.mrf.mxu0
        %v1475 = vadd.f32 0.0, %v1474
        %1476 = vmatmul.bf16.gmra.mxu0 %v1403
        %v1477 = vpop.f32.mrf.mxu0
        %v1478 = vadd.f32 0.0, %v1477
        %v1479 = vpop.f32.mrf.mxu0
        %v1480 = vadd.f32 0.0, %v1479
        %1481 = vmatmul.bf16.gmra.mxu0 %v1406
        %v1482 = vpop.f32.mrf.mxu0
        %v1483 = vadd.f32 0.0, %v1482
        %v1484 = vpop.f32.mrf.mxu0
        %v1485 = vadd.f32 0.0, %v1484
        %1486 = vmatmul.bf16.gmra.mxu0 %v1409
        %v1487 = vpop.f32.mrf.mxu0
        %v1488 = vadd.f32 0.0, %v1487
        %v1489 = vpop.f32.mrf.mxu0
        %v1490 = vadd.f32 0.0, %v1489
        %1491 = vmatmul.bf16.gmra.mxu0 %v1412
        %v1492 = vpop.f32.mrf.mxu0
        %v1493 = vadd.f32 0.0, %v1492
        %v1494 = vpop.f32.mrf.mxu0
        %v1495 = vadd.f32 0.0, %v1494
        %1496 = vmatmul.bf16.gmra.mxu0 %v1415
        %v1497 = vpop.f32.mrf.mxu0
        %v1498 = vadd.f32 0.0, %v1497
        %v1499 = vpop.f32.mrf.mxu0
        %v1500 = vadd.f32 0.0, %v1499
        %1501 = vmatmul.bf16.gmra.mxu0 %v1418
        %v1502 = vpop.f32.mrf.mxu0
        %v1503 = vadd.f32 0.0, %v1502
        %v1504 = vpop.f32.mrf.mxu0
        %v1505 = vadd.f32 0.0, %v1504
        %1506 = vmatmul.bf16.gmra.mxu0 %v1421
        %v1507 = vpop.f32.mrf.mxu0
        %v1508 = vadd.f32 0.0, %v1507
        %v1509 = vpop.f32.mrf.mxu0
        %v1510 = vadd.f32 0.0, %v1509
        %1511 = vdwg.mxu0
        %v1512 = vadd.f32 %v1262, %v1433
        %v1513 = vadd.f32 %v1263, %v1435
        %v1514 = vadd.f32 %v1264, %v1438
        %v1515 = vadd.f32 %v1265, %v1440
        %v1516 = vadd.f32 %v1266, %v1443
        %v1517 = vadd.f32 %v1267, %v1445
        %v1518 = vadd.f32 %v1268, %v1448
        %v1519 = vadd.f32 %v1269, %v1450
        %v1520 = vadd.f32 %v1270, %v1453
        %v1521 = vadd.f32 %v1271, %v1455
        %v1522 = vadd.f32 %v1272, %v1458
        %v1523 = vadd.f32 %v1273, %v1460
        %v1524 = vadd.f32 %v1274, %v1463
        %v1525 = vadd.f32 %v1275, %v1465
        %v1526 = vadd.f32 %v1276, %v1468
        %v1527 = vadd.f32 %v1277, %v1470
        %v1528 = vadd.f32 %v1278, %v1473
        %v1529 = vadd.f32 %v1279, %v1475
        %v1530 = vadd.f32 %v1280, %v1478
        %v1531 = vadd.f32 %v1281, %v1480
        %v1532 = vadd.f32 %v1282, %v1483
        %v1533 = vadd.f32 %v1283, %v1485
        %v1534 = vadd.f32 %v1284, %v1488
        %v1535 = vadd.f32 %v1285, %v1490
        %v1536 = vadd.f32 %v1286, %v1493
        %v1537 = vadd.f32 %v1287, %v1495
        %v1538 = vadd.f32 %v1288, %v1498
        %v1539 = vadd.f32 %v1289, %v1500
        %v1540 = vadd.f32 %v1290, %v1503
        %v1541 = vadd.f32 %v1291, %v1505
        %v1542 = vadd.f32 %v1292, %v1508
        %v1543 = vadd.f32 %v1293, %v1510
        %v1544 = vld [vmem:[%s326 + $0x2] sm:$0xff]
        %v1545 = vld [vmem:[%s326 + $0xa] sm:$0xff]
        %v1546 = vld [vmem:[%s326 + $0x1a] sm:$0xff]
        %v1547 = vld [vmem:[%s326 + $0x22] sm:$0xff]
        %v1548 = vld [vmem:[%s326 + $0x32] sm:$0xff]
        %v1549 = vld [vmem:[%s326 + $0x3a] sm:$0xff]
        %v1550 = vld [vmem:[%s326 + $0x4a] sm:$0xff]
        %v1551 = vld [vmem:[%s326 + $0x52] sm:$0xff]
        %v1552 = vld [vmem:[%s326 + $0x62] sm:$0xff]
        %v1553 = vld [vmem:[%s326 + $0x6a] sm:$0xff]
        %v1554 = vld [vmem:[%s326 + $0x7a] sm:$0xff]
        %v1555 = vld [vmem:[%s326 + $0x82] sm:$0xff]
        %v1556 = vld [vmem:[%s326 + $0x92] sm:$0xff]
        %v1557 = vld [vmem:[%s326 + $0x9a] sm:$0xff]
        %v1558 = vld [vmem:[%s326 + $0xaa] sm:$0xff]
        %v1559 = vld [vmem:[%s326 + $0xb2] sm:$0xff]
        %v1560 = vld [vmem:[%s326 + $0xc2] sm:$0xff]
        %v1561 = vld [vmem:[%s326 + $0xca] sm:$0xff]
        %v1562 = vld [vmem:[%s326 + $0xda] sm:$0xff]
        %v1563 = vld [vmem:[%s326 + $0xe2] sm:$0xff]
        %v1564 = vld [vmem:[%s326 + $0xf2] sm:$0xff]
        %v1565 = vld [vmem:[%s326 + $0xfa] sm:$0xff]
        %v1566 = vld [vmem:[%s326 + $0x10a] sm:$0xff]
        %v1567 = vld [vmem:[%s326 + $0x112] sm:$0xff]
        %v1568 = vld [vmem:[%s326 + $0x122] sm:$0xff]
        %v1569 = vld [vmem:[%s326 + $0x12a] sm:$0xff]
        %v1570 = vld [vmem:[%s326 + $0x13a] sm:$0xff]
        %v1571 = vld [vmem:[%s326 + $0x142] sm:$0xff]
        %v1572 = vld [vmem:[%s326 + $0x152] sm:$0xff]
        %v1573 = vld [vmem:[%s326 + $0x15a] sm:$0xff]
        %v1574 = vld [vmem:[%s326 + $0x16a] sm:$0xff]
        %v1575 = vld [vmem:[%s326 + $0x172] sm:$0xff]
        %v1576 = vpack.c.bf16 %v1545, %v1544
        %v1577 = vpack.c.bf16 %v1547, %v1546
        %v1578 = vpack.c.bf16 %v1549, %v1548
        %v1579 = vpack.c.bf16 %v1551, %v1550
        %v1580 = vpack.c.bf16 %v1553, %v1552
        %v1581 = vpack.c.bf16 %v1555, %v1554
        %v1582 = vpack.c.bf16 %v1557, %v1556
        %v1583 = vpack.c.bf16 %v1559, %v1558
        %v1584 = vpack.c.bf16 %v1561, %v1560
        %v1585 = vpack.c.bf16 %v1563, %v1562
        %v1586 = vpack.c.bf16 %v1565, %v1564
        %v1587 = vpack.c.bf16 %v1567, %v1566
        %v1588 = vpack.c.bf16 %v1569, %v1568
        %v1589 = vpack.c.bf16 %v1571, %v1570
        %v1590 = vpack.c.bf16 %v1573, %v1572
        %v1591 = vpack.c.bf16 %v1575, %v1574
        %s1592 = scalar_lea.vmem [#allocation6], 160
        %v1593 = vld [vmem:[%s1592] sm:$0xf]
        %v1594 = vld [vmem:[%s1592 + $0x4] sm:$0xf]
        %v1595 = vld [vmem:[%s1592 + $0x8] sm:$0xf]
        %v1596 = vld [vmem:[%s1592 + $0xc] sm:$0xf]
        %v1597 = vld [vmem:[%s1592 + $0x10] sm:$0xf]
        %v1598 = vld [vmem:[%s1592 + $0x14] sm:$0xf]
        %v1599 = vld [vmem:[%s1592 + $0x18] sm:$0xf]
        %v1600 = vld [vmem:[%s1592 + $0x1c] sm:$0xf]
        %v1609 = vunpack.c.l.b16 %v1593
        %v1610 = vunpack.c.l.b16 %v1594
        %v1611 = vunpack.c.l.b16 %v1595
        %v1612 = vunpack.c.l.b16 %v1596
        %v1613 = vunpack.c.l.b16 %v1597
        %v1614 = vunpack.c.l.b16 %v1598
        %v1615 = vunpack.c.l.b16 %v1599
        %v1616 = vunpack.c.l.b16 %v1600
        %v1617 = vpack.c.b16 %v1610, %v1609
        %v1618 = vpack.c.b16 %v1612, %v1611
        %v1619 = vpack.c.b16 %v1614, %v1613
        %v1620 = vpack.c.b16 %v1616, %v1615
        %v1626 = vsel %vm236, %v1576, 0
        %v1629 = vsel %vm236, %v1577, 0
        %v1632 = vsel %vm236, %v1578, 0
        %v1635 = vsel %vm236, %v1579, 0
        %v1638 = vsel %vm236, %v1580, 0
        %v1641 = vsel %vm236, %v1581, 0
        %v1644 = vsel %vm236, %v1582, 0
        %v1647 = vsel %vm236, %v1583, 0
        %v1650 = vsel %vm236, %v1584, 0
        %v1653 = vsel %vm236, %v1585, 0
        %v1656 = vsel %vm236, %v1586, 0
        %v1659 = vsel %vm236, %v1587, 0
        %v1662 = vsel %vm236, %v1588, 0
        %v1665 = vsel %vm236, %v1589, 0
        %v1668 = vsel %vm236, %v1590, 0
        %v1671 = vsel %vm236, %v1591, 0
        %1673 = vmatpush.bf16.msra.mxu0 0
        %1674 = vmatpush.bf16.msra.mxu0 0
        %1675 = vmatpush.bf16.msra.mxu0 0
        %1676 = vmatpush.bf16.msra.mxu0 0
        %1677 = vmatpush.bf16.msra.mxu0 %v1620
        %1678 = vmatpush.bf16.msra.mxu0 %v1619
        %1679 = vmatpush.bf16.msra.mxu0 %v1618
        %1680 = vmatpush.bf16.msra.mxu0 %v1617
        %1681 = vmatmul.bf16.gmra.mxu0 %v1626
        %v1682 = vpop.f32.mrf.mxu0
        %v1683 = vadd.f32 0.0, %v1682
        %v1684 = vpop.f32.mrf.mxu0
        %v1685 = vadd.f32 0.0, %v1684
        %1686 = vmatmul.bf16.gmra.mxu0 %v1629
        %v1687 = vpop.f32.mrf.mxu0
        %v1688 = vadd.f32 0.0, %v1687
        %v1689 = vpop.f32.mrf.mxu0
        %v1690 = vadd.f32 0.0, %v1689
        %1691 = vmatmul.bf16.gmra.mxu0 %v1632
        %v1692 = vpop.f32.mrf.mxu0
        %v1693 = vadd.f32 0.0, %v1692
        %v1694 = vpop.f32.mrf.mxu0
        %v1695 = vadd.f32 0.0, %v1694
        %1696 = vmatmul.bf16.gmra.mxu0 %v1635
        %v1697 = vpop.f32.mrf.mxu0
        %v1698 = vadd.f32 0.0, %v1697
        %v1699 = vpop.f32.mrf.mxu0
        %v1700 = vadd.f32 0.0, %v1699
        %1701 = vmatmul.bf16.gmra.mxu0 %v1638
        %v1702 = vpop.f32.mrf.mxu0
        %v1703 = vadd.f32 0.0, %v1702
        %v1704 = vpop.f32.mrf.mxu0
        %v1705 = vadd.f32 0.0, %v1704
        %1706 = vmatmul.bf16.gmra.mxu0 %v1641
        %v1707 = vpop.f32.mrf.mxu0
        %v1708 = vadd.f32 0.0, %v1707
        %v1709 = vpop.f32.mrf.mxu0
        %v1710 = vadd.f32 0.0, %v1709
        %1711 = vmatmul.bf16.gmra.mxu0 %v1644
        %v1712 = vpop.f32.mrf.mxu0
        %v1713 = vadd.f32 0.0, %v1712
        %v1714 = vpop.f32.mrf.mxu0
        %v1715 = vadd.f32 0.0, %v1714
        %1716 = vmatmul.bf16.gmra.mxu0 %v1647
        %v1717 = vpop.f32.mrf.mxu0
        %v1718 = vadd.f32 0.0, %v1717
        %v1719 = vpop.f32.mrf.mxu0
        %v1720 = vadd.f32 0.0, %v1719
        %1721 = vmatmul.bf16.gmra.mxu0 %v1650
        %v1722 = vpop.f32.mrf.mxu0
        %v1723 = vadd.f32 0.0, %v1722
        %v1724 = vpop.f32.mrf.mxu0
        %v1725 = vadd.f32 0.0, %v1724
        %1726 = vmatmul.bf16.gmra.mxu0 %v1653
        %v1727 = vpop.f32.mrf.mxu0
        %v1728 = vadd.f32 0.0, %v1727
        %v1729 = vpop.f32.mrf.mxu0
        %v1730 = vadd.f32 0.0, %v1729
        %1731 = vmatmul.bf16.gmra.mxu0 %v1656
        %v1732 = vpop.f32.mrf.mxu0
        %v1733 = vadd.f32 0.0, %v1732
        %v1734 = vpop.f32.mrf.mxu0
        %v1735 = vadd.f32 0.0, %v1734
        %1736 = vmatmul.bf16.gmra.mxu0 %v1659
        %v1737 = vpop.f32.mrf.mxu0
        %v1738 = vadd.f32 0.0, %v1737
        %v1739 = vpop.f32.mrf.mxu0
        %v1740 = vadd.f32 0.0, %v1739
        %1741 = vmatmul.bf16.gmra.mxu0 %v1662
        %v1742 = vpop.f32.mrf.mxu0
        %v1743 = vadd.f32 0.0, %v1742
        %v1744 = vpop.f32.mrf.mxu0
        %v1745 = vadd.f32 0.0, %v1744
        %1746 = vmatmul.bf16.gmra.mxu0 %v1665
        %v1747 = vpop.f32.mrf.mxu0
        %v1748 = vadd.f32 0.0, %v1747
        %v1749 = vpop.f32.mrf.mxu0
        %v1750 = vadd.f32 0.0, %v1749
        %1751 = vmatmul.bf16.gmra.mxu0 %v1668
        %v1752 = vpop.f32.mrf.mxu0
        %v1753 = vadd.f32 0.0, %v1752
        %v1754 = vpop.f32.mrf.mxu0
        %v1755 = vadd.f32 0.0, %v1754
        %1756 = vmatmul.bf16.gmra.mxu0 %v1671
        %v1757 = vpop.f32.mrf.mxu0
        %v1758 = vadd.f32 0.0, %v1757
        %v1759 = vpop.f32.mrf.mxu0
        %v1760 = vadd.f32 0.0, %v1759
        %1761 = vdwg.mxu0
        %v1762 = vadd.f32 %v1512, %v1683
        %v1763 = vadd.f32 %v1513, %v1685
        %v1764 = vadd.f32 %v1514, %v1688
        %v1765 = vadd.f32 %v1515, %v1690
        %v1766 = vadd.f32 %v1516, %v1693
        %v1767 = vadd.f32 %v1517, %v1695
        %v1768 = vadd.f32 %v1518, %v1698
        %v1769 = vadd.f32 %v1519, %v1700
        %v1770 = vadd.f32 %v1520, %v1703
        %v1771 = vadd.f32 %v1521, %v1705
        %v1772 = vadd.f32 %v1522, %v1708
        %v1773 = vadd.f32 %v1523, %v1710
        %v1774 = vadd.f32 %v1524, %v1713
        %v1775 = vadd.f32 %v1525, %v1715
        %v1776 = vadd.f32 %v1526, %v1718
        %v1777 = vadd.f32 %v1527, %v1720
        %v1778 = vadd.f32 %v1528, %v1723
        %v1779 = vadd.f32 %v1529, %v1725
        %v1780 = vadd.f32 %v1530, %v1728
        %v1781 = vadd.f32 %v1531, %v1730
        %v1782 = vadd.f32 %v1532, %v1733
        %v1783 = vadd.f32 %v1533, %v1735
        %v1784 = vadd.f32 %v1534, %v1738
        %v1785 = vadd.f32 %v1535, %v1740
        %v1786 = vadd.f32 %v1536, %v1743
        %v1787 = vadd.f32 %v1537, %v1745
        %v1788 = vadd.f32 %v1538, %v1748
        %v1789 = vadd.f32 %v1539, %v1750
        %v1790 = vadd.f32 %v1540, %v1753
        %v1791 = vadd.f32 %v1541, %v1755
        %v1792 = vadd.f32 %v1542, %v1758
        %v1793 = vadd.f32 %v1543, %v1760
        %s1794 = scalar_lea.vmem [#allocation2], 48
        %v1795 = vld [vmem:[%s1794] sm:$0xff]
        %v1796 = vld [vmem:[%s1794 + $0x8] sm:$0xff]
        %v1797 = vld [vmem:[%s1794 + $0x18] sm:$0xff]
        %v1798 = vld [vmem:[%s1794 + $0x20] sm:$0xff]
        %v1799 = vld [vmem:[%s1794 + $0x30] sm:$0xff]
        %v1800 = vld [vmem:[%s1794 + $0x38] sm:$0xff]
        %v1801 = vld [vmem:[%s1794 + $0x48] sm:$0xff]
        %v1802 = vld [vmem:[%s1794 + $0x50] sm:$0xff]
        %v1803 = vld [vmem:[%s1794 + $0x60] sm:$0xff]
        %v1804 = vld [vmem:[%s1794 + $0x68] sm:$0xff]
        %v1805 = vld [vmem:[%s1794 + $0x78] sm:$0xff]
        %v1806 = vld [vmem:[%s1794 + $0x80] sm:$0xff]
        %v1807 = vld [vmem:[%s1794 + $0x90] sm:$0xff]
        %v1808 = vld [vmem:[%s1794 + $0x98] sm:$0xff]
        %v1809 = vld [vmem:[%s1794 + $0xa8] sm:$0xff]
        %v1810 = vld [vmem:[%s1794 + $0xb0] sm:$0xff]
        %v1811 = vld [vmem:[%s1794 + $0xc0] sm:$0xff]
        %v1812 = vld [vmem:[%s1794 + $0xc8] sm:$0xff]
        %v1813 = vld [vmem:[%s1794 + $0xd8] sm:$0xff]
        %v1814 = vld [vmem:[%s1794 + $0xe0] sm:$0xff]
        %v1815 = vld [vmem:[%s1794 + $0xf0] sm:$0xff]
        %v1816 = vld [vmem:[%s1794 + $0xf8] sm:$0xff]
        %v1817 = vld [vmem:[%s1794 + $0x108] sm:$0xff]
        %v1818 = vld [vmem:[%s1794 + $0x110] sm:$0xff]
        %v1819 = vld [vmem:[%s1794 + $0x120] sm:$0xff]
        %v1820 = vld [vmem:[%s1794 + $0x128] sm:$0xff]
        %v1821 = vld [vmem:[%s1794 + $0x138] sm:$0xff]
        %v1822 = vld [vmem:[%s1794 + $0x140] sm:$0xff]
        %v1823 = vld [vmem:[%s1794 + $0x150] sm:$0xff]
        %v1824 = vld [vmem:[%s1794 + $0x158] sm:$0xff]
        %v1825 = vld [vmem:[%s1794 + $0x168] sm:$0xff]
        %v1826 = vld [vmem:[%s1794 + $0x170] sm:$0xff]
        %v1827 = vpack.c.bf16 %v1796, %v1795
        %v1828 = vpack.c.bf16 %v1798, %v1797
        %v1829 = vpack.c.bf16 %v1800, %v1799
        %v1830 = vpack.c.bf16 %v1802, %v1801
        %v1831 = vpack.c.bf16 %v1804, %v1803
        %v1832 = vpack.c.bf16 %v1806, %v1805
        %v1833 = vpack.c.bf16 %v1808, %v1807
        %v1834 = vpack.c.bf16 %v1810, %v1809
        %v1835 = vpack.c.bf16 %v1812, %v1811
        %v1836 = vpack.c.bf16 %v1814, %v1813
        %v1837 = vpack.c.bf16 %v1816, %v1815
        %v1838 = vpack.c.bf16 %v1818, %v1817
        %v1839 = vpack.c.bf16 %v1820, %v1819
        %v1840 = vpack.c.bf16 %v1822, %v1821
        %v1841 = vpack.c.bf16 %v1824, %v1823
        %v1842 = vpack.c.bf16 %v1826, %v1825
        %s1843 = scalar_lea.vmem [#allocation6], 192
        %v1844 = vld [vmem:[%s1843] sm:$0xf]
        %v1845 = vld [vmem:[%s1843 + $0x4] sm:$0xf]
        %v1846 = vld [vmem:[%s1843 + $0x8] sm:$0xf]
        %v1847 = vld [vmem:[%s1843 + $0xc] sm:$0xf]
        %v1848 = vld [vmem:[%s1843 + $0x10] sm:$0xf]
        %v1849 = vld [vmem:[%s1843 + $0x14] sm:$0xf]
        %v1850 = vld [vmem:[%s1843 + $0x18] sm:$0xf]
        %v1851 = vld [vmem:[%s1843 + $0x1c] sm:$0xf]
        %v1860 = vunpack.c.l.b16 %v1844
        %v1861 = vunpack.c.l.b16 %v1845
        %v1862 = vunpack.c.l.b16 %v1846
        %v1863 = vunpack.c.l.b16 %v1847
        %v1864 = vunpack.c.l.b16 %v1848
        %v1865 = vunpack.c.l.b16 %v1849
        %v1866 = vunpack.c.l.b16 %v1850
        %v1867 = vunpack.c.l.b16 %v1851
        %v1868 = vpack.c.b16 %v1861, %v1860
        %v1869 = vpack.c.b16 %v1863, %v1862
        %v1870 = vpack.c.b16 %v1865, %v1864
        %v1871 = vpack.c.b16 %v1867, %v1866
        %v1877 = vsel %vm236, %v1827, 0
        %v1880 = vsel %vm236, %v1828, 0
        %v1883 = vsel %vm236, %v1829, 0
        %v1886 = vsel %vm236, %v1830, 0
        %v1889 = vsel %vm236, %v1831, 0
        %v1892 = vsel %vm236, %v1832, 0
        %v1895 = vsel %vm236, %v1833, 0
        %v1898 = vsel %vm236, %v1834, 0
        %v1901 = vsel %vm236, %v1835, 0
        %v1904 = vsel %vm236, %v1836, 0
        %v1907 = vsel %vm236, %v1837, 0
        %v1910 = vsel %vm236, %v1838, 0
        %v1913 = vsel %vm236, %v1839, 0
        %v1916 = vsel %vm236, %v1840, 0
        %v1919 = vsel %vm236, %v1841, 0
        %v1922 = vsel %vm236, %v1842, 0
        %1924 = vmatpush.bf16.msra.mxu0 0
        %1925 = vmatpush.bf16.msra.mxu0 0
        %1926 = vmatpush.bf16.msra.mxu0 0
        %1927 = vmatpush.bf16.msra.mxu0 0
        %1928 = vmatpush.bf16.msra.mxu0 %v1871
        %1929 = vmatpush.bf16.msra.mxu0 %v1870
        %1930 = vmatpush.bf16.msra.mxu0 %v1869
        %1931 = vmatpush.bf16.msra.mxu0 %v1868
        %1932 = vmatmul.bf16.gmra.mxu0 %v1877
        %v1933 = vpop.f32.mrf.mxu0
        %v1934 = vadd.f32 0.0, %v1933
        %v1935 = vpop.f32.mrf.mxu0
        %v1936 = vadd.f32 0.0, %v1935
        %1937 = vmatmul.bf16.gmra.mxu0 %v1880
        %v1938 = vpop.f32.mrf.mxu0
        %v1939 = vadd.f32 0.0, %v1938
        %v1940 = vpop.f32.mrf.mxu0
        %v1941 = vadd.f32 0.0, %v1940
        %1942 = vmatmul.bf16.gmra.mxu0 %v1883
        %v1943 = vpop.f32.mrf.mxu0
        %v1944 = vadd.f32 0.0, %v1943
        %v1945 = vpop.f32.mrf.mxu0
        %v1946 = vadd.f32 0.0, %v1945
        %1947 = vmatmul.bf16.gmra.mxu0 %v1886
        %v1948 = vpop.f32.mrf.mxu0
        %v1949 = vadd.f32 0.0, %v1948
        %v1950 = vpop.f32.mrf.mxu0
        %v1951 = vadd.f32 0.0, %v1950
        %1952 = vmatmul.bf16.gmra.mxu0 %v1889
        %v1953 = vpop.f32.mrf.mxu0
        %v1954 = vadd.f32 0.0, %v1953
        %v1955 = vpop.f32.mrf.mxu0
        %v1956 = vadd.f32 0.0, %v1955
        %1957 = vmatmul.bf16.gmra.mxu0 %v1892
        %v1958 = vpop.f32.mrf.mxu0
        %v1959 = vadd.f32 0.0, %v1958
        %v1960 = vpop.f32.mrf.mxu0
        %v1961 = vadd.f32 0.0, %v1960
        %1962 = vmatmul.bf16.gmra.mxu0 %v1895
        %v1963 = vpop.f32.mrf.mxu0
        %v1964 = vadd.f32 0.0, %v1963
        %v1965 = vpop.f32.mrf.mxu0
        %v1966 = vadd.f32 0.0, %v1965
        %1967 = vmatmul.bf16.gmra.mxu0 %v1898
        %v1968 = vpop.f32.mrf.mxu0
        %v1969 = vadd.f32 0.0, %v1968
        %v1970 = vpop.f32.mrf.mxu0
        %v1971 = vadd.f32 0.0, %v1970
        %1972 = vmatmul.bf16.gmra.mxu0 %v1901
        %v1973 = vpop.f32.mrf.mxu0
        %v1974 = vadd.f32 0.0, %v1973
        %v1975 = vpop.f32.mrf.mxu0
        %v1976 = vadd.f32 0.0, %v1975
        %1977 = vmatmul.bf16.gmra.mxu0 %v1904
        %v1978 = vpop.f32.mrf.mxu0
        %v1979 = vadd.f32 0.0, %v1978
        %v1980 = vpop.f32.mrf.mxu0
        %v1981 = vadd.f32 0.0, %v1980
        %1982 = vmatmul.bf16.gmra.mxu0 %v1907
        %v1983 = vpop.f32.mrf.mxu0
        %v1984 = vadd.f32 0.0, %v1983
        %v1985 = vpop.f32.mrf.mxu0
        %v1986 = vadd.f32 0.0, %v1985
        %1987 = vmatmul.bf16.gmra.mxu0 %v1910
        %v1988 = vpop.f32.mrf.mxu0
        %v1989 = vadd.f32 0.0, %v1988
        %v1990 = vpop.f32.mrf.mxu0
        %v1991 = vadd.f32 0.0, %v1990
        %1992 = vmatmul.bf16.gmra.mxu0 %v1913
        %v1993 = vpop.f32.mrf.mxu0
        %v1994 = vadd.f32 0.0, %v1993
        %v1995 = vpop.f32.mrf.mxu0
        %v1996 = vadd.f32 0.0, %v1995
        %1997 = vmatmul.bf16.gmra.mxu0 %v1916
        %v1998 = vpop.f32.mrf.mxu0
        %v1999 = vadd.f32 0.0, %v1998
        %v2000 = vpop.f32.mrf.mxu0
        %v2001 = vadd.f32 0.0, %v2000
        %2002 = vmatmul.bf16.gmra.mxu0 %v1919
        %v2003 = vpop.f32.mrf.mxu0
        %v2004 = vadd.f32 0.0, %v2003
        %v2005 = vpop.f32.mrf.mxu0
        %v2006 = vadd.f32 0.0, %v2005
        %2007 = vmatmul.bf16.gmra.mxu0 %v1922
        %v2008 = vpop.f32.mrf.mxu0
        %v2009 = vadd.f32 0.0, %v2008
        %v2010 = vpop.f32.mrf.mxu0
        %v2011 = vadd.f32 0.0, %v2010
        %2012 = vdwg.mxu0
        %v2013 = vadd.f32 %v1762, %v1934
        %v2014 = vadd.f32 %v1763, %v1936
        %v2015 = vadd.f32 %v1764, %v1939
        %v2016 = vadd.f32 %v1765, %v1941
        %v2017 = vadd.f32 %v1766, %v1944
        %v2018 = vadd.f32 %v1767, %v1946
        %v2019 = vadd.f32 %v1768, %v1949
        %v2020 = vadd.f32 %v1769, %v1951
        %v2021 = vadd.f32 %v1770, %v1954
        %v2022 = vadd.f32 %v1771, %v1956
        %v2023 = vadd.f32 %v1772, %v1959
        %v2024 = vadd.f32 %v1773, %v1961
        %v2025 = vadd.f32 %v1774, %v1964
        %v2026 = vadd.f32 %v1775, %v1966
        %v2027 = vadd.f32 %v1776, %v1969
        %v2028 = vadd.f32 %v1777, %v1971
        %v2029 = vadd.f32 %v1778, %v1974
        %v2030 = vadd.f32 %v1779, %v1976
        %v2031 = vadd.f32 %v1780, %v1979
        %v2032 = vadd.f32 %v1781, %v1981
        %v2033 = vadd.f32 %v1782, %v1984
        %v2034 = vadd.f32 %v1783, %v1986
        %v2035 = vadd.f32 %v1784, %v1989
        %v2036 = vadd.f32 %v1785, %v1991
        %v2037 = vadd.f32 %v1786, %v1994
        %v2038 = vadd.f32 %v1787, %v1996
        %v2039 = vadd.f32 %v1788, %v1999
        %v2040 = vadd.f32 %v1789, %v2001
        %v2041 = vadd.f32 %v1790, %v2004
        %v2042 = vadd.f32 %v1791, %v2006
        %v2043 = vadd.f32 %v1792, %v2009
        %v2044 = vadd.f32 %v1793, %v2011
        %v2045 = vld [vmem:[%s1794 + $0x1] sm:$0xff]
        %v2046 = vld [vmem:[%s1794 + $0x9] sm:$0xff]
        %v2047 = vld [vmem:[%s1794 + $0x19] sm:$0xff]
        %v2048 = vld [vmem:[%s1794 + $0x21] sm:$0xff]
        %v2049 = vld [vmem:[%s1794 + $0x31] sm:$0xff]
        %v2050 = vld [vmem:[%s1794 + $0x39] sm:$0xff]
        %v2051 = vld [vmem:[%s1794 + $0x49] sm:$0xff]
        %v2052 = vld [vmem:[%s1794 + $0x51] sm:$0xff]
        %v2053 = vld [vmem:[%s1794 + $0x61] sm:$0xff]
        %v2054 = vld [vmem:[%s1794 + $0x69] sm:$0xff]
        %v2055 = vld [vmem:[%s1794 + $0x79] sm:$0xff]
        %v2056 = vld [vmem:[%s1794 + $0x81] sm:$0xff]
        %v2057 = vld [vmem:[%s1794 + $0x91] sm:$0xff]
        %v2058 = vld [vmem:[%s1794 + $0x99] sm:$0xff]
        %v2059 = vld [vmem:[%s1794 + $0xa9] sm:$0xff]
        %v2060 = vld [vmem:[%s1794 + $0xb1] sm:$0xff]
        %v2061 = vld [vmem:[%s1794 + $0xc1] sm:$0xff]
        %v2062 = vld [vmem:[%s1794 + $0xc9] sm:$0xff]
        %v2063 = vld [vmem:[%s1794 + $0xd9] sm:$0xff]
        %v2064 = vld [vmem:[%s1794 + $0xe1] sm:$0xff]
        %v2065 = vld [vmem:[%s1794 + $0xf1] sm:$0xff]
        %v2066 = vld [vmem:[%s1794 + $0xf9] sm:$0xff]
        %v2067 = vld [vmem:[%s1794 + $0x109] sm:$0xff]
        %v2068 = vld [vmem:[%s1794 + $0x111] sm:$0xff]
        %v2069 = vld [vmem:[%s1794 + $0x121] sm:$0xff]
        %v2070 = vld [vmem:[%s1794 + $0x129] sm:$0xff]
        %v2071 = vld [vmem:[%s1794 + $0x139] sm:$0xff]
        %v2072 = vld [vmem:[%s1794 + $0x141] sm:$0xff]
        %v2073 = vld [vmem:[%s1794 + $0x151] sm:$0xff]
        %v2074 = vld [vmem:[%s1794 + $0x159] sm:$0xff]
        %v2075 = vld [vmem:[%s1794 + $0x169] sm:$0xff]
        %v2076 = vld [vmem:[%s1794 + $0x171] sm:$0xff]
        %v2077 = vpack.c.bf16 %v2046, %v2045
        %v2078 = vpack.c.bf16 %v2048, %v2047
        %v2079 = vpack.c.bf16 %v2050, %v2049
        %v2080 = vpack.c.bf16 %v2052, %v2051
        %v2081 = vpack.c.bf16 %v2054, %v2053
        %v2082 = vpack.c.bf16 %v2056, %v2055
        %v2083 = vpack.c.bf16 %v2058, %v2057
        %v2084 = vpack.c.bf16 %v2060, %v2059
        %v2085 = vpack.c.bf16 %v2062, %v2061
        %v2086 = vpack.c.bf16 %v2064, %v2063
        %v2087 = vpack.c.bf16 %v2066, %v2065
        %v2088 = vpack.c.bf16 %v2068, %v2067
        %v2089 = vpack.c.bf16 %v2070, %v2069
        %v2090 = vpack.c.bf16 %v2072, %v2071
        %v2091 = vpack.c.bf16 %v2074, %v2073
        %v2092 = vpack.c.bf16 %v2076, %v2075
        %s2093 = scalar_lea.vmem [#allocation6], 224
        %v2094 = vld [vmem:[%s2093] sm:$0xf]
        %v2095 = vld [vmem:[%s2093 + $0x4] sm:$0xf]
        %v2096 = vld [vmem:[%s2093 + $0x8] sm:$0xf]
        %v2097 = vld [vmem:[%s2093 + $0xc] sm:$0xf]
        %v2098 = vld [vmem:[%s2093 + $0x10] sm:$0xf]
        %v2099 = vld [vmem:[%s2093 + $0x14] sm:$0xf]
        %v2100 = vld [vmem:[%s2093 + $0x18] sm:$0xf]
        %v2101 = vld [vmem:[%s2093 + $0x1c] sm:$0xf]
        %v2110 = vunpack.c.l.b16 %v2094
        %v2111 = vunpack.c.l.b16 %v2095
        %v2112 = vunpack.c.l.b16 %v2096
        %v2113 = vunpack.c.l.b16 %v2097
        %v2114 = vunpack.c.l.b16 %v2098
        %v2115 = vunpack.c.l.b16 %v2099
        %v2116 = vunpack.c.l.b16 %v2100
        %v2117 = vunpack.c.l.b16 %v2101
        %v2118 = vpack.c.b16 %v2111, %v2110
        %v2119 = vpack.c.b16 %v2113, %v2112
        %v2120 = vpack.c.b16 %v2115, %v2114
        %v2121 = vpack.c.b16 %v2117, %v2116
        %v2127 = vsel %vm236, %v2077, 0
        %v2130 = vsel %vm236, %v2078, 0
        %v2133 = vsel %vm236, %v2079, 0
        %v2136 = vsel %vm236, %v2080, 0
        %v2139 = vsel %vm236, %v2081, 0
        %v2142 = vsel %vm236, %v2082, 0
        %v2145 = vsel %vm236, %v2083, 0
        %v2148 = vsel %vm236, %v2084, 0
        %v2151 = vsel %vm236, %v2085, 0
        %v2154 = vsel %vm236, %v2086, 0
        %v2157 = vsel %vm236, %v2087, 0
        %v2160 = vsel %vm236, %v2088, 0
        %v2163 = vsel %vm236, %v2089, 0
        %v2166 = vsel %vm236, %v2090, 0
        %v2169 = vsel %vm236, %v2091, 0
        %v2172 = vsel %vm236, %v2092, 0
        %2174 = vmatpush.bf16.msra.mxu0 0
        %2175 = vmatpush.bf16.msra.mxu0 0
        %2176 = vmatpush.bf16.msra.mxu0 0
        %2177 = vmatpush.bf16.msra.mxu0 0
        %2178 = vmatpush.bf16.msra.mxu0 %v2121
        %2179 = vmatpush.bf16.msra.mxu0 %v2120
        %2180 = vmatpush.bf16.msra.mxu0 %v2119
        %2181 = vmatpush.bf16.msra.mxu0 %v2118
        %2182 = vmatmul.bf16.gmra.mxu0 %v2127
        %v2183 = vpop.f32.mrf.mxu0
        %v2184 = vadd.f32 0.0, %v2183
        %v2185 = vpop.f32.mrf.mxu0
        %v2186 = vadd.f32 0.0, %v2185
        %2187 = vmatmul.bf16.gmra.mxu0 %v2130
        %v2188 = vpop.f32.mrf.mxu0
        %v2189 = vadd.f32 0.0, %v2188
        %v2190 = vpop.f32.mrf.mxu0
        %v2191 = vadd.f32 0.0, %v2190
        %2192 = vmatmul.bf16.gmra.mxu0 %v2133
        %v2193 = vpop.f32.mrf.mxu0
        %v2194 = vadd.f32 0.0, %v2193
        %v2195 = vpop.f32.mrf.mxu0
        %v2196 = vadd.f32 0.0, %v2195
        %2197 = vmatmul.bf16.gmra.mxu0 %v2136
        %v2198 = vpop.f32.mrf.mxu0
        %v2199 = vadd.f32 0.0, %v2198
        %v2200 = vpop.f32.mrf.mxu0
        %v2201 = vadd.f32 0.0, %v2200
        %2202 = vmatmul.bf16.gmra.mxu0 %v2139
        %v2203 = vpop.f32.mrf.mxu0
        %v2204 = vadd.f32 0.0, %v2203
        %v2205 = vpop.f32.mrf.mxu0
        %v2206 = vadd.f32 0.0, %v2205
        %2207 = vmatmul.bf16.gmra.mxu0 %v2142
        %v2208 = vpop.f32.mrf.mxu0
        %v2209 = vadd.f32 0.0, %v2208
        %v2210 = vpop.f32.mrf.mxu0
        %v2211 = vadd.f32 0.0, %v2210
        %2212 = vmatmul.bf16.gmra.mxu0 %v2145
        %v2213 = vpop.f32.mrf.mxu0
        %v2214 = vadd.f32 0.0, %v2213
        %v2215 = vpop.f32.mrf.mxu0
        %v2216 = vadd.f32 0.0, %v2215
        %2217 = vmatmul.bf16.gmra.mxu0 %v2148
        %v2218 = vpop.f32.mrf.mxu0
        %v2219 = vadd.f32 0.0, %v2218
        %v2220 = vpop.f32.mrf.mxu0
        %v2221 = vadd.f32 0.0, %v2220
        %2222 = vmatmul.bf16.gmra.mxu0 %v2151
        %v2223 = vpop.f32.mrf.mxu0
        %v2224 = vadd.f32 0.0, %v2223
        %v2225 = vpop.f32.mrf.mxu0
        %v2226 = vadd.f32 0.0, %v2225
        %2227 = vmatmul.bf16.gmra.mxu0 %v2154
        %v2228 = vpop.f32.mrf.mxu0
        %v2229 = vadd.f32 0.0, %v2228
        %v2230 = vpop.f32.mrf.mxu0
        %v2231 = vadd.f32 0.0, %v2230
        %2232 = vmatmul.bf16.gmra.mxu0 %v2157
        %v2233 = vpop.f32.mrf.mxu0
        %v2234 = vadd.f32 0.0, %v2233
        %v2235 = vpop.f32.mrf.mxu0
        %v2236 = vadd.f32 0.0, %v2235
        %2237 = vmatmul.bf16.gmra.mxu0 %v2160
        %v2238 = vpop.f32.mrf.mxu0
        %v2239 = vadd.f32 0.0, %v2238
        %v2240 = vpop.f32.mrf.mxu0
        %v2241 = vadd.f32 0.0, %v2240
        %2242 = vmatmul.bf16.gmra.mxu0 %v2163
        %v2243 = vpop.f32.mrf.mxu0
        %v2244 = vadd.f32 0.0, %v2243
        %v2245 = vpop.f32.mrf.mxu0
        %v2246 = vadd.f32 0.0, %v2245
        %2247 = vmatmul.bf16.gmra.mxu0 %v2166
        %v2248 = vpop.f32.mrf.mxu0
        %v2249 = vadd.f32 0.0, %v2248
        %v2250 = vpop.f32.mrf.mxu0
        %v2251 = vadd.f32 0.0, %v2250
        %2252 = vmatmul.bf16.gmra.mxu0 %v2169
        %v2253 = vpop.f32.mrf.mxu0
        %v2254 = vadd.f32 0.0, %v2253
        %v2255 = vpop.f32.mrf.mxu0
        %v2256 = vadd.f32 0.0, %v2255
        %2257 = vmatmul.bf16.gmra.mxu0 %v2172
        %v2258 = vpop.f32.mrf.mxu0
        %v2259 = vadd.f32 0.0, %v2258
        %v2260 = vpop.f32.mrf.mxu0
        %v2261 = vadd.f32 0.0, %v2260
        %2262 = vdwg.mxu0
        %v2263 = vadd.f32 %v2013, %v2184
        %v2264 = vadd.f32 %v2014, %v2186
        %v2265 = vadd.f32 %v2015, %v2189
        %v2266 = vadd.f32 %v2016, %v2191
        %v2267 = vadd.f32 %v2017, %v2194
        %v2268 = vadd.f32 %v2018, %v2196
        %v2269 = vadd.f32 %v2019, %v2199
        %v2270 = vadd.f32 %v2020, %v2201
        %v2271 = vadd.f32 %v2021, %v2204
        %v2272 = vadd.f32 %v2022, %v2206
        %v2273 = vadd.f32 %v2023, %v2209
        %v2274 = vadd.f32 %v2024, %v2211
        %v2275 = vadd.f32 %v2025, %v2214
        %v2276 = vadd.f32 %v2026, %v2216
        %v2277 = vadd.f32 %v2027, %v2219
        %v2278 = vadd.f32 %v2028, %v2221
        %v2279 = vadd.f32 %v2029, %v2224
        %v2280 = vadd.f32 %v2030, %v2226
        %v2281 = vadd.f32 %v2031, %v2229
        %v2282 = vadd.f32 %v2032, %v2231
        %v2283 = vadd.f32 %v2033, %v2234
        %v2284 = vadd.f32 %v2034, %v2236
        %v2285 = vadd.f32 %v2035, %v2239
        %v2286 = vadd.f32 %v2036, %v2241
        %v2287 = vadd.f32 %v2037, %v2244
        %v2288 = vadd.f32 %v2038, %v2246
        %v2289 = vadd.f32 %v2039, %v2249
        %v2290 = vadd.f32 %v2040, %v2251
        %v2291 = vadd.f32 %v2041, %v2254
        %v2292 = vadd.f32 %v2042, %v2256
        %v2293 = vadd.f32 %v2043, %v2259
        %v2294 = vadd.f32 %v2044, %v2261
        %v2295 = vld [vmem:[%s1794 + $0x2] sm:$0xff]
        %v2296 = vld [vmem:[%s1794 + $0xa] sm:$0xff]
        %v2297 = vld [vmem:[%s1794 + $0x1a] sm:$0xff]
        %v2298 = vld [vmem:[%s1794 + $0x22] sm:$0xff]
        %v2299 = vld [vmem:[%s1794 + $0x32] sm:$0xff]
        %v2300 = vld [vmem:[%s1794 + $0x3a] sm:$0xff]
        %v2301 = vld [vmem:[%s1794 + $0x4a] sm:$0xff]
        %v2302 = vld [vmem:[%s1794 + $0x52] sm:$0xff]
        %v2303 = vld [vmem:[%s1794 + $0x62] sm:$0xff]
        %v2304 = vld [vmem:[%s1794 + $0x6a] sm:$0xff]
        %v2305 = vld [vmem:[%s1794 + $0x7a] sm:$0xff]
        %v2306 = vld [vmem:[%s1794 + $0x82] sm:$0xff]
        %v2307 = vld [vmem:[%s1794 + $0x92] sm:$0xff]
        %v2308 = vld [vmem:[%s1794 + $0x9a] sm:$0xff]
        %v2309 = vld [vmem:[%s1794 + $0xaa] sm:$0xff]
        %v2310 = vld [vmem:[%s1794 + $0xb2] sm:$0xff]
        %v2311 = vld [vmem:[%s1794 + $0xc2] sm:$0xff]
        %v2312 = vld [vmem:[%s1794 + $0xca] sm:$0xff]
        %v2313 = vld [vmem:[%s1794 + $0xda] sm:$0xff]
        %v2314 = vld [vmem:[%s1794 + $0xe2] sm:$0xff]
        %v2315 = vld [vmem:[%s1794 + $0xf2] sm:$0xff]
        %v2316 = vld [vmem:[%s1794 + $0xfa] sm:$0xff]
        %v2317 = vld [vmem:[%s1794 + $0x10a] sm:$0xff]
        %v2318 = vld [vmem:[%s1794 + $0x112] sm:$0xff]
        %v2319 = vld [vmem:[%s1794 + $0x122] sm:$0xff]
        %v2320 = vld [vmem:[%s1794 + $0x12a] sm:$0xff]
        %v2321 = vld [vmem:[%s1794 + $0x13a] sm:$0xff]
        %v2322 = vld [vmem:[%s1794 + $0x142] sm:$0xff]
        %v2323 = vld [vmem:[%s1794 + $0x152] sm:$0xff]
        %v2324 = vld [vmem:[%s1794 + $0x15a] sm:$0xff]
        %v2325 = vld [vmem:[%s1794 + $0x16a] sm:$0xff]
        %v2326 = vld [vmem:[%s1794 + $0x172] sm:$0xff]
        %v2327 = vpack.c.bf16 %v2296, %v2295
        %v2328 = vpack.c.bf16 %v2298, %v2297
        %v2329 = vpack.c.bf16 %v2300, %v2299
        %v2330 = vpack.c.bf16 %v2302, %v2301
        %v2331 = vpack.c.bf16 %v2304, %v2303
        %v2332 = vpack.c.bf16 %v2306, %v2305
        %v2333 = vpack.c.bf16 %v2308, %v2307
        %v2334 = vpack.c.bf16 %v2310, %v2309
        %v2335 = vpack.c.bf16 %v2312, %v2311
        %v2336 = vpack.c.bf16 %v2314, %v2313
        %v2337 = vpack.c.bf16 %v2316, %v2315
        %v2338 = vpack.c.bf16 %v2318, %v2317
        %v2339 = vpack.c.bf16 %v2320, %v2319
        %v2340 = vpack.c.bf16 %v2322, %v2321
        %v2341 = vpack.c.bf16 %v2324, %v2323
        %v2342 = vpack.c.bf16 %v2326, %v2325
        %s2343 = scalar_lea.vmem [#allocation6], 256
        %v2344 = vld [vmem:[%s2343] sm:$0xf]
        %v2345 = vld [vmem:[%s2343 + $0x4] sm:$0xf]
        %v2346 = vld [vmem:[%s2343 + $0x8] sm:$0xf]
        %v2347 = vld [vmem:[%s2343 + $0xc] sm:$0xf]
        %v2348 = vld [vmem:[%s2343 + $0x10] sm:$0xf]
        %v2349 = vld [vmem:[%s2343 + $0x14] sm:$0xf]
        %v2350 = vld [vmem:[%s2343 + $0x18] sm:$0xf]
        %v2351 = vld [vmem:[%s2343 + $0x1c] sm:$0xf]
        %v2360 = vunpack.c.l.b16 %v2344
        %v2361 = vunpack.c.l.b16 %v2345
        %v2362 = vunpack.c.l.b16 %v2346
        %v2363 = vunpack.c.l.b16 %v2347
        %v2364 = vunpack.c.l.b16 %v2348
        %v2365 = vunpack.c.l.b16 %v2349
        %v2366 = vunpack.c.l.b16 %v2350
        %v2367 = vunpack.c.l.b16 %v2351
        %v2368 = vpack.c.b16 %v2361, %v2360
        %v2369 = vpack.c.b16 %v2363, %v2362
        %v2370 = vpack.c.b16 %v2365, %v2364
        %v2371 = vpack.c.b16 %v2367, %v2366
        %v2377 = vsel %vm236, %v2327, 0
        %v2380 = vsel %vm236, %v2328, 0
        %v2383 = vsel %vm236, %v2329, 0
        %v2386 = vsel %vm236, %v2330, 0
        %v2389 = vsel %vm236, %v2331, 0
        %v2392 = vsel %vm236, %v2332, 0
        %v2395 = vsel %vm236, %v2333, 0
        %v2398 = vsel %vm236, %v2334, 0
        %v2401 = vsel %vm236, %v2335, 0
        %v2404 = vsel %vm236, %v2336, 0
        %v2407 = vsel %vm236, %v2337, 0
        %v2410 = vsel %vm236, %v2338, 0
        %v2413 = vsel %vm236, %v2339, 0
        %v2416 = vsel %vm236, %v2340, 0
        %v2419 = vsel %vm236, %v2341, 0
        %v2422 = vsel %vm236, %v2342, 0
        %2424 = vmatpush.bf16.msra.mxu0 0
        %2425 = vmatpush.bf16.msra.mxu0 0
        %2426 = vmatpush.bf16.msra.mxu0 0
        %2427 = vmatpush.bf16.msra.mxu0 0
        %2428 = vmatpush.bf16.msra.mxu0 %v2371
        %2429 = vmatpush.bf16.msra.mxu0 %v2370
        %2430 = vmatpush.bf16.msra.mxu0 %v2369
        %2431 = vmatpush.bf16.msra.mxu0 %v2368
        %2432 = vmatmul.bf16.gmra.mxu0 %v2377
        %v2433 = vpop.f32.mrf.mxu0
        %v2434 = vadd.f32 0.0, %v2433
        %v2435 = vpop.f32.mrf.mxu0
        %v2436 = vadd.f32 0.0, %v2435
        %2437 = vmatmul.bf16.gmra.mxu0 %v2380
        %v2438 = vpop.f32.mrf.mxu0
        %v2439 = vadd.f32 0.0, %v2438
        %v2440 = vpop.f32.mrf.mxu0
        %v2441 = vadd.f32 0.0, %v2440
        %2442 = vmatmul.bf16.gmra.mxu0 %v2383
        %v2443 = vpop.f32.mrf.mxu0
        %v2444 = vadd.f32 0.0, %v2443
        %v2445 = vpop.f32.mrf.mxu0
        %v2446 = vadd.f32 0.0, %v2445
        %2447 = vmatmul.bf16.gmra.mxu0 %v2386
        %v2448 = vpop.f32.mrf.mxu0
        %v2449 = vadd.f32 0.0, %v2448
        %v2450 = vpop.f32.mrf.mxu0
        %v2451 = vadd.f32 0.0, %v2450
        %2452 = vmatmul.bf16.gmra.mxu0 %v2389
        %v2453 = vpop.f32.mrf.mxu0
        %v2454 = vadd.f32 0.0, %v2453
        %v2455 = vpop.f32.mrf.mxu0
        %v2456 = vadd.f32 0.0, %v2455
        %2457 = vmatmul.bf16.gmra.mxu0 %v2392
        %v2458 = vpop.f32.mrf.mxu0
        %v2459 = vadd.f32 0.0, %v2458
        %v2460 = vpop.f32.mrf.mxu0
        %v2461 = vadd.f32 0.0, %v2460
        %2462 = vmatmul.bf16.gmra.mxu0 %v2395
        %v2463 = vpop.f32.mrf.mxu0
        %v2464 = vadd.f32 0.0, %v2463
        %v2465 = vpop.f32.mrf.mxu0
        %v2466 = vadd.f32 0.0, %v2465
        %2467 = vmatmul.bf16.gmra.mxu0 %v2398
        %v2468 = vpop.f32.mrf.mxu0
        %v2469 = vadd.f32 0.0, %v2468
        %v2470 = vpop.f32.mrf.mxu0
        %v2471 = vadd.f32 0.0, %v2470
        %2472 = vmatmul.bf16.gmra.mxu0 %v2401
        %v2473 = vpop.f32.mrf.mxu0
        %v2474 = vadd.f32 0.0, %v2473
        %v2475 = vpop.f32.mrf.mxu0
        %v2476 = vadd.f32 0.0, %v2475
        %2477 = vmatmul.bf16.gmra.mxu0 %v2404
        %v2478 = vpop.f32.mrf.mxu0
        %v2479 = vadd.f32 0.0, %v2478
        %v2480 = vpop.f32.mrf.mxu0
        %v2481 = vadd.f32 0.0, %v2480
        %2482 = vmatmul.bf16.gmra.mxu0 %v2407
        %v2483 = vpop.f32.mrf.mxu0
        %v2484 = vadd.f32 0.0, %v2483
        %v2485 = vpop.f32.mrf.mxu0
        %v2486 = vadd.f32 0.0, %v2485
        %2487 = vmatmul.bf16.gmra.mxu0 %v2410
        %v2488 = vpop.f32.mrf.mxu0
        %v2489 = vadd.f32 0.0, %v2488
        %v2490 = vpop.f32.mrf.mxu0
        %v2491 = vadd.f32 0.0, %v2490
        %2492 = vmatmul.bf16.gmra.mxu0 %v2413
        %v2493 = vpop.f32.mrf.mxu0
        %v2494 = vadd.f32 0.0, %v2493
        %v2495 = vpop.f32.mrf.mxu0
        %v2496 = vadd.f32 0.0, %v2495
        %2497 = vmatmul.bf16.gmra.mxu0 %v2416
        %v2498 = vpop.f32.mrf.mxu0
        %v2499 = vadd.f32 0.0, %v2498
        %v2500 = vpop.f32.mrf.mxu0
        %v2501 = vadd.f32 0.0, %v2500
        %2502 = vmatmul.bf16.gmra.mxu0 %v2419
        %v2503 = vpop.f32.mrf.mxu0
        %v2504 = vadd.f32 0.0, %v2503
        %v2505 = vpop.f32.mrf.mxu0
        %v2506 = vadd.f32 0.0, %v2505
        %2507 = vmatmul.bf16.gmra.mxu0 %v2422
        %v2508 = vpop.f32.mrf.mxu0
        %v2509 = vadd.f32 0.0, %v2508
        %v2510 = vpop.f32.mrf.mxu0
        %v2511 = vadd.f32 0.0, %v2510
        %2512 = vdwg.mxu0
        %v2513 = vadd.f32 %v2263, %v2434
        %v2514 = vadd.f32 %v2264, %v2436
        %v2515 = vadd.f32 %v2265, %v2439
        %v2516 = vadd.f32 %v2266, %v2441
        %v2517 = vadd.f32 %v2267, %v2444
        %v2518 = vadd.f32 %v2268, %v2446
        %v2519 = vadd.f32 %v2269, %v2449
        %v2520 = vadd.f32 %v2270, %v2451
        %v2521 = vadd.f32 %v2271, %v2454
        %v2522 = vadd.f32 %v2272, %v2456
        %v2523 = vadd.f32 %v2273, %v2459
        %v2524 = vadd.f32 %v2274, %v2461
        %v2525 = vadd.f32 %v2275, %v2464
        %v2526 = vadd.f32 %v2276, %v2466
        %v2527 = vadd.f32 %v2277, %v2469
        %v2528 = vadd.f32 %v2278, %v2471
        %v2529 = vadd.f32 %v2279, %v2474
        %v2530 = vadd.f32 %v2280, %v2476
        %v2531 = vadd.f32 %v2281, %v2479
        %v2532 = vadd.f32 %v2282, %v2481
        %v2533 = vadd.f32 %v2283, %v2484
        %v2534 = vadd.f32 %v2284, %v2486
        %v2535 = vadd.f32 %v2285, %v2489
        %v2536 = vadd.f32 %v2286, %v2491
        %v2537 = vadd.f32 %v2287, %v2494
        %v2538 = vadd.f32 %v2288, %v2496
        %v2539 = vadd.f32 %v2289, %v2499
        %v2540 = vadd.f32 %v2290, %v2501
        %v2541 = vadd.f32 %v2291, %v2504
        %v2542 = vadd.f32 %v2292, %v2506
        %v2543 = vadd.f32 %v2293, %v2509
        %v2544 = vadd.f32 %v2294, %v2511
        %v2546 = vperm.slane %v324, 0
        %v2548 = vmul.f32 %v2513, %v2546
        %v2549 = vmul.f32 %v2514, %v2546
        %v2550 = vmul.f32 %v2515, %v2546
        %v2551 = vmul.f32 %v2516, %v2546
        %v2552 = vmul.f32 %v2517, %v2546
        %v2553 = vmul.f32 %v2518, %v2546
        %v2554 = vmul.f32 %v2519, %v2546
        %v2555 = vmul.f32 %v2520, %v2546
        %v2556 = vmul.f32 %v2521, %v2546
        %v2557 = vmul.f32 %v2522, %v2546
        %v2558 = vmul.f32 %v2523, %v2546
        %v2559 = vmul.f32 %v2524, %v2546
        %v2560 = vmul.f32 %v2525, %v2546
        %v2561 = vmul.f32 %v2526, %v2546
        %v2562 = vmul.f32 %v2527, %v2546
        %v2563 = vmul.f32 %v2528, %v2546
        %v2564 = vmul.f32 %v2529, %v2546
        %v2565 = vmul.f32 %v2530, %v2546
        %v2566 = vmul.f32 %v2531, %v2546
        %v2567 = vmul.f32 %v2532, %v2546
        %v2568 = vmul.f32 %v2533, %v2546
        %v2569 = vmul.f32 %v2534, %v2546
        %v2570 = vmul.f32 %v2535, %v2546
        %v2571 = vmul.f32 %v2536, %v2546
        %v2572 = vmul.f32 %v2537, %v2546
        %v2573 = vmul.f32 %v2538, %v2546
        %v2574 = vmul.f32 %v2539, %v2546
        %v2575 = vmul.f32 %v2540, %v2546
        %v2576 = vmul.f32 %v2541, %v2546
        %v2577 = vmul.f32 %v2542, %v2546
        %v2578 = vmul.f32 %v2543, %v2546
        %v2579 = vmul.f32 %v2544, %v2546
        %v2581 = vperm.slane %v325, 0
        %v2583 = vadd.f32 %v2548, %v2581
        %v2584 = vadd.f32 %v2549, %v2581
        %v2585 = vadd.f32 %v2550, %v2581
        %v2586 = vadd.f32 %v2551, %v2581
        %v2587 = vadd.f32 %v2552, %v2581
        %v2588 = vadd.f32 %v2553, %v2581
        %v2589 = vadd.f32 %v2554, %v2581
        %v2590 = vadd.f32 %v2555, %v2581
        %v2591 = vadd.f32 %v2556, %v2581
        %v2592 = vadd.f32 %v2557, %v2581
        %v2593 = vadd.f32 %v2558, %v2581
        %v2594 = vadd.f32 %v2559, %v2581
        %v2595 = vadd.f32 %v2560, %v2581
        %v2596 = vadd.f32 %v2561, %v2581
        %v2597 = vadd.f32 %v2562, %v2581
        %v2598 = vadd.f32 %v2563, %v2581
        %v2599 = vadd.f32 %v2564, %v2581
        %v2600 = vadd.f32 %v2565, %v2581
        %v2601 = vadd.f32 %v2566, %v2581
        %v2602 = vadd.f32 %v2567, %v2581
        %v2603 = vadd.f32 %v2568, %v2581
        %v2604 = vadd.f32 %v2569, %v2581
        %v2605 = vadd.f32 %v2570, %v2581
        %v2606 = vadd.f32 %v2571, %v2581
        %v2607 = vadd.f32 %v2572, %v2581
        %v2608 = vadd.f32 %v2573, %v2581
        %v2609 = vadd.f32 %v2574, %v2581
        %v2610 = vadd.f32 %v2575, %v2581
        %v2611 = vadd.f32 %v2576, %v2581
        %v2612 = vadd.f32 %v2577, %v2581
        %v2613 = vadd.f32 %v2578, %v2581
        %v2614 = vadd.f32 %v2579, %v2581
        %v2615 = vmax.f32 %v2583, 0.0
        %v2616 = vmax.f32 %v2584, 0.0
        %v2617 = vmax.f32 %v2585, 0.0
        %v2618 = vmax.f32 %v2586, 0.0
        %v2619 = vmax.f32 %v2587, 0.0
        %v2620 = vmax.f32 %v2588, 0.0
        %v2621 = vmax.f32 %v2589, 0.0
        %v2622 = vmax.f32 %v2590, 0.0
        %v2623 = vmax.f32 %v2591, 0.0
        %v2624 = vmax.f32 %v2592, 0.0
        %v2625 = vmax.f32 %v2593, 0.0
        %v2626 = vmax.f32 %v2594, 0.0
        %v2627 = vmax.f32 %v2595, 0.0
        %v2628 = vmax.f32 %v2596, 0.0
        %v2629 = vmax.f32 %v2597, 0.0
        %v2630 = vmax.f32 %v2598, 0.0
        %v2631 = vmax.f32 %v2599, 0.0
        %v2632 = vmax.f32 %v2600, 0.0
        %v2633 = vmax.f32 %v2601, 0.0
        %v2634 = vmax.f32 %v2602, 0.0
        %v2635 = vmax.f32 %v2603, 0.0
        %v2636 = vmax.f32 %v2604, 0.0
        %v2637 = vmax.f32 %v2605, 0.0
        %v2638 = vmax.f32 %v2606, 0.0
        %v2639 = vmax.f32 %v2607, 0.0
        %v2640 = vmax.f32 %v2608, 0.0
        %v2641 = vmax.f32 %v2609, 0.0
        %v2642 = vmax.f32 %v2610, 0.0
        %v2643 = vmax.f32 %v2611, 0.0
        %v2644 = vmax.f32 %v2612, 0.0
        %v2645 = vmax.f32 %v2613, 0.0
        %v2646 = vmax.f32 %v2614, 0.0
        %v2647 = vadd.f32 %v292, %v2615
        %v2648 = vadd.f32 %v293, %v2616
        %v2649 = vadd.f32 %v294, %v2617
        %v2650 = vadd.f32 %v295, %v2618
        %v2651 = vadd.f32 %v296, %v2619
        %v2652 = vadd.f32 %v297, %v2620
        %v2653 = vadd.f32 %v298, %v2621
        %v2654 = vadd.f32 %v299, %v2622
        %v2655 = vadd.f32 %v300, %v2623
        %v2656 = vadd.f32 %v301, %v2624
        %v2657 = vadd.f32 %v302, %v2625
        %v2658 = vadd.f32 %v303, %v2626
        %v2659 = vadd.f32 %v304, %v2627
        %v2660 = vadd.f32 %v305, %v2628
        %v2661 = vadd.f32 %v306, %v2629
        %v2662 = vadd.f32 %v307, %v2630
        %v2663 = vadd.f32 %v308, %v2631
        %v2664 = vadd.f32 %v309, %v2632
        %v2665 = vadd.f32 %v310, %v2633
        %v2666 = vadd.f32 %v311, %v2634
        %v2667 = vadd.f32 %v312, %v2635
        %v2668 = vadd.f32 %v313, %v2636
        %v2669 = vadd.f32 %v314, %v2637
        %v2670 = vadd.f32 %v315, %v2638
        %v2671 = vadd.f32 %v316, %v2639
        %v2672 = vadd.f32 %v317, %v2640
        %v2673 = vadd.f32 %v318, %v2641
        %v2674 = vadd.f32 %v319, %v2642
        %v2675 = vadd.f32 %v320, %v2643
        %v2676 = vadd.f32 %v321, %v2644
        %v2677 = vadd.f32 %v322, %v2645
        %v2678 = vadd.f32 %v323, %v2646
        %2679 = vst.msk [vmem:[%s326 + $0x1] sm:$0xff] %vm236, %v2647
        %2680 = vst.msk [vmem:[%s326 + $0x9] sm:$0xff] %vm236, %v2648
        %2681 = vst.msk [vmem:[%s326 + $0x19] sm:$0xff] %vm236, %v2649
        %2682 = vst.msk [vmem:[%s326 + $0x21] sm:$0xff] %vm236, %v2650
        %2683 = vst.msk [vmem:[%s326 + $0x31] sm:$0xff] %vm236, %v2651
        %2684 = vst.msk [vmem:[%s326 + $0x39] sm:$0xff] %vm236, %v2652
        %2685 = vst.msk [vmem:[%s326 + $0x49] sm:$0xff] %vm236, %v2653
        %2686 = vst.msk [vmem:[%s326 + $0x51] sm:$0xff] %vm236, %v2654
        %2687 = vst.msk [vmem:[%s326 + $0x61] sm:$0xff] %vm236, %v2655
        %2688 = vst.msk [vmem:[%s326 + $0x69] sm:$0xff] %vm236, %v2656
        %2689 = vst.msk [vmem:[%s326 + $0x79] sm:$0xff] %vm236, %v2657
        %2690 = vst.msk [vmem:[%s326 + $0x81] sm:$0xff] %vm236, %v2658
        %2691 = vst.msk [vmem:[%s326 + $0x91] sm:$0xff] %vm236, %v2659
        %2692 = vst.msk [vmem:[%s326 + $0x99] sm:$0xff] %vm236, %v2660
        %2693 = vst.msk [vmem:[%s326 + $0xa9] sm:$0xff] %vm236, %v2661
        %2694 = vst.msk [vmem:[%s326 + $0xb1] sm:$0xff] %vm236, %v2662
        %2695 = vst.msk [vmem:[%s326 + $0xc1] sm:$0xff] %vm236, %v2663
        %2696 = vst.msk [vmem:[%s326 + $0xc9] sm:$0xff] %vm236, %v2664
        %2697 = vst.msk [vmem:[%s326 + $0xd9] sm:$0xff] %vm236, %v2665
        %2698 = vst.msk [vmem:[%s326 + $0xe1] sm:$0xff] %vm236, %v2666
        %2699 = vst.msk [vmem:[%s326 + $0xf1] sm:$0xff] %vm236, %v2667
        %2700 = vst.msk [vmem:[%s326 + $0xf9] sm:$0xff] %vm236, %v2668
        %2701 = vst.msk [vmem:[%s326 + $0x109] sm:$0xff] %vm236, %v2669
        %2702 = vst.msk [vmem:[%s326 + $0x111] sm:$0xff] %vm236, %v2670
        %2703 = vst.msk [vmem:[%s326 + $0x121] sm:$0xff] %vm236, %v2671
        %2704 = vst.msk [vmem:[%s326 + $0x129] sm:$0xff] %vm236, %v2672
        %2705 = vst.msk [vmem:[%s326 + $0x139] sm:$0xff] %vm236, %v2673
        %2706 = vst.msk [vmem:[%s326 + $0x141] sm:$0xff] %vm236, %v2674
        %2707 = vst.msk [vmem:[%s326 + $0x151] sm:$0xff] %vm236, %v2675
        %2708 = vst.msk [vmem:[%s326 + $0x159] sm:$0xff] %vm236, %v2676
        %2709 = vst.msk [vmem:[%s326 + $0x169] sm:$0xff] %vm236, %v2677
        %2710 = vst.msk [vmem:[%s326 + $0x171] sm:$0xff] %vm236, %v2678
        %v2711 = vld [vmem:[#allocation2] sm:$0xff]
        %v2712 = vld [vmem:[#allocation2 + $0x8] sm:$0xff]
        %v2713 = vld [vmem:[#allocation2 + $0x18] sm:$0xff]
        %v2714 = vld [vmem:[#allocation2 + $0x20] sm:$0xff]
        %v2715 = vld [vmem:[#allocation2 + $0x30] sm:$0xff]
        %v2716 = vld [vmem:[#allocation2 + $0x38] sm:$0xff]
        %v2717 = vld [vmem:[#allocation2 + $0x48] sm:$0xff]
        %v2718 = vld [vmem:[#allocation2 + $0x50] sm:$0xff]
        %v2719 = vld [vmem:[#allocation2 + $0x60] sm:$0xff]
        %v2720 = vld [vmem:[#allocation2 + $0x68] sm:$0xff]
        %v2721 = vld [vmem:[#allocation2 + $0x78] sm:$0xff]
        %v2722 = vld [vmem:[#allocation2 + $0x80] sm:$0xff]
        %v2723 = vld [vmem:[#allocation2 + $0x90] sm:$0xff]
        %v2724 = vld [vmem:[#allocation2 + $0x98] sm:$0xff]
        %v2725 = vld [vmem:[#allocation2 + $0xa8] sm:$0xff]
        %v2726 = vld [vmem:[#allocation2 + $0xb0] sm:$0xff]
        %v2727 = vld [vmem:[#allocation2 + $0xc0] sm:$0xff]
        %v2728 = vld [vmem:[#allocation2 + $0xc8] sm:$0xff]
        %v2729 = vld [vmem:[#allocation2 + $0xd8] sm:$0xff]
        %v2730 = vld [vmem:[#allocation2 + $0xe0] sm:$0xff]
        %v2731 = vld [vmem:[#allocation2 + $0xf0] sm:$0xff]
        %v2732 = vld [vmem:[#allocation2 + $0xf8] sm:$0xff]
        %v2733 = vld [vmem:[#allocation2 + $0x108] sm:$0xff]
        %v2734 = vld [vmem:[#allocation2 + $0x110] sm:$0xff]
        %v2735 = vld [vmem:[#allocation2 + $0x120] sm:$0xff]
        %v2736 = vld [vmem:[#allocation2 + $0x128] sm:$0xff]
        %v2737 = vld [vmem:[#allocation2 + $0x138] sm:$0xff]
        %v2738 = vld [vmem:[#allocation2 + $0x140] sm:$0xff]
        %v2739 = vld [vmem:[#allocation2 + $0x150] sm:$0xff]
        %v2740 = vld [vmem:[#allocation2 + $0x158] sm:$0xff]
        %v2741 = vld [vmem:[#allocation2 + $0x168] sm:$0xff]
        %v2742 = vld [vmem:[#allocation2 + $0x170] sm:$0xff]
        %v2743 = vpack.c.bf16 %v2712, %v2711
        %v2744 = vpack.c.bf16 %v2714, %v2713
        %v2745 = vpack.c.bf16 %v2716, %v2715
        %v2746 = vpack.c.bf16 %v2718, %v2717
        %v2747 = vpack.c.bf16 %v2720, %v2719
        %v2748 = vpack.c.bf16 %v2722, %v2721
        %v2749 = vpack.c.bf16 %v2724, %v2723
        %v2750 = vpack.c.bf16 %v2726, %v2725
        %v2751 = vpack.c.bf16 %v2728, %v2727
        %v2752 = vpack.c.bf16 %v2730, %v2729
        %v2753 = vpack.c.bf16 %v2732, %v2731
        %v2754 = vpack.c.bf16 %v2734, %v2733
        %v2755 = vpack.c.bf16 %v2736, %v2735
        %v2756 = vpack.c.bf16 %v2738, %v2737
        %v2757 = vpack.c.bf16 %v2740, %v2739
        %v2758 = vpack.c.bf16 %v2742, %v2741
        %v2759 = vld [vmem:[#allocation6] sm:$0xf]
        %v2760 = vld [vmem:[#allocation6 + $0x4] sm:$0xf]
        %v2761 = vld [vmem:[#allocation6 + $0x8] sm:$0xf]
        %v2762 = vld [vmem:[#allocation6 + $0xc] sm:$0xf]
        %v2763 = vld [vmem:[#allocation6 + $0x10] sm:$0xf]
        %v2764 = vld [vmem:[#allocation6 + $0x14] sm:$0xf]
        %v2765 = vld [vmem:[#allocation6 + $0x18] sm:$0xf]
        %v2766 = vld [vmem:[#allocation6 + $0x1c] sm:$0xf]
        %v2767 = vld [vmem:[#allocation2 + $0x1] sm:$0xff]
        %v2768 = vld [vmem:[#allocation2 + $0x9] sm:$0xff]
        %v2769 = vld [vmem:[#allocation2 + $0x19] sm:$0xff]
        %v2770 = vld [vmem:[#allocation2 + $0x21] sm:$0xff]
        %v2771 = vld [vmem:[#allocation2 + $0x31] sm:$0xff]
        %v2772 = vld [vmem:[#allocation2 + $0x39] sm:$0xff]
        %v2773 = vld [vmem:[#allocation2 + $0x49] sm:$0xff]
        %v2774 = vld [vmem:[#allocation2 + $0x51] sm:$0xff]
        %v2775 = vld [vmem:[#allocation2 + $0x61] sm:$0xff]
        %v2776 = vld [vmem:[#allocation2 + $0x69] sm:$0xff]
        %v2777 = vld [vmem:[#allocation2 + $0x79] sm:$0xff]
        %v2778 = vld [vmem:[#allocation2 + $0x81] sm:$0xff]
        %v2779 = vld [vmem:[#allocation2 + $0x91] sm:$0xff]
        %v2780 = vld [vmem:[#allocation2 + $0x99] sm:$0xff]
        %v2781 = vld [vmem:[#allocation2 + $0xa9] sm:$0xff]
        %v2782 = vld [vmem:[#allocation2 + $0xb1] sm:$0xff]
        %v2783 = vld [vmem:[#allocation2 + $0xc1] sm:$0xff]
        %v2784 = vld [vmem:[#allocation2 + $0xc9] sm:$0xff]
        %v2785 = vld [vmem:[#allocation2 + $0xd9] sm:$0xff]
        %v2786 = vld [vmem:[#allocation2 + $0xe1] sm:$0xff]
        %v2787 = vld [vmem:[#allocation2 + $0xf1] sm:$0xff]
        %v2788 = vld [vmem:[#allocation2 + $0xf9] sm:$0xff]
        %v2789 = vld [vmem:[#allocation2 + $0x109] sm:$0xff]
        %v2790 = vld [vmem:[#allocation2 + $0x111] sm:$0xff]
        %v2791 = vld [vmem:[#allocation2 + $0x121] sm:$0xff]
        %v2792 = vld [vmem:[#allocation2 + $0x129] sm:$0xff]
        %v2793 = vld [vmem:[#allocation2 + $0x139] sm:$0xff]
        %v2794 = vld [vmem:[#allocation2 + $0x141] sm:$0xff]
        %v2795 = vld [vmem:[#allocation2 + $0x151] sm:$0xff]
        %v2796 = vld [vmem:[#allocation2 + $0x159] sm:$0xff]
        %v2797 = vld [vmem:[#allocation2 + $0x169] sm:$0xff]
        %v2798 = vld [vmem:[#allocation2 + $0x171] sm:$0xff]
        %v2799 = vpack.c.bf16 %v2768, %v2767
        %v2800 = vpack.c.bf16 %v2770, %v2769
        %v2801 = vpack.c.bf16 %v2772, %v2771
        %v2802 = vpack.c.bf16 %v2774, %v2773
        %v2803 = vpack.c.bf16 %v2776, %v2775
        %v2804 = vpack.c.bf16 %v2778, %v2777
        %v2805 = vpack.c.bf16 %v2780, %v2779
        %v2806 = vpack.c.bf16 %v2782, %v2781
        %v2807 = vpack.c.bf16 %v2784, %v2783
        %v2808 = vpack.c.bf16 %v2786, %v2785
        %v2809 = vpack.c.bf16 %v2788, %v2787
        %v2810 = vpack.c.bf16 %v2790, %v2789
        %v2811 = vpack.c.bf16 %v2792, %v2791
        %v2812 = vpack.c.bf16 %v2794, %v2793
        %v2813 = vpack.c.bf16 %v2796, %v2795
        %v2814 = vpack.c.bf16 %v2798, %v2797
        %v2815 = vld [vmem:[%s463] sm:$0xf]
        %v2816 = vld [vmem:[%s463 + $0x4] sm:$0xf]
        %v2817 = vld [vmem:[%s463 + $0x8] sm:$0xf]
        %v2818 = vld [vmem:[%s463 + $0xc] sm:$0xf]
        %v2819 = vld [vmem:[%s463 + $0x10] sm:$0xf]
        %v2820 = vld [vmem:[%s463 + $0x14] sm:$0xf]
        %v2821 = vld [vmem:[%s463 + $0x18] sm:$0xf]
        %v2822 = vld [vmem:[%s463 + $0x1c] sm:$0xf]
        %v2831 = vunpack.c.l.b16 %v2815
        %v2832 = vunpack.c.l.b16 %v2816
        %v2833 = vunpack.c.l.b16 %v2817
        %v2834 = vunpack.c.l.b16 %v2818
        %v2835 = vunpack.c.l.b16 %v2819
        %v2836 = vunpack.c.l.b16 %v2820
        %v2837 = vunpack.c.l.b16 %v2821
        %v2838 = vunpack.c.l.b16 %v2822
        %v2839 = vpack.c.b16 %v2832, %v2831
        %v2840 = vpack.c.b16 %v2834, %v2833
        %v2841 = vpack.c.b16 %v2836, %v2835
        %v2842 = vpack.c.b16 %v2838, %v2837
        %v2848 = vsel %vm236, %v2799, 0
        %v2851 = vsel %vm236, %v2800, 0
        %v2854 = vsel %vm236, %v2801, 0
        %v2857 = vsel %vm236, %v2802, 0
        %v2860 = vsel %vm236, %v2803, 0
        %v2863 = vsel %vm236, %v2804, 0
        %v2866 = vsel %vm236, %v2805, 0
        %v2869 = vsel %vm236, %v2806, 0
        %v2872 = vsel %vm236, %v2807, 0
        %v2875 = vsel %vm236, %v2808, 0
        %v2878 = vsel %vm236, %v2809, 0
        %v2881 = vsel %vm236, %v2810, 0
        %v2884 = vsel %vm236, %v2811, 0
        %v2887 = vsel %vm236, %v2812, 0
        %v2890 = vsel %vm236, %v2813, 0
        %v2893 = vsel %vm236, %v2814, 0
        %2895 = vmatpush.bf16.msra.mxu0 0
        %2896 = vmatpush.bf16.msra.mxu0 0
        %2897 = vmatpush.bf16.msra.mxu0 0
        %2898 = vmatpush.bf16.msra.mxu0 0
        %2899 = vmatpush.bf16.msra.mxu0 %v2842
        %2900 = vmatpush.bf16.msra.mxu0 %v2841
        %2901 = vmatpush.bf16.msra.mxu0 %v2840
        %2902 = vmatpush.bf16.msra.mxu0 %v2839
        %2903 = vmatmul.bf16.gmra.mxu0 %v2848
        %v2904 = vpop.f32.mrf.mxu0
        %v2905 = vadd.f32 0.0, %v2904
        %v2906 = vpop.f32.mrf.mxu0
        %v2907 = vadd.f32 0.0, %v2906
        %2908 = vmatmul.bf16.gmra.mxu0 %v2851
        %v2909 = vpop.f32.mrf.mxu0
        %v2910 = vadd.f32 0.0, %v2909
        %v2911 = vpop.f32.mrf.mxu0
        %v2912 = vadd.f32 0.0, %v2911
        %2913 = vmatmul.bf16.gmra.mxu0 %v2854
        %v2914 = vpop.f32.mrf.mxu0
        %v2915 = vadd.f32 0.0, %v2914
        %v2916 = vpop.f32.mrf.mxu0
        %v2917 = vadd.f32 0.0, %v2916
        %2918 = vmatmul.bf16.gmra.mxu0 %v2857
        %v2919 = vpop.f32.mrf.mxu0
        %v2920 = vadd.f32 0.0, %v2919
        %v2921 = vpop.f32.mrf.mxu0
        %v2922 = vadd.f32 0.0, %v2921
        %2923 = vmatmul.bf16.gmra.mxu0 %v2860
        %v2924 = vpop.f32.mrf.mxu0
        %v2925 = vadd.f32 0.0, %v2924
        %v2926 = vpop.f32.mrf.mxu0
        %v2927 = vadd.f32 0.0, %v2926
        %2928 = vmatmul.bf16.gmra.mxu0 %v2863
        %v2929 = vpop.f32.mrf.mxu0
        %v2930 = vadd.f32 0.0, %v2929
        %v2931 = vpop.f32.mrf.mxu0
        %v2932 = vadd.f32 0.0, %v2931
        %2933 = vmatmul.bf16.gmra.mxu0 %v2866
        %v2934 = vpop.f32.mrf.mxu0
        %v2935 = vadd.f32 0.0, %v2934
        %v2936 = vpop.f32.mrf.mxu0
        %v2937 = vadd.f32 0.0, %v2936
        %2938 = vmatmul.bf16.gmra.mxu0 %v2869
        %v2939 = vpop.f32.mrf.mxu0
        %v2940 = vadd.f32 0.0, %v2939
        %v2941 = vpop.f32.mrf.mxu0
        %v2942 = vadd.f32 0.0, %v2941
        %2943 = vmatmul.bf16.gmra.mxu0 %v2872
        %v2944 = vpop.f32.mrf.mxu0
        %v2945 = vadd.f32 0.0, %v2944
        %v2946 = vpop.f32.mrf.mxu0
        %v2947 = vadd.f32 0.0, %v2946
        %2948 = vmatmul.bf16.gmra.mxu0 %v2875
        %v2949 = vpop.f32.mrf.mxu0
        %v2950 = vadd.f32 0.0, %v2949
        %v2951 = vpop.f32.mrf.mxu0
        %v2952 = vadd.f32 0.0, %v2951
        %2953 = vmatmul.bf16.gmra.mxu0 %v2878
        %v2954 = vpop.f32.mrf.mxu0
        %v2955 = vadd.f32 0.0, %v2954
        %v2956 = vpop.f32.mrf.mxu0
        %v2957 = vadd.f32 0.0, %v2956
        %2958 = vmatmul.bf16.gmra.mxu0 %v2881
        %v2959 = vpop.f32.mrf.mxu0
        %v2960 = vadd.f32 0.0, %v2959
        %v2961 = vpop.f32.mrf.mxu0
        %v2962 = vadd.f32 0.0, %v2961
        %2963 = vmatmul.bf16.gmra.mxu0 %v2884
        %v2964 = vpop.f32.mrf.mxu0
        %v2965 = vadd.f32 0.0, %v2964
        %v2966 = vpop.f32.mrf.mxu0
        %v2967 = vadd.f32 0.0, %v2966
        %2968 = vmatmul.bf16.gmra.mxu0 %v2887
        %v2969 = vpop.f32.mrf.mxu0
        %v2970 = vadd.f32 0.0, %v2969
        %v2971 = vpop.f32.mrf.mxu0
        %v2972 = vadd.f32 0.0, %v2971
        %2973 = vmatmul.bf16.gmra.mxu0 %v2890
        %v2974 = vpop.f32.mrf.mxu0
        %v2975 = vadd.f32 0.0, %v2974
        %v2976 = vpop.f32.mrf.mxu0
        %v2977 = vadd.f32 0.0, %v2976
        %2978 = vmatmul.bf16.gmra.mxu0 %v2893
        %v2979 = vpop.f32.mrf.mxu0
        %v2980 = vadd.f32 0.0, %v2979
        %v2981 = vpop.f32.mrf.mxu0
        %v2982 = vadd.f32 0.0, %v2981
        %2983 = vdwg.mxu0
        %v2992 = vunpack.c.l.b16 %v2759
        %v2993 = vunpack.c.l.b16 %v2760
        %v2994 = vunpack.c.l.b16 %v2761
        %v2995 = vunpack.c.l.b16 %v2762
        %v2996 = vunpack.c.l.b16 %v2763
        %v2997 = vunpack.c.l.b16 %v2764
        %v2998 = vunpack.c.l.b16 %v2765
        %v2999 = vunpack.c.l.b16 %v2766
        %v3000 = vpack.c.b16 %v2993, %v2992
        %v3001 = vpack.c.b16 %v2995, %v2994
        %v3002 = vpack.c.b16 %v2997, %v2996
        %v3003 = vpack.c.b16 %v2999, %v2998
        %v3009 = vsel %vm236, %v2743, 0
        %v3012 = vsel %vm236, %v2744, 0
        %v3015 = vsel %vm236, %v2745, 0
        %v3018 = vsel %vm236, %v2746, 0
        %v3021 = vsel %vm236, %v2747, 0
        %v3024 = vsel %vm236, %v2748, 0
        %v3027 = vsel %vm236, %v2749, 0
        %v3030 = vsel %vm236, %v2750, 0
        %v3033 = vsel %vm236, %v2751, 0
        %v3036 = vsel %vm236, %v2752, 0
        %v3039 = vsel %vm236, %v2753, 0
        %v3042 = vsel %vm236, %v2754, 0
        %v3045 = vsel %vm236, %v2755, 0
        %v3048 = vsel %vm236, %v2756, 0
        %v3051 = vsel %vm236, %v2757, 0
        %v3054 = vsel %vm236, %v2758, 0
        %3056 = vmatpush.bf16.msra.mxu0 0
        %3057 = vmatpush.bf16.msra.mxu0 0
        %3058 = vmatpush.bf16.msra.mxu0 0
        %3059 = vmatpush.bf16.msra.mxu0 0
        %3060 = vmatpush.bf16.msra.mxu0 %v3003
        %3061 = vmatpush.bf16.msra.mxu0 %v3002
        %3062 = vmatpush.bf16.msra.mxu0 %v3001
        %3063 = vmatpush.bf16.msra.mxu0 %v3000
        %3064 = vmatmul.bf16.gmra.mxu0 %v3009
        %v3065 = vpop.f32.mrf.mxu0
        %v3066 = vadd.f32 %v2905, %v3065
        %v3067 = vpop.f32.mrf.mxu0
        %v3068 = vadd.f32 %v2907, %v3067
        %3069 = vmatmul.bf16.gmra.mxu0 %v3012
        %v3070 = vpop.f32.mrf.mxu0
        %v3071 = vadd.f32 %v2910, %v3070
        %v3072 = vpop.f32.mrf.mxu0
        %v3073 = vadd.f32 %v2912, %v3072
        %3074 = vmatmul.bf16.gmra.mxu0 %v3015
        %v3075 = vpop.f32.mrf.mxu0
        %v3076 = vadd.f32 %v2915, %v3075
        %v3077 = vpop.f32.mrf.mxu0
        %v3078 = vadd.f32 %v2917, %v3077
        %3079 = vmatmul.bf16.gmra.mxu0 %v3018
        %v3080 = vpop.f32.mrf.mxu0
        %v3081 = vadd.f32 %v2920, %v3080
        %v3082 = vpop.f32.mrf.mxu0
        %v3083 = vadd.f32 %v2922, %v3082
        %3084 = vmatmul.bf16.gmra.mxu0 %v3021
        %v3085 = vpop.f32.mrf.mxu0
        %v3086 = vadd.f32 %v2925, %v3085
        %v3087 = vpop.f32.mrf.mxu0
        %v3088 = vadd.f32 %v2927, %v3087
        %3089 = vmatmul.bf16.gmra.mxu0 %v3024
        %v3090 = vpop.f32.mrf.mxu0
        %v3091 = vadd.f32 %v2930, %v3090
        %v3092 = vpop.f32.mrf.mxu0
        %v3093 = vadd.f32 %v2932, %v3092
        %3094 = vmatmul.bf16.gmra.mxu0 %v3027
        %v3095 = vpop.f32.mrf.mxu0
        %v3096 = vadd.f32 %v2935, %v3095
        %v3097 = vpop.f32.mrf.mxu0
        %v3098 = vadd.f32 %v2937, %v3097
        %3099 = vmatmul.bf16.gmra.mxu0 %v3030
        %v3100 = vpop.f32.mrf.mxu0
        %v3101 = vadd.f32 %v2940, %v3100
        %v3102 = vpop.f32.mrf.mxu0
        %v3103 = vadd.f32 %v2942, %v3102
        %3104 = vmatmul.bf16.gmra.mxu0 %v3033
        %v3105 = vpop.f32.mrf.mxu0
        %v3106 = vadd.f32 %v2945, %v3105
        %v3107 = vpop.f32.mrf.mxu0
        %v3108 = vadd.f32 %v2947, %v3107
        %3109 = vmatmul.bf16.gmra.mxu0 %v3036
        %v3110 = vpop.f32.mrf.mxu0
        %v3111 = vadd.f32 %v2950, %v3110
        %v3112 = vpop.f32.mrf.mxu0
        %v3113 = vadd.f32 %v2952, %v3112
        %3114 = vmatmul.bf16.gmra.mxu0 %v3039
        %v3115 = vpop.f32.mrf.mxu0
        %v3116 = vadd.f32 %v2955, %v3115
        %v3117 = vpop.f32.mrf.mxu0
        %v3118 = vadd.f32 %v2957, %v3117
        %3119 = vmatmul.bf16.gmra.mxu0 %v3042
        %v3120 = vpop.f32.mrf.mxu0
        %v3121 = vadd.f32 %v2960, %v3120
        %v3122 = vpop.f32.mrf.mxu0
        %v3123 = vadd.f32 %v2962, %v3122
        %3124 = vmatmul.bf16.gmra.mxu0 %v3045
        %v3125 = vpop.f32.mrf.mxu0
        %v3126 = vadd.f32 %v2965, %v3125
        %v3127 = vpop.f32.mrf.mxu0
        %v3128 = vadd.f32 %v2967, %v3127
        %3129 = vmatmul.bf16.gmra.mxu0 %v3048
        %v3130 = vpop.f32.mrf.mxu0
        %v3131 = vadd.f32 %v2970, %v3130
        %v3132 = vpop.f32.mrf.mxu0
        %v3133 = vadd.f32 %v2972, %v3132
        %3134 = vmatmul.bf16.gmra.mxu0 %v3051
        %v3135 = vpop.f32.mrf.mxu0
        %v3136 = vadd.f32 %v2975, %v3135
        %v3137 = vpop.f32.mrf.mxu0
        %v3138 = vadd.f32 %v2977, %v3137
        %3139 = vmatmul.bf16.gmra.mxu0 %v3054
        %v3140 = vpop.f32.mrf.mxu0
        %v3141 = vadd.f32 %v2980, %v3140
        %v3142 = vpop.f32.mrf.mxu0
        %v3143 = vadd.f32 %v2982, %v3142
        %3144 = vdwg.mxu0
        %v3145 = vld [vmem:[#allocation2 + $0x2] sm:$0xff]
        %v3146 = vld [vmem:[#allocation2 + $0xa] sm:$0xff]
        %v3147 = vld [vmem:[#allocation2 + $0x1a] sm:$0xff]
        %v3148 = vld [vmem:[#allocation2 + $0x22] sm:$0xff]
        %v3149 = vld [vmem:[#allocation2 + $0x32] sm:$0xff]
        %v3150 = vld [vmem:[#allocation2 + $0x3a] sm:$0xff]
        %v3151 = vld [vmem:[#allocation2 + $0x4a] sm:$0xff]
        %v3152 = vld [vmem:[#allocation2 + $0x52] sm:$0xff]
        %v3153 = vld [vmem:[#allocation2 + $0x62] sm:$0xff]
        %v3154 = vld [vmem:[#allocation2 + $0x6a] sm:$0xff]
        %v3155 = vld [vmem:[#allocation2 + $0x7a] sm:$0xff]
        %v3156 = vld [vmem:[#allocation2 + $0x82] sm:$0xff]
        %v3157 = vld [vmem:[#allocation2 + $0x92] sm:$0xff]
        %v3158 = vld [vmem:[#allocation2 + $0x9a] sm:$0xff]
        %v3159 = vld [vmem:[#allocation2 + $0xaa] sm:$0xff]
        %v3160 = vld [vmem:[#allocation2 + $0xb2] sm:$0xff]
        %v3161 = vld [vmem:[#allocation2 + $0xc2] sm:$0xff]
        %v3162 = vld [vmem:[#allocation2 + $0xca] sm:$0xff]
        %v3163 = vld [vmem:[#allocation2 + $0xda] sm:$0xff]
        %v3164 = vld [vmem:[#allocation2 + $0xe2] sm:$0xff]
        %v3165 = vld [vmem:[#allocation2 + $0xf2] sm:$0xff]
        %v3166 = vld [vmem:[#allocation2 + $0xfa] sm:$0xff]
        %v3167 = vld [vmem:[#allocation2 + $0x10a] sm:$0xff]
        %v3168 = vld [vmem:[#allocation2 + $0x112] sm:$0xff]
        %v3169 = vld [vmem:[#allocation2 + $0x122] sm:$0xff]
        %v3170 = vld [vmem:[#allocation2 + $0x12a] sm:$0xff]
        %v3171 = vld [vmem:[#allocation2 + $0x13a] sm:$0xff]
        %v3172 = vld [vmem:[#allocation2 + $0x142] sm:$0xff]
        %v3173 = vld [vmem:[#allocation2 + $0x152] sm:$0xff]
        %v3174 = vld [vmem:[#allocation2 + $0x15a] sm:$0xff]
        %v3175 = vld [vmem:[#allocation2 + $0x16a] sm:$0xff]
        %v3176 = vld [vmem:[#allocation2 + $0x172] sm:$0xff]
        %v3177 = vpack.c.bf16 %v3146, %v3145
        %v3178 = vpack.c.bf16 %v3148, %v3147
        %v3179 = vpack.c.bf16 %v3150, %v3149
        %v3180 = vpack.c.bf16 %v3152, %v3151
        %v3181 = vpack.c.bf16 %v3154, %v3153
        %v3182 = vpack.c.bf16 %v3156, %v3155
        %v3183 = vpack.c.bf16 %v3158, %v3157
        %v3184 = vpack.c.bf16 %v3160, %v3159
        %v3185 = vpack.c.bf16 %v3162, %v3161
        %v3186 = vpack.c.bf16 %v3164, %v3163
        %v3187 = vpack.c.bf16 %v3166, %v3165
        %v3188 = vpack.c.bf16 %v3168, %v3167
        %v3189 = vpack.c.bf16 %v3170, %v3169
        %v3190 = vpack.c.bf16 %v3172, %v3171
        %v3191 = vpack.c.bf16 %v3174, %v3173
        %v3192 = vpack.c.bf16 %v3176, %v3175
        %v3193 = vld [vmem:[%s842] sm:$0xf]
        %v3194 = vld [vmem:[%s842 + $0x4] sm:$0xf]
        %v3195 = vld [vmem:[%s842 + $0x8] sm:$0xf]
        %v3196 = vld [vmem:[%s842 + $0xc] sm:$0xf]
        %v3197 = vld [vmem:[%s842 + $0x10] sm:$0xf]
        %v3198 = vld [vmem:[%s842 + $0x14] sm:$0xf]
        %v3199 = vld [vmem:[%s842 + $0x18] sm:$0xf]
        %v3200 = vld [vmem:[%s842 + $0x1c] sm:$0xf]
        %v3209 = vunpack.c.l.b16 %v3193
        %v3210 = vunpack.c.l.b16 %v3194
        %v3211 = vunpack.c.l.b16 %v3195
        %v3212 = vunpack.c.l.b16 %v3196
        %v3213 = vunpack.c.l.b16 %v3197
        %v3214 = vunpack.c.l.b16 %v3198
        %v3215 = vunpack.c.l.b16 %v3199
        %v3216 = vunpack.c.l.b16 %v3200
        %v3217 = vpack.c.b16 %v3210, %v3209
        %v3218 = vpack.c.b16 %v3212, %v3211
        %v3219 = vpack.c.b16 %v3214, %v3213
        %v3220 = vpack.c.b16 %v3216, %v3215
        %v3226 = vsel %vm236, %v3177, 0
        %v3229 = vsel %vm236, %v3178, 0
        %v3232 = vsel %vm236, %v3179, 0
        %v3235 = vsel %vm236, %v3180, 0
        %v3238 = vsel %vm236, %v3181, 0
        %v3241 = vsel %vm236, %v3182, 0
        %v3244 = vsel %vm236, %v3183, 0
        %v3247 = vsel %vm236, %v3184, 0
        %v3250 = vsel %vm236, %v3185, 0
        %v3253 = vsel %vm236, %v3186, 0
        %v3256 = vsel %vm236, %v3187, 0
        %v3259 = vsel %vm236, %v3188, 0
        %v3262 = vsel %vm236, %v3189, 0
        %v3265 = vsel %vm236, %v3190, 0
        %v3268 = vsel %vm236, %v3191, 0
        %v3271 = vsel %vm236, %v3192, 0
        %3273 = vmatpush.bf16.msra.mxu0 0
        %3274 = vmatpush.bf16.msra.mxu0 0
        %3275 = vmatpush.bf16.msra.mxu0 0
        %3276 = vmatpush.bf16.msra.mxu0 0
        %3277 = vmatpush.bf16.msra.mxu0 %v3220
        %3278 = vmatpush.bf16.msra.mxu0 %v3219
        %3279 = vmatpush.bf16.msra.mxu0 %v3218
        %3280 = vmatpush.bf16.msra.mxu0 %v3217
        %3281 = vmatmul.bf16.gmra.mxu0 %v3226
        %v3282 = vpop.f32.mrf.mxu0
        %v3283 = vadd.f32 0.0, %v3282
        %v3284 = vpop.f32.mrf.mxu0
        %v3285 = vadd.f32 0.0, %v3284
        %3286 = vmatmul.bf16.gmra.mxu0 %v3229
        %v3287 = vpop.f32.mrf.mxu0
        %v3288 = vadd.f32 0.0, %v3287
        %v3289 = vpop.f32.mrf.mxu0
        %v3290 = vadd.f32 0.0, %v3289
        %3291 = vmatmul.bf16.gmra.mxu0 %v3232
        %v3292 = vpop.f32.mrf.mxu0
        %v3293 = vadd.f32 0.0, %v3292
        %v3294 = vpop.f32.mrf.mxu0
        %v3295 = vadd.f32 0.0, %v3294
        %3296 = vmatmul.bf16.gmra.mxu0 %v3235
        %v3297 = vpop.f32.mrf.mxu0
        %v3298 = vadd.f32 0.0, %v3297
        %v3299 = vpop.f32.mrf.mxu0
        %v3300 = vadd.f32 0.0, %v3299
        %3301 = vmatmul.bf16.gmra.mxu0 %v3238
        %v3302 = vpop.f32.mrf.mxu0
        %v3303 = vadd.f32 0.0, %v3302
        %v3304 = vpop.f32.mrf.mxu0
        %v3305 = vadd.f32 0.0, %v3304
        %3306 = vmatmul.bf16.gmra.mxu0 %v3241
        %v3307 = vpop.f32.mrf.mxu0
        %v3308 = vadd.f32 0.0, %v3307
        %v3309 = vpop.f32.mrf.mxu0
        %v3310 = vadd.f32 0.0, %v3309
        %3311 = vmatmul.bf16.gmra.mxu0 %v3244
        %v3312 = vpop.f32.mrf.mxu0
        %v3313 = vadd.f32 0.0, %v3312
        %v3314 = vpop.f32.mrf.mxu0
        %v3315 = vadd.f32 0.0, %v3314
        %3316 = vmatmul.bf16.gmra.mxu0 %v3247
        %v3317 = vpop.f32.mrf.mxu0
        %v3318 = vadd.f32 0.0, %v3317
        %v3319 = vpop.f32.mrf.mxu0
        %v3320 = vadd.f32 0.0, %v3319
        %3321 = vmatmul.bf16.gmra.mxu0 %v3250
        %v3322 = vpop.f32.mrf.mxu0
        %v3323 = vadd.f32 0.0, %v3322
        %v3324 = vpop.f32.mrf.mxu0
        %v3325 = vadd.f32 0.0, %v3324
        %3326 = vmatmul.bf16.gmra.mxu0 %v3253
        %v3327 = vpop.f32.mrf.mxu0
        %v3328 = vadd.f32 0.0, %v3327
        %v3329 = vpop.f32.mrf.mxu0
        %v3330 = vadd.f32 0.0, %v3329
        %3331 = vmatmul.bf16.gmra.mxu0 %v3256
        %v3332 = vpop.f32.mrf.mxu0
        %v3333 = vadd.f32 0.0, %v3332
        %v3334 = vpop.f32.mrf.mxu0
        %v3335 = vadd.f32 0.0, %v3334
        %3336 = vmatmul.bf16.gmra.mxu0 %v3259
        %v3337 = vpop.f32.mrf.mxu0
        %v3338 = vadd.f32 0.0, %v3337
        %v3339 = vpop.f32.mrf.mxu0
        %v3340 = vadd.f32 0.0, %v3339
        %3341 = vmatmul.bf16.gmra.mxu0 %v3262
        %v3342 = vpop.f32.mrf.mxu0
        %v3343 = vadd.f32 0.0, %v3342
        %v3344 = vpop.f32.mrf.mxu0
        %v3345 = vadd.f32 0.0, %v3344
        %3346 = vmatmul.bf16.gmra.mxu0 %v3265
        %v3347 = vpop.f32.mrf.mxu0
        %v3348 = vadd.f32 0.0, %v3347
        %v3349 = vpop.f32.mrf.mxu0
        %v3350 = vadd.f32 0.0, %v3349
        %3351 = vmatmul.bf16.gmra.mxu0 %v3268
        %v3352 = vpop.f32.mrf.mxu0
        %v3353 = vadd.f32 0.0, %v3352
        %v3354 = vpop.f32.mrf.mxu0
        %v3355 = vadd.f32 0.0, %v3354
        %3356 = vmatmul.bf16.gmra.mxu0 %v3271
        %v3357 = vpop.f32.mrf.mxu0
        %v3358 = vadd.f32 0.0, %v3357
        %v3359 = vpop.f32.mrf.mxu0
        %v3360 = vadd.f32 0.0, %v3359
        %3361 = vdwg.mxu0
        %v3362 = vadd.f32 %v3066, %v3283
        %v3363 = vadd.f32 %v3068, %v3285
        %v3364 = vadd.f32 %v3071, %v3288
        %v3365 = vadd.f32 %v3073, %v3290
        %v3366 = vadd.f32 %v3076, %v3293
        %v3367 = vadd.f32 %v3078, %v3295
        %v3368 = vadd.f32 %v3081, %v3298
        %v3369 = vadd.f32 %v3083, %v3300
        %v3370 = vadd.f32 %v3086, %v3303
        %v3371 = vadd.f32 %v3088, %v3305
        %v3372 = vadd.f32 %v3091, %v3308
        %v3373 = vadd.f32 %v3093, %v3310
        %v3374 = vadd.f32 %v3096, %v3313
        %v3375 = vadd.f32 %v3098, %v3315
        %v3376 = vadd.f32 %v3101, %v3318
        %v3377 = vadd.f32 %v3103, %v3320
        %v3378 = vadd.f32 %v3106, %v3323
        %v3379 = vadd.f32 %v3108, %v3325
        %v3380 = vadd.f32 %v3111, %v3328
        %v3381 = vadd.f32 %v3113, %v3330
        %v3382 = vadd.f32 %v3116, %v3333
        %v3383 = vadd.f32 %v3118, %v3335
        %v3384 = vadd.f32 %v3121, %v3338
        %v3385 = vadd.f32 %v3123, %v3340
        %v3386 = vadd.f32 %v3126, %v3343
        %v3387 = vadd.f32 %v3128, %v3345
        %v3388 = vadd.f32 %v3131, %v3348
        %v3389 = vadd.f32 %v3133, %v3350
        %v3390 = vadd.f32 %v3136, %v3353
        %v3391 = vadd.f32 %v3138, %v3355
        %v3392 = vadd.f32 %v3141, %v3358
        %v3393 = vadd.f32 %v3143, %v3360
        %v3394 = vld [vmem:[%s326] sm:$0xff]
        %v3395 = vld [vmem:[%s326 + $0x8] sm:$0xff]
        %v3396 = vld [vmem:[%s326 + $0x18] sm:$0xff]
        %v3397 = vld [vmem:[%s326 + $0x20] sm:$0xff]
        %v3398 = vld [vmem:[%s326 + $0x30] sm:$0xff]
        %v3399 = vld [vmem:[%s326 + $0x38] sm:$0xff]
        %v3400 = vld [vmem:[%s326 + $0x48] sm:$0xff]
        %v3401 = vld [vmem:[%s326 + $0x50] sm:$0xff]
        %v3402 = vld [vmem:[%s326 + $0x60] sm:$0xff]
        %v3403 = vld [vmem:[%s326 + $0x68] sm:$0xff]
        %v3404 = vld [vmem:[%s326 + $0x78] sm:$0xff]
        %v3405 = vld [vmem:[%s326 + $0x80] sm:$0xff]
        %v3406 = vld [vmem:[%s326 + $0x90] sm:$0xff]
        %v3407 = vld [vmem:[%s326 + $0x98] sm:$0xff]
        %v3408 = vld [vmem:[%s326 + $0xa8] sm:$0xff]
        %v3409 = vld [vmem:[%s326 + $0xb0] sm:$0xff]
        %v3410 = vld [vmem:[%s326 + $0xc0] sm:$0xff]
        %v3411 = vld [vmem:[%s326 + $0xc8] sm:$0xff]
        %v3412 = vld [vmem:[%s326 + $0xd8] sm:$0xff]
        %v3413 = vld [vmem:[%s326 + $0xe0] sm:$0xff]
        %v3414 = vld [vmem:[%s326 + $0xf0] sm:$0xff]
        %v3415 = vld [vmem:[%s326 + $0xf8] sm:$0xff]
        %v3416 = vld [vmem:[%s326 + $0x108] sm:$0xff]
        %v3417 = vld [vmem:[%s326 + $0x110] sm:$0xff]
        %v3418 = vld [vmem:[%s326 + $0x120] sm:$0xff]
        %v3419 = vld [vmem:[%s326 + $0x128] sm:$0xff]
        %v3420 = vld [vmem:[%s326 + $0x138] sm:$0xff]
        %v3421 = vld [vmem:[%s326 + $0x140] sm:$0xff]
        %v3422 = vld [vmem:[%s326 + $0x150] sm:$0xff]
        %v3423 = vld [vmem:[%s326 + $0x158] sm:$0xff]
        %v3424 = vld [vmem:[%s326 + $0x168] sm:$0xff]
        %v3425 = vld [vmem:[%s326 + $0x170] sm:$0xff]
        %v3426 = vpack.c.bf16 %v3395, %v3394
        %v3427 = vpack.c.bf16 %v3397, %v3396
        %v3428 = vpack.c.bf16 %v3399, %v3398
        %v3429 = vpack.c.bf16 %v3401, %v3400
        %v3430 = vpack.c.bf16 %v3403, %v3402
        %v3431 = vpack.c.bf16 %v3405, %v3404
        %v3432 = vpack.c.bf16 %v3407, %v3406
        %v3433 = vpack.c.bf16 %v3409, %v3408
        %v3434 = vpack.c.bf16 %v3411, %v3410
        %v3435 = vpack.c.bf16 %v3413, %v3412
        %v3436 = vpack.c.bf16 %v3415, %v3414
        %v3437 = vpack.c.bf16 %v3417, %v3416
        %v3438 = vpack.c.bf16 %v3419, %v3418
        %v3439 = vpack.c.bf16 %v3421, %v3420
        %v3440 = vpack.c.bf16 %v3423, %v3422
        %v3441 = vpack.c.bf16 %v3425, %v3424
        %v3442 = vld [vmem:[%s1092] sm:$0xf]
        %v3443 = vld [vmem:[%s1092 + $0x4] sm:$0xf]
        %v3444 = vld [vmem:[%s1092 + $0x8] sm:$0xf]
        %v3445 = vld [vmem:[%s1092 + $0xc] sm:$0xf]
        %v3446 = vld [vmem:[%s1092 + $0x10] sm:$0xf]
        %v3447 = vld [vmem:[%s1092 + $0x14] sm:$0xf]
        %v3448 = vld [vmem:[%s1092 + $0x18] sm:$0xf]
        %v3449 = vld [vmem:[%s1092 + $0x1c] sm:$0xf]
        %v3458 = vunpack.c.l.b16 %v3442
        %v3459 = vunpack.c.l.b16 %v3443
        %v3460 = vunpack.c.l.b16 %v3444
        %v3461 = vunpack.c.l.b16 %v3445
        %v3462 = vunpack.c.l.b16 %v3446
        %v3463 = vunpack.c.l.b16 %v3447
        %v3464 = vunpack.c.l.b16 %v3448
        %v3465 = vunpack.c.l.b16 %v3449
        %v3466 = vpack.c.b16 %v3459, %v3458
        %v3467 = vpack.c.b16 %v3461, %v3460
        %v3468 = vpack.c.b16 %v3463, %v3462
        %v3469 = vpack.c.b16 %v3465, %v3464
        %v3475 = vsel %vm236, %v3426, 0
        %v3478 = vsel %vm236, %v3427, 0
        %v3481 = vsel %vm236, %v3428, 0
        %v3484 = vsel %vm236, %v3429, 0
        %v3487 = vsel %vm236, %v3430, 0
        %v3490 = vsel %vm236, %v3431, 0
        %v3493 = vsel %vm236, %v3432, 0
        %v3496 = vsel %vm236, %v3433, 0
        %v3499 = vsel %vm236, %v3434, 0
        %v3502 = vsel %vm236, %v3435, 0
        %v3505 = vsel %vm236, %v3436, 0
        %v3508 = vsel %vm236, %v3437, 0
        %v3511 = vsel %vm236, %v3438, 0
        %v3514 = vsel %vm236, %v3439, 0
        %v3517 = vsel %vm236, %v3440, 0
        %v3520 = vsel %vm236, %v3441, 0
        %3522 = vmatpush.bf16.msra.mxu0 0
        %3523 = vmatpush.bf16.msra.mxu0 0
        %3524 = vmatpush.bf16.msra.mxu0 0
        %3525 = vmatpush.bf16.msra.mxu0 0
        %3526 = vmatpush.bf16.msra.mxu0 %v3469
        %3527 = vmatpush.bf16.msra.mxu0 %v3468
        %3528 = vmatpush.bf16.msra.mxu0 %v3467
        %3529 = vmatpush.bf16.msra.mxu0 %v3466
        %3530 = vmatmul.bf16.gmra.mxu0 %v3475
        %v3531 = vpop.f32.mrf.mxu0
        %v3532 = vadd.f32 0.0, %v3531
        %v3533 = vpop.f32.mrf.mxu0
        %v3534 = vadd.f32 0.0, %v3533
        %3535 = vmatmul.bf16.gmra.mxu0 %v3478
        %v3536 = vpop.f32.mrf.mxu0
        %v3537 = vadd.f32 0.0, %v3536
        %v3538 = vpop.f32.mrf.mxu0
        %v3539 = vadd.f32 0.0, %v3538
        %3540 = vmatmul.bf16.gmra.mxu0 %v3481
        %v3541 = vpop.f32.mrf.mxu0
        %v3542 = vadd.f32 0.0, %v3541
        %v3543 = vpop.f32.mrf.mxu0
        %v3544 = vadd.f32 0.0, %v3543
        %3545 = vmatmul.bf16.gmra.mxu0 %v3484
        %v3546 = vpop.f32.mrf.mxu0
        %v3547 = vadd.f32 0.0, %v3546
        %v3548 = vpop.f32.mrf.mxu0
        %v3549 = vadd.f32 0.0, %v3548
        %3550 = vmatmul.bf16.gmra.mxu0 %v3487
        %v3551 = vpop.f32.mrf.mxu0
        %v3552 = vadd.f32 0.0, %v3551
        %v3553 = vpop.f32.mrf.mxu0
        %v3554 = vadd.f32 0.0, %v3553
        %3555 = vmatmul.bf16.gmra.mxu0 %v3490
        %v3556 = vpop.f32.mrf.mxu0
        %v3557 = vadd.f32 0.0, %v3556
        %v3558 = vpop.f32.mrf.mxu0
        %v3559 = vadd.f32 0.0, %v3558
        %3560 = vmatmul.bf16.gmra.mxu0 %v3493
        %v3561 = vpop.f32.mrf.mxu0
        %v3562 = vadd.f32 0.0, %v3561
        %v3563 = vpop.f32.mrf.mxu0
        %v3564 = vadd.f32 0.0, %v3563
        %3565 = vmatmul.bf16.gmra.mxu0 %v3496
        %v3566 = vpop.f32.mrf.mxu0
        %v3567 = vadd.f32 0.0, %v3566
        %v3568 = vpop.f32.mrf.mxu0
        %v3569 = vadd.f32 0.0, %v3568
        %3570 = vmatmul.bf16.gmra.mxu0 %v3499
        %v3571 = vpop.f32.mrf.mxu0
        %v3572 = vadd.f32 0.0, %v3571
        %v3573 = vpop.f32.mrf.mxu0
        %v3574 = vadd.f32 0.0, %v3573
        %3575 = vmatmul.bf16.gmra.mxu0 %v3502
        %v3576 = vpop.f32.mrf.mxu0
        %v3577 = vadd.f32 0.0, %v3576
        %v3578 = vpop.f32.mrf.mxu0
        %v3579 = vadd.f32 0.0, %v3578
        %3580 = vmatmul.bf16.gmra.mxu0 %v3505
        %v3581 = vpop.f32.mrf.mxu0
        %v3582 = vadd.f32 0.0, %v3581
        %v3583 = vpop.f32.mrf.mxu0
        %v3584 = vadd.f32 0.0, %v3583
        %3585 = vmatmul.bf16.gmra.mxu0 %v3508
        %v3586 = vpop.f32.mrf.mxu0
        %v3587 = vadd.f32 0.0, %v3586
        %v3588 = vpop.f32.mrf.mxu0
        %v3589 = vadd.f32 0.0, %v3588
        %3590 = vmatmul.bf16.gmra.mxu0 %v3511
        %v3591 = vpop.f32.mrf.mxu0
        %v3592 = vadd.f32 0.0, %v3591
        %v3593 = vpop.f32.mrf.mxu0
        %v3594 = vadd.f32 0.0, %v3593
        %3595 = vmatmul.bf16.gmra.mxu0 %v3514
        %v3596 = vpop.f32.mrf.mxu0
        %v3597 = vadd.f32 0.0, %v3596
        %v3598 = vpop.f32.mrf.mxu0
        %v3599 = vadd.f32 0.0, %v3598
        %3600 = vmatmul.bf16.gmra.mxu0 %v3517
        %v3601 = vpop.f32.mrf.mxu0
        %v3602 = vadd.f32 0.0, %v3601
        %v3603 = vpop.f32.mrf.mxu0
        %v3604 = vadd.f32 0.0, %v3603
        %3605 = vmatmul.bf16.gmra.mxu0 %v3520
        %v3606 = vpop.f32.mrf.mxu0
        %v3607 = vadd.f32 0.0, %v3606
        %v3608 = vpop.f32.mrf.mxu0
        %v3609 = vadd.f32 0.0, %v3608
        %3610 = vdwg.mxu0
        %v3611 = vadd.f32 %v3362, %v3532
        %v3612 = vadd.f32 %v3363, %v3534
        %v3613 = vadd.f32 %v3364, %v3537
        %v3614 = vadd.f32 %v3365, %v3539
        %v3615 = vadd.f32 %v3366, %v3542
        %v3616 = vadd.f32 %v3367, %v3544
        %v3617 = vadd.f32 %v3368, %v3547
        %v3618 = vadd.f32 %v3369, %v3549
        %v3619 = vadd.f32 %v3370, %v3552
        %v3620 = vadd.f32 %v3371, %v3554
        %v3621 = vadd.f32 %v3372, %v3557
        %v3622 = vadd.f32 %v3373, %v3559
        %v3623 = vadd.f32 %v3374, %v3562
        %v3624 = vadd.f32 %v3375, %v3564
        %v3625 = vadd.f32 %v3376, %v3567
        %v3626 = vadd.f32 %v3377, %v3569
        %v3627 = vadd.f32 %v3378, %v3572
        %v3628 = vadd.f32 %v3379, %v3574
        %v3629 = vadd.f32 %v3380, %v3577
        %v3630 = vadd.f32 %v3381, %v3579
        %v3631 = vadd.f32 %v3382, %v3582
        %v3632 = vadd.f32 %v3383, %v3584
        %v3633 = vadd.f32 %v3384, %v3587
        %v3634 = vadd.f32 %v3385, %v3589
        %v3635 = vadd.f32 %v3386, %v3592
        %v3636 = vadd.f32 %v3387, %v3594
        %v3637 = vadd.f32 %v3388, %v3597
        %v3638 = vadd.f32 %v3389, %v3599
        %v3639 = vadd.f32 %v3390, %v3602
        %v3640 = vadd.f32 %v3391, %v3604
        %v3641 = vadd.f32 %v3392, %v3607
        %v3642 = vadd.f32 %v3393, %v3609
        %v3643 = vld [vmem:[%s326 + $0x1] sm:$0xff]
        %v3644 = vld [vmem:[%s326 + $0x9] sm:$0xff]
        %v3645 = vld [vmem:[%s326 + $0x19] sm:$0xff]
        %v3646 = vld [vmem:[%s326 + $0x21] sm:$0xff]
        %v3647 = vld [vmem:[%s326 + $0x31] sm:$0xff]
        %v3648 = vld [vmem:[%s326 + $0x39] sm:$0xff]
        %v3649 = vld [vmem:[%s326 + $0x49] sm:$0xff]
        %v3650 = vld [vmem:[%s326 + $0x51] sm:$0xff]
        %v3651 = vld [vmem:[%s326 + $0x61] sm:$0xff]
        %v3652 = vld [vmem:[%s326 + $0x69] sm:$0xff]
        %v3653 = vld [vmem:[%s326 + $0x79] sm:$0xff]
        %v3654 = vld [vmem:[%s326 + $0x81] sm:$0xff]
        %v3655 = vld [vmem:[%s326 + $0x91] sm:$0xff]
        %v3656 = vld [vmem:[%s326 + $0x99] sm:$0xff]
        %v3657 = vld [vmem:[%s326 + $0xa9] sm:$0xff]
        %v3658 = vld [vmem:[%s326 + $0xb1] sm:$0xff]
        %v3659 = vld [vmem:[%s326 + $0xc1] sm:$0xff]
        %v3660 = vld [vmem:[%s326 + $0xc9] sm:$0xff]
        %v3661 = vld [vmem:[%s326 + $0xd9] sm:$0xff]
        %v3662 = vld [vmem:[%s326 + $0xe1] sm:$0xff]
        %v3663 = vld [vmem:[%s326 + $0xf1] sm:$0xff]
        %v3664 = vld [vmem:[%s326 + $0xf9] sm:$0xff]
        %v3665 = vld [vmem:[%s326 + $0x109] sm:$0xff]
        %v3666 = vld [vmem:[%s326 + $0x111] sm:$0xff]
        %v3667 = vld [vmem:[%s326 + $0x121] sm:$0xff]
        %v3668 = vld [vmem:[%s326 + $0x129] sm:$0xff]
        %v3669 = vld [vmem:[%s326 + $0x139] sm:$0xff]
        %v3670 = vld [vmem:[%s326 + $0x141] sm:$0xff]
        %v3671 = vld [vmem:[%s326 + $0x151] sm:$0xff]
        %v3672 = vld [vmem:[%s326 + $0x159] sm:$0xff]
        %v3673 = vld [vmem:[%s326 + $0x169] sm:$0xff]
        %v3674 = vld [vmem:[%s326 + $0x171] sm:$0xff]
        %v3675 = vpack.c.bf16 %v3644, %v3643
        %v3676 = vpack.c.bf16 %v3646, %v3645
        %v3677 = vpack.c.bf16 %v3648, %v3647
        %v3678 = vpack.c.bf16 %v3650, %v3649
        %v3679 = vpack.c.bf16 %v3652, %v3651
        %v3680 = vpack.c.bf16 %v3654, %v3653
        %v3681 = vpack.c.bf16 %v3656, %v3655
        %v3682 = vpack.c.bf16 %v3658, %v3657
        %v3683 = vpack.c.bf16 %v3660, %v3659
        %v3684 = vpack.c.bf16 %v3662, %v3661
        %v3685 = vpack.c.bf16 %v3664, %v3663
        %v3686 = vpack.c.bf16 %v3666, %v3665
        %v3687 = vpack.c.bf16 %v3668, %v3667
        %v3688 = vpack.c.bf16 %v3670, %v3669
        %v3689 = vpack.c.bf16 %v3672, %v3671
        %v3690 = vpack.c.bf16 %v3674, %v3673
        %v3691 = vld [vmem:[%s1342] sm:$0xf]
        %v3692 = vld [vmem:[%s1342 + $0x4] sm:$0xf]
        %v3693 = vld [vmem:[%s1342 + $0x8] sm:$0xf]
        %v3694 = vld [vmem:[%s1342 + $0xc] sm:$0xf]
        %v3695 = vld [vmem:[%s1342 + $0x10] sm:$0xf]
        %v3696 = vld [vmem:[%s1342 + $0x14] sm:$0xf]
        %v3697 = vld [vmem:[%s1342 + $0x18] sm:$0xf]
        %v3698 = vld [vmem:[%s1342 + $0x1c] sm:$0xf]
        %v3707 = vunpack.c.l.b16 %v3691
        %v3708 = vunpack.c.l.b16 %v3692
        %v3709 = vunpack.c.l.b16 %v3693
        %v3710 = vunpack.c.l.b16 %v3694
        %v3711 = vunpack.c.l.b16 %v3695
        %v3712 = vunpack.c.l.b16 %v3696
        %v3713 = vunpack.c.l.b16 %v3697
        %v3714 = vunpack.c.l.b16 %v3698
        %v3715 = vpack.c.b16 %v3708, %v3707
        %v3716 = vpack.c.b16 %v3710, %v3709
        %v3717 = vpack.c.b16 %v3712, %v3711
        %v3718 = vpack.c.b16 %v3714, %v3713
        %v3724 = vsel %vm236, %v3675, 0
        %v3727 = vsel %vm236, %v3676, 0
        %v3730 = vsel %vm236, %v3677, 0
        %v3733 = vsel %vm236, %v3678, 0
        %v3736 = vsel %vm236, %v3679, 0
        %v3739 = vsel %vm236, %v3680, 0
        %v3742 = vsel %vm236, %v3681, 0
        %v3745 = vsel %vm236, %v3682, 0
        %v3748 = vsel %vm236, %v3683, 0
        %v3751 = vsel %vm236, %v3684, 0
        %v3754 = vsel %vm236, %v3685, 0
        %v3757 = vsel %vm236, %v3686, 0
        %v3760 = vsel %vm236, %v3687, 0
        %v3763 = vsel %vm236, %v3688, 0
        %v3766 = vsel %vm236, %v3689, 0
        %v3769 = vsel %vm236, %v3690, 0
        %3771 = vmatpush.bf16.msra.mxu0 0
        %3772 = vmatpush.bf16.msra.mxu0 0
        %3773 = vmatpush.bf16.msra.mxu0 0
        %3774 = vmatpush.bf16.msra.mxu0 0
        %3775 = vmatpush.bf16.msra.mxu0 %v3718
        %3776 = vmatpush.bf16.msra.mxu0 %v3717
        %3777 = vmatpush.bf16.msra.mxu0 %v3716
        %3778 = vmatpush.bf16.msra.mxu0 %v3715
        %3779 = vmatmul.bf16.gmra.mxu0 %v3724
        %v3780 = vpop.f32.mrf.mxu0
        %v3781 = vadd.f32 0.0, %v3780
        %v3782 = vpop.f32.mrf.mxu0
        %v3783 = vadd.f32 0.0, %v3782
        %3784 = vmatmul.bf16.gmra.mxu0 %v3727
        %v3785 = vpop.f32.mrf.mxu0
        %v3786 = vadd.f32 0.0, %v3785
        %v3787 = vpop.f32.mrf.mxu0
        %v3788 = vadd.f32 0.0, %v3787
        %3789 = vmatmul.bf16.gmra.mxu0 %v3730
        %v3790 = vpop.f32.mrf.mxu0
        %v3791 = vadd.f32 0.0, %v3790
        %v3792 = vpop.f32.mrf.mxu0
        %v3793 = vadd.f32 0.0, %v3792
        %3794 = vmatmul.bf16.gmra.mxu0 %v3733
        %v3795 = vpop.f32.mrf.mxu0
        %v3796 = vadd.f32 0.0, %v3795
        %v3797 = vpop.f32.mrf.mxu0
        %v3798 = vadd.f32 0.0, %v3797
        %3799 = vmatmul.bf16.gmra.mxu0 %v3736
        %v3800 = vpop.f32.mrf.mxu0
        %v3801 = vadd.f32 0.0, %v3800
        %v3802 = vpop.f32.mrf.mxu0
        %v3803 = vadd.f32 0.0, %v3802
        %3804 = vmatmul.bf16.gmra.mxu0 %v3739
        %v3805 = vpop.f32.mrf.mxu0
        %v3806 = vadd.f32 0.0, %v3805
        %v3807 = vpop.f32.mrf.mxu0
        %v3808 = vadd.f32 0.0, %v3807
        %3809 = vmatmul.bf16.gmra.mxu0 %v3742
        %v3810 = vpop.f32.mrf.mxu0
        %v3811 = vadd.f32 0.0, %v3810
        %v3812 = vpop.f32.mrf.mxu0
        %v3813 = vadd.f32 0.0, %v3812
        %3814 = vmatmul.bf16.gmra.mxu0 %v3745
        %v3815 = vpop.f32.mrf.mxu0
        %v3816 = vadd.f32 0.0, %v3815
        %v3817 = vpop.f32.mrf.mxu0
        %v3818 = vadd.f32 0.0, %v3817
        %3819 = vmatmul.bf16.gmra.mxu0 %v3748
        %v3820 = vpop.f32.mrf.mxu0
        %v3821 = vadd.f32 0.0, %v3820
        %v3822 = vpop.f32.mrf.mxu0
        %v3823 = vadd.f32 0.0, %v3822
        %3824 = vmatmul.bf16.gmra.mxu0 %v3751
        %v3825 = vpop.f32.mrf.mxu0
        %v3826 = vadd.f32 0.0, %v3825
        %v3827 = vpop.f32.mrf.mxu0
        %v3828 = vadd.f32 0.0, %v3827
        %3829 = vmatmul.bf16.gmra.mxu0 %v3754
        %v3830 = vpop.f32.mrf.mxu0
        %v3831 = vadd.f32 0.0, %v3830
        %v3832 = vpop.f32.mrf.mxu0
        %v3833 = vadd.f32 0.0, %v3832
        %3834 = vmatmul.bf16.gmra.mxu0 %v3757
        %v3835 = vpop.f32.mrf.mxu0
        %v3836 = vadd.f32 0.0, %v3835
        %v3837 = vpop.f32.mrf.mxu0
        %v3838 = vadd.f32 0.0, %v3837
        %3839 = vmatmul.bf16.gmra.mxu0 %v3760
        %v3840 = vpop.f32.mrf.mxu0
        %v3841 = vadd.f32 0.0, %v3840
        %v3842 = vpop.f32.mrf.mxu0
        %v3843 = vadd.f32 0.0, %v3842
        %3844 = vmatmul.bf16.gmra.mxu0 %v3763
        %v3845 = vpop.f32.mrf.mxu0
        %v3846 = vadd.f32 0.0, %v3845
        %v3847 = vpop.f32.mrf.mxu0
        %v3848 = vadd.f32 0.0, %v3847
        %3849 = vmatmul.bf16.gmra.mxu0 %v3766
        %v3850 = vpop.f32.mrf.mxu0
        %v3851 = vadd.f32 0.0, %v3850
        %v3852 = vpop.f32.mrf.mxu0
        %v3853 = vadd.f32 0.0, %v3852
        %3854 = vmatmul.bf16.gmra.mxu0 %v3769
        %v3855 = vpop.f32.mrf.mxu0
        %v3856 = vadd.f32 0.0, %v3855
        %v3857 = vpop.f32.mrf.mxu0
        %v3858 = vadd.f32 0.0, %v3857
        %3859 = vdwg.mxu0
        %v3860 = vadd.f32 %v3611, %v3781
        %v3861 = vadd.f32 %v3612, %v3783
        %v3862 = vadd.f32 %v3613, %v3786
        %v3863 = vadd.f32 %v3614, %v3788
        %v3864 = vadd.f32 %v3615, %v3791
        %v3865 = vadd.f32 %v3616, %v3793
        %v3866 = vadd.f32 %v3617, %v3796
        %v3867 = vadd.f32 %v3618, %v3798
        %v3868 = vadd.f32 %v3619, %v3801
        %v3869 = vadd.f32 %v3620, %v3803
        %v3870 = vadd.f32 %v3621, %v3806
        %v3871 = vadd.f32 %v3622, %v3808
        %v3872 = vadd.f32 %v3623, %v3811
        %v3873 = vadd.f32 %v3624, %v3813
        %v3874 = vadd.f32 %v3625, %v3816
        %v3875 = vadd.f32 %v3626, %v3818
        %v3876 = vadd.f32 %v3627, %v3821
        %v3877 = vadd.f32 %v3628, %v3823
        %v3878 = vadd.f32 %v3629, %v3826
        %v3879 = vadd.f32 %v3630, %v3828
        %v3880 = vadd.f32 %v3631, %v3831
        %v3881 = vadd.f32 %v3632, %v3833
        %v3882 = vadd.f32 %v3633, %v3836
        %v3883 = vadd.f32 %v3634, %v3838
        %v3884 = vadd.f32 %v3635, %v3841
        %v3885 = vadd.f32 %v3636, %v3843
        %v3886 = vadd.f32 %v3637, %v3846
        %v3887 = vadd.f32 %v3638, %v3848
        %v3888 = vadd.f32 %v3639, %v3851
        %v3889 = vadd.f32 %v3640, %v3853
        %v3890 = vadd.f32 %v3641, %v3856
        %v3891 = vadd.f32 %v3642, %v3858
        %v3892 = vld [vmem:[%s326 + $0x2] sm:$0xff]
        %v3893 = vld [vmem:[%s326 + $0xa] sm:$0xff]
        %v3894 = vld [vmem:[%s326 + $0x1a] sm:$0xff]
        %v3895 = vld [vmem:[%s326 + $0x22] sm:$0xff]
        %v3896 = vld [vmem:[%s326 + $0x32] sm:$0xff]
        %v3897 = vld [vmem:[%s326 + $0x3a] sm:$0xff]
        %v3898 = vld [vmem:[%s326 + $0x4a] sm:$0xff]
        %v3899 = vld [vmem:[%s326 + $0x52] sm:$0xff]
        %v3900 = vld [vmem:[%s326 + $0x62] sm:$0xff]
        %v3901 = vld [vmem:[%s326 + $0x6a] sm:$0xff]
        %v3902 = vld [vmem:[%s326 + $0x7a] sm:$0xff]
        %v3903 = vld [vmem:[%s326 + $0x82] sm:$0xff]
        %v3904 = vld [vmem:[%s326 + $0x92] sm:$0xff]
        %v3905 = vld [vmem:[%s326 + $0x9a] sm:$0xff]
        %v3906 = vld [vmem:[%s326 + $0xaa] sm:$0xff]
        %v3907 = vld [vmem:[%s326 + $0xb2] sm:$0xff]
        %v3908 = vld [vmem:[%s326 + $0xc2] sm:$0xff]
        %v3909 = vld [vmem:[%s326 + $0xca] sm:$0xff]
        %v3910 = vld [vmem:[%s326 + $0xda] sm:$0xff]
        %v3911 = vld [vmem:[%s326 + $0xe2] sm:$0xff]
        %v3912 = vld [vmem:[%s326 + $0xf2] sm:$0xff]
        %v3913 = vld [vmem:[%s326 + $0xfa] sm:$0xff]
        %v3914 = vld [vmem:[%s326 + $0x10a] sm:$0xff]
        %v3915 = vld [vmem:[%s326 + $0x112] sm:$0xff]
        %v3916 = vld [vmem:[%s326 + $0x122] sm:$0xff]
        %v3917 = vld [vmem:[%s326 + $0x12a] sm:$0xff]
        %v3918 = vld [vmem:[%s326 + $0x13a] sm:$0xff]
        %v3919 = vld [vmem:[%s326 + $0x142] sm:$0xff]
        %v3920 = vld [vmem:[%s326 + $0x152] sm:$0xff]
        %v3921 = vld [vmem:[%s326 + $0x15a] sm:$0xff]
        %v3922 = vld [vmem:[%s326 + $0x16a] sm:$0xff]
        %v3923 = vld [vmem:[%s326 + $0x172] sm:$0xff]
        %v3924 = vpack.c.bf16 %v3893, %v3892
        %v3925 = vpack.c.bf16 %v3895, %v3894
        %v3926 = vpack.c.bf16 %v3897, %v3896
        %v3927 = vpack.c.bf16 %v3899, %v3898
        %v3928 = vpack.c.bf16 %v3901, %v3900
        %v3929 = vpack.c.bf16 %v3903, %v3902
        %v3930 = vpack.c.bf16 %v3905, %v3904
        %v3931 = vpack.c.bf16 %v3907, %v3906
        %v3932 = vpack.c.bf16 %v3909, %v3908
        %v3933 = vpack.c.bf16 %v3911, %v3910
        %v3934 = vpack.c.bf16 %v3913, %v3912
        %v3935 = vpack.c.bf16 %v3915, %v3914
        %v3936 = vpack.c.bf16 %v3917, %v3916
        %v3937 = vpack.c.bf16 %v3919, %v3918
        %v3938 = vpack.c.bf16 %v3921, %v3920
        %v3939 = vpack.c.bf16 %v3923, %v3922
        %v3940 = vld [vmem:[%s1592] sm:$0xf]
        %v3941 = vld [vmem:[%s1592 + $0x4] sm:$0xf]
        %v3942 = vld [vmem:[%s1592 + $0x8] sm:$0xf]
        %v3943 = vld [vmem:[%s1592 + $0xc] sm:$0xf]
        %v3944 = vld [vmem:[%s1592 + $0x10] sm:$0xf]
        %v3945 = vld [vmem:[%s1592 + $0x14] sm:$0xf]
        %v3946 = vld [vmem:[%s1592 + $0x18] sm:$0xf]
        %v3947 = vld [vmem:[%s1592 + $0x1c] sm:$0xf]
        %v3956 = vunpack.c.l.b16 %v3940
        %v3957 = vunpack.c.l.b16 %v3941
        %v3958 = vunpack.c.l.b16 %v3942
        %v3959 = vunpack.c.l.b16 %v3943
        %v3960 = vunpack.c.l.b16 %v3944
        %v3961 = vunpack.c.l.b16 %v3945
        %v3962 = vunpack.c.l.b16 %v3946
        %v3963 = vunpack.c.l.b16 %v3947
        %v3964 = vpack.c.b16 %v3957, %v3956
        %v3965 = vpack.c.b16 %v3959, %v3958
        %v3966 = vpack.c.b16 %v3961, %v3960
        %v3967 = vpack.c.b16 %v3963, %v3962
        %v3973 = vsel %vm236, %v3924, 0
        %v3976 = vsel %vm236, %v3925, 0
        %v3979 = vsel %vm236, %v3926, 0
        %v3982 = vsel %vm236, %v3927, 0
        %v3985 = vsel %vm236, %v3928, 0
        %v3988 = vsel %vm236, %v3929, 0
        %v3991 = vsel %vm236, %v3930, 0
        %v3994 = vsel %vm236, %v3931, 0
        %v3997 = vsel %vm236, %v3932, 0
        %v4000 = vsel %vm236, %v3933, 0
        %v4003 = vsel %vm236, %v3934, 0
        %v4006 = vsel %vm236, %v3935, 0
        %v4009 = vsel %vm236, %v3936, 0
        %v4012 = vsel %vm236, %v3937, 0
        %v4015 = vsel %vm236, %v3938, 0
        %v4018 = vsel %vm236, %v3939, 0
        %4020 = vmatpush.bf16.msra.mxu0 0
        %4021 = vmatpush.bf16.msra.mxu0 0
        %4022 = vmatpush.bf16.msra.mxu0 0
        %4023 = vmatpush.bf16.msra.mxu0 0
        %4024 = vmatpush.bf16.msra.mxu0 %v3967
        %4025 = vmatpush.bf16.msra.mxu0 %v3966
        %4026 = vmatpush.bf16.msra.mxu0 %v3965
        %4027 = vmatpush.bf16.msra.mxu0 %v3964
        %4028 = vmatmul.bf16.gmra.mxu0 %v3973
        %v4029 = vpop.f32.mrf.mxu0
        %v4030 = vadd.f32 0.0, %v4029
        %v4031 = vpop.f32.mrf.mxu0
        %v4032 = vadd.f32 0.0, %v4031
        %4033 = vmatmul.bf16.gmra.mxu0 %v3976
        %v4034 = vpop.f32.mrf.mxu0
        %v4035 = vadd.f32 0.0, %v4034
        %v4036 = vpop.f32.mrf.mxu0
        %v4037 = vadd.f32 0.0, %v4036
        %4038 = vmatmul.bf16.gmra.mxu0 %v3979
        %v4039 = vpop.f32.mrf.mxu0
        %v4040 = vadd.f32 0.0, %v4039
        %v4041 = vpop.f32.mrf.mxu0
        %v4042 = vadd.f32 0.0, %v4041
        %4043 = vmatmul.bf16.gmra.mxu0 %v3982
        %v4044 = vpop.f32.mrf.mxu0
        %v4045 = vadd.f32 0.0, %v4044
        %v4046 = vpop.f32.mrf.mxu0
        %v4047 = vadd.f32 0.0, %v4046
        %4048 = vmatmul.bf16.gmra.mxu0 %v3985
        %v4049 = vpop.f32.mrf.mxu0
        %v4050 = vadd.f32 0.0, %v4049
        %v4051 = vpop.f32.mrf.mxu0
        %v4052 = vadd.f32 0.0, %v4051
        %4053 = vmatmul.bf16.gmra.mxu0 %v3988
        %v4054 = vpop.f32.mrf.mxu0
        %v4055 = vadd.f32 0.0, %v4054
        %v4056 = vpop.f32.mrf.mxu0
        %v4057 = vadd.f32 0.0, %v4056
        %4058 = vmatmul.bf16.gmra.mxu0 %v3991
        %v4059 = vpop.f32.mrf.mxu0
        %v4060 = vadd.f32 0.0, %v4059
        %v4061 = vpop.f32.mrf.mxu0
        %v4062 = vadd.f32 0.0, %v4061
        %4063 = vmatmul.bf16.gmra.mxu0 %v3994
        %v4064 = vpop.f32.mrf.mxu0
        %v4065 = vadd.f32 0.0, %v4064
        %v4066 = vpop.f32.mrf.mxu0
        %v4067 = vadd.f32 0.0, %v4066
        %4068 = vmatmul.bf16.gmra.mxu0 %v3997
        %v4069 = vpop.f32.mrf.mxu0
        %v4070 = vadd.f32 0.0, %v4069
        %v4071 = vpop.f32.mrf.mxu0
        %v4072 = vadd.f32 0.0, %v4071
        %4073 = vmatmul.bf16.gmra.mxu0 %v4000
        %v4074 = vpop.f32.mrf.mxu0
        %v4075 = vadd.f32 0.0, %v4074
        %v4076 = vpop.f32.mrf.mxu0
        %v4077 = vadd.f32 0.0, %v4076
        %4078 = vmatmul.bf16.gmra.mxu0 %v4003
        %v4079 = vpop.f32.mrf.mxu0
        %v4080 = vadd.f32 0.0, %v4079
        %v4081 = vpop.f32.mrf.mxu0
        %v4082 = vadd.f32 0.0, %v4081
        %4083 = vmatmul.bf16.gmra.mxu0 %v4006
        %v4084 = vpop.f32.mrf.mxu0
        %v4085 = vadd.f32 0.0, %v4084
        %v4086 = vpop.f32.mrf.mxu0
        %v4087 = vadd.f32 0.0, %v4086
        %4088 = vmatmul.bf16.gmra.mxu0 %v4009
        %v4089 = vpop.f32.mrf.mxu0
        %v4090 = vadd.f32 0.0, %v4089
        %v4091 = vpop.f32.mrf.mxu0
        %v4092 = vadd.f32 0.0, %v4091
        %4093 = vmatmul.bf16.gmra.mxu0 %v4012
        %v4094 = vpop.f32.mrf.mxu0
        %v4095 = vadd.f32 0.0, %v4094
        %v4096 = vpop.f32.mrf.mxu0
        %v4097 = vadd.f32 0.0, %v4096
        %4098 = vmatmul.bf16.gmra.mxu0 %v4015
        %v4099 = vpop.f32.mrf.mxu0
        %v4100 = vadd.f32 0.0, %v4099
        %v4101 = vpop.f32.mrf.mxu0
        %v4102 = vadd.f32 0.0, %v4101
        %4103 = vmatmul.bf16.gmra.mxu0 %v4018
        %v4104 = vpop.f32.mrf.mxu0
        %v4105 = vadd.f32 0.0, %v4104
        %v4106 = vpop.f32.mrf.mxu0
        %v4107 = vadd.f32 0.0, %v4106
        %4108 = vdwg.mxu0
        %v4109 = vadd.f32 %v3860, %v4030
        %v4110 = vadd.f32 %v3861, %v4032
        %v4111 = vadd.f32 %v3862, %v4035
        %v4112 = vadd.f32 %v3863, %v4037
        %v4113 = vadd.f32 %v3864, %v4040
        %v4114 = vadd.f32 %v3865, %v4042
        %v4115 = vadd.f32 %v3866, %v4045
        %v4116 = vadd.f32 %v3867, %v4047
        %v4117 = vadd.f32 %v3868, %v4050
        %v4118 = vadd.f32 %v3869, %v4052
        %v4119 = vadd.f32 %v3870, %v4055
        %v4120 = vadd.f32 %v3871, %v4057
        %v4121 = vadd.f32 %v3872, %v4060
        %v4122 = vadd.f32 %v3873, %v4062
        %v4123 = vadd.f32 %v3874, %v4065
        %v4124 = vadd.f32 %v3875, %v4067
        %v4125 = vadd.f32 %v3876, %v4070
        %v4126 = vadd.f32 %v3877, %v4072
        %v4127 = vadd.f32 %v3878, %v4075
        %v4128 = vadd.f32 %v3879, %v4077
        %v4129 = vadd.f32 %v3880, %v4080
        %v4130 = vadd.f32 %v3881, %v4082
        %v4131 = vadd.f32 %v3882, %v4085
        %v4132 = vadd.f32 %v3883, %v4087
        %v4133 = vadd.f32 %v3884, %v4090
        %v4134 = vadd.f32 %v3885, %v4092
        %v4135 = vadd.f32 %v3886, %v4095
        %v4136 = vadd.f32 %v3887, %v4097
        %v4137 = vadd.f32 %v3888, %v4100
        %v4138 = vadd.f32 %v3889, %v4102
        %v4139 = vadd.f32 %v3890, %v4105
        %v4140 = vadd.f32 %v3891, %v4107
        %v4141 = vld [vmem:[%s1794] sm:$0xff]
        %v4142 = vld [vmem:[%s1794 + $0x8] sm:$0xff]
        %v4143 = vld [vmem:[%s1794 + $0x18] sm:$0xff]
        %v4144 = vld [vmem:[%s1794 + $0x20] sm:$0xff]
        %v4145 = vld [vmem:[%s1794 + $0x30] sm:$0xff]
        %v4146 = vld [vmem:[%s1794 + $0x38] sm:$0xff]
        %v4147 = vld [vmem:[%s1794 + $0x48] sm:$0xff]
        %v4148 = vld [vmem:[%s1794 + $0x50] sm:$0xff]
        %v4149 = vld [vmem:[%s1794 + $0x60] sm:$0xff]
        %v4150 = vld [vmem:[%s1794 + $0x68] sm:$0xff]
        %v4151 = vld [vmem:[%s1794 + $0x78] sm:$0xff]
        %v4152 = vld [vmem:[%s1794 + $0x80] sm:$0xff]
        %v4153 = vld [vmem:[%s1794 + $0x90] sm:$0xff]
        %v4154 = vld [vmem:[%s1794 + $0x98] sm:$0xff]
        %v4155 = vld [vmem:[%s1794 + $0xa8] sm:$0xff]
        %v4156 = vld [vmem:[%s1794 + $0xb0] sm:$0xff]
        %v4157 = vld [vmem:[%s1794 + $0xc0] sm:$0xff]
        %v4158 = vld [vmem:[%s1794 + $0xc8] sm:$0xff]
        %v4159 = vld [vmem:[%s1794 + $0xd8] sm:$0xff]
        %v4160 = vld [vmem:[%s1794 + $0xe0] sm:$0xff]
        %v4161 = vld [vmem:[%s1794 + $0xf0] sm:$0xff]
        %v4162 = vld [vmem:[%s1794 + $0xf8] sm:$0xff]
        %v4163 = vld [vmem:[%s1794 + $0x108] sm:$0xff]
        %v4164 = vld [vmem:[%s1794 + $0x110] sm:$0xff]
        %v4165 = vld [vmem:[%s1794 + $0x120] sm:$0xff]
        %v4166 = vld [vmem:[%s1794 + $0x128] sm:$0xff]
        %v4167 = vld [vmem:[%s1794 + $0x138] sm:$0xff]
        %v4168 = vld [vmem:[%s1794 + $0x140] sm:$0xff]
        %v4169 = vld [vmem:[%s1794 + $0x150] sm:$0xff]
        %v4170 = vld [vmem:[%s1794 + $0x158] sm:$0xff]
        %v4171 = vld [vmem:[%s1794 + $0x168] sm:$0xff]
        %v4172 = vld [vmem:[%s1794 + $0x170] sm:$0xff]
        %v4173 = vpack.c.bf16 %v4142, %v4141
        %v4174 = vpack.c.bf16 %v4144, %v4143
        %v4175 = vpack.c.bf16 %v4146, %v4145
        %v4176 = vpack.c.bf16 %v4148, %v4147
        %v4177 = vpack.c.bf16 %v4150, %v4149
        %v4178 = vpack.c.bf16 %v4152, %v4151
        %v4179 = vpack.c.bf16 %v4154, %v4153
        %v4180 = vpack.c.bf16 %v4156, %v4155
        %v4181 = vpack.c.bf16 %v4158, %v4157
        %v4182 = vpack.c.bf16 %v4160, %v4159
        %v4183 = vpack.c.bf16 %v4162, %v4161
        %v4184 = vpack.c.bf16 %v4164, %v4163
        %v4185 = vpack.c.bf16 %v4166, %v4165
        %v4186 = vpack.c.bf16 %v4168, %v4167
        %v4187 = vpack.c.bf16 %v4170, %v4169
        %v4188 = vpack.c.bf16 %v4172, %v4171
        %v4189 = vld [vmem:[%s1843] sm:$0xf]
        %v4190 = vld [vmem:[%s1843 + $0x4] sm:$0xf]
        %v4191 = vld [vmem:[%s1843 + $0x8] sm:$0xf]
        %v4192 = vld [vmem:[%s1843 + $0xc] sm:$0xf]
        %v4193 = vld [vmem:[%s1843 + $0x10] sm:$0xf]
        %v4194 = vld [vmem:[%s1843 + $0x14] sm:$0xf]
        %v4195 = vld [vmem:[%s1843 + $0x18] sm:$0xf]
        %v4196 = vld [vmem:[%s1843 + $0x1c] sm:$0xf]
        %v4205 = vunpack.c.l.b16 %v4189
        %v4206 = vunpack.c.l.b16 %v4190
        %v4207 = vunpack.c.l.b16 %v4191
        %v4208 = vunpack.c.l.b16 %v4192
        %v4209 = vunpack.c.l.b16 %v4193
        %v4210 = vunpack.c.l.b16 %v4194
        %v4211 = vunpack.c.l.b16 %v4195
        %v4212 = vunpack.c.l.b16 %v4196
        %v4213 = vpack.c.b16 %v4206, %v4205
        %v4214 = vpack.c.b16 %v4208, %v4207
        %v4215 = vpack.c.b16 %v4210, %v4209
        %v4216 = vpack.c.b16 %v4212, %v4211
        %v4222 = vsel %vm236, %v4173, 0
        %v4225 = vsel %vm236, %v4174, 0
        %v4228 = vsel %vm236, %v4175, 0
        %v4231 = vsel %vm236, %v4176, 0
        %v4234 = vsel %vm236, %v4177, 0
        %v4237 = vsel %vm236, %v4178, 0
        %v4240 = vsel %vm236, %v4179, 0
        %v4243 = vsel %vm236, %v4180, 0
        %v4246 = vsel %vm236, %v4181, 0
        %v4249 = vsel %vm236, %v4182, 0
        %v4252 = vsel %vm236, %v4183, 0
        %v4255 = vsel %vm236, %v4184, 0
        %v4258 = vsel %vm236, %v4185, 0
        %v4261 = vsel %vm236, %v4186, 0
        %v4264 = vsel %vm236, %v4187, 0
        %v4267 = vsel %vm236, %v4188, 0
        %4269 = vmatpush.bf16.msra.mxu0 0
        %4270 = vmatpush.bf16.msra.mxu0 0
        %4271 = vmatpush.bf16.msra.mxu0 0
        %4272 = vmatpush.bf16.msra.mxu0 0
        %4273 = vmatpush.bf16.msra.mxu0 %v4216
        %4274 = vmatpush.bf16.msra.mxu0 %v4215
        %4275 = vmatpush.bf16.msra.mxu0 %v4214
        %4276 = vmatpush.bf16.msra.mxu0 %v4213
        %4277 = vmatmul.bf16.gmra.mxu0 %v4222
        %v4278 = vpop.f32.mrf.mxu0
        %v4279 = vadd.f32 0.0, %v4278
        %v4280 = vpop.f32.mrf.mxu0
        %v4281 = vadd.f32 0.0, %v4280
        %4282 = vmatmul.bf16.gmra.mxu0 %v4225
        %v4283 = vpop.f32.mrf.mxu0
        %v4284 = vadd.f32 0.0, %v4283
        %v4285 = vpop.f32.mrf.mxu0
        %v4286 = vadd.f32 0.0, %v4285
        %4287 = vmatmul.bf16.gmra.mxu0 %v4228
        %v4288 = vpop.f32.mrf.mxu0
        %v4289 = vadd.f32 0.0, %v4288
        %v4290 = vpop.f32.mrf.mxu0
        %v4291 = vadd.f32 0.0, %v4290
        %4292 = vmatmul.bf16.gmra.mxu0 %v4231
        %v4293 = vpop.f32.mrf.mxu0
        %v4294 = vadd.f32 0.0, %v4293
        %v4295 = vpop.f32.mrf.mxu0
        %v4296 = vadd.f32 0.0, %v4295
        %4297 = vmatmul.bf16.gmra.mxu0 %v4234
        %v4298 = vpop.f32.mrf.mxu0
        %v4299 = vadd.f32 0.0, %v4298
        %v4300 = vpop.f32.mrf.mxu0
        %v4301 = vadd.f32 0.0, %v4300
        %4302 = vmatmul.bf16.gmra.mxu0 %v4237
        %v4303 = vpop.f32.mrf.mxu0
        %v4304 = vadd.f32 0.0, %v4303
        %v4305 = vpop.f32.mrf.mxu0
        %v4306 = vadd.f32 0.0, %v4305
        %4307 = vmatmul.bf16.gmra.mxu0 %v4240
        %v4308 = vpop.f32.mrf.mxu0
        %v4309 = vadd.f32 0.0, %v4308
        %v4310 = vpop.f32.mrf.mxu0
        %v4311 = vadd.f32 0.0, %v4310
        %4312 = vmatmul.bf16.gmra.mxu0 %v4243
        %v4313 = vpop.f32.mrf.mxu0
        %v4314 = vadd.f32 0.0, %v4313
        %v4315 = vpop.f32.mrf.mxu0
        %v4316 = vadd.f32 0.0, %v4315
        %4317 = vmatmul.bf16.gmra.mxu0 %v4246
        %v4318 = vpop.f32.mrf.mxu0
        %v4319 = vadd.f32 0.0, %v4318
        %v4320 = vpop.f32.mrf.mxu0
        %v4321 = vadd.f32 0.0, %v4320
        %4322 = vmatmul.bf16.gmra.mxu0 %v4249
        %v4323 = vpop.f32.mrf.mxu0
        %v4324 = vadd.f32 0.0, %v4323
        %v4325 = vpop.f32.mrf.mxu0
        %v4326 = vadd.f32 0.0, %v4325
        %4327 = vmatmul.bf16.gmra.mxu0 %v4252
        %v4328 = vpop.f32.mrf.mxu0
        %v4329 = vadd.f32 0.0, %v4328
        %v4330 = vpop.f32.mrf.mxu0
        %v4331 = vadd.f32 0.0, %v4330
        %4332 = vmatmul.bf16.gmra.mxu0 %v4255
        %v4333 = vpop.f32.mrf.mxu0
        %v4334 = vadd.f32 0.0, %v4333
        %v4335 = vpop.f32.mrf.mxu0
        %v4336 = vadd.f32 0.0, %v4335
        %4337 = vmatmul.bf16.gmra.mxu0 %v4258
        %v4338 = vpop.f32.mrf.mxu0
        %v4339 = vadd.f32 0.0, %v4338
        %v4340 = vpop.f32.mrf.mxu0
        %v4341 = vadd.f32 0.0, %v4340
        %4342 = vmatmul.bf16.gmra.mxu0 %v4261
        %v4343 = vpop.f32.mrf.mxu0
        %v4344 = vadd.f32 0.0, %v4343
        %v4345 = vpop.f32.mrf.mxu0
        %v4346 = vadd.f32 0.0, %v4345
        %4347 = vmatmul.bf16.gmra.mxu0 %v4264
        %v4348 = vpop.f32.mrf.mxu0
        %v4349 = vadd.f32 0.0, %v4348
        %v4350 = vpop.f32.mrf.mxu0
        %v4351 = vadd.f32 0.0, %v4350
        %4352 = vmatmul.bf16.gmra.mxu0 %v4267
        %v4353 = vpop.f32.mrf.mxu0
        %v4354 = vadd.f32 0.0, %v4353
        %v4355 = vpop.f32.mrf.mxu0
        %v4356 = vadd.f32 0.0, %v4355
        %4357 = vdwg.mxu0
        %v4358 = vadd.f32 %v4109, %v4279
        %v4359 = vadd.f32 %v4110, %v4281
        %v4360 = vadd.f32 %v4111, %v4284
        %v4361 = vadd.f32 %v4112, %v4286
        %v4362 = vadd.f32 %v4113, %v4289
        %v4363 = vadd.f32 %v4114, %v4291
        %v4364 = vadd.f32 %v4115, %v4294
        %v4365 = vadd.f32 %v4116, %v4296
        %v4366 = vadd.f32 %v4117, %v4299
        %v4367 = vadd.f32 %v4118, %v4301
        %v4368 = vadd.f32 %v4119, %v4304
        %v4369 = vadd.f32 %v4120, %v4306
        %v4370 = vadd.f32 %v4121, %v4309
        %v4371 = vadd.f32 %v4122, %v4311
        %v4372 = vadd.f32 %v4123, %v4314
        %v4373 = vadd.f32 %v4124, %v4316
        %v4374 = vadd.f32 %v4125, %v4319
        %v4375 = vadd.f32 %v4126, %v4321
        %v4376 = vadd.f32 %v4127, %v4324
        %v4377 = vadd.f32 %v4128, %v4326
        %v4378 = vadd.f32 %v4129, %v4329
        %v4379 = vadd.f32 %v4130, %v4331
        %v4380 = vadd.f32 %v4131, %v4334
        %v4381 = vadd.f32 %v4132, %v4336
        %v4382 = vadd.f32 %v4133, %v4339
        %v4383 = vadd.f32 %v4134, %v4341
        %v4384 = vadd.f32 %v4135, %v4344
        %v4385 = vadd.f32 %v4136, %v4346
        %v4386 = vadd.f32 %v4137, %v4349
        %v4387 = vadd.f32 %v4138, %v4351
        %v4388 = vadd.f32 %v4139, %v4354
        %v4389 = vadd.f32 %v4140, %v4356
        %v4390 = vld [vmem:[%s1794 + $0x1] sm:$0xff]
        %v4391 = vld [vmem:[%s1794 + $0x9] sm:$0xff]
        %v4392 = vld [vmem:[%s1794 + $0x19] sm:$0xff]
        %v4393 = vld [vmem:[%s1794 + $0x21] sm:$0xff]
        %v4394 = vld [vmem:[%s1794 + $0x31] sm:$0xff]
        %v4395 = vld [vmem:[%s1794 + $0x39] sm:$0xff]
        %v4396 = vld [vmem:[%s1794 + $0x49] sm:$0xff]
        %v4397 = vld [vmem:[%s1794 + $0x51] sm:$0xff]
        %v4398 = vld [vmem:[%s1794 + $0x61] sm:$0xff]
        %v4399 = vld [vmem:[%s1794 + $0x69] sm:$0xff]
        %v4400 = vld [vmem:[%s1794 + $0x79] sm:$0xff]
        %v4401 = vld [vmem:[%s1794 + $0x81] sm:$0xff]
        %v4402 = vld [vmem:[%s1794 + $0x91] sm:$0xff]
        %v4403 = vld [vmem:[%s1794 + $0x99] sm:$0xff]
        %v4404 = vld [vmem:[%s1794 + $0xa9] sm:$0xff]
        %v4405 = vld [vmem:[%s1794 + $0xb1] sm:$0xff]
        %v4406 = vld [vmem:[%s1794 + $0xc1] sm:$0xff]
        %v4407 = vld [vmem:[%s1794 + $0xc9] sm:$0xff]
        %v4408 = vld [vmem:[%s1794 + $0xd9] sm:$0xff]
        %v4409 = vld [vmem:[%s1794 + $0xe1] sm:$0xff]
        %v4410 = vld [vmem:[%s1794 + $0xf1] sm:$0xff]
        %v4411 = vld [vmem:[%s1794 + $0xf9] sm:$0xff]
        %v4412 = vld [vmem:[%s1794 + $0x109] sm:$0xff]
        %v4413 = vld [vmem:[%s1794 + $0x111] sm:$0xff]
        %v4414 = vld [vmem:[%s1794 + $0x121] sm:$0xff]
        %v4415 = vld [vmem:[%s1794 + $0x129] sm:$0xff]
        %v4416 = vld [vmem:[%s1794 + $0x139] sm:$0xff]
        %v4417 = vld [vmem:[%s1794 + $0x141] sm:$0xff]
        %v4418 = vld [vmem:[%s1794 + $0x151] sm:$0xff]
        %v4419 = vld [vmem:[%s1794 + $0x159] sm:$0xff]
        %v4420 = vld [vmem:[%s1794 + $0x169] sm:$0xff]
        %v4421 = vld [vmem:[%s1794 + $0x171] sm:$0xff]
        %v4422 = vpack.c.bf16 %v4391, %v4390
        %v4423 = vpack.c.bf16 %v4393, %v4392
        %v4424 = vpack.c.bf16 %v4395, %v4394
        %v4425 = vpack.c.bf16 %v4397, %v4396
        %v4426 = vpack.c.bf16 %v4399, %v4398
        %v4427 = vpack.c.bf16 %v4401, %v4400
        %v4428 = vpack.c.bf16 %v4403, %v4402
        %v4429 = vpack.c.bf16 %v4405, %v4404
        %v4430 = vpack.c.bf16 %v4407, %v4406
        %v4431 = vpack.c.bf16 %v4409, %v4408
        %v4432 = vpack.c.bf16 %v4411, %v4410
        %v4433 = vpack.c.bf16 %v4413, %v4412
        %v4434 = vpack.c.bf16 %v4415, %v4414
        %v4435 = vpack.c.bf16 %v4417, %v4416
        %v4436 = vpack.c.bf16 %v4419, %v4418
        %v4437 = vpack.c.bf16 %v4421, %v4420
        %v4438 = vld [vmem:[%s2093] sm:$0xf]
        %v4439 = vld [vmem:[%s2093 + $0x4] sm:$0xf]
        %v4440 = vld [vmem:[%s2093 + $0x8] sm:$0xf]
        %v4441 = vld [vmem:[%s2093 + $0xc] sm:$0xf]
        %v4442 = vld [vmem:[%s2093 + $0x10] sm:$0xf]
        %v4443 = vld [vmem:[%s2093 + $0x14] sm:$0xf]
        %v4444 = vld [vmem:[%s2093 + $0x18] sm:$0xf]
        %v4445 = vld [vmem:[%s2093 + $0x1c] sm:$0xf]
        %v4454 = vunpack.c.l.b16 %v4438
        %v4455 = vunpack.c.l.b16 %v4439
        %v4456 = vunpack.c.l.b16 %v4440
        %v4457 = vunpack.c.l.b16 %v4441
        %v4458 = vunpack.c.l.b16 %v4442
        %v4459 = vunpack.c.l.b16 %v4443
        %v4460 = vunpack.c.l.b16 %v4444
        %v4461 = vunpack.c.l.b16 %v4445
        %v4462 = vpack.c.b16 %v4455, %v4454
        %v4463 = vpack.c.b16 %v4457, %v4456
        %v4464 = vpack.c.b16 %v4459, %v4458
        %v4465 = vpack.c.b16 %v4461, %v4460
        %v4471 = vsel %vm236, %v4422, 0
        %v4474 = vsel %vm236, %v4423, 0
        %v4477 = vsel %vm236, %v4424, 0
        %v4480 = vsel %vm236, %v4425, 0
        %v4483 = vsel %vm236, %v4426, 0
        %v4486 = vsel %vm236, %v4427, 0
        %v4489 = vsel %vm236, %v4428, 0
        %v4492 = vsel %vm236, %v4429, 0
        %v4495 = vsel %vm236, %v4430, 0
        %v4498 = vsel %vm236, %v4431, 0
        %v4501 = vsel %vm236, %v4432, 0
        %v4504 = vsel %vm236, %v4433, 0
        %v4507 = vsel %vm236, %v4434, 0
        %v4510 = vsel %vm236, %v4435, 0
        %v4513 = vsel %vm236, %v4436, 0
        %v4516 = vsel %vm236, %v4437, 0
        %4518 = vmatpush.bf16.msra.mxu0 0
        %4519 = vmatpush.bf16.msra.mxu0 0
        %4520 = vmatpush.bf16.msra.mxu0 0
        %4521 = vmatpush.bf16.msra.mxu0 0
        %4522 = vmatpush.bf16.msra.mxu0 %v4465
        %4523 = vmatpush.bf16.msra.mxu0 %v4464
        %4524 = vmatpush.bf16.msra.mxu0 %v4463
        %4525 = vmatpush.bf16.msra.mxu0 %v4462
        %4526 = vmatmul.bf16.gmra.mxu0 %v4471
        %v4527 = vpop.f32.mrf.mxu0
        %v4528 = vadd.f32 0.0, %v4527
        %v4529 = vpop.f32.mrf.mxu0
        %v4530 = vadd.f32 0.0, %v4529
        %4531 = vmatmul.bf16.gmra.mxu0 %v4474
        %v4532 = vpop.f32.mrf.mxu0
        %v4533 = vadd.f32 0.0, %v4532
        %v4534 = vpop.f32.mrf.mxu0
        %v4535 = vadd.f32 0.0, %v4534
        %4536 = vmatmul.bf16.gmra.mxu0 %v4477
        %v4537 = vpop.f32.mrf.mxu0
        %v4538 = vadd.f32 0.0, %v4537
        %v4539 = vpop.f32.mrf.mxu0
        %v4540 = vadd.f32 0.0, %v4539
        %4541 = vmatmul.bf16.gmra.mxu0 %v4480
        %v4542 = vpop.f32.mrf.mxu0
        %v4543 = vadd.f32 0.0, %v4542
        %v4544 = vpop.f32.mrf.mxu0
        %v4545 = vadd.f32 0.0, %v4544
        %4546 = vmatmul.bf16.gmra.mxu0 %v4483
        %v4547 = vpop.f32.mrf.mxu0
        %v4548 = vadd.f32 0.0, %v4547
        %v4549 = vpop.f32.mrf.mxu0
        %v4550 = vadd.f32 0.0, %v4549
        %4551 = vmatmul.bf16.gmra.mxu0 %v4486
        %v4552 = vpop.f32.mrf.mxu0
        %v4553 = vadd.f32 0.0, %v4552
        %v4554 = vpop.f32.mrf.mxu0
        %v4555 = vadd.f32 0.0, %v4554
        %4556 = vmatmul.bf16.gmra.mxu0 %v4489
        %v4557 = vpop.f32.mrf.mxu0
        %v4558 = vadd.f32 0.0, %v4557
        %v4559 = vpop.f32.mrf.mxu0
        %v4560 = vadd.f32 0.0, %v4559
        %4561 = vmatmul.bf16.gmra.mxu0 %v4492
        %v4562 = vpop.f32.mrf.mxu0
        %v4563 = vadd.f32 0.0, %v4562
        %v4564 = vpop.f32.mrf.mxu0
        %v4565 = vadd.f32 0.0, %v4564
        %4566 = vmatmul.bf16.gmra.mxu0 %v4495
        %v4567 = vpop.f32.mrf.mxu0
        %v4568 = vadd.f32 0.0, %v4567
        %v4569 = vpop.f32.mrf.mxu0
        %v4570 = vadd.f32 0.0, %v4569
        %4571 = vmatmul.bf16.gmra.mxu0 %v4498
        %v4572 = vpop.f32.mrf.mxu0
        %v4573 = vadd.f32 0.0, %v4572
        %v4574 = vpop.f32.mrf.mxu0
        %v4575 = vadd.f32 0.0, %v4574
        %4576 = vmatmul.bf16.gmra.mxu0 %v4501
        %v4577 = vpop.f32.mrf.mxu0
        %v4578 = vadd.f32 0.0, %v4577
        %v4579 = vpop.f32.mrf.mxu0
        %v4580 = vadd.f32 0.0, %v4579
        %4581 = vmatmul.bf16.gmra.mxu0 %v4504
        %v4582 = vpop.f32.mrf.mxu0
        %v4583 = vadd.f32 0.0, %v4582
        %v4584 = vpop.f32.mrf.mxu0
        %v4585 = vadd.f32 0.0, %v4584
        %4586 = vmatmul.bf16.gmra.mxu0 %v4507
        %v4587 = vpop.f32.mrf.mxu0
        %v4588 = vadd.f32 0.0, %v4587
        %v4589 = vpop.f32.mrf.mxu0
        %v4590 = vadd.f32 0.0, %v4589
        %4591 = vmatmul.bf16.gmra.mxu0 %v4510
        %v4592 = vpop.f32.mrf.mxu0
        %v4593 = vadd.f32 0.0, %v4592
        %v4594 = vpop.f32.mrf.mxu0
        %v4595 = vadd.f32 0.0, %v4594
        %4596 = vmatmul.bf16.gmra.mxu0 %v4513
        %v4597 = vpop.f32.mrf.mxu0
        %v4598 = vadd.f32 0.0, %v4597
        %v4599 = vpop.f32.mrf.mxu0
        %v4600 = vadd.f32 0.0, %v4599
        %4601 = vmatmul.bf16.gmra.mxu0 %v4516
        %v4602 = vpop.f32.mrf.mxu0
        %v4603 = vadd.f32 0.0, %v4602
        %v4604 = vpop.f32.mrf.mxu0
        %v4605 = vadd.f32 0.0, %v4604
        %4606 = vdwg.mxu0
        %v4607 = vadd.f32 %v4358, %v4528
        %v4608 = vadd.f32 %v4359, %v4530
        %v4609 = vadd.f32 %v4360, %v4533
        %v4610 = vadd.f32 %v4361, %v4535
        %v4611 = vadd.f32 %v4362, %v4538
        %v4612 = vadd.f32 %v4363, %v4540
        %v4613 = vadd.f32 %v4364, %v4543
        %v4614 = vadd.f32 %v4365, %v4545
        %v4615 = vadd.f32 %v4366, %v4548
        %v4616 = vadd.f32 %v4367, %v4550
        %v4617 = vadd.f32 %v4368, %v4553
        %v4618 = vadd.f32 %v4369, %v4555
        %v4619 = vadd.f32 %v4370, %v4558
        %v4620 = vadd.f32 %v4371, %v4560
        %v4621 = vadd.f32 %v4372, %v4563
        %v4622 = vadd.f32 %v4373, %v4565
        %v4623 = vadd.f32 %v4374, %v4568
        %v4624 = vadd.f32 %v4375, %v4570
        %v4625 = vadd.f32 %v4376, %v4573
        %v4626 = vadd.f32 %v4377, %v4575
        %v4627 = vadd.f32 %v4378, %v4578
        %v4628 = vadd.f32 %v4379, %v4580
        %v4629 = vadd.f32 %v4380, %v4583
        %v4630 = vadd.f32 %v4381, %v4585
        %v4631 = vadd.f32 %v4382, %v4588
        %v4632 = vadd.f32 %v4383, %v4590
        %v4633 = vadd.f32 %v4384, %v4593
        %v4634 = vadd.f32 %v4385, %v4595
        %v4635 = vadd.f32 %v4386, %v4598
        %v4636 = vadd.f32 %v4387, %v4600
        %v4637 = vadd.f32 %v4388, %v4603
        %v4638 = vadd.f32 %v4389, %v4605
        %v4639 = vld [vmem:[%s1794 + $0x2] sm:$0xff]
        %v4640 = vld [vmem:[%s1794 + $0xa] sm:$0xff]
        %v4641 = vld [vmem:[%s1794 + $0x1a] sm:$0xff]
        %v4642 = vld [vmem:[%s1794 + $0x22] sm:$0xff]
        %v4643 = vld [vmem:[%s1794 + $0x32] sm:$0xff]
        %v4644 = vld [vmem:[%s1794 + $0x3a] sm:$0xff]
        %v4645 = vld [vmem:[%s1794 + $0x4a] sm:$0xff]
        %v4646 = vld [vmem:[%s1794 + $0x52] sm:$0xff]
        %v4647 = vld [vmem:[%s1794 + $0x62] sm:$0xff]
        %v4648 = vld [vmem:[%s1794 + $0x6a] sm:$0xff]
        %v4649 = vld [vmem:[%s1794 + $0x7a] sm:$0xff]
        %v4650 = vld [vmem:[%s1794 + $0x82] sm:$0xff]
        %v4651 = vld [vmem:[%s1794 + $0x92] sm:$0xff]
        %v4652 = vld [vmem:[%s1794 + $0x9a] sm:$0xff]
        %v4653 = vld [vmem:[%s1794 + $0xaa] sm:$0xff]
        %v4654 = vld [vmem:[%s1794 + $0xb2] sm:$0xff]
        %v4655 = vld [vmem:[%s1794 + $0xc2] sm:$0xff]
        %v4656 = vld [vmem:[%s1794 + $0xca] sm:$0xff]
        %v4657 = vld [vmem:[%s1794 + $0xda] sm:$0xff]
        %v4658 = vld [vmem:[%s1794 + $0xe2] sm:$0xff]
        %v4659 = vld [vmem:[%s1794 + $0xf2] sm:$0xff]
        %v4660 = vld [vmem:[%s1794 + $0xfa] sm:$0xff]
        %v4661 = vld [vmem:[%s1794 + $0x10a] sm:$0xff]
        %v4662 = vld [vmem:[%s1794 + $0x112] sm:$0xff]
        %v4663 = vld [vmem:[%s1794 + $0x122] sm:$0xff]
        %v4664 = vld [vmem:[%s1794 + $0x12a] sm:$0xff]
        %v4665 = vld [vmem:[%s1794 + $0x13a] sm:$0xff]
        %v4666 = vld [vmem:[%s1794 + $0x142] sm:$0xff]
        %v4667 = vld [vmem:[%s1794 + $0x152] sm:$0xff]
        %v4668 = vld [vmem:[%s1794 + $0x15a] sm:$0xff]
        %v4669 = vld [vmem:[%s1794 + $0x16a] sm:$0xff]
        %v4670 = vld [vmem:[%s1794 + $0x172] sm:$0xff]
        %v4671 = vpack.c.bf16 %v4640, %v4639
        %v4672 = vpack.c.bf16 %v4642, %v4641
        %v4673 = vpack.c.bf16 %v4644, %v4643
        %v4674 = vpack.c.bf16 %v4646, %v4645
        %v4675 = vpack.c.bf16 %v4648, %v4647
        %v4676 = vpack.c.bf16 %v4650, %v4649
        %v4677 = vpack.c.bf16 %v4652, %v4651
        %v4678 = vpack.c.bf16 %v4654, %v4653
        %v4679 = vpack.c.bf16 %v4656, %v4655
        %v4680 = vpack.c.bf16 %v4658, %v4657
        %v4681 = vpack.c.bf16 %v4660, %v4659
        %v4682 = vpack.c.bf16 %v4662, %v4661
        %v4683 = vpack.c.bf16 %v4664, %v4663
        %v4684 = vpack.c.bf16 %v4666, %v4665
        %v4685 = vpack.c.bf16 %v4668, %v4667
        %v4686 = vpack.c.bf16 %v4670, %v4669
        %v4687 = vld [vmem:[%s2343] sm:$0xf]
        %v4688 = vld [vmem:[%s2343 + $0x4] sm:$0xf]
        %v4689 = vld [vmem:[%s2343 + $0x8] sm:$0xf]
        %v4690 = vld [vmem:[%s2343 + $0xc] sm:$0xf]
        %v4691 = vld [vmem:[%s2343 + $0x10] sm:$0xf]
        %v4692 = vld [vmem:[%s2343 + $0x14] sm:$0xf]
        %v4693 = vld [vmem:[%s2343 + $0x18] sm:$0xf]
        %v4694 = vld [vmem:[%s2343 + $0x1c] sm:$0xf]
        %v4703 = vunpack.c.l.b16 %v4687
        %v4704 = vunpack.c.l.b16 %v4688
        %v4705 = vunpack.c.l.b16 %v4689
        %v4706 = vunpack.c.l.b16 %v4690
        %v4707 = vunpack.c.l.b16 %v4691
        %v4708 = vunpack.c.l.b16 %v4692
        %v4709 = vunpack.c.l.b16 %v4693
        %v4710 = vunpack.c.l.b16 %v4694
        %v4711 = vpack.c.b16 %v4704, %v4703
        %v4712 = vpack.c.b16 %v4706, %v4705
        %v4713 = vpack.c.b16 %v4708, %v4707
        %v4714 = vpack.c.b16 %v4710, %v4709
        %v4720 = vsel %vm236, %v4671, 0
        %v4723 = vsel %vm236, %v4672, 0
        %v4726 = vsel %vm236, %v4673, 0
        %v4729 = vsel %vm236, %v4674, 0
        %v4732 = vsel %vm236, %v4675, 0
        %v4735 = vsel %vm236, %v4676, 0
        %v4738 = vsel %vm236, %v4677, 0
        %v4741 = vsel %vm236, %v4678, 0
        %v4744 = vsel %vm236, %v4679, 0
        %v4747 = vsel %vm236, %v4680, 0
        %v4750 = vsel %vm236, %v4681, 0
        %v4753 = vsel %vm236, %v4682, 0
        %v4756 = vsel %vm236, %v4683, 0
        %v4759 = vsel %vm236, %v4684, 0
        %v4762 = vsel %vm236, %v4685, 0
        %v4765 = vsel %vm236, %v4686, 0
        %4767 = vmatpush.bf16.msra.mxu0 0
        %4768 = vmatpush.bf16.msra.mxu0 0
        %4769 = vmatpush.bf16.msra.mxu0 0
        %4770 = vmatpush.bf16.msra.mxu0 0
        %4771 = vmatpush.bf16.msra.mxu0 %v4714
        %4772 = vmatpush.bf16.msra.mxu0 %v4713
        %4773 = vmatpush.bf16.msra.mxu0 %v4712
        %4774 = vmatpush.bf16.msra.mxu0 %v4711
        %4775 = vmatmul.bf16.gmra.mxu0 %v4720
        %v4776 = vpop.f32.mrf.mxu0
        %v4777 = vadd.f32 0.0, %v4776
        %v4778 = vpop.f32.mrf.mxu0
        %v4779 = vadd.f32 0.0, %v4778
        %4780 = vmatmul.bf16.gmra.mxu0 %v4723
        %v4781 = vpop.f32.mrf.mxu0
        %v4782 = vadd.f32 0.0, %v4781
        %v4783 = vpop.f32.mrf.mxu0
        %v4784 = vadd.f32 0.0, %v4783
        %4785 = vmatmul.bf16.gmra.mxu0 %v4726
        %v4786 = vpop.f32.mrf.mxu0
        %v4787 = vadd.f32 0.0, %v4786
        %v4788 = vpop.f32.mrf.mxu0
        %v4789 = vadd.f32 0.0, %v4788
        %4790 = vmatmul.bf16.gmra.mxu0 %v4729
        %v4791 = vpop.f32.mrf.mxu0
        %v4792 = vadd.f32 0.0, %v4791
        %v4793 = vpop.f32.mrf.mxu0
        %v4794 = vadd.f32 0.0, %v4793
        %4795 = vmatmul.bf16.gmra.mxu0 %v4732
        %v4796 = vpop.f32.mrf.mxu0
        %v4797 = vadd.f32 0.0, %v4796
        %v4798 = vpop.f32.mrf.mxu0
        %v4799 = vadd.f32 0.0, %v4798
        %4800 = vmatmul.bf16.gmra.mxu0 %v4735
        %v4801 = vpop.f32.mrf.mxu0
        %v4802 = vadd.f32 0.0, %v4801
        %v4803 = vpop.f32.mrf.mxu0
        %v4804 = vadd.f32 0.0, %v4803
        %4805 = vmatmul.bf16.gmra.mxu0 %v4738
        %v4806 = vpop.f32.mrf.mxu0
        %v4807 = vadd.f32 0.0, %v4806
        %v4808 = vpop.f32.mrf.mxu0
        %v4809 = vadd.f32 0.0, %v4808
        %4810 = vmatmul.bf16.gmra.mxu0 %v4741
        %v4811 = vpop.f32.mrf.mxu0
        %v4812 = vadd.f32 0.0, %v4811
        %v4813 = vpop.f32.mrf.mxu0
        %v4814 = vadd.f32 0.0, %v4813
        %4815 = vmatmul.bf16.gmra.mxu0 %v4744
        %v4816 = vpop.f32.mrf.mxu0
        %v4817 = vadd.f32 0.0, %v4816
        %v4818 = vpop.f32.mrf.mxu0
        %v4819 = vadd.f32 0.0, %v4818
        %4820 = vmatmul.bf16.gmra.mxu0 %v4747
        %v4821 = vpop.f32.mrf.mxu0
        %v4822 = vadd.f32 0.0, %v4821
        %v4823 = vpop.f32.mrf.mxu0
        %v4824 = vadd.f32 0.0, %v4823
        %4825 = vmatmul.bf16.gmra.mxu0 %v4750
        %v4826 = vpop.f32.mrf.mxu0
        %v4827 = vadd.f32 0.0, %v4826
        %v4828 = vpop.f32.mrf.mxu0
        %v4829 = vadd.f32 0.0, %v4828
        %4830 = vmatmul.bf16.gmra.mxu0 %v4753
        %v4831 = vpop.f32.mrf.mxu0
        %v4832 = vadd.f32 0.0, %v4831
        %v4833 = vpop.f32.mrf.mxu0
        %v4834 = vadd.f32 0.0, %v4833
        %4835 = vmatmul.bf16.gmra.mxu0 %v4756
        %v4836 = vpop.f32.mrf.mxu0
        %v4837 = vadd.f32 0.0, %v4836
        %v4838 = vpop.f32.mrf.mxu0
        %v4839 = vadd.f32 0.0, %v4838
        %4840 = vmatmul.bf16.gmra.mxu0 %v4759
        %v4841 = vpop.f32.mrf.mxu0
        %v4842 = vadd.f32 0.0, %v4841
        %v4843 = vpop.f32.mrf.mxu0
        %v4844 = vadd.f32 0.0, %v4843
        %4845 = vmatmul.bf16.gmra.mxu0 %v4762
        %v4846 = vpop.f32.mrf.mxu0
        %v4847 = vadd.f32 0.0, %v4846
        %v4848 = vpop.f32.mrf.mxu0
        %v4849 = vadd.f32 0.0, %v4848
        %4850 = vmatmul.bf16.gmra.mxu0 %v4765
        %v4851 = vpop.f32.mrf.mxu0
        %v4852 = vadd.f32 0.0, %v4851
        %v4853 = vpop.f32.mrf.mxu0
        %v4854 = vadd.f32 0.0, %v4853
        %4855 = vdwg.mxu0
        %v4856 = vadd.f32 %v4607, %v4777
        %v4857 = vadd.f32 %v4608, %v4779
        %v4858 = vadd.f32 %v4609, %v4782
        %v4859 = vadd.f32 %v4610, %v4784
        %v4860 = vadd.f32 %v4611, %v4787
        %v4861 = vadd.f32 %v4612, %v4789
        %v4862 = vadd.f32 %v4613, %v4792
        %v4863 = vadd.f32 %v4614, %v4794
        %v4864 = vadd.f32 %v4615, %v4797
        %v4865 = vadd.f32 %v4616, %v4799
        %v4866 = vadd.f32 %v4617, %v4802
        %v4867 = vadd.f32 %v4618, %v4804
        %v4868 = vadd.f32 %v4619, %v4807
        %v4869 = vadd.f32 %v4620, %v4809
        %v4870 = vadd.f32 %v4621, %v4812
        %v4871 = vadd.f32 %v4622, %v4814
        %v4872 = vadd.f32 %v4623, %v4817
        %v4873 = vadd.f32 %v4624, %v4819
        %v4874 = vadd.f32 %v4625, %v4822
        %v4875 = vadd.f32 %v4626, %v4824
        %v4876 = vadd.f32 %v4627, %v4827
        %v4877 = vadd.f32 %v4628, %v4829
        %v4878 = vadd.f32 %v4629, %v4832
        %v4879 = vadd.f32 %v4630, %v4834
        %v4880 = vadd.f32 %v4631, %v4837
        %v4881 = vadd.f32 %v4632, %v4839
        %v4882 = vadd.f32 %v4633, %v4842
        %v4883 = vadd.f32 %v4634, %v4844
        %v4884 = vadd.f32 %v4635, %v4847
        %v4885 = vadd.f32 %v4636, %v4849
        %v4886 = vadd.f32 %v4637, %v4852
        %v4887 = vadd.f32 %v4638, %v4854
        %v4888 = vmul.f32 %v4856, %v2546
        %v4889 = vmul.f32 %v4857, %v2546
        %v4890 = vmul.f32 %v4858, %v2546
        %v4891 = vmul.f32 %v4859, %v2546
        %v4892 = vmul.f32 %v4860, %v2546
        %v4893 = vmul.f32 %v4861, %v2546
        %v4894 = vmul.f32 %v4862, %v2546
        %v4895 = vmul.f32 %v4863, %v2546
        %v4896 = vmul.f32 %v4864, %v2546
        %v4897 = vmul.f32 %v4865, %v2546
        %v4898 = vmul.f32 %v4866, %v2546
        %v4899 = vmul.f32 %v4867, %v2546
        %v4900 = vmul.f32 %v4868, %v2546
        %v4901 = vmul.f32 %v4869, %v2546
        %v4902 = vmul.f32 %v4870, %v2546
        %v4903 = vmul.f32 %v4871, %v2546
        %v4904 = vmul.f32 %v4872, %v2546
        %v4905 = vmul.f32 %v4873, %v2546
        %v4906 = vmul.f32 %v4874, %v2546
        %v4907 = vmul.f32 %v4875, %v2546
        %v4908 = vmul.f32 %v4876, %v2546
        %v4909 = vmul.f32 %v4877, %v2546
        %v4910 = vmul.f32 %v4878, %v2546
        %v4911 = vmul.f32 %v4879, %v2546
        %v4912 = vmul.f32 %v4880, %v2546
        %v4913 = vmul.f32 %v4881, %v2546
        %v4914 = vmul.f32 %v4882, %v2546
        %v4915 = vmul.f32 %v4883, %v2546
        %v4916 = vmul.f32 %v4884, %v2546
        %v4917 = vmul.f32 %v4885, %v2546
        %v4918 = vmul.f32 %v4886, %v2546
        %v4919 = vmul.f32 %v4887, %v2546
        %v4920 = vadd.f32 %v4888, %v2581
        %v4921 = vadd.f32 %v4889, %v2581
        %v4922 = vadd.f32 %v4890, %v2581
        %v4923 = vadd.f32 %v4891, %v2581
        %v4924 = vadd.f32 %v4892, %v2581
        %v4925 = vadd.f32 %v4893, %v2581
        %v4926 = vadd.f32 %v4894, %v2581
        %v4927 = vadd.f32 %v4895, %v2581
        %v4928 = vadd.f32 %v4896, %v2581
        %v4929 = vadd.f32 %v4897, %v2581
        %v4930 = vadd.f32 %v4898, %v2581
        %v4931 = vadd.f32 %v4899, %v2581
        %v4932 = vadd.f32 %v4900, %v2581
        %v4933 = vadd.f32 %v4901, %v2581
        %v4934 = vadd.f32 %v4902, %v2581
        %v4935 = vadd.f32 %v4903, %v2581
        %v4936 = vadd.f32 %v4904, %v2581
        %v4937 = vadd.f32 %v4905, %v2581
        %v4938 = vadd.f32 %v4906, %v2581
        %v4939 = vadd.f32 %v4907, %v2581
        %v4940 = vadd.f32 %v4908, %v2581
        %v4941 = vadd.f32 %v4909, %v2581
        %v4942 = vadd.f32 %v4910, %v2581
        %v4943 = vadd.f32 %v4911, %v2581
        %v4944 = vadd.f32 %v4912, %v2581
        %v4945 = vadd.f32 %v4913, %v2581
        %v4946 = vadd.f32 %v4914, %v2581
        %v4947 = vadd.f32 %v4915, %v2581
        %v4948 = vadd.f32 %v4916, %v2581
        %v4949 = vadd.f32 %v4917, %v2581
        %v4950 = vadd.f32 %v4918, %v2581
        %v4951 = vadd.f32 %v4919, %v2581
        %v4952 = vmax.f32 %v4920, 0.0
        %v4953 = vmax.f32 %v4921, 0.0
        %v4954 = vmax.f32 %v4922, 0.0
        %v4955 = vmax.f32 %v4923, 0.0
        %v4956 = vmax.f32 %v4924, 0.0
        %v4957 = vmax.f32 %v4925, 0.0
        %v4958 = vmax.f32 %v4926, 0.0
        %v4959 = vmax.f32 %v4927, 0.0
        %v4960 = vmax.f32 %v4928, 0.0
        %v4961 = vmax.f32 %v4929, 0.0
        %v4962 = vmax.f32 %v4930, 0.0
        %v4963 = vmax.f32 %v4931, 0.0
        %v4964 = vmax.f32 %v4932, 0.0
        %v4965 = vmax.f32 %v4933, 0.0
        %v4966 = vmax.f32 %v4934, 0.0
        %v4967 = vmax.f32 %v4935, 0.0
        %v4968 = vmax.f32 %v4936, 0.0
        %v4969 = vmax.f32 %v4937, 0.0
        %v4970 = vmax.f32 %v4938, 0.0
        %v4971 = vmax.f32 %v4939, 0.0
        %v4972 = vmax.f32 %v4940, 0.0
        %v4973 = vmax.f32 %v4941, 0.0
        %v4974 = vmax.f32 %v4942, 0.0
        %v4975 = vmax.f32 %v4943, 0.0
        %v4976 = vmax.f32 %v4944, 0.0
        %v4977 = vmax.f32 %v4945, 0.0
        %v4978 = vmax.f32 %v4946, 0.0
        %v4979 = vmax.f32 %v4947, 0.0
        %v4980 = vmax.f32 %v4948, 0.0
        %v4981 = vmax.f32 %v4949, 0.0
        %v4982 = vmax.f32 %v4950, 0.0
        %v4983 = vmax.f32 %v4951, 0.0
        %v4984 = vadd.f32 %v292, %v4952
        %v4985 = vadd.f32 %v293, %v4953
        %v4986 = vadd.f32 %v294, %v4954
        %v4987 = vadd.f32 %v295, %v4955
        %v4988 = vadd.f32 %v296, %v4956
        %v4989 = vadd.f32 %v297, %v4957
        %v4990 = vadd.f32 %v298, %v4958
        %v4991 = vadd.f32 %v299, %v4959
        %v4992 = vadd.f32 %v300, %v4960
        %v4993 = vadd.f32 %v301, %v4961
        %v4994 = vadd.f32 %v302, %v4962
        %v4995 = vadd.f32 %v303, %v4963
        %v4996 = vadd.f32 %v304, %v4964
        %v4997 = vadd.f32 %v305, %v4965
        %v4998 = vadd.f32 %v306, %v4966
        %v4999 = vadd.f32 %v307, %v4967
        %v5000 = vadd.f32 %v308, %v4968
        %v5001 = vadd.f32 %v309, %v4969
        %v5002 = vadd.f32 %v310, %v4970
        %v5003 = vadd.f32 %v311, %v4971
        %v5004 = vadd.f32 %v312, %v4972
        %v5005 = vadd.f32 %v313, %v4973
        %v5006 = vadd.f32 %v314, %v4974
        %v5007 = vadd.f32 %v315, %v4975
        %v5008 = vadd.f32 %v316, %v4976
        %v5009 = vadd.f32 %v317, %v4977
        %v5010 = vadd.f32 %v318, %v4978
        %v5011 = vadd.f32 %v319, %v4979
        %v5012 = vadd.f32 %v320, %v4980
        %v5013 = vadd.f32 %v321, %v4981
        %v5014 = vadd.f32 %v322, %v4982
        %v5015 = vadd.f32 %v323, %v4983
        %5016 = vst.msk [vmem:[%s326 + $0x1] sm:$0xff] %vm236, %v4984
        %5017 = vst.msk [vmem:[%s326 + $0x9] sm:$0xff] %vm236, %v4985
        %5018 = vst.msk [vmem:[%s326 + $0x19] sm:$0xff] %vm236, %v4986
        %5019 = vst.msk [vmem:[%s326 + $0x21] sm:$0xff] %vm236, %v4987
        %5020 = vst.msk [vmem:[%s326 + $0x31] sm:$0xff] %vm236, %v4988
        %5021 = vst.msk [vmem:[%s326 + $0x39] sm:$0xff] %vm236, %v4989
        %5022 = vst.msk [vmem:[%s326 + $0x49] sm:$0xff] %vm236, %v4990
        %5023 = vst.msk [vmem:[%s326 + $0x51] sm:$0xff] %vm236, %v4991
        %5024 = vst.msk [vmem:[%s326 + $0x61] sm:$0xff] %vm236, %v4992
        %5025 = vst.msk [vmem:[%s326 + $0x69] sm:$0xff] %vm236, %v4993
        %5026 = vst.msk [vmem:[%s326 + $0x79] sm:$0xff] %vm236, %v4994
        %5027 = vst.msk [vmem:[%s326 + $0x81] sm:$0xff] %vm236, %v4995
        %5028 = vst.msk [vmem:[%s326 + $0x91] sm:$0xff] %vm236, %v4996
        %5029 = vst.msk [vmem:[%s326 + $0x99] sm:$0xff] %vm236, %v4997
        %5030 = vst.msk [vmem:[%s326 + $0xa9] sm:$0xff] %vm236, %v4998
        %5031 = vst.msk [vmem:[%s326 + $0xb1] sm:$0xff] %vm236, %v4999
        %5032 = vst.msk [vmem:[%s326 + $0xc1] sm:$0xff] %vm236, %v5000
        %5033 = vst.msk [vmem:[%s326 + $0xc9] sm:$0xff] %vm236, %v5001
        %5034 = vst.msk [vmem:[%s326 + $0xd9] sm:$0xff] %vm236, %v5002
        %5035 = vst.msk [vmem:[%s326 + $0xe1] sm:$0xff] %vm236, %v5003
        %5036 = vst.msk [vmem:[%s326 + $0xf1] sm:$0xff] %vm236, %v5004
        %5037 = vst.msk [vmem:[%s326 + $0xf9] sm:$0xff] %vm236, %v5005
        %5038 = vst.msk [vmem:[%s326 + $0x109] sm:$0xff] %vm236, %v5006
        %5039 = vst.msk [vmem:[%s326 + $0x111] sm:$0xff] %vm236, %v5007
        %5040 = vst.msk [vmem:[%s326 + $0x121] sm:$0xff] %vm236, %v5008
        %5041 = vst.msk [vmem:[%s326 + $0x129] sm:$0xff] %vm236, %v5009
        %5042 = vst.msk [vmem:[%s326 + $0x139] sm:$0xff] %vm236, %v5010
        %5043 = vst.msk [vmem:[%s326 + $0x141] sm:$0xff] %vm236, %v5011
        %5044 = vst.msk [vmem:[%s326 + $0x151] sm:$0xff] %vm236, %v5012
        %5045 = vst.msk [vmem:[%s326 + $0x159] sm:$0xff] %vm236, %v5013
        %5046 = vst.msk [vmem:[%s326 + $0x169] sm:$0xff] %vm236, %v5014
        %5047 = vst.msk [vmem:[%s326 + $0x171] sm:$0xff] %vm236, %v5015
        %v5048 = vld [vmem:[#allocation2] sm:$0xff]
        %v5049 = vld [vmem:[#allocation2 + $0x8] sm:$0xff]
        %v5050 = vld [vmem:[#allocation2 + $0x18] sm:$0xff]
        %v5051 = vld [vmem:[#allocation2 + $0x20] sm:$0xff]
        %v5052 = vld [vmem:[#allocation2 + $0x30] sm:$0xff]
        %v5053 = vld [vmem:[#allocation2 + $0x38] sm:$0xff]
        %v5054 = vld [vmem:[#allocation2 + $0x48] sm:$0xff]
        %v5055 = vld [vmem:[#allocation2 + $0x50] sm:$0xff]
        %v5056 = vld [vmem:[#allocation2 + $0x60] sm:$0xff]
        %v5057 = vld [vmem:[#allocation2 + $0x68] sm:$0xff]
        %v5058 = vld [vmem:[#allocation2 + $0x78] sm:$0xff]
        %v5059 = vld [vmem:[#allocation2 + $0x80] sm:$0xff]
        %v5060 = vld [vmem:[#allocation2 + $0x90] sm:$0xff]
        %v5061 = vld [vmem:[#allocation2 + $0x98] sm:$0xff]
        %v5062 = vld [vmem:[#allocation2 + $0xa8] sm:$0xff]
        %v5063 = vld [vmem:[#allocation2 + $0xb0] sm:$0xff]
        %v5064 = vld [vmem:[#allocation2 + $0xc0] sm:$0xff]
        %v5065 = vld [vmem:[#allocation2 + $0xc8] sm:$0xff]
        %v5066 = vld [vmem:[#allocation2 + $0xd8] sm:$0xff]
        %v5067 = vld [vmem:[#allocation2 + $0xe0] sm:$0xff]
        %v5068 = vld [vmem:[#allocation2 + $0xf0] sm:$0xff]
        %v5069 = vld [vmem:[#allocation2 + $0xf8] sm:$0xff]
        %v5070 = vld [vmem:[#allocation2 + $0x108] sm:$0xff]
        %v5071 = vld [vmem:[#allocation2 + $0x110] sm:$0xff]
        %v5072 = vld [vmem:[#allocation2 + $0x120] sm:$0xff]
        %v5073 = vld [vmem:[#allocation2 + $0x128] sm:$0xff]
        %v5074 = vld [vmem:[#allocation2 + $0x138] sm:$0xff]
        %v5075 = vld [vmem:[#allocation2 + $0x140] sm:$0xff]
        %v5076 = vld [vmem:[#allocation2 + $0x150] sm:$0xff]
        %v5077 = vld [vmem:[#allocation2 + $0x158] sm:$0xff]
        %v5078 = vld [vmem:[#allocation2 + $0x168] sm:$0xff]
        %v5079 = vld [vmem:[#allocation2 + $0x170] sm:$0xff]
        %v5080 = vpack.c.bf16 %v5049, %v5048
        %v5081 = vpack.c.bf16 %v5051, %v5050
        %v5082 = vpack.c.bf16 %v5053, %v5052
        %v5083 = vpack.c.bf16 %v5055, %v5054
        %v5084 = vpack.c.bf16 %v5057, %v5056
        %v5085 = vpack.c.bf16 %v5059, %v5058
        %v5086 = vpack.c.bf16 %v5061, %v5060
        %v5087 = vpack.c.bf16 %v5063, %v5062
        %v5088 = vpack.c.bf16 %v5065, %v5064
        %v5089 = vpack.c.bf16 %v5067, %v5066
        %v5090 = vpack.c.bf16 %v5069, %v5068
        %v5091 = vpack.c.bf16 %v5071, %v5070
        %v5092 = vpack.c.bf16 %v5073, %v5072
        %v5093 = vpack.c.bf16 %v5075, %v5074
        %v5094 = vpack.c.bf16 %v5077, %v5076
        %v5095 = vpack.c.bf16 %v5079, %v5078
        %v5096 = vld [vmem:[#allocation6] sm:$0xf]
        %v5097 = vld [vmem:[#allocation6 + $0x4] sm:$0xf]
        %v5098 = vld [vmem:[#allocation6 + $0x8] sm:$0xf]
        %v5099 = vld [vmem:[#allocation6 + $0xc] sm:$0xf]
        %v5100 = vld [vmem:[#allocation6 + $0x10] sm:$0xf]
        %v5101 = vld [vmem:[#allocation6 + $0x14] sm:$0xf]
        %v5102 = vld [vmem:[#allocation6 + $0x18] sm:$0xf]
        %v5103 = vld [vmem:[#allocation6 + $0x1c] sm:$0xf]
        %v5104 = vld [vmem:[#allocation2 + $0x1] sm:$0xff]
        %v5105 = vld [vmem:[#allocation2 + $0x9] sm:$0xff]
        %v5106 = vld [vmem:[#allocation2 + $0x19] sm:$0xff]
        %v5107 = vld [vmem:[#allocation2 + $0x21] sm:$0xff]
        %v5108 = vld [vmem:[#allocation2 + $0x31] sm:$0xff]
        %v5109 = vld [vmem:[#allocation2 + $0x39] sm:$0xff]
        %v5110 = vld [vmem:[#allocation2 + $0x49] sm:$0xff]
        %v5111 = vld [vmem:[#allocation2 + $0x51] sm:$0xff]
        %v5112 = vld [vmem:[#allocation2 + $0x61] sm:$0xff]
        %v5113 = vld [vmem:[#allocation2 + $0x69] sm:$0xff]
        %v5114 = vld [vmem:[#allocation2 + $0x79] sm:$0xff]
        %v5115 = vld [vmem:[#allocation2 + $0x81] sm:$0xff]
        %v5116 = vld [vmem:[#allocation2 + $0x91] sm:$0xff]
        %v5117 = vld [vmem:[#allocation2 + $0x99] sm:$0xff]
        %v5118 = vld [vmem:[#allocation2 + $0xa9] sm:$0xff]
        %v5119 = vld [vmem:[#allocation2 + $0xb1] sm:$0xff]
        %v5120 = vld [vmem:[#allocation2 + $0xc1] sm:$0xff]
        %v5121 = vld [vmem:[#allocation2 + $0xc9] sm:$0xff]
        %v5122 = vld [vmem:[#allocation2 + $0xd9] sm:$0xff]
        %v5123 = vld [vmem:[#allocation2 + $0xe1] sm:$0xff]
        %v5124 = vld [vmem:[#allocation2 + $0xf1] sm:$0xff]
        %v5125 = vld [vmem:[#allocation2 + $0xf9] sm:$0xff]
        %v5126 = vld [vmem:[#allocation2 + $0x109] sm:$0xff]
        %v5127 = vld [vmem:[#allocation2 + $0x111] sm:$0xff]
        %v5128 = vld [vmem:[#allocation2 + $0x121] sm:$0xff]
        %v5129 = vld [vmem:[#allocation2 + $0x129] sm:$0xff]
        %v5130 = vld [vmem:[#allocation2 + $0x139] sm:$0xff]
        %v5131 = vld [vmem:[#allocation2 + $0x141] sm:$0xff]
        %v5132 = vld [vmem:[#allocation2 + $0x151] sm:$0xff]
        %v5133 = vld [vmem:[#allocation2 + $0x159] sm:$0xff]
        %v5134 = vld [vmem:[#allocation2 + $0x169] sm:$0xff]
        %v5135 = vld [vmem:[#allocation2 + $0x171] sm:$0xff]
        %v5136 = vpack.c.bf16 %v5105, %v5104
        %v5137 = vpack.c.bf16 %v5107, %v5106
        %v5138 = vpack.c.bf16 %v5109, %v5108
        %v5139 = vpack.c.bf16 %v5111, %v5110
        %v5140 = vpack.c.bf16 %v5113, %v5112
        %v5141 = vpack.c.bf16 %v5115, %v5114
        %v5142 = vpack.c.bf16 %v5117, %v5116
        %v5143 = vpack.c.bf16 %v5119, %v5118
        %v5144 = vpack.c.bf16 %v5121, %v5120
        %v5145 = vpack.c.bf16 %v5123, %v5122
        %v5146 = vpack.c.bf16 %v5125, %v5124
        %v5147 = vpack.c.bf16 %v5127, %v5126
        %v5148 = vpack.c.bf16 %v5129, %v5128
        %v5149 = vpack.c.bf16 %v5131, %v5130
        %v5150 = vpack.c.bf16 %v5133, %v5132
        %v5151 = vpack.c.bf16 %v5135, %v5134
        %v5152 = vld [vmem:[%s463] sm:$0xf]
        %v5153 = vld [vmem:[%s463 + $0x4] sm:$0xf]
        %v5154 = vld [vmem:[%s463 + $0x8] sm:$0xf]
        %v5155 = vld [vmem:[%s463 + $0xc] sm:$0xf]
        %v5156 = vld [vmem:[%s463 + $0x10] sm:$0xf]
        %v5157 = vld [vmem:[%s463 + $0x14] sm:$0xf]
        %v5158 = vld [vmem:[%s463 + $0x18] sm:$0xf]
        %v5159 = vld [vmem:[%s463 + $0x1c] sm:$0xf]
        %v5168 = vunpack.c.l.b16 %v5152
        %v5169 = vunpack.c.l.b16 %v5153
        %v5170 = vunpack.c.l.b16 %v5154
        %v5171 = vunpack.c.l.b16 %v5155
        %v5172 = vunpack.c.l.b16 %v5156
        %v5173 = vunpack.c.l.b16 %v5157
        %v5174 = vunpack.c.l.b16 %v5158
        %v5175 = vunpack.c.l.b16 %v5159
        %v5176 = vpack.c.b16 %v5169, %v5168
        %v5177 = vpack.c.b16 %v5171, %v5170
        %v5178 = vpack.c.b16 %v5173, %v5172
        %v5179 = vpack.c.b16 %v5175, %v5174
        %v5185 = vsel %vm236, %v5136, 0
        %v5188 = vsel %vm236, %v5137, 0
        %v5191 = vsel %vm236, %v5138, 0
        %v5194 = vsel %vm236, %v5139, 0
        %v5197 = vsel %vm236, %v5140, 0
        %v5200 = vsel %vm236, %v5141, 0
        %v5203 = vsel %vm236, %v5142, 0
        %v5206 = vsel %vm236, %v5143, 0
        %v5209 = vsel %vm236, %v5144, 0
        %v5212 = vsel %vm236, %v5145, 0
        %v5215 = vsel %vm236, %v5146, 0
        %v5218 = vsel %vm236, %v5147, 0
        %v5221 = vsel %vm236, %v5148, 0
        %v5224 = vsel %vm236, %v5149, 0
        %v5227 = vsel %vm236, %v5150, 0
        %v5230 = vsel %vm236, %v5151, 0
        %5232 = vmatpush.bf16.msra.mxu0 0
        %5233 = vmatpush.bf16.msra.mxu0 0
        %5234 = vmatpush.bf16.msra.mxu0 0
        %5235 = vmatpush.bf16.msra.mxu0 0
        %5236 = vmatpush.bf16.msra.mxu0 %v5179
        %5237 = vmatpush.bf16.msra.mxu0 %v5178
        %5238 = vmatpush.bf16.msra.mxu0 %v5177
        %5239 = vmatpush.bf16.msra.mxu0 %v5176
        %5240 = vmatmul.bf16.gmra.mxu0 %v5185
        %v5241 = vpop.f32.mrf.mxu0
        %v5242 = vadd.f32 0.0, %v5241
        %v5243 = vpop.f32.mrf.mxu0
        %v5244 = vadd.f32 0.0, %v5243
        %5245 = vmatmul.bf16.gmra.mxu0 %v5188
        %v5246 = vpop.f32.mrf.mxu0
        %v5247 = vadd.f32 0.0, %v5246
        %v5248 = vpop.f32.mrf.mxu0
        %v5249 = vadd.f32 0.0, %v5248
        %5250 = vmatmul.bf16.gmra.mxu0 %v5191
        %v5251 = vpop.f32.mrf.mxu0
        %v5252 = vadd.f32 0.0, %v5251
        %v5253 = vpop.f32.mrf.mxu0
        %v5254 = vadd.f32 0.0, %v5253
        %5255 = vmatmul.bf16.gmra.mxu0 %v5194
        %v5256 = vpop.f32.mrf.mxu0
        %v5257 = vadd.f32 0.0, %v5256
        %v5258 = vpop.f32.mrf.mxu0
        %v5259 = vadd.f32 0.0, %v5258
        %5260 = vmatmul.bf16.gmra.mxu0 %v5197
        %v5261 = vpop.f32.mrf.mxu0
        %v5262 = vadd.f32 0.0, %v5261
        %v5263 = vpop.f32.mrf.mxu0
        %v5264 = vadd.f32 0.0, %v5263
        %5265 = vmatmul.bf16.gmra.mxu0 %v5200
        %v5266 = vpop.f32.mrf.mxu0
        %v5267 = vadd.f32 0.0, %v5266
        %v5268 = vpop.f32.mrf.mxu0
        %v5269 = vadd.f32 0.0, %v5268
        %5270 = vmatmul.bf16.gmra.mxu0 %v5203
        %v5271 = vpop.f32.mrf.mxu0
        %v5272 = vadd.f32 0.0, %v5271
        %v5273 = vpop.f32.mrf.mxu0
        %v5274 = vadd.f32 0.0, %v5273
        %5275 = vmatmul.bf16.gmra.mxu0 %v5206
        %v5276 = vpop.f32.mrf.mxu0
        %v5277 = vadd.f32 0.0, %v5276
        %v5278 = vpop.f32.mrf.mxu0
        %v5279 = vadd.f32 0.0, %v5278
        %5280 = vmatmul.bf16.gmra.mxu0 %v5209
        %v5281 = vpop.f32.mrf.mxu0
        %v5282 = vadd.f32 0.0, %v5281
        %v5283 = vpop.f32.mrf.mxu0
        %v5284 = vadd.f32 0.0, %v5283
        %5285 = vmatmul.bf16.gmra.mxu0 %v5212
        %v5286 = vpop.f32.mrf.mxu0
        %v5287 = vadd.f32 0.0, %v5286
        %v5288 = vpop.f32.mrf.mxu0
        %v5289 = vadd.f32 0.0, %v5288
        %5290 = vmatmul.bf16.gmra.mxu0 %v5215
        %v5291 = vpop.f32.mrf.mxu0
        %v5292 = vadd.f32 0.0, %v5291
        %v5293 = vpop.f32.mrf.mxu0
        %v5294 = vadd.f32 0.0, %v5293
        %5295 = vmatmul.bf16.gmra.mxu0 %v5218
        %v5296 = vpop.f32.mrf.mxu0
        %v5297 = vadd.f32 0.0, %v5296
        %v5298 = vpop.f32.mrf.mxu0
        %v5299 = vadd.f32 0.0, %v5298
        %5300 = vmatmul.bf16.gmra.mxu0 %v5221
        %v5301 = vpop.f32.mrf.mxu0
        %v5302 = vadd.f32 0.0, %v5301
        %v5303 = vpop.f32.mrf.mxu0
        %v5304 = vadd.f32 0.0, %v5303
        %5305 = vmatmul.bf16.gmra.mxu0 %v5224
        %v5306 = vpop.f32.mrf.mxu0
        %v5307 = vadd.f32 0.0, %v5306
        %v5308 = vpop.f32.mrf.mxu0
        %v5309 = vadd.f32 0.0, %v5308
        %5310 = vmatmul.bf16.gmra.mxu0 %v5227
        %v5311 = vpop.f32.mrf.mxu0
        %v5312 = vadd.f32 0.0, %v5311
        %v5313 = vpop.f32.mrf.mxu0
        %v5314 = vadd.f32 0.0, %v5313
        %5315 = vmatmul.bf16.gmra.mxu0 %v5230
        %v5316 = vpop.f32.mrf.mxu0
        %v5317 = vadd.f32 0.0, %v5316
        %v5318 = vpop.f32.mrf.mxu0
        %v5319 = vadd.f32 0.0, %v5318
        %5320 = vdwg.mxu0
        %v5329 = vunpack.c.l.b16 %v5096
        %v5330 = vunpack.c.l.b16 %v5097
        %v5331 = vunpack.c.l.b16 %v5098
        %v5332 = vunpack.c.l.b16 %v5099
        %v5333 = vunpack.c.l.b16 %v5100
        %v5334 = vunpack.c.l.b16 %v5101
        %v5335 = vunpack.c.l.b16 %v5102
        %v5336 = vunpack.c.l.b16 %v5103
        %v5337 = vpack.c.b16 %v5330, %v5329
        %v5338 = vpack.c.b16 %v5332, %v5331
        %v5339 = vpack.c.b16 %v5334, %v5333
        %v5340 = vpack.c.b16 %v5336, %v5335
        %v5346 = vsel %vm236, %v5080, 0
        %v5349 = vsel %vm236, %v5081, 0
        %v5352 = vsel %vm236, %v5082, 0
        %v5355 = vsel %vm236, %v5083, 0
        %v5358 = vsel %vm236, %v5084, 0
        %v5361 = vsel %vm236, %v5085, 0
        %v5364 = vsel %vm236, %v5086, 0
        %v5367 = vsel %vm236, %v5087, 0
        %v5370 = vsel %vm236, %v5088, 0
        %v5373 = vsel %vm236, %v5089, 0
        %v5376 = vsel %vm236, %v5090, 0
        %v5379 = vsel %vm236, %v5091, 0
        %v5382 = vsel %vm236, %v5092, 0
        %v5385 = vsel %vm236, %v5093, 0
        %v5388 = vsel %vm236, %v5094, 0
        %v5391 = vsel %vm236, %v5095, 0
        %5393 = vmatpush.bf16.msra.mxu0 0
        %5394 = vmatpush.bf16.msra.mxu0 0
        %5395 = vmatpush.bf16.msra.mxu0 0
        %5396 = vmatpush.bf16.msra.mxu0 0
        %5397 = vmatpush.bf16.msra.mxu0 %v5340
        %5398 = vmatpush.bf16.msra.mxu0 %v5339
        %5399 = vmatpush.bf16.msra.mxu0 %v5338
        %5400 = vmatpush.bf16.msra.mxu0 %v5337
        %5401 = vmatmul.bf16.gmra.mxu0 %v5346
        %v5402 = vpop.f32.mrf.mxu0
        %v5403 = vadd.f32 %v5242, %v5402
        %v5404 = vpop.f32.mrf.mxu0
        %v5405 = vadd.f32 %v5244, %v5404
        %5406 = vmatmul.bf16.gmra.mxu0 %v5349
        %v5407 = vpop.f32.mrf.mxu0
        %v5408 = vadd.f32 %v5247, %v5407
        %v5409 = vpop.f32.mrf.mxu0
        %v5410 = vadd.f32 %v5249, %v5409
        %5411 = vmatmul.bf16.gmra.mxu0 %v5352
        %v5412 = vpop.f32.mrf.mxu0
        %v5413 = vadd.f32 %v5252, %v5412
        %v5414 = vpop.f32.mrf.mxu0
        %v5415 = vadd.f32 %v5254, %v5414
        %5416 = vmatmul.bf16.gmra.mxu0 %v5355
        %v5417 = vpop.f32.mrf.mxu0
        %v5418 = vadd.f32 %v5257, %v5417
        %v5419 = vpop.f32.mrf.mxu0
        %v5420 = vadd.f32 %v5259, %v5419
        %5421 = vmatmul.bf16.gmra.mxu0 %v5358
        %v5422 = vpop.f32.mrf.mxu0
        %v5423 = vadd.f32 %v5262, %v5422
        %v5424 = vpop.f32.mrf.mxu0
        %v5425 = vadd.f32 %v5264, %v5424
        %5426 = vmatmul.bf16.gmra.mxu0 %v5361
        %v5427 = vpop.f32.mrf.mxu0
        %v5428 = vadd.f32 %v5267, %v5427
        %v5429 = vpop.f32.mrf.mxu0
        %v5430 = vadd.f32 %v5269, %v5429
        %5431 = vmatmul.bf16.gmra.mxu0 %v5364
        %v5432 = vpop.f32.mrf.mxu0
        %v5433 = vadd.f32 %v5272, %v5432
        %v5434 = vpop.f32.mrf.mxu0
        %v5435 = vadd.f32 %v5274, %v5434
        %5436 = vmatmul.bf16.gmra.mxu0 %v5367
        %v5437 = vpop.f32.mrf.mxu0
        %v5438 = vadd.f32 %v5277, %v5437
        %v5439 = vpop.f32.mrf.mxu0
        %v5440 = vadd.f32 %v5279, %v5439
        %5441 = vmatmul.bf16.gmra.mxu0 %v5370
        %v5442 = vpop.f32.mrf.mxu0
        %v5443 = vadd.f32 %v5282, %v5442
        %v5444 = vpop.f32.mrf.mxu0
        %v5445 = vadd.f32 %v5284, %v5444
        %5446 = vmatmul.bf16.gmra.mxu0 %v5373
        %v5447 = vpop.f32.mrf.mxu0
        %v5448 = vadd.f32 %v5287, %v5447
        %v5449 = vpop.f32.mrf.mxu0
        %v5450 = vadd.f32 %v5289, %v5449
        %5451 = vmatmul.bf16.gmra.mxu0 %v5376
        %v5452 = vpop.f32.mrf.mxu0
        %v5453 = vadd.f32 %v5292, %v5452
        %v5454 = vpop.f32.mrf.mxu0
        %v5455 = vadd.f32 %v5294, %v5454
        %5456 = vmatmul.bf16.gmra.mxu0 %v5379
        %v5457 = vpop.f32.mrf.mxu0
        %v5458 = vadd.f32 %v5297, %v5457
        %v5459 = vpop.f32.mrf.mxu0
        %v5460 = vadd.f32 %v5299, %v5459
        %5461 = vmatmul.bf16.gmra.mxu0 %v5382
        %v5462 = vpop.f32.mrf.mxu0
        %v5463 = vadd.f32 %v5302, %v5462
        %v5464 = vpop.f32.mrf.mxu0
        %v5465 = vadd.f32 %v5304, %v5464
        %5466 = vmatmul.bf16.gmra.mxu0 %v5385
        %v5467 = vpop.f32.mrf.mxu0
        %v5468 = vadd.f32 %v5307, %v5467
        %v5469 = vpop.f32.mrf.mxu0
        %v5470 = vadd.f32 %v5309, %v5469
        %5471 = vmatmul.bf16.gmra.mxu0 %v5388
        %v5472 = vpop.f32.mrf.mxu0
        %v5473 = vadd.f32 %v5312, %v5472
        %v5474 = vpop.f32.mrf.mxu0
        %v5475 = vadd.f32 %v5314, %v5474
        %5476 = vmatmul.bf16.gmra.mxu0 %v5391
        %v5477 = vpop.f32.mrf.mxu0
        %v5478 = vadd.f32 %v5317, %v5477
        %v5479 = vpop.f32.mrf.mxu0
        %v5480 = vadd.f32 %v5319, %v5479
        %5481 = vdwg.mxu0
        %v5482 = vld [vmem:[#allocation2 + $0x2] sm:$0xff]
        %v5483 = vld [vmem:[#allocation2 + $0xa] sm:$0xff]
        %v5484 = vld [vmem:[#allocation2 + $0x1a] sm:$0xff]
        %v5485 = vld [vmem:[#allocation2 + $0x22] sm:$0xff]
        %v5486 = vld [vmem:[#allocation2 + $0x32] sm:$0xff]
        %v5487 = vld [vmem:[#allocation2 + $0x3a] sm:$0xff]
        %v5488 = vld [vmem:[#allocation2 + $0x4a] sm:$0xff]
        %v5489 = vld [vmem:[#allocation2 + $0x52] sm:$0xff]
        %v5490 = vld [vmem:[#allocation2 + $0x62] sm:$0xff]
        %v5491 = vld [vmem:[#allocation2 + $0x6a] sm:$0xff]
        %v5492 = vld [vmem:[#allocation2 + $0x7a] sm:$0xff]
        %v5493 = vld [vmem:[#allocation2 + $0x82] sm:$0xff]
        %v5494 = vld [vmem:[#allocation2 + $0x92] sm:$0xff]
        %v5495 = vld [vmem:[#allocation2 + $0x9a] sm:$0xff]
        %v5496 = vld [vmem:[#allocation2 + $0xaa] sm:$0xff]
        %v5497 = vld [vmem:[#allocation2 + $0xb2] sm:$0xff]
        %v5498 = vld [vmem:[#allocation2 + $0xc2] sm:$0xff]
        %v5499 = vld [vmem:[#allocation2 + $0xca] sm:$0xff]
        %v5500 = vld [vmem:[#allocation2 + $0xda] sm:$0xff]
        %v5501 = vld [vmem:[#allocation2 + $0xe2] sm:$0xff]
        %v5502 = vld [vmem:[#allocation2 + $0xf2] sm:$0xff]
        %v5503 = vld [vmem:[#allocation2 + $0xfa] sm:$0xff]
        %v5504 = vld [vmem:[#allocation2 + $0x10a] sm:$0xff]
        %v5505 = vld [vmem:[#allocation2 + $0x112] sm:$0xff]
        %v5506 = vld [vmem:[#allocation2 + $0x122] sm:$0xff]
        %v5507 = vld [vmem:[#allocation2 + $0x12a] sm:$0xff]
        %v5508 = vld [vmem:[#allocation2 + $0x13a] sm:$0xff]
        %v5509 = vld [vmem:[#allocation2 + $0x142] sm:$0xff]
        %v5510 = vld [vmem:[#allocation2 + $0x152] sm:$0xff]
        %v5511 = vld [vmem:[#allocation2 + $0x15a] sm:$0xff]
        %v5512 = vld [vmem:[#allocation2 + $0x16a] sm:$0xff]
        %v5513 = vld [vmem:[#allocation2 + $0x172] sm:$0xff]
        %v5514 = vpack.c.bf16 %v5483, %v5482
        %v5515 = vpack.c.bf16 %v5485, %v5484
        %v5516 = vpack.c.bf16 %v5487, %v5486
        %v5517 = vpack.c.bf16 %v5489, %v5488
        %v5518 = vpack.c.bf16 %v5491, %v5490
        %v5519 = vpack.c.bf16 %v5493, %v5492
        %v5520 = vpack.c.bf16 %v5495, %v5494
        %v5521 = vpack.c.bf16 %v5497, %v5496
        %v5522 = vpack.c.bf16 %v5499, %v5498
        %v5523 = vpack.c.bf16 %v5501, %v5500
        %v5524 = vpack.c.bf16 %v5503, %v5502
        %v5525 = vpack.c.bf16 %v5505, %v5504
        %v5526 = vpack.c.bf16 %v5507, %v5506
        %v5527 = vpack.c.bf16 %v5509, %v5508
        %v5528 = vpack.c.bf16 %v5511, %v5510
        %v5529 = vpack.c.bf16 %v5513, %v5512
        %v5530 = vld [vmem:[%s842] sm:$0xf]
        %v5531 = vld [vmem:[%s842 + $0x4] sm:$0xf]
        %v5532 = vld [vmem:[%s842 + $0x8] sm:$0xf]
        %v5533 = vld [vmem:[%s842 + $0xc] sm:$0xf]
        %v5534 = vld [vmem:[%s842 + $0x10] sm:$0xf]
        %v5535 = vld [vmem:[%s842 + $0x14] sm:$0xf]
        %v5536 = vld [vmem:[%s842 + $0x18] sm:$0xf]
        %v5537 = vld [vmem:[%s842 + $0x1c] sm:$0xf]
        %v5546 = vunpack.c.l.b16 %v5530
        %v5547 = vunpack.c.l.b16 %v5531
        %v5548 = vunpack.c.l.b16 %v5532
        %v5549 = vunpack.c.l.b16 %v5533
        %v5550 = vunpack.c.l.b16 %v5534
        %v5551 = vunpack.c.l.b16 %v5535
        %v5552 = vunpack.c.l.b16 %v5536
        %v5553 = vunpack.c.l.b16 %v5537
        %v5554 = vpack.c.b16 %v5547, %v5546
        %v5555 = vpack.c.b16 %v5549, %v5548
        %v5556 = vpack.c.b16 %v5551, %v5550
        %v5557 = vpack.c.b16 %v5553, %v5552
        %v5563 = vsel %vm236, %v5514, 0
        %v5566 = vsel %vm236, %v5515, 0
        %v5569 = vsel %vm236, %v5516, 0
        %v5572 = vsel %vm236, %v5517, 0
        %v5575 = vsel %vm236, %v5518, 0
        %v5578 = vsel %vm236, %v5519, 0
        %v5581 = vsel %vm236, %v5520, 0
        %v5584 = vsel %vm236, %v5521, 0
        %v5587 = vsel %vm236, %v5522, 0
        %v5590 = vsel %vm236, %v5523, 0
        %v5593 = vsel %vm236, %v5524, 0
        %v5596 = vsel %vm236, %v5525, 0
        %v5599 = vsel %vm236, %v5526, 0
        %v5602 = vsel %vm236, %v5527, 0
        %v5605 = vsel %vm236, %v5528, 0
        %v5608 = vsel %vm236, %v5529, 0
        %5610 = vmatpush.bf16.msra.mxu0 0
        %5611 = vmatpush.bf16.msra.mxu0 0
        %5612 = vmatpush.bf16.msra.mxu0 0
        %5613 = vmatpush.bf16.msra.mxu0 0
        %5614 = vmatpush.bf16.msra.mxu0 %v5557
        %5615 = vmatpush.bf16.msra.mxu0 %v5556
        %5616 = vmatpush.bf16.msra.mxu0 %v5555
        %5617 = vmatpush.bf16.msra.mxu0 %v5554
        %5618 = vmatmul.bf16.gmra.mxu0 %v5563
        %v5619 = vpop.f32.mrf.mxu0
        %v5620 = vadd.f32 0.0, %v5619
        %v5621 = vpop.f32.mrf.mxu0
        %v5622 = vadd.f32 0.0, %v5621
        %5623 = vmatmul.bf16.gmra.mxu0 %v5566
        %v5624 = vpop.f32.mrf.mxu0
        %v5625 = vadd.f32 0.0, %v5624
        %v5626 = vpop.f32.mrf.mxu0
        %v5627 = vadd.f32 0.0, %v5626
        %5628 = vmatmul.bf16.gmra.mxu0 %v5569
        %v5629 = vpop.f32.mrf.mxu0
        %v5630 = vadd.f32 0.0, %v5629
        %v5631 = vpop.f32.mrf.mxu0
        %v5632 = vadd.f32 0.0, %v5631
        %5633 = vmatmul.bf16.gmra.mxu0 %v5572
        %v5634 = vpop.f32.mrf.mxu0
        %v5635 = vadd.f32 0.0, %v5634
        %v5636 = vpop.f32.mrf.mxu0
        %v5637 = vadd.f32 0.0, %v5636
        %5638 = vmatmul.bf16.gmra.mxu0 %v5575
        %v5639 = vpop.f32.mrf.mxu0
        %v5640 = vadd.f32 0.0, %v5639
        %v5641 = vpop.f32.mrf.mxu0
        %v5642 = vadd.f32 0.0, %v5641
        %5643 = vmatmul.bf16.gmra.mxu0 %v5578
        %v5644 = vpop.f32.mrf.mxu0
        %v5645 = vadd.f32 0.0, %v5644
        %v5646 = vpop.f32.mrf.mxu0
        %v5647 = vadd.f32 0.0, %v5646
        %5648 = vmatmul.bf16.gmra.mxu0 %v5581
        %v5649 = vpop.f32.mrf.mxu0
        %v5650 = vadd.f32 0.0, %v5649
        %v5651 = vpop.f32.mrf.mxu0
        %v5652 = vadd.f32 0.0, %v5651
        %5653 = vmatmul.bf16.gmra.mxu0 %v5584
        %v5654 = vpop.f32.mrf.mxu0
        %v5655 = vadd.f32 0.0, %v5654
        %v5656 = vpop.f32.mrf.mxu0
        %v5657 = vadd.f32 0.0, %v5656
        %5658 = vmatmul.bf16.gmra.mxu0 %v5587
        %v5659 = vpop.f32.mrf.mxu0
        %v5660 = vadd.f32 0.0, %v5659
        %v5661 = vpop.f32.mrf.mxu0
        %v5662 = vadd.f32 0.0, %v5661
        %5663 = vmatmul.bf16.gmra.mxu0 %v5590
        %v5664 = vpop.f32.mrf.mxu0
        %v5665 = vadd.f32 0.0, %v5664
        %v5666 = vpop.f32.mrf.mxu0
        %v5667 = vadd.f32 0.0, %v5666
        %5668 = vmatmul.bf16.gmra.mxu0 %v5593
        %v5669 = vpop.f32.mrf.mxu0
        %v5670 = vadd.f32 0.0, %v5669
        %v5671 = vpop.f32.mrf.mxu0
        %v5672 = vadd.f32 0.0, %v5671
        %5673 = vmatmul.bf16.gmra.mxu0 %v5596
        %v5674 = vpop.f32.mrf.mxu0
        %v5675 = vadd.f32 0.0, %v5674
        %v5676 = vpop.f32.mrf.mxu0
        %v5677 = vadd.f32 0.0, %v5676
        %5678 = vmatmul.bf16.gmra.mxu0 %v5599
        %v5679 = vpop.f32.mrf.mxu0
        %v5680 = vadd.f32 0.0, %v5679
        %v5681 = vpop.f32.mrf.mxu0
        %v5682 = vadd.f32 0.0, %v5681
        %5683 = vmatmul.bf16.gmra.mxu0 %v5602
        %v5684 = vpop.f32.mrf.mxu0
        %v5685 = vadd.f32 0.0, %v5684
        %v5686 = vpop.f32.mrf.mxu0
        %v5687 = vadd.f32 0.0, %v5686
        %5688 = vmatmul.bf16.gmra.mxu0 %v5605
        %v5689 = vpop.f32.mrf.mxu0
        %v5690 = vadd.f32 0.0, %v5689
        %v5691 = vpop.f32.mrf.mxu0
        %v5692 = vadd.f32 0.0, %v5691
        %5693 = vmatmul.bf16.gmra.mxu0 %v5608
        %v5694 = vpop.f32.mrf.mxu0
        %v5695 = vadd.f32 0.0, %v5694
        %v5696 = vpop.f32.mrf.mxu0
        %v5697 = vadd.f32 0.0, %v5696
        %5698 = vdwg.mxu0
        %v5699 = vadd.f32 %v5403, %v5620
        %v5700 = vadd.f32 %v5405, %v5622
        %v5701 = vadd.f32 %v5408, %v5625
        %v5702 = vadd.f32 %v5410, %v5627
        %v5703 = vadd.f32 %v5413, %v5630
        %v5704 = vadd.f32 %v5415, %v5632
        %v5705 = vadd.f32 %v5418, %v5635
        %v5706 = vadd.f32 %v5420, %v5637
        %v5707 = vadd.f32 %v5423, %v5640
        %v5708 = vadd.f32 %v5425, %v5642
        %v5709 = vadd.f32 %v5428, %v5645
        %v5710 = vadd.f32 %v5430, %v5647
        %v5711 = vadd.f32 %v5433, %v5650
        %v5712 = vadd.f32 %v5435, %v5652
        %v5713 = vadd.f32 %v5438, %v5655
        %v5714 = vadd.f32 %v5440, %v5657
        %v5715 = vadd.f32 %v5443, %v5660
        %v5716 = vadd.f32 %v5445, %v5662
        %v5717 = vadd.f32 %v5448, %v5665
        %v5718 = vadd.f32 %v5450, %v5667
        %v5719 = vadd.f32 %v5453, %v5670
        %v5720 = vadd.f32 %v5455, %v5672
        %v5721 = vadd.f32 %v5458, %v5675
        %v5722 = vadd.f32 %v5460, %v5677
        %v5723 = vadd.f32 %v5463, %v5680
        %v5724 = vadd.f32 %v5465, %v5682
        %v5725 = vadd.f32 %v5468, %v5685
        %v5726 = vadd.f32 %v5470, %v5687
        %v5727 = vadd.f32 %v5473, %v5690
        %v5728 = vadd.f32 %v5475, %v5692
        %v5729 = vadd.f32 %v5478, %v5695
        %v5730 = vadd.f32 %v5480, %v5697
        %v5731 = vld [vmem:[%s326] sm:$0xff]
        %v5732 = vld [vmem:[%s326 + $0x8] sm:$0xff]
        %v5733 = vld [vmem:[%s326 + $0x18] sm:$0xff]
        %v5734 = vld [vmem:[%s326 + $0x20] sm:$0xff]
        %v5735 = vld [vmem:[%s326 + $0x30] sm:$0xff]
        %v5736 = vld [vmem:[%s326 + $0x38] sm:$0xff]
        %v5737 = vld [vmem:[%s326 + $0x48] sm:$0xff]
        %v5738 = vld [vmem:[%s326 + $0x50] sm:$0xff]
        %v5739 = vld [vmem:[%s326 + $0x60] sm:$0xff]
        %v5740 = vld [vmem:[%s326 + $0x68] sm:$0xff]
        %v5741 = vld [vmem:[%s326 + $0x78] sm:$0xff]
        %v5742 = vld [vmem:[%s326 + $0x80] sm:$0xff]
        %v5743 = vld [vmem:[%s326 + $0x90] sm:$0xff]
        %v5744 = vld [vmem:[%s326 + $0x98] sm:$0xff]
        %v5745 = vld [vmem:[%s326 + $0xa8] sm:$0xff]
        %v5746 = vld [vmem:[%s326 + $0xb0] sm:$0xff]
        %v5747 = vld [vmem:[%s326 + $0xc0] sm:$0xff]
        %v5748 = vld [vmem:[%s326 + $0xc8] sm:$0xff]
        %v5749 = vld [vmem:[%s326 + $0xd8] sm:$0xff]
        %v5750 = vld [vmem:[%s326 + $0xe0] sm:$0xff]
        %v5751 = vld [vmem:[%s326 + $0xf0] sm:$0xff]
        %v5752 = vld [vmem:[%s326 + $0xf8] sm:$0xff]
        %v5753 = vld [vmem:[%s326 + $0x108] sm:$0xff]
        %v5754 = vld [vmem:[%s326 + $0x110] sm:$0xff]
        %v5755 = vld [vmem:[%s326 + $0x120] sm:$0xff]
        %v5756 = vld [vmem:[%s326 + $0x128] sm:$0xff]
        %v5757 = vld [vmem:[%s326 + $0x138] sm:$0xff]
        %v5758 = vld [vmem:[%s326 + $0x140] sm:$0xff]
        %v5759 = vld [vmem:[%s326 + $0x150] sm:$0xff]
        %v5760 = vld [vmem:[%s326 + $0x158] sm:$0xff]
        %v5761 = vld [vmem:[%s326 + $0x168] sm:$0xff]
        %v5762 = vld [vmem:[%s326 + $0x170] sm:$0xff]
        %v5763 = vpack.c.bf16 %v5732, %v5731
        %v5764 = vpack.c.bf16 %v5734, %v5733
        %v5765 = vpack.c.bf16 %v5736, %v5735
        %v5766 = vpack.c.bf16 %v5738, %v5737
        %v5767 = vpack.c.bf16 %v5740, %v5739
        %v5768 = vpack.c.bf16 %v5742, %v5741
        %v5769 = vpack.c.bf16 %v5744, %v5743
        %v5770 = vpack.c.bf16 %v5746, %v5745
        %v5771 = vpack.c.bf16 %v5748, %v5747
        %v5772 = vpack.c.bf16 %v5750, %v5749
        %v5773 = vpack.c.bf16 %v5752, %v5751
        %v5774 = vpack.c.bf16 %v5754, %v5753
        %v5775 = vpack.c.bf16 %v5756, %v5755
        %v5776 = vpack.c.bf16 %v5758, %v5757
        %v5777 = vpack.c.bf16 %v5760, %v5759
        %v5778 = vpack.c.bf16 %v5762, %v5761
        %v5779 = vld [vmem:[%s1092] sm:$0xf]
        %v5780 = vld [vmem:[%s1092 + $0x4] sm:$0xf]
        %v5781 = vld [vmem:[%s1092 + $0x8] sm:$0xf]
        %v5782 = vld [vmem:[%s1092 + $0xc] sm:$0xf]
        %v5783 = vld [vmem:[%s1092 + $0x10] sm:$0xf]
        %v5784 = vld [vmem:[%s1092 + $0x14] sm:$0xf]
        %v5785 = vld [vmem:[%s1092 + $0x18] sm:$0xf]
        %v5786 = vld [vmem:[%s1092 + $0x1c] sm:$0xf]
        %v5795 = vunpack.c.l.b16 %v5779
        %v5796 = vunpack.c.l.b16 %v5780
        %v5797 = vunpack.c.l.b16 %v5781
        %v5798 = vunpack.c.l.b16 %v5782
        %v5799 = vunpack.c.l.b16 %v5783
        %v5800 = vunpack.c.l.b16 %v5784
        %v5801 = vunpack.c.l.b16 %v5785
        %v5802 = vunpack.c.l.b16 %v5786
        %v5803 = vpack.c.b16 %v5796, %v5795
        %v5804 = vpack.c.b16 %v5798, %v5797
        %v5805 = vpack.c.b16 %v5800, %v5799
        %v5806 = vpack.c.b16 %v5802, %v5801
        %v5812 = vsel %vm236, %v5763, 0
        %v5815 = vsel %vm236, %v5764, 0
        %v5818 = vsel %vm236, %v5765, 0
        %v5821 = vsel %vm236, %v5766, 0
        %v5824 = vsel %vm236, %v5767, 0
        %v5827 = vsel %vm236, %v5768, 0
        %v5830 = vsel %vm236, %v5769, 0
        %v5833 = vsel %vm236, %v5770, 0
        %v5836 = vsel %vm236, %v5771, 0
        %v5839 = vsel %vm236, %v5772, 0
        %v5842 = vsel %vm236, %v5773, 0
        %v5845 = vsel %vm236, %v5774, 0
        %v5848 = vsel %vm236, %v5775, 0
        %v5851 = vsel %vm236, %v5776, 0
        %v5854 = vsel %vm236, %v5777, 0
        %v5857 = vsel %vm236, %v5778, 0
        %5859 = vmatpush.bf16.msra.mxu0 0
        %5860 = vmatpush.bf16.msra.mxu0 0
        %5861 = vmatpush.bf16.msra.mxu0 0
        %5862 = vmatpush.bf16.msra.mxu0 0
        %5863 = vmatpush.bf16.msra.mxu0 %v5806
        %5864 = vmatpush.bf16.msra.mxu0 %v5805
        %5865 = vmatpush.bf16.msra.mxu0 %v5804
        %5866 = vmatpush.bf16.msra.mxu0 %v5803
        %5867 = vmatmul.bf16.gmra.mxu0 %v5812
        %v5868 = vpop.f32.mrf.mxu0
        %v5869 = vadd.f32 0.0, %v5868
        %v5870 = vpop.f32.mrf.mxu0
        %v5871 = vadd.f32 0.0, %v5870
        %5872 = vmatmul.bf16.gmra.mxu0 %v5815
        %v5873 = vpop.f32.mrf.mxu0
        %v5874 = vadd.f32 0.0, %v5873
        %v5875 = vpop.f32.mrf.mxu0
        %v5876 = vadd.f32 0.0, %v5875
        %5877 = vmatmul.bf16.gmra.mxu0 %v5818
        %v5878 = vpop.f32.mrf.mxu0
        %v5879 = vadd.f32 0.0, %v5878
        %v5880 = vpop.f32.mrf.mxu0
        %v5881 = vadd.f32 0.0, %v5880
        %5882 = vmatmul.bf16.gmra.mxu0 %v5821
        %v5883 = vpop.f32.mrf.mxu0
        %v5884 = vadd.f32 0.0, %v5883
        %v5885 = vpop.f32.mrf.mxu0
        %v5886 = vadd.f32 0.0, %v5885
        %5887 = vmatmul.bf16.gmra.mxu0 %v5824
        %v5888 = vpop.f32.mrf.mxu0
        %v5889 = vadd.f32 0.0, %v5888
        %v5890 = vpop.f32.mrf.mxu0
        %v5891 = vadd.f32 0.0, %v5890
        %5892 = vmatmul.bf16.gmra.mxu0 %v5827
        %v5893 = vpop.f32.mrf.mxu0
        %v5894 = vadd.f32 0.0, %v5893
        %v5895 = vpop.f32.mrf.mxu0
        %v5896 = vadd.f32 0.0, %v5895
        %5897 = vmatmul.bf16.gmra.mxu0 %v5830
        %v5898 = vpop.f32.mrf.mxu0
        %v5899 = vadd.f32 0.0, %v5898
        %v5900 = vpop.f32.mrf.mxu0
        %v5901 = vadd.f32 0.0, %v5900
        %5902 = vmatmul.bf16.gmra.mxu0 %v5833
        %v5903 = vpop.f32.mrf.mxu0
        %v5904 = vadd.f32 0.0, %v5903
        %v5905 = vpop.f32.mrf.mxu0
        %v5906 = vadd.f32 0.0, %v5905
        %5907 = vmatmul.bf16.gmra.mxu0 %v5836
        %v5908 = vpop.f32.mrf.mxu0
        %v5909 = vadd.f32 0.0, %v5908
        %v5910 = vpop.f32.mrf.mxu0
        %v5911 = vadd.f32 0.0, %v5910
        %5912 = vmatmul.bf16.gmra.mxu0 %v5839
        %v5913 = vpop.f32.mrf.mxu0
        %v5914 = vadd.f32 0.0, %v5913
        %v5915 = vpop.f32.mrf.mxu0
        %v5916 = vadd.f32 0.0, %v5915
        %5917 = vmatmul.bf16.gmra.mxu0 %v5842
        %v5918 = vpop.f32.mrf.mxu0
        %v5919 = vadd.f32 0.0, %v5918
        %v5920 = vpop.f32.mrf.mxu0
        %v5921 = vadd.f32 0.0, %v5920
        %5922 = vmatmul.bf16.gmra.mxu0 %v5845
        %v5923 = vpop.f32.mrf.mxu0
        %v5924 = vadd.f32 0.0, %v5923
        %v5925 = vpop.f32.mrf.mxu0
        %v5926 = vadd.f32 0.0, %v5925
        %5927 = vmatmul.bf16.gmra.mxu0 %v5848
        %v5928 = vpop.f32.mrf.mxu0
        %v5929 = vadd.f32 0.0, %v5928
        %v5930 = vpop.f32.mrf.mxu0
        %v5931 = vadd.f32 0.0, %v5930
        %5932 = vmatmul.bf16.gmra.mxu0 %v5851
        %v5933 = vpop.f32.mrf.mxu0
        %v5934 = vadd.f32 0.0, %v5933
        %v5935 = vpop.f32.mrf.mxu0
        %v5936 = vadd.f32 0.0, %v5935
        %5937 = vmatmul.bf16.gmra.mxu0 %v5854
        %v5938 = vpop.f32.mrf.mxu0
        %v5939 = vadd.f32 0.0, %v5938
        %v5940 = vpop.f32.mrf.mxu0
        %v5941 = vadd.f32 0.0, %v5940
        %5942 = vmatmul.bf16.gmra.mxu0 %v5857
        %v5943 = vpop.f32.mrf.mxu0
        %v5944 = vadd.f32 0.0, %v5943
        %v5945 = vpop.f32.mrf.mxu0
        %v5946 = vadd.f32 0.0, %v5945
        %5947 = vdwg.mxu0
        %v5948 = vadd.f32 %v5699, %v5869
        %v5949 = vadd.f32 %v5700, %v5871
        %v5950 = vadd.f32 %v5701, %v5874
        %v5951 = vadd.f32 %v5702, %v5876
        %v5952 = vadd.f32 %v5703, %v5879
        %v5953 = vadd.f32 %v5704, %v5881
        %v5954 = vadd.f32 %v5705, %v5884
        %v5955 = vadd.f32 %v5706, %v5886
        %v5956 = vadd.f32 %v5707, %v5889
        %v5957 = vadd.f32 %v5708, %v5891
        %v5958 = vadd.f32 %v5709, %v5894
        %v5959 = vadd.f32 %v5710, %v5896
        %v5960 = vadd.f32 %v5711, %v5899
        %v5961 = vadd.f32 %v5712, %v5901
        %v5962 = vadd.f32 %v5713, %v5904
        %v5963 = vadd.f32 %v5714, %v5906
        %v5964 = vadd.f32 %v5715, %v5909
        %v5965 = vadd.f32 %v5716, %v5911
        %v5966 = vadd.f32 %v5717, %v5914
        %v5967 = vadd.f32 %v5718, %v5916
        %v5968 = vadd.f32 %v5719, %v5919
        %v5969 = vadd.f32 %v5720, %v5921
        %v5970 = vadd.f32 %v5721, %v5924
        %v5971 = vadd.f32 %v5722, %v5926
        %v5972 = vadd.f32 %v5723, %v5929
        %v5973 = vadd.f32 %v5724, %v5931
        %v5974 = vadd.f32 %v5725, %v5934
        %v5975 = vadd.f32 %v5726, %v5936
        %v5976 = vadd.f32 %v5727, %v5939
        %v5977 = vadd.f32 %v5728, %v5941
        %v5978 = vadd.f32 %v5729, %v5944
        %v5979 = vadd.f32 %v5730, %v5946
        %v5980 = vld [vmem:[%s326 + $0x1] sm:$0xff]
        %v5981 = vld [vmem:[%s326 + $0x9] sm:$0xff]
        %v5982 = vld [vmem:[%s326 + $0x19] sm:$0xff]
        %v5983 = vld [vmem:[%s326 + $0x21] sm:$0xff]
        %v5984 = vld [vmem:[%s326 + $0x31] sm:$0xff]
        %v5985 = vld [vmem:[%s326 + $0x39] sm:$0xff]
        %v5986 = vld [vmem:[%s326 + $0x49] sm:$0xff]
        %v5987 = vld [vmem:[%s326 + $0x51] sm:$0xff]
        %v5988 = vld [vmem:[%s326 + $0x61] sm:$0xff]
        %v5989 = vld [vmem:[%s326 + $0x69] sm:$0xff]
        %v5990 = vld [vmem:[%s326 + $0x79] sm:$0xff]
        %v5991 = vld [vmem:[%s326 + $0x81] sm:$0xff]
        %v5992 = vld [vmem:[%s326 + $0x91] sm:$0xff]
        %v5993 = vld [vmem:[%s326 + $0x99] sm:$0xff]
        %v5994 = vld [vmem:[%s326 + $0xa9] sm:$0xff]
        %v5995 = vld [vmem:[%s326 + $0xb1] sm:$0xff]
        %v5996 = vld [vmem:[%s326 + $0xc1] sm:$0xff]
        %v5997 = vld [vmem:[%s326 + $0xc9] sm:$0xff]
        %v5998 = vld [vmem:[%s326 + $0xd9] sm:$0xff]
        %v5999 = vld [vmem:[%s326 + $0xe1] sm:$0xff]
        %v6000 = vld [vmem:[%s326 + $0xf1] sm:$0xff]
        %v6001 = vld [vmem:[%s326 + $0xf9] sm:$0xff]
        %v6002 = vld [vmem:[%s326 + $0x109] sm:$0xff]
        %v6003 = vld [vmem:[%s326 + $0x111] sm:$0xff]
        %v6004 = vld [vmem:[%s326 + $0x121] sm:$0xff]
        %v6005 = vld [vmem:[%s326 + $0x129] sm:$0xff]
        %v6006 = vld [vmem:[%s326 + $0x139] sm:$0xff]
        %v6007 = vld [vmem:[%s326 + $0x141] sm:$0xff]
        %v6008 = vld [vmem:[%s326 + $0x151] sm:$0xff]
        %v6009 = vld [vmem:[%s326 + $0x159] sm:$0xff]
        %v6010 = vld [vmem:[%s326 + $0x169] sm:$0xff]
        %v6011 = vld [vmem:[%s326 + $0x171] sm:$0xff]
        %v6012 = vpack.c.bf16 %v5981, %v5980
        %v6013 = vpack.c.bf16 %v5983, %v5982
        %v6014 = vpack.c.bf16 %v5985, %v5984
        %v6015 = vpack.c.bf16 %v5987, %v5986
        %v6016 = vpack.c.bf16 %v5989, %v5988
        %v6017 = vpack.c.bf16 %v5991, %v5990
        %v6018 = vpack.c.bf16 %v5993, %v5992
        %v6019 = vpack.c.bf16 %v5995, %v5994
        %v6020 = vpack.c.bf16 %v5997, %v5996
        %v6021 = vpack.c.bf16 %v5999, %v5998
        %v6022 = vpack.c.bf16 %v6001, %v6000
        %v6023 = vpack.c.bf16 %v6003, %v6002
        %v6024 = vpack.c.bf16 %v6005, %v6004
        %v6025 = vpack.c.bf16 %v6007, %v6006
        %v6026 = vpack.c.bf16 %v6009, %v6008
        %v6027 = vpack.c.bf16 %v6011, %v6010
        %v6028 = vld [vmem:[%s1342] sm:$0xf]
        %v6029 = vld [vmem:[%s1342 + $0x4] sm:$0xf]
        %v6030 = vld [vmem:[%s1342 + $0x8] sm:$0xf]
        %v6031 = vld [vmem:[%s1342 + $0xc] sm:$0xf]
        %v6032 = vld [vmem:[%s1342 + $0x10] sm:$0xf]
        %v6033 = vld [vmem:[%s1342 + $0x14] sm:$0xf]
        %v6034 = vld [vmem:[%s1342 + $0x18] sm:$0xf]
        %v6035 = vld [vmem:[%s1342 + $0x1c] sm:$0xf]
        %v6044 = vunpack.c.l.b16 %v6028
        %v6045 = vunpack.c.l.b16 %v6029
        %v6046 = vunpack.c.l.b16 %v6030
        %v6047 = vunpack.c.l.b16 %v6031
        %v6048 = vunpack.c.l.b16 %v6032
        %v6049 = vunpack.c.l.b16 %v6033
        %v6050 = vunpack.c.l.b16 %v6034
        %v6051 = vunpack.c.l.b16 %v6035
        %v6052 = vpack.c.b16 %v6045, %v6044
        %v6053 = vpack.c.b16 %v6047, %v6046
        %v6054 = vpack.c.b16 %v6049, %v6048
        %v6055 = vpack.c.b16 %v6051, %v6050
        %v6061 = vsel %vm236, %v6012, 0
        %v6064 = vsel %vm236, %v6013, 0
        %v6067 = vsel %vm236, %v6014, 0
        %v6070 = vsel %vm236, %v6015, 0
        %v6073 = vsel %vm236, %v6016, 0
        %v6076 = vsel %vm236, %v6017, 0
        %v6079 = vsel %vm236, %v6018, 0
        %v6082 = vsel %vm236, %v6019, 0
        %v6085 = vsel %vm236, %v6020, 0
        %v6088 = vsel %vm236, %v6021, 0
        %v6091 = vsel %vm236, %v6022, 0
        %v6094 = vsel %vm236, %v6023, 0
        %v6097 = vsel %vm236, %v6024, 0
        %v6100 = vsel %vm236, %v6025, 0
        %v6103 = vsel %vm236, %v6026, 0
        %v6106 = vsel %vm236, %v6027, 0
        %6108 = vmatpush.bf16.msra.mxu0 0
        %6109 = vmatpush.bf16.msra.mxu0 0
        %6110 = vmatpush.bf16.msra.mxu0 0
        %6111 = vmatpush.bf16.msra.mxu0 0
        %6112 = vmatpush.bf16.msra.mxu0 %v6055
        %6113 = vmatpush.bf16.msra.mxu0 %v6054
        %6114 = vmatpush.bf16.msra.mxu0 %v6053
        %6115 = vmatpush.bf16.msra.mxu0 %v6052
        %6116 = vmatmul.bf16.gmra.mxu0 %v6061
        %v6117 = vpop.f32.mrf.mxu0
        %v6118 = vadd.f32 0.0, %v6117
        %v6119 = vpop.f32.mrf.mxu0
        %v6120 = vadd.f32 0.0, %v6119
        %6121 = vmatmul.bf16.gmra.mxu0 %v6064
        %v6122 = vpop.f32.mrf.mxu0
        %v6123 = vadd.f32 0.0, %v6122
        %v6124 = vpop.f32.mrf.mxu0
        %v6125 = vadd.f32 0.0, %v6124
        %6126 = vmatmul.bf16.gmra.mxu0 %v6067
        %v6127 = vpop.f32.mrf.mxu0
        %v6128 = vadd.f32 0.0, %v6127
        %v6129 = vpop.f32.mrf.mxu0
        %v6130 = vadd.f32 0.0, %v6129
        %6131 = vmatmul.bf16.gmra.mxu0 %v6070
        %v6132 = vpop.f32.mrf.mxu0
        %v6133 = vadd.f32 0.0, %v6132
        %v6134 = vpop.f32.mrf.mxu0
        %v6135 = vadd.f32 0.0, %v6134
        %6136 = vmatmul.bf16.gmra.mxu0 %v6073
        %v6137 = vpop.f32.mrf.mxu0
        %v6138 = vadd.f32 0.0, %v6137
        %v6139 = vpop.f32.mrf.mxu0
        %v6140 = vadd.f32 0.0, %v6139
        %6141 = vmatmul.bf16.gmra.mxu0 %v6076
        %v6142 = vpop.f32.mrf.mxu0
        %v6143 = vadd.f32 0.0, %v6142
        %v6144 = vpop.f32.mrf.mxu0
        %v6145 = vadd.f32 0.0, %v6144
        %6146 = vmatmul.bf16.gmra.mxu0 %v6079
        %v6147 = vpop.f32.mrf.mxu0
        %v6148 = vadd.f32 0.0, %v6147
        %v6149 = vpop.f32.mrf.mxu0
        %v6150 = vadd.f32 0.0, %v6149
        %6151 = vmatmul.bf16.gmra.mxu0 %v6082
        %v6152 = vpop.f32.mrf.mxu0
        %v6153 = vadd.f32 0.0, %v6152
        %v6154 = vpop.f32.mrf.mxu0
        %v6155 = vadd.f32 0.0, %v6154
        %6156 = vmatmul.bf16.gmra.mxu0 %v6085
        %v6157 = vpop.f32.mrf.mxu0
        %v6158 = vadd.f32 0.0, %v6157
        %v6159 = vpop.f32.mrf.mxu0
        %v6160 = vadd.f32 0.0, %v6159
        %6161 = vmatmul.bf16.gmra.mxu0 %v6088
        %v6162 = vpop.f32.mrf.mxu0
        %v6163 = vadd.f32 0.0, %v6162
        %v6164 = vpop.f32.mrf.mxu0
        %v6165 = vadd.f32 0.0, %v6164
        %6166 = vmatmul.bf16.gmra.mxu0 %v6091
        %v6167 = vpop.f32.mrf.mxu0
        %v6168 = vadd.f32 0.0, %v6167
        %v6169 = vpop.f32.mrf.mxu0
        %v6170 = vadd.f32 0.0, %v6169
        %6171 = vmatmul.bf16.gmra.mxu0 %v6094
        %v6172 = vpop.f32.mrf.mxu0
        %v6173 = vadd.f32 0.0, %v6172
        %v6174 = vpop.f32.mrf.mxu0
        %v6175 = vadd.f32 0.0, %v6174
        %6176 = vmatmul.bf16.gmra.mxu0 %v6097
        %v6177 = vpop.f32.mrf.mxu0
        %v6178 = vadd.f32 0.0, %v6177
        %v6179 = vpop.f32.mrf.mxu0
        %v6180 = vadd.f32 0.0, %v6179
        %6181 = vmatmul.bf16.gmra.mxu0 %v6100
        %v6182 = vpop.f32.mrf.mxu0
        %v6183 = vadd.f32 0.0, %v6182
        %v6184 = vpop.f32.mrf.mxu0
        %v6185 = vadd.f32 0.0, %v6184
        %6186 = vmatmul.bf16.gmra.mxu0 %v6103
        %v6187 = vpop.f32.mrf.mxu0
        %v6188 = vadd.f32 0.0, %v6187
        %v6189 = vpop.f32.mrf.mxu0
        %v6190 = vadd.f32 0.0, %v6189
        %6191 = vmatmul.bf16.gmra.mxu0 %v6106
        %v6192 = vpop.f32.mrf.mxu0
        %v6193 = vadd.f32 0.0, %v6192
        %v6194 = vpop.f32.mrf.mxu0
        %v6195 = vadd.f32 0.0, %v6194
        %6196 = vdwg.mxu0
        %v6197 = vadd.f32 %v5948, %v6118
        %v6198 = vadd.f32 %v5949, %v6120
        %v6199 = vadd.f32 %v5950, %v6123
        %v6200 = vadd.f32 %v5951, %v6125
        %v6201 = vadd.f32 %v5952, %v6128
        %v6202 = vadd.f32 %v5953, %v6130
        %v6203 = vadd.f32 %v5954, %v6133
        %v6204 = vadd.f32 %v5955, %v6135
        %v6205 = vadd.f32 %v5956, %v6138
        %v6206 = vadd.f32 %v5957, %v6140
        %v6207 = vadd.f32 %v5958, %v6143
        %v6208 = vadd.f32 %v5959, %v6145
        %v6209 = vadd.f32 %v5960, %v6148
        %v6210 = vadd.f32 %v5961, %v6150
        %v6211 = vadd.f32 %v5962, %v6153
        %v6212 = vadd.f32 %v5963, %v6155
        %v6213 = vadd.f32 %v5964, %v6158
        %v6214 = vadd.f32 %v5965, %v6160
        %v6215 = vadd.f32 %v5966, %v6163
        %v6216 = vadd.f32 %v5967, %v6165
        %v6217 = vadd.f32 %v5968, %v6168
        %v6218 = vadd.f32 %v5969, %v6170
        %v6219 = vadd.f32 %v5970, %v6173
        %v6220 = vadd.f32 %v5971, %v6175
        %v6221 = vadd.f32 %v5972, %v6178
        %v6222 = vadd.f32 %v5973, %v6180
        %v6223 = vadd.f32 %v5974, %v6183
        %v6224 = vadd.f32 %v5975, %v6185
        %v6225 = vadd.f32 %v5976, %v6188
        %v6226 = vadd.f32 %v5977, %v6190
        %v6227 = vadd.f32 %v5978, %v6193
        %v6228 = vadd.f32 %v5979, %v6195
        %v6229 = vld [vmem:[%s326 + $0x2] sm:$0xff]
        %v6230 = vld [vmem:[%s326 + $0xa] sm:$0xff]
        %v6231 = vld [vmem:[%s326 + $0x1a] sm:$0xff]
        %v6232 = vld [vmem:[%s326 + $0x22] sm:$0xff]
        %v6233 = vld [vmem:[%s326 + $0x32] sm:$0xff]
        %v6234 = vld [vmem:[%s326 + $0x3a] sm:$0xff]
        %v6235 = vld [vmem:[%s326 + $0x4a] sm:$0xff]
        %v6236 = vld [vmem:[%s326 + $0x52] sm:$0xff]
        %v6237 = vld [vmem:[%s326 + $0x62] sm:$0xff]
        %v6238 = vld [vmem:[%s326 + $0x6a] sm:$0xff]
        %v6239 = vld [vmem:[%s326 + $0x7a] sm:$0xff]
        %v6240 = vld [vmem:[%s326 + $0x82] sm:$0xff]
        %v6241 = vld [vmem:[%s326 + $0x92] sm:$0xff]
        %v6242 = vld [vmem:[%s326 + $0x9a] sm:$0xff]
        %v6243 = vld [vmem:[%s326 + $0xaa] sm:$0xff]
        %v6244 = vld [vmem:[%s326 + $0xb2] sm:$0xff]
        %v6245 = vld [vmem:[%s326 + $0xc2] sm:$0xff]
        %v6246 = vld [vmem:[%s326 + $0xca] sm:$0xff]
        %v6247 = vld [vmem:[%s326 + $0xda] sm:$0xff]
        %v6248 = vld [vmem:[%s326 + $0xe2] sm:$0xff]
        %v6249 = vld [vmem:[%s326 + $0xf2] sm:$0xff]
        %v6250 = vld [vmem:[%s326 + $0xfa] sm:$0xff]
        %v6251 = vld [vmem:[%s326 + $0x10a] sm:$0xff]
        %v6252 = vld [vmem:[%s326 + $0x112] sm:$0xff]
        %v6253 = vld [vmem:[%s326 + $0x122] sm:$0xff]
        %v6254 = vld [vmem:[%s326 + $0x12a] sm:$0xff]
        %v6255 = vld [vmem:[%s326 + $0x13a] sm:$0xff]
        %v6256 = vld [vmem:[%s326 + $0x142] sm:$0xff]
        %v6257 = vld [vmem:[%s326 + $0x152] sm:$0xff]
        %v6258 = vld [vmem:[%s326 + $0x15a] sm:$0xff]
        %v6259 = vld [vmem:[%s326 + $0x16a] sm:$0xff]
        %v6260 = vld [vmem:[%s326 + $0x172] sm:$0xff]
        %v6261 = vpack.c.bf16 %v6230, %v6229
        %v6262 = vpack.c.bf16 %v6232, %v6231
        %v6263 = vpack.c.bf16 %v6234, %v6233
        %v6264 = vpack.c.bf16 %v6236, %v6235
        %v6265 = vpack.c.bf16 %v6238, %v6237
        %v6266 = vpack.c.bf16 %v6240, %v6239
        %v6267 = vpack.c.bf16 %v6242, %v6241
        %v6268 = vpack.c.bf16 %v6244, %v6243
        %v6269 = vpack.c.bf16 %v6246, %v6245
        %v6270 = vpack.c.bf16 %v6248, %v6247
        %v6271 = vpack.c.bf16 %v6250, %v6249
        %v6272 = vpack.c.bf16 %v6252, %v6251
        %v6273 = vpack.c.bf16 %v6254, %v6253
        %v6274 = vpack.c.bf16 %v6256, %v6255
        %v6275 = vpack.c.bf16 %v6258, %v6257
        %v6276 = vpack.c.bf16 %v6260, %v6259
        %v6277 = vld [vmem:[%s1592] sm:$0xf]
        %v6278 = vld [vmem:[%s1592 + $0x4] sm:$0xf]
        %v6279 = vld [vmem:[%s1592 + $0x8] sm:$0xf]
        %v6280 = vld [vmem:[%s1592 + $0xc] sm:$0xf]
        %v6281 = vld [vmem:[%s1592 + $0x10] sm:$0xf]
        %v6282 = vld [vmem:[%s1592 + $0x14] sm:$0xf]
        %v6283 = vld [vmem:[%s1592 + $0x18] sm:$0xf]
        %v6284 = vld [vmem:[%s1592 + $0x1c] sm:$0xf]
        %v6293 = vunpack.c.l.b16 %v6277
        %v6294 = vunpack.c.l.b16 %v6278
        %v6295 = vunpack.c.l.b16 %v6279
        %v6296 = vunpack.c.l.b16 %v6280
        %v6297 = vunpack.c.l.b16 %v6281
        %v6298 = vunpack.c.l.b16 %v6282
        %v6299 = vunpack.c.l.b16 %v6283
        %v6300 = vunpack.c.l.b16 %v6284
        %v6301 = vpack.c.b16 %v6294, %v6293
        %v6302 = vpack.c.b16 %v6296, %v6295
        %v6303 = vpack.c.b16 %v6298, %v6297
        %v6304 = vpack.c.b16 %v6300, %v6299
        %v6310 = vsel %vm236, %v6261, 0
        %v6313 = vsel %vm236, %v6262, 0
        %v6316 = vsel %vm236, %v6263, 0
        %v6319 = vsel %vm236, %v6264, 0
        %v6322 = vsel %vm236, %v6265, 0
        %v6325 = vsel %vm236, %v6266, 0
        %v6328 = vsel %vm236, %v6267, 0
        %v6331 = vsel %vm236, %v6268, 0
        %v6334 = vsel %vm236, %v6269, 0
        %v6337 = vsel %vm236, %v6270, 0
        %v6340 = vsel %vm236, %v6271, 0
        %v6343 = vsel %vm236, %v6272, 0
        %v6346 = vsel %vm236, %v6273, 0
        %v6349 = vsel %vm236, %v6274, 0
        %v6352 = vsel %vm236, %v6275, 0
        %v6355 = vsel %vm236, %v6276, 0
        %6357 = vmatpush.bf16.msra.mxu0 0
        %6358 = vmatpush.bf16.msra.mxu0 0
        %6359 = vmatpush.bf16.msra.mxu0 0
        %6360 = vmatpush.bf16.msra.mxu0 0
        %6361 = vmatpush.bf16.msra.mxu0 %v6304
        %6362 = vmatpush.bf16.msra.mxu0 %v6303
        %6363 = vmatpush.bf16.msra.mxu0 %v6302
        %6364 = vmatpush.bf16.msra.mxu0 %v6301
        %6365 = vmatmul.bf16.gmra.mxu0 %v6310
        %v6366 = vpop.f32.mrf.mxu0
        %v6367 = vadd.f32 0.0, %v6366
        %v6368 = vpop.f32.mrf.mxu0
        %v6369 = vadd.f32 0.0, %v6368
        %6370 = vmatmul.bf16.gmra.mxu0 %v6313
        %v6371 = vpop.f32.mrf.mxu0
        %v6372 = vadd.f32 0.0, %v6371
        %v6373 = vpop.f32.mrf.mxu0
        %v6374 = vadd.f32 0.0, %v6373
        %6375 = vmatmul.bf16.gmra.mxu0 %v6316
        %v6376 = vpop.f32.mrf.mxu0
        %v6377 = vadd.f32 0.0, %v6376
        %v6378 = vpop.f32.mrf.mxu0
        %v6379 = vadd.f32 0.0, %v6378
        %6380 = vmatmul.bf16.gmra.mxu0 %v6319
        %v6381 = vpop.f32.mrf.mxu0
        %v6382 = vadd.f32 0.0, %v6381
        %v6383 = vpop.f32.mrf.mxu0
        %v6384 = vadd.f32 0.0, %v6383
        %6385 = vmatmul.bf16.gmra.mxu0 %v6322
        %v6386 = vpop.f32.mrf.mxu0
        %v6387 = vadd.f32 0.0, %v6386
        %v6388 = vpop.f32.mrf.mxu0
        %v6389 = vadd.f32 0.0, %v6388
        %6390 = vmatmul.bf16.gmra.mxu0 %v6325
        %v6391 = vpop.f32.mrf.mxu0
        %v6392 = vadd.f32 0.0, %v6391
        %v6393 = vpop.f32.mrf.mxu0
        %v6394 = vadd.f32 0.0, %v6393
        %6395 = vmatmul.bf16.gmra.mxu0 %v6328
        %v6396 = vpop.f32.mrf.mxu0
        %v6397 = vadd.f32 0.0, %v6396
        %v6398 = vpop.f32.mrf.mxu0
        %v6399 = vadd.f32 0.0, %v6398
        %6400 = vmatmul.bf16.gmra.mxu0 %v6331
        %v6401 = vpop.f32.mrf.mxu0
        %v6402 = vadd.f32 0.0, %v6401
        %v6403 = vpop.f32.mrf.mxu0
        %v6404 = vadd.f32 0.0, %v6403
        %6405 = vmatmul.bf16.gmra.mxu0 %v6334
        %v6406 = vpop.f32.mrf.mxu0
        %v6407 = vadd.f32 0.0, %v6406
        %v6408 = vpop.f32.mrf.mxu0
        %v6409 = vadd.f32 0.0, %v6408
        %6410 = vmatmul.bf16.gmra.mxu0 %v6337
        %v6411 = vpop.f32.mrf.mxu0
        %v6412 = vadd.f32 0.0, %v6411
        %v6413 = vpop.f32.mrf.mxu0
        %v6414 = vadd.f32 0.0, %v6413
        %6415 = vmatmul.bf16.gmra.mxu0 %v6340
        %v6416 = vpop.f32.mrf.mxu0
        %v6417 = vadd.f32 0.0, %v6416
        %v6418 = vpop.f32.mrf.mxu0
        %v6419 = vadd.f32 0.0, %v6418
        %6420 = vmatmul.bf16.gmra.mxu0 %v6343
        %v6421 = vpop.f32.mrf.mxu0
        %v6422 = vadd.f32 0.0, %v6421
        %v6423 = vpop.f32.mrf.mxu0
        %v6424 = vadd.f32 0.0, %v6423
        %6425 = vmatmul.bf16.gmra.mxu0 %v6346
        %v6426 = vpop.f32.mrf.mxu0
        %v6427 = vadd.f32 0.0, %v6426
        %v6428 = vpop.f32.mrf.mxu0
        %v6429 = vadd.f32 0.0, %v6428
        %6430 = vmatmul.bf16.gmra.mxu0 %v6349
        %v6431 = vpop.f32.mrf.mxu0
        %v6432 = vadd.f32 0.0, %v6431
        %v6433 = vpop.f32.mrf.mxu0
        %v6434 = vadd.f32 0.0, %v6433
        %6435 = vmatmul.bf16.gmra.mxu0 %v6352
        %v6436 = vpop.f32.mrf.mxu0
        %v6437 = vadd.f32 0.0, %v6436
        %v6438 = vpop.f32.mrf.mxu0
        %v6439 = vadd.f32 0.0, %v6438
        %6440 = vmatmul.bf16.gmra.mxu0 %v6355
        %v6441 = vpop.f32.mrf.mxu0
        %v6442 = vadd.f32 0.0, %v6441
        %v6443 = vpop.f32.mrf.mxu0
        %v6444 = vadd.f32 0.0, %v6443
        %6445 = vdwg.mxu0
        %v6446 = vadd.f32 %v6197, %v6367
        %v6447 = vadd.f32 %v6198, %v6369
        %v6448 = vadd.f32 %v6199, %v6372
        %v6449 = vadd.f32 %v6200, %v6374
        %v6450 = vadd.f32 %v6201, %v6377
        %v6451 = vadd.f32 %v6202, %v6379
        %v6452 = vadd.f32 %v6203, %v6382
        %v6453 = vadd.f32 %v6204, %v6384
        %v6454 = vadd.f32 %v6205, %v6387
        %v6455 = vadd.f32 %v6206, %v6389
        %v6456 = vadd.f32 %v6207, %v6392
        %v6457 = vadd.f32 %v6208, %v6394
        %v6458 = vadd.f32 %v6209, %v6397
        %v6459 = vadd.f32 %v6210, %v6399
        %v6460 = vadd.f32 %v6211, %v6402
        %v6461 = vadd.f32 %v6212, %v6404
        %v6462 = vadd.f32 %v6213, %v6407
        %v6463 = vadd.f32 %v6214, %v6409
        %v6464 = vadd.f32 %v6215, %v6412
        %v6465 = vadd.f32 %v6216, %v6414
        %v6466 = vadd.f32 %v6217, %v6417
        %v6467 = vadd.f32 %v6218, %v6419
        %v6468 = vadd.f32 %v6219, %v6422
        %v6469 = vadd.f32 %v6220, %v6424
        %v6470 = vadd.f32 %v6221, %v6427
        %v6471 = vadd.f32 %v6222, %v6429
        %v6472 = vadd.f32 %v6223, %v6432
        %v6473 = vadd.f32 %v6224, %v6434
        %v6474 = vadd.f32 %v6225, %v6437
        %v6475 = vadd.f32 %v6226, %v6439
        %v6476 = vadd.f32 %v6227, %v6442
        %v6477 = vadd.f32 %v6228, %v6444
        %v6478 = vld [vmem:[%s1794] sm:$0xff]
        %v6479 = vld [vmem:[%s1794 + $0x8] sm:$0xff]
        %v6480 = vld [vmem:[%s1794 + $0x18] sm:$0xff]
        %v6481 = vld [vmem:[%s1794 + $0x20] sm:$0xff]
        %v6482 = vld [vmem:[%s1794 + $0x30] sm:$0xff]
        %v6483 = vld [vmem:[%s1794 + $0x38] sm:$0xff]
        %v6484 = vld [vmem:[%s1794 + $0x48] sm:$0xff]
        %v6485 = vld [vmem:[%s1794 + $0x50] sm:$0xff]
        %v6486 = vld [vmem:[%s1794 + $0x60] sm:$0xff]
        %v6487 = vld [vmem:[%s1794 + $0x68] sm:$0xff]
        %v6488 = vld [vmem:[%s1794 + $0x78] sm:$0xff]
        %v6489 = vld [vmem:[%s1794 + $0x80] sm:$0xff]
        %v6490 = vld [vmem:[%s1794 + $0x90] sm:$0xff]
        %v6491 = vld [vmem:[%s1794 + $0x98] sm:$0xff]
        %v6492 = vld [vmem:[%s1794 + $0xa8] sm:$0xff]
        %v6493 = vld [vmem:[%s1794 + $0xb0] sm:$0xff]
        %v6494 = vld [vmem:[%s1794 + $0xc0] sm:$0xff]
        %v6495 = vld [vmem:[%s1794 + $0xc8] sm:$0xff]
        %v6496 = vld [vmem:[%s1794 + $0xd8] sm:$0xff]
        %v6497 = vld [vmem:[%s1794 + $0xe0] sm:$0xff]
        %v6498 = vld [vmem:[%s1794 + $0xf0] sm:$0xff]
        %v6499 = vld [vmem:[%s1794 + $0xf8] sm:$0xff]
        %v6500 = vld [vmem:[%s1794 + $0x108] sm:$0xff]
        %v6501 = vld [vmem:[%s1794 + $0x110] sm:$0xff]
        %v6502 = vld [vmem:[%s1794 + $0x120] sm:$0xff]
        %v6503 = vld [vmem:[%s1794 + $0x128] sm:$0xff]
        %v6504 = vld [vmem:[%s1794 + $0x138] sm:$0xff]
        %v6505 = vld [vmem:[%s1794 + $0x140] sm:$0xff]
        %v6506 = vld [vmem:[%s1794 + $0x150] sm:$0xff]
        %v6507 = vld [vmem:[%s1794 + $0x158] sm:$0xff]
        %v6508 = vld [vmem:[%s1794 + $0x168] sm:$0xff]
        %v6509 = vld [vmem:[%s1794 + $0x170] sm:$0xff]
        %v6510 = vpack.c.bf16 %v6479, %v6478
        %v6511 = vpack.c.bf16 %v6481, %v6480
        %v6512 = vpack.c.bf16 %v6483, %v6482
        %v6513 = vpack.c.bf16 %v6485, %v6484
        %v6514 = vpack.c.bf16 %v6487, %v6486
        %v6515 = vpack.c.bf16 %v6489, %v6488
        %v6516 = vpack.c.bf16 %v6491, %v6490
        %v6517 = vpack.c.bf16 %v6493, %v6492
        %v6518 = vpack.c.bf16 %v6495, %v6494
        %v6519 = vpack.c.bf16 %v6497, %v6496
        %v6520 = vpack.c.bf16 %v6499, %v6498
        %v6521 = vpack.c.bf16 %v6501, %v6500
        %v6522 = vpack.c.bf16 %v6503, %v6502
        %v6523 = vpack.c.bf16 %v6505, %v6504
        %v6524 = vpack.c.bf16 %v6507, %v6506
        %v6525 = vpack.c.bf16 %v6509, %v6508
        %v6526 = vld [vmem:[%s1843] sm:$0xf]
        %v6527 = vld [vmem:[%s1843 + $0x4] sm:$0xf]
        %v6528 = vld [vmem:[%s1843 + $0x8] sm:$0xf]
        %v6529 = vld [vmem:[%s1843 + $0xc] sm:$0xf]
        %v6530 = vld [vmem:[%s1843 + $0x10] sm:$0xf]
        %v6531 = vld [vmem:[%s1843 + $0x14] sm:$0xf]
        %v6532 = vld [vmem:[%s1843 + $0x18] sm:$0xf]
        %v6533 = vld [vmem:[%s1843 + $0x1c] sm:$0xf]
        %v6542 = vunpack.c.l.b16 %v6526
        %v6543 = vunpack.c.l.b16 %v6527
        %v6544 = vunpack.c.l.b16 %v6528
        %v6545 = vunpack.c.l.b16 %v6529
        %v6546 = vunpack.c.l.b16 %v6530
        %v6547 = vunpack.c.l.b16 %v6531
        %v6548 = vunpack.c.l.b16 %v6532
        %v6549 = vunpack.c.l.b16 %v6533
        %v6550 = vpack.c.b16 %v6543, %v6542
        %v6551 = vpack.c.b16 %v6545, %v6544
        %v6552 = vpack.c.b16 %v6547, %v6546
        %v6553 = vpack.c.b16 %v6549, %v6548
        %v6559 = vsel %vm236, %v6510, 0
        %v6562 = vsel %vm236, %v6511, 0
        %v6565 = vsel %vm236, %v6512, 0
        %v6568 = vsel %vm236, %v6513, 0
        %v6571 = vsel %vm236, %v6514, 0
        %v6574 = vsel %vm236, %v6515, 0
        %v6577 = vsel %vm236, %v6516, 0
        %v6580 = vsel %vm236, %v6517, 0
        %v6583 = vsel %vm236, %v6518, 0
        %v6586 = vsel %vm236, %v6519, 0
        %v6589 = vsel %vm236, %v6520, 0
        %v6592 = vsel %vm236, %v6521, 0
        %v6595 = vsel %vm236, %v6522, 0
        %v6598 = vsel %vm236, %v6523, 0
        %v6601 = vsel %vm236, %v6524, 0
        %v6604 = vsel %vm236, %v6525, 0
        %6606 = vmatpush.bf16.msra.mxu0 0
        %6607 = vmatpush.bf16.msra.mxu0 0
        %6608 = vmatpush.bf16.msra.mxu0 0
        %6609 = vmatpush.bf16.msra.mxu0 0
        %6610 = vmatpush.bf16.msra.mxu0 %v6553
        %6611 = vmatpush.bf16.msra.mxu0 %v6552
        %6612 = vmatpush.bf16.msra.mxu0 %v6551
        %6613 = vmatpush.bf16.msra.mxu0 %v6550
        %6614 = vmatmul.bf16.gmra.mxu0 %v6559
        %v6615 = vpop.f32.mrf.mxu0
        %v6616 = vadd.f32 0.0, %v6615
        %v6617 = vpop.f32.mrf.mxu0
        %v6618 = vadd.f32 0.0, %v6617
        %6619 = vmatmul.bf16.gmra.mxu0 %v6562
        %v6620 = vpop.f32.mrf.mxu0
        %v6621 = vadd.f32 0.0, %v6620
        %v6622 = vpop.f32.mrf.mxu0
        %v6623 = vadd.f32 0.0, %v6622
        %6624 = vmatmul.bf16.gmra.mxu0 %v6565
        %v6625 = vpop.f32.mrf.mxu0
        %v6626 = vadd.f32 0.0, %v6625
        %v6627 = vpop.f32.mrf.mxu0
        %v6628 = vadd.f32 0.0, %v6627
        %6629 = vmatmul.bf16.gmra.mxu0 %v6568
        %v6630 = vpop.f32.mrf.mxu0
        %v6631 = vadd.f32 0.0, %v6630
        %v6632 = vpop.f32.mrf.mxu0
        %v6633 = vadd.f32 0.0, %v6632
        %6634 = vmatmul.bf16.gmra.mxu0 %v6571
        %v6635 = vpop.f32.mrf.mxu0
        %v6636 = vadd.f32 0.0, %v6635
        %v6637 = vpop.f32.mrf.mxu0
        %v6638 = vadd.f32 0.0, %v6637
        %6639 = vmatmul.bf16.gmra.mxu0 %v6574
        %v6640 = vpop.f32.mrf.mxu0
        %v6641 = vadd.f32 0.0, %v6640
        %v6642 = vpop.f32.mrf.mxu0
        %v6643 = vadd.f32 0.0, %v6642
        %6644 = vmatmul.bf16.gmra.mxu0 %v6577
        %v6645 = vpop.f32.mrf.mxu0
        %v6646 = vadd.f32 0.0, %v6645
        %v6647 = vpop.f32.mrf.mxu0
        %v6648 = vadd.f32 0.0, %v6647
        %6649 = vmatmul.bf16.gmra.mxu0 %v6580
        %v6650 = vpop.f32.mrf.mxu0
        %v6651 = vadd.f32 0.0, %v6650
        %v6652 = vpop.f32.mrf.mxu0
        %v6653 = vadd.f32 0.0, %v6652
        %6654 = vmatmul.bf16.gmra.mxu0 %v6583
        %v6655 = vpop.f32.mrf.mxu0
        %v6656 = vadd.f32 0.0, %v6655
        %v6657 = vpop.f32.mrf.mxu0
        %v6658 = vadd.f32 0.0, %v6657
        %6659 = vmatmul.bf16.gmra.mxu0 %v6586
        %v6660 = vpop.f32.mrf.mxu0
        %v6661 = vadd.f32 0.0, %v6660
        %v6662 = vpop.f32.mrf.mxu0
        %v6663 = vadd.f32 0.0, %v6662
        %6664 = vmatmul.bf16.gmra.mxu0 %v6589
        %v6665 = vpop.f32.mrf.mxu0
        %v6666 = vadd.f32 0.0, %v6665
        %v6667 = vpop.f32.mrf.mxu0
        %v6668 = vadd.f32 0.0, %v6667
        %6669 = vmatmul.bf16.gmra.mxu0 %v6592
        %v6670 = vpop.f32.mrf.mxu0
        %v6671 = vadd.f32 0.0, %v6670
        %v6672 = vpop.f32.mrf.mxu0
        %v6673 = vadd.f32 0.0, %v6672
        %6674 = vmatmul.bf16.gmra.mxu0 %v6595
        %v6675 = vpop.f32.mrf.mxu0
        %v6676 = vadd.f32 0.0, %v6675
        %v6677 = vpop.f32.mrf.mxu0
        %v6678 = vadd.f32 0.0, %v6677
        %6679 = vmatmul.bf16.gmra.mxu0 %v6598
        %v6680 = vpop.f32.mrf.mxu0
        %v6681 = vadd.f32 0.0, %v6680
        %v6682 = vpop.f32.mrf.mxu0
        %v6683 = vadd.f32 0.0, %v6682
        %6684 = vmatmul.bf16.gmra.mxu0 %v6601
        %v6685 = vpop.f32.mrf.mxu0
        %v6686 = vadd.f32 0.0, %v6685
        %v6687 = vpop.f32.mrf.mxu0
        %v6688 = vadd.f32 0.0, %v6687
        %6689 = vmatmul.bf16.gmra.mxu0 %v6604
        %v6690 = vpop.f32.mrf.mxu0
        %v6691 = vadd.f32 0.0, %v6690
        %v6692 = vpop.f32.mrf.mxu0
        %v6693 = vadd.f32 0.0, %v6692
        %6694 = vdwg.mxu0
        %v6695 = vadd.f32 %v6446, %v6616
        %v6696 = vadd.f32 %v6447, %v6618
        %v6697 = vadd.f32 %v6448, %v6621
        %v6698 = vadd.f32 %v6449, %v6623
        %v6699 = vadd.f32 %v6450, %v6626
        %v6700 = vadd.f32 %v6451, %v6628
        %v6701 = vadd.f32 %v6452, %v6631
        %v6702 = vadd.f32 %v6453, %v6633
        %v6703 = vadd.f32 %v6454, %v6636
        %v6704 = vadd.f32 %v6455, %v6638
        %v6705 = vadd.f32 %v6456, %v6641
        %v6706 = vadd.f32 %v6457, %v6643
        %v6707 = vadd.f32 %v6458, %v6646
        %v6708 = vadd.f32 %v6459, %v6648
        %v6709 = vadd.f32 %v6460, %v6651
        %v6710 = vadd.f32 %v6461, %v6653
        %v6711 = vadd.f32 %v6462, %v6656
        %v6712 = vadd.f32 %v6463, %v6658
        %v6713 = vadd.f32 %v6464, %v6661
        %v6714 = vadd.f32 %v6465, %v6663
        %v6715 = vadd.f32 %v6466, %v6666
        %v6716 = vadd.f32 %v6467, %v6668
        %v6717 = vadd.f32 %v6468, %v6671
        %v6718 = vadd.f32 %v6469, %v6673
        %v6719 = vadd.f32 %v6470, %v6676
        %v6720 = vadd.f32 %v6471, %v6678
        %v6721 = vadd.f32 %v6472, %v6681
        %v6722 = vadd.f32 %v6473, %v6683
        %v6723 = vadd.f32 %v6474, %v6686
        %v6724 = vadd.f32 %v6475, %v6688
        %v6725 = vadd.f32 %v6476, %v6691
        %v6726 = vadd.f32 %v6477, %v6693
        %v6727 = vld [vmem:[%s1794 + $0x1] sm:$0xff]
        %v6728 = vld [vmem:[%s1794 + $0x9] sm:$0xff]
        %v6729 = vld [vmem:[%s1794 + $0x19] sm:$0xff]
        %v6730 = vld [vmem:[%s1794 + $0x21] sm:$0xff]
        %v6731 = vld [vmem:[%s1794 + $0x31] sm:$0xff]
        %v6732 = vld [vmem:[%s1794 + $0x39] sm:$0xff]
        %v6733 = vld [vmem:[%s1794 + $0x49] sm:$0xff]
        %v6734 = vld [vmem:[%s1794 + $0x51] sm:$0xff]
        %v6735 = vld [vmem:[%s1794 + $0x61] sm:$0xff]
        %v6736 = vld [vmem:[%s1794 + $0x69] sm:$0xff]
        %v6737 = vld [vmem:[%s1794 + $0x79] sm:$0xff]
        %v6738 = vld [vmem:[%s1794 + $0x81] sm:$0xff]
        %v6739 = vld [vmem:[%s1794 + $0x91] sm:$0xff]
        %v6740 = vld [vmem:[%s1794 + $0x99] sm:$0xff]
        %v6741 = vld [vmem:[%s1794 + $0xa9] sm:$0xff]
        %v6742 = vld [vmem:[%s1794 + $0xb1] sm:$0xff]
        %v6743 = vld [vmem:[%s1794 + $0xc1] sm:$0xff]
        %v6744 = vld [vmem:[%s1794 + $0xc9] sm:$0xff]
        %v6745 = vld [vmem:[%s1794 + $0xd9] sm:$0xff]
        %v6746 = vld [vmem:[%s1794 + $0xe1] sm:$0xff]
        %v6747 = vld [vmem:[%s1794 + $0xf1] sm:$0xff]
        %v6748 = vld [vmem:[%s1794 + $0xf9] sm:$0xff]
        %v6749 = vld [vmem:[%s1794 + $0x109] sm:$0xff]
        %v6750 = vld [vmem:[%s1794 + $0x111] sm:$0xff]
        %v6751 = vld [vmem:[%s1794 + $0x121] sm:$0xff]
        %v6752 = vld [vmem:[%s1794 + $0x129] sm:$0xff]
        %v6753 = vld [vmem:[%s1794 + $0x139] sm:$0xff]
        %v6754 = vld [vmem:[%s1794 + $0x141] sm:$0xff]
        %v6755 = vld [vmem:[%s1794 + $0x151] sm:$0xff]
        %v6756 = vld [vmem:[%s1794 + $0x159] sm:$0xff]
        %v6757 = vld [vmem:[%s1794 + $0x169] sm:$0xff]
        %v6758 = vld [vmem:[%s1794 + $0x171] sm:$0xff]
        %v6759 = vpack.c.bf16 %v6728, %v6727
        %v6760 = vpack.c.bf16 %v6730, %v6729
        %v6761 = vpack.c.bf16 %v6732, %v6731
        %v6762 = vpack.c.bf16 %v6734, %v6733
        %v6763 = vpack.c.bf16 %v6736, %v6735
        %v6764 = vpack.c.bf16 %v6738, %v6737
        %v6765 = vpack.c.bf16 %v6740, %v6739
        %v6766 = vpack.c.bf16 %v6742, %v6741
        %v6767 = vpack.c.bf16 %v6744, %v6743
        %v6768 = vpack.c.bf16 %v6746, %v6745
        %v6769 = vpack.c.bf16 %v6748, %v6747
        %v6770 = vpack.c.bf16 %v6750, %v6749
        %v6771 = vpack.c.bf16 %v6752, %v6751
        %v6772 = vpack.c.bf16 %v6754, %v6753
        %v6773 = vpack.c.bf16 %v6756, %v6755
        %v6774 = vpack.c.bf16 %v6758, %v6757
        %v6775 = vld [vmem:[%s2093] sm:$0xf]
        %v6776 = vld [vmem:[%s2093 + $0x4] sm:$0xf]
        %v6777 = vld [vmem:[%s2093 + $0x8] sm:$0xf]
        %v6778 = vld [vmem:[%s2093 + $0xc] sm:$0xf]
        %v6779 = vld [vmem:[%s2093 + $0x10] sm:$0xf]
        %v6780 = vld [vmem:[%s2093 + $0x14] sm:$0xf]
        %v6781 = vld [vmem:[%s2093 + $0x18] sm:$0xf]
        %v6782 = vld [vmem:[%s2093 + $0x1c] sm:$0xf]
        %v6791 = vunpack.c.l.b16 %v6775
        %v6792 = vunpack.c.l.b16 %v6776
        %v6793 = vunpack.c.l.b16 %v6777
        %v6794 = vunpack.c.l.b16 %v6778
        %v6795 = vunpack.c.l.b16 %v6779
        %v6796 = vunpack.c.l.b16 %v6780
        %v6797 = vunpack.c.l.b16 %v6781
        %v6798 = vunpack.c.l.b16 %v6782
        %v6799 = vpack.c.b16 %v6792, %v6791
        %v6800 = vpack.c.b16 %v6794, %v6793
        %v6801 = vpack.c.b16 %v6796, %v6795
        %v6802 = vpack.c.b16 %v6798, %v6797
        %v6808 = vsel %vm236, %v6759, 0
        %v6811 = vsel %vm236, %v6760, 0
        %v6814 = vsel %vm236, %v6761, 0
        %v6817 = vsel %vm236, %v6762, 0
        %v6820 = vsel %vm236, %v6763, 0
        %v6823 = vsel %vm236, %v6764, 0
        %v6826 = vsel %vm236, %v6765, 0
        %v6829 = vsel %vm236, %v6766, 0
        %v6832 = vsel %vm236, %v6767, 0
        %v6835 = vsel %vm236, %v6768, 0
        %v6838 = vsel %vm236, %v6769, 0
        %v6841 = vsel %vm236, %v6770, 0
        %v6844 = vsel %vm236, %v6771, 0
        %v6847 = vsel %vm236, %v6772, 0
        %v6850 = vsel %vm236, %v6773, 0
        %v6853 = vsel %vm236, %v6774, 0
        %6855 = vmatpush.bf16.msra.mxu0 0
        %6856 = vmatpush.bf16.msra.mxu0 0
        %6857 = vmatpush.bf16.msra.mxu0 0
        %6858 = vmatpush.bf16.msra.mxu0 0
        %6859 = vmatpush.bf16.msra.mxu0 %v6802
        %6860 = vmatpush.bf16.msra.mxu0 %v6801
        %6861 = vmatpush.bf16.msra.mxu0 %v6800
        %6862 = vmatpush.bf16.msra.mxu0 %v6799
        %6863 = vmatmul.bf16.gmra.mxu0 %v6808
        %v6864 = vpop.f32.mrf.mxu0
        %v6865 = vadd.f32 0.0, %v6864
        %v6866 = vpop.f32.mrf.mxu0
        %v6867 = vadd.f32 0.0, %v6866
        %6868 = vmatmul.bf16.gmra.mxu0 %v6811
        %v6869 = vpop.f32.mrf.mxu0
        %v6870 = vadd.f32 0.0, %v6869
        %v6871 = vpop.f32.mrf.mxu0
        %v6872 = vadd.f32 0.0, %v6871
        %6873 = vmatmul.bf16.gmra.mxu0 %v6814
        %v6874 = vpop.f32.mrf.mxu0
        %v6875 = vadd.f32 0.0, %v6874
        %v6876 = vpop.f32.mrf.mxu0
        %v6877 = vadd.f32 0.0, %v6876
        %6878 = vmatmul.bf16.gmra.mxu0 %v6817
        %v6879 = vpop.f32.mrf.mxu0
        %v6880 = vadd.f32 0.0, %v6879
        %v6881 = vpop.f32.mrf.mxu0
        %v6882 = vadd.f32 0.0, %v6881
        %6883 = vmatmul.bf16.gmra.mxu0 %v6820
        %v6884 = vpop.f32.mrf.mxu0
        %v6885 = vadd.f32 0.0, %v6884
        %v6886 = vpop.f32.mrf.mxu0
        %v6887 = vadd.f32 0.0, %v6886
        %6888 = vmatmul.bf16.gmra.mxu0 %v6823
        %v6889 = vpop.f32.mrf.mxu0
        %v6890 = vadd.f32 0.0, %v6889
        %v6891 = vpop.f32.mrf.mxu0
        %v6892 = vadd.f32 0.0, %v6891
        %6893 = vmatmul.bf16.gmra.mxu0 %v6826
        %v6894 = vpop.f32.mrf.mxu0
        %v6895 = vadd.f32 0.0, %v6894
        %v6896 = vpop.f32.mrf.mxu0
        %v6897 = vadd.f32 0.0, %v6896
        %6898 = vmatmul.bf16.gmra.mxu0 %v6829
        %v6899 = vpop.f32.mrf.mxu0
        %v6900 = vadd.f32 0.0, %v6899
        %v6901 = vpop.f32.mrf.mxu0
        %v6902 = vadd.f32 0.0, %v6901
        %6903 = vmatmul.bf16.gmra.mxu0 %v6832
        %v6904 = vpop.f32.mrf.mxu0
        %v6905 = vadd.f32 0.0, %v6904
        %v6906 = vpop.f32.mrf.mxu0
        %v6907 = vadd.f32 0.0, %v6906
        %6908 = vmatmul.bf16.gmra.mxu0 %v6835
        %v6909 = vpop.f32.mrf.mxu0
        %v6910 = vadd.f32 0.0, %v6909
        %v6911 = vpop.f32.mrf.mxu0
        %v6912 = vadd.f32 0.0, %v6911
        %6913 = vmatmul.bf16.gmra.mxu0 %v6838
        %v6914 = vpop.f32.mrf.mxu0
        %v6915 = vadd.f32 0.0, %v6914
        %v6916 = vpop.f32.mrf.mxu0
        %v6917 = vadd.f32 0.0, %v6916
        %6918 = vmatmul.bf16.gmra.mxu0 %v6841
        %v6919 = vpop.f32.mrf.mxu0
        %v6920 = vadd.f32 0.0, %v6919
        %v6921 = vpop.f32.mrf.mxu0
        %v6922 = vadd.f32 0.0, %v6921
        %6923 = vmatmul.bf16.gmra.mxu0 %v6844
        %v6924 = vpop.f32.mrf.mxu0
        %v6925 = vadd.f32 0.0, %v6924
        %v6926 = vpop.f32.mrf.mxu0
        %v6927 = vadd.f32 0.0, %v6926
        %6928 = vmatmul.bf16.gmra.mxu0 %v6847
        %v6929 = vpop.f32.mrf.mxu0
        %v6930 = vadd.f32 0.0, %v6929
        %v6931 = vpop.f32.mrf.mxu0
        %v6932 = vadd.f32 0.0, %v6931
        %6933 = vmatmul.bf16.gmra.mxu0 %v6850
        %v6934 = vpop.f32.mrf.mxu0
        %v6935 = vadd.f32 0.0, %v6934
        %v6936 = vpop.f32.mrf.mxu0
        %v6937 = vadd.f32 0.0, %v6936
        %6938 = vmatmul.bf16.gmra.mxu0 %v6853
        %v6939 = vpop.f32.mrf.mxu0
        %v6940 = vadd.f32 0.0, %v6939
        %v6941 = vpop.f32.mrf.mxu0
        %v6942 = vadd.f32 0.0, %v6941
        %6943 = vdwg.mxu0
        %v6944 = vadd.f32 %v6695, %v6865
        %v6945 = vadd.f32 %v6696, %v6867
        %v6946 = vadd.f32 %v6697, %v6870
        %v6947 = vadd.f32 %v6698, %v6872
        %v6948 = vadd.f32 %v6699, %v6875
        %v6949 = vadd.f32 %v6700, %v6877
        %v6950 = vadd.f32 %v6701, %v6880
        %v6951 = vadd.f32 %v6702, %v6882
        %v6952 = vadd.f32 %v6703, %v6885
        %v6953 = vadd.f32 %v6704, %v6887
        %v6954 = vadd.f32 %v6705, %v6890
        %v6955 = vadd.f32 %v6706, %v6892
        %v6956 = vadd.f32 %v6707, %v6895
        %v6957 = vadd.f32 %v6708, %v6897
        %v6958 = vadd.f32 %v6709, %v6900
        %v6959 = vadd.f32 %v6710, %v6902
        %v6960 = vadd.f32 %v6711, %v6905
        %v6961 = vadd.f32 %v6712, %v6907
        %v6962 = vadd.f32 %v6713, %v6910
        %v6963 = vadd.f32 %v6714, %v6912
        %v6964 = vadd.f32 %v6715, %v6915
        %v6965 = vadd.f32 %v6716, %v6917
        %v6966 = vadd.f32 %v6717, %v6920
        %v6967 = vadd.f32 %v6718, %v6922
        %v6968 = vadd.f32 %v6719, %v6925
        %v6969 = vadd.f32 %v6720, %v6927
        %v6970 = vadd.f32 %v6721, %v6930
        %v6971 = vadd.f32 %v6722, %v6932
        %v6972 = vadd.f32 %v6723, %v6935
        %v6973 = vadd.f32 %v6724, %v6937
        %v6974 = vadd.f32 %v6725, %v6940
        %v6975 = vadd.f32 %v6726, %v6942
        %v6976 = vld [vmem:[%s1794 + $0x2] sm:$0xff]
        %v6977 = vld [vmem:[%s1794 + $0xa] sm:$0xff]
        %v6978 = vld [vmem:[%s1794 + $0x1a] sm:$0xff]
        %v6979 = vld [vmem:[%s1794 + $0x22] sm:$0xff]
        %v6980 = vld [vmem:[%s1794 + $0x32] sm:$0xff]
        %v6981 = vld [vmem:[%s1794 + $0x3a] sm:$0xff]
        %v6982 = vld [vmem:[%s1794 + $0x4a] sm:$0xff]
        %v6983 = vld [vmem:[%s1794 + $0x52] sm:$0xff]
        %v6984 = vld [vmem:[%s1794 + $0x62] sm:$0xff]
        %v6985 = vld [vmem:[%s1794 + $0x6a] sm:$0xff]
        %v6986 = vld [vmem:[%s1794 + $0x7a] sm:$0xff]
        %v6987 = vld [vmem:[%s1794 + $0x82] sm:$0xff]
        %v6988 = vld [vmem:[%s1794 + $0x92] sm:$0xff]
        %v6989 = vld [vmem:[%s1794 + $0x9a] sm:$0xff]
        %v6990 = vld [vmem:[%s1794 + $0xaa] sm:$0xff]
        %v6991 = vld [vmem:[%s1794 + $0xb2] sm:$0xff]
        %v6992 = vld [vmem:[%s1794 + $0xc2] sm:$0xff]
        %v6993 = vld [vmem:[%s1794 + $0xca] sm:$0xff]
        %v6994 = vld [vmem:[%s1794 + $0xda] sm:$0xff]
        %v6995 = vld [vmem:[%s1794 + $0xe2] sm:$0xff]
        %v6996 = vld [vmem:[%s1794 + $0xf2] sm:$0xff]
        %v6997 = vld [vmem:[%s1794 + $0xfa] sm:$0xff]
        %v6998 = vld [vmem:[%s1794 + $0x10a] sm:$0xff]
        %v6999 = vld [vmem:[%s1794 + $0x112] sm:$0xff]
        %v7000 = vld [vmem:[%s1794 + $0x122] sm:$0xff]
        %v7001 = vld [vmem:[%s1794 + $0x12a] sm:$0xff]
        %v7002 = vld [vmem:[%s1794 + $0x13a] sm:$0xff]
        %v7003 = vld [vmem:[%s1794 + $0x142] sm:$0xff]
        %v7004 = vld [vmem:[%s1794 + $0x152] sm:$0xff]
        %v7005 = vld [vmem:[%s1794 + $0x15a] sm:$0xff]
        %v7006 = vld [vmem:[%s1794 + $0x16a] sm:$0xff]
        %v7007 = vld [vmem:[%s1794 + $0x172] sm:$0xff]
        %v7008 = vpack.c.bf16 %v6977, %v6976
        %v7009 = vpack.c.bf16 %v6979, %v6978
        %v7010 = vpack.c.bf16 %v6981, %v6980
        %v7011 = vpack.c.bf16 %v6983, %v6982
        %v7012 = vpack.c.bf16 %v6985, %v6984
        %v7013 = vpack.c.bf16 %v6987, %v6986
        %v7014 = vpack.c.bf16 %v6989, %v6988
        %v7015 = vpack.c.bf16 %v6991, %v6990
        %v7016 = vpack.c.bf16 %v6993, %v6992
        %v7017 = vpack.c.bf16 %v6995, %v6994
        %v7018 = vpack.c.bf16 %v6997, %v6996
        %v7019 = vpack.c.bf16 %v6999, %v6998
        %v7020 = vpack.c.bf16 %v7001, %v7000
        %v7021 = vpack.c.bf16 %v7003, %v7002
        %v7022 = vpack.c.bf16 %v7005, %v7004
        %v7023 = vpack.c.bf16 %v7007, %v7006
        %v7024 = vld [vmem:[%s2343] sm:$0xf]
        %v7025 = vld [vmem:[%s2343 + $0x4] sm:$0xf]
        %v7026 = vld [vmem:[%s2343 + $0x8] sm:$0xf]
        %v7027 = vld [vmem:[%s2343 + $0xc] sm:$0xf]
        %v7028 = vld [vmem:[%s2343 + $0x10] sm:$0xf]
        %v7029 = vld [vmem:[%s2343 + $0x14] sm:$0xf]
        %v7030 = vld [vmem:[%s2343 + $0x18] sm:$0xf]
        %v7031 = vld [vmem:[%s2343 + $0x1c] sm:$0xf]
        %v7040 = vunpack.c.l.b16 %v7024
        %v7041 = vunpack.c.l.b16 %v7025
        %v7042 = vunpack.c.l.b16 %v7026
        %v7043 = vunpack.c.l.b16 %v7027
        %v7044 = vunpack.c.l.b16 %v7028
        %v7045 = vunpack.c.l.b16 %v7029
        %v7046 = vunpack.c.l.b16 %v7030
        %v7047 = vunpack.c.l.b16 %v7031
        %v7048 = vpack.c.b16 %v7041, %v7040
        %v7049 = vpack.c.b16 %v7043, %v7042
        %v7050 = vpack.c.b16 %v7045, %v7044
        %v7051 = vpack.c.b16 %v7047, %v7046
        %v7057 = vsel %vm236, %v7008, 0
        %v7060 = vsel %vm236, %v7009, 0
        %v7063 = vsel %vm236, %v7010, 0
        %v7066 = vsel %vm236, %v7011, 0
        %v7069 = vsel %vm236, %v7012, 0
        %v7072 = vsel %vm236, %v7013, 0
        %v7075 = vsel %vm236, %v7014, 0
        %v7078 = vsel %vm236, %v7015, 0
        %v7081 = vsel %vm236, %v7016, 0
        %v7084 = vsel %vm236, %v7017, 0
        %v7087 = vsel %vm236, %v7018, 0
        %v7090 = vsel %vm236, %v7019, 0
        %v7093 = vsel %vm236, %v7020, 0
        %v7096 = vsel %vm236, %v7021, 0
        %v7099 = vsel %vm236, %v7022, 0
        %v7102 = vsel %vm236, %v7023, 0
        %7104 = vmatpush.bf16.msra.mxu0 0
        %7105 = vmatpush.bf16.msra.mxu0 0
        %7106 = vmatpush.bf16.msra.mxu0 0
        %7107 = vmatpush.bf16.msra.mxu0 0
        %7108 = vmatpush.bf16.msra.mxu0 %v7051
        %7109 = vmatpush.bf16.msra.mxu0 %v7050
        %7110 = vmatpush.bf16.msra.mxu0 %v7049
        %7111 = vmatpush.bf16.msra.mxu0 %v7048
        %7112 = vmatmul.bf16.gmra.mxu0 %v7057
        %v7113 = vpop.f32.mrf.mxu0
        %v7114 = vadd.f32 0.0, %v7113
        %v7115 = vpop.f32.mrf.mxu0
        %v7116 = vadd.f32 0.0, %v7115
        %7117 = vmatmul.bf16.gmra.mxu0 %v7060
        %v7118 = vpop.f32.mrf.mxu0
        %v7119 = vadd.f32 0.0, %v7118
        %v7120 = vpop.f32.mrf.mxu0
        %v7121 = vadd.f32 0.0, %v7120
        %7122 = vmatmul.bf16.gmra.mxu0 %v7063
        %v7123 = vpop.f32.mrf.mxu0
        %v7124 = vadd.f32 0.0, %v7123
        %v7125 = vpop.f32.mrf.mxu0
        %v7126 = vadd.f32 0.0, %v7125
        %7127 = vmatmul.bf16.gmra.mxu0 %v7066
        %v7128 = vpop.f32.mrf.mxu0
        %v7129 = vadd.f32 0.0, %v7128
        %v7130 = vpop.f32.mrf.mxu0
        %v7131 = vadd.f32 0.0, %v7130
        %7132 = vmatmul.bf16.gmra.mxu0 %v7069
        %v7133 = vpop.f32.mrf.mxu0
        %v7134 = vadd.f32 0.0, %v7133
        %v7135 = vpop.f32.mrf.mxu0
        %v7136 = vadd.f32 0.0, %v7135
        %7137 = vmatmul.bf16.gmra.mxu0 %v7072
        %v7138 = vpop.f32.mrf.mxu0
        %v7139 = vadd.f32 0.0, %v7138
        %v7140 = vpop.f32.mrf.mxu0
        %v7141 = vadd.f32 0.0, %v7140
        %7142 = vmatmul.bf16.gmra.mxu0 %v7075
        %v7143 = vpop.f32.mrf.mxu0
        %v7144 = vadd.f32 0.0, %v7143
        %v7145 = vpop.f32.mrf.mxu0
        %v7146 = vadd.f32 0.0, %v7145
        %7147 = vmatmul.bf16.gmra.mxu0 %v7078
        %v7148 = vpop.f32.mrf.mxu0
        %v7149 = vadd.f32 0.0, %v7148
        %v7150 = vpop.f32.mrf.mxu0
        %v7151 = vadd.f32 0.0, %v7150
        %7152 = vmatmul.bf16.gmra.mxu0 %v7081
        %v7153 = vpop.f32.mrf.mxu0
        %v7154 = vadd.f32 0.0, %v7153
        %v7155 = vpop.f32.mrf.mxu0
        %v7156 = vadd.f32 0.0, %v7155
        %7157 = vmatmul.bf16.gmra.mxu0 %v7084
        %v7158 = vpop.f32.mrf.mxu0
        %v7159 = vadd.f32 0.0, %v7158
        %v7160 = vpop.f32.mrf.mxu0
        %v7161 = vadd.f32 0.0, %v7160
        %7162 = vmatmul.bf16.gmra.mxu0 %v7087
        %v7163 = vpop.f32.mrf.mxu0
        %v7164 = vadd.f32 0.0, %v7163
        %v7165 = vpop.f32.mrf.mxu0
        %v7166 = vadd.f32 0.0, %v7165
        %7167 = vmatmul.bf16.gmra.mxu0 %v7090
        %v7168 = vpop.f32.mrf.mxu0
        %v7169 = vadd.f32 0.0, %v7168
        %v7170 = vpop.f32.mrf.mxu0
        %v7171 = vadd.f32 0.0, %v7170
        %7172 = vmatmul.bf16.gmra.mxu0 %v7093
        %v7173 = vpop.f32.mrf.mxu0
        %v7174 = vadd.f32 0.0, %v7173
        %v7175 = vpop.f32.mrf.mxu0
        %v7176 = vadd.f32 0.0, %v7175
        %7177 = vmatmul.bf16.gmra.mxu0 %v7096
        %v7178 = vpop.f32.mrf.mxu0
        %v7179 = vadd.f32 0.0, %v7178
        %v7180 = vpop.f32.mrf.mxu0
        %v7181 = vadd.f32 0.0, %v7180
        %7182 = vmatmul.bf16.gmra.mxu0 %v7099
        %v7183 = vpop.f32.mrf.mxu0
        %v7184 = vadd.f32 0.0, %v7183
        %v7185 = vpop.f32.mrf.mxu0
        %v7186 = vadd.f32 0.0, %v7185
        %7187 = vmatmul.bf16.gmra.mxu0 %v7102
        %v7188 = vpop.f32.mrf.mxu0
        %v7189 = vadd.f32 0.0, %v7188
        %v7190 = vpop.f32.mrf.mxu0
        %v7191 = vadd.f32 0.0, %v7190
        %7192 = vdwg.mxu0
        %v7193 = vadd.f32 %v6944, %v7114
        %v7194 = vadd.f32 %v6945, %v7116
        %v7195 = vadd.f32 %v6946, %v7119
        %v7196 = vadd.f32 %v6947, %v7121
        %v7197 = vadd.f32 %v6948, %v7124
        %v7198 = vadd.f32 %v6949, %v7126
        %v7199 = vadd.f32 %v6950, %v7129
        %v7200 = vadd.f32 %v6951, %v7131
        %v7201 = vadd.f32 %v6952, %v7134
        %v7202 = vadd.f32 %v6953, %v7136
        %v7203 = vadd.f32 %v6954, %v7139
        %v7204 = vadd.f32 %v6955, %v7141
        %v7205 = vadd.f32 %v6956, %v7144
        %v7206 = vadd.f32 %v6957, %v7146
        %v7207 = vadd.f32 %v6958, %v7149
        %v7208 = vadd.f32 %v6959, %v7151
        %v7209 = vadd.f32 %v6960, %v7154
        %v7210 = vadd.f32 %v6961, %v7156
        %v7211 = vadd.f32 %v6962, %v7159
        %v7212 = vadd.f32 %v6963, %v7161
        %v7213 = vadd.f32 %v6964, %v7164
        %v7214 = vadd.f32 %v6965, %v7166
        %v7215 = vadd.f32 %v6966, %v7169
        %v7216 = vadd.f32 %v6967, %v7171
        %v7217 = vadd.f32 %v6968, %v7174
        %v7218 = vadd.f32 %v6969, %v7176
        %v7219 = vadd.f32 %v6970, %v7179
        %v7220 = vadd.f32 %v6971, %v7181
        %v7221 = vadd.f32 %v6972, %v7184
        %v7222 = vadd.f32 %v6973, %v7186
        %v7223 = vadd.f32 %v6974, %v7189
        %v7224 = vadd.f32 %v6975, %v7191
        %v7225 = vmul.f32 %v7193, %v2546
        %v7226 = vmul.f32 %v7194, %v2546
        %v7227 = vmul.f32 %v7195, %v2546
        %v7228 = vmul.f32 %v7196, %v2546
        %v7229 = vmul.f32 %v7197, %v2546
        %v7230 = vmul.f32 %v7198, %v2546
        %v7231 = vmul.f32 %v7199, %v2546
        %v7232 = vmul.f32 %v7200, %v2546
        %v7233 = vmul.f32 %v7201, %v2546
        %v7234 = vmul.f32 %v7202, %v2546
        %v7235 = vmul.f32 %v7203, %v2546
        %v7236 = vmul.f32 %v7204, %v2546
        %v7237 = vmul.f32 %v7205, %v2546
        %v7238 = vmul.f32 %v7206, %v2546
        %v7239 = vmul.f32 %v7207, %v2546
        %v7240 = vmul.f32 %v7208, %v2546
        %v7241 = vmul.f32 %v7209, %v2546
        %v7242 = vmul.f32 %v7210, %v2546
        %v7243 = vmul.f32 %v7211, %v2546
        %v7244 = vmul.f32 %v7212, %v2546
        %v7245 = vmul.f32 %v7213, %v2546
        %v7246 = vmul.f32 %v7214, %v2546
        %v7247 = vmul.f32 %v7215, %v2546
        %v7248 = vmul.f32 %v7216, %v2546
        %v7249 = vmul.f32 %v7217, %v2546
        %v7250 = vmul.f32 %v7218, %v2546
        %v7251 = vmul.f32 %v7219, %v2546
        %v7252 = vmul.f32 %v7220, %v2546
        %v7253 = vmul.f32 %v7221, %v2546
        %v7254 = vmul.f32 %v7222, %v2546
        %v7255 = vmul.f32 %v7223, %v2546
        %v7256 = vmul.f32 %v7224, %v2546
        %v7257 = vadd.f32 %v7225, %v2581
        %v7258 = vadd.f32 %v7226, %v2581
        %v7259 = vadd.f32 %v7227, %v2581
        %v7260 = vadd.f32 %v7228, %v2581
        %v7261 = vadd.f32 %v7229, %v2581
        %v7262 = vadd.f32 %v7230, %v2581
        %v7263 = vadd.f32 %v7231, %v2581
        %v7264 = vadd.f32 %v7232, %v2581
        %v7265 = vadd.f32 %v7233, %v2581
        %v7266 = vadd.f32 %v7234, %v2581
        %v7267 = vadd.f32 %v7235, %v2581
        %v7268 = vadd.f32 %v7236, %v2581
        %v7269 = vadd.f32 %v7237, %v2581
        %v7270 = vadd.f32 %v7238, %v2581
        %v7271 = vadd.f32 %v7239, %v2581
        %v7272 = vadd.f32 %v7240, %v2581
        %v7273 = vadd.f32 %v7241, %v2581
        %v7274 = vadd.f32 %v7242, %v2581
        %v7275 = vadd.f32 %v7243, %v2581
        %v7276 = vadd.f32 %v7244, %v2581
        %v7277 = vadd.f32 %v7245, %v2581
        %v7278 = vadd.f32 %v7246, %v2581
        %v7279 = vadd.f32 %v7247, %v2581
        %v7280 = vadd.f32 %v7248, %v2581
        %v7281 = vadd.f32 %v7249, %v2581
        %v7282 = vadd.f32 %v7250, %v2581
        %v7283 = vadd.f32 %v7251, %v2581
        %v7284 = vadd.f32 %v7252, %v2581
        %v7285 = vadd.f32 %v7253, %v2581
        %v7286 = vadd.f32 %v7254, %v2581
        %v7287 = vadd.f32 %v7255, %v2581
        %v7288 = vadd.f32 %v7256, %v2581
        %v7289 = vmax.f32 %v7257, 0.0
        %v7290 = vmax.f32 %v7258, 0.0
        %v7291 = vmax.f32 %v7259, 0.0
        %v7292 = vmax.f32 %v7260, 0.0
        %v7293 = vmax.f32 %v7261, 0.0
        %v7294 = vmax.f32 %v7262, 0.0
        %v7295 = vmax.f32 %v7263, 0.0
        %v7296 = vmax.f32 %v7264, 0.0
        %v7297 = vmax.f32 %v7265, 0.0
        %v7298 = vmax.f32 %v7266, 0.0
        %v7299 = vmax.f32 %v7267, 0.0
        %v7300 = vmax.f32 %v7268, 0.0
        %v7301 = vmax.f32 %v7269, 0.0
        %v7302 = vmax.f32 %v7270, 0.0
        %v7303 = vmax.f32 %v7271, 0.0
        %v7304 = vmax.f32 %v7272, 0.0
        %v7305 = vmax.f32 %v7273, 0.0
        %v7306 = vmax.f32 %v7274, 0.0
        %v7307 = vmax.f32 %v7275, 0.0
        %v7308 = vmax.f32 %v7276, 0.0
        %v7309 = vmax.f32 %v7277, 0.0
        %v7310 = vmax.f32 %v7278, 0.0
        %v7311 = vmax.f32 %v7279, 0.0
        %v7312 = vmax.f32 %v7280, 0.0
        %v7313 = vmax.f32 %v7281, 0.0
        %v7314 = vmax.f32 %v7282, 0.0
        %v7315 = vmax.f32 %v7283, 0.0
        %v7316 = vmax.f32 %v7284, 0.0
        %v7317 = vmax.f32 %v7285, 0.0
        %v7318 = vmax.f32 %v7286, 0.0
        %v7319 = vmax.f32 %v7287, 0.0
        %v7320 = vmax.f32 %v7288, 0.0
        %7321 = vst.msk [vmem:[%s234] sm:$0xff] %vm236, %v7289
        %7322 = vst.msk [vmem:[%s234 + $0x8] sm:$0xff] %vm236, %v7290
        %7323 = vst.msk [vmem:[%s234 + $0x10] sm:$0xff] %vm236, %v7291
        %7324 = vst.msk [vmem:[%s234 + $0x18] sm:$0xff] %vm236, %v7292
        %7325 = vst.msk [vmem:[%s234 + $0x20] sm:$0xff] %vm236, %v7293
        %7326 = vst.msk [vmem:[%s234 + $0x28] sm:$0xff] %vm236, %v7294
        %7327 = vst.msk [vmem:[%s234 + $0x30] sm:$0xff] %vm236, %v7295
        %7328 = vst.msk [vmem:[%s234 + $0x38] sm:$0xff] %vm236, %v7296
        %7329 = vst.msk [vmem:[%s234 + $0x40] sm:$0xff] %vm236, %v7297
        %7330 = vst.msk [vmem:[%s234 + $0x48] sm:$0xff] %vm236, %v7298
        %7331 = vst.msk [vmem:[%s234 + $0x50] sm:$0xff] %vm236, %v7299
        %7332 = vst.msk [vmem:[%s234 + $0x58] sm:$0xff] %vm236, %v7300
        %7333 = vst.msk [vmem:[%s234 + $0x60] sm:$0xff] %vm236, %v7301
        %7334 = vst.msk [vmem:[%s234 + $0x68] sm:$0xff] %vm236, %v7302
        %7335 = vst.msk [vmem:[%s234 + $0x70] sm:$0xff] %vm236, %v7303
        %7336 = vst.msk [vmem:[%s234 + $0x78] sm:$0xff] %vm236, %v7304
        %7337 = vst.msk [vmem:[%s234 + $0x80] sm:$0xff] %vm236, %v7305
        %7338 = vst.msk [vmem:[%s234 + $0x88] sm:$0xff] %vm236, %v7306
        %7339 = vst.msk [vmem:[%s234 + $0x90] sm:$0xff] %vm236, %v7307
        %7340 = vst.msk [vmem:[%s234 + $0x98] sm:$0xff] %vm236, %v7308
        %7341 = vst.msk [vmem:[%s234 + $0xa0] sm:$0xff] %vm236, %v7309
        %7342 = vst.msk [vmem:[%s234 + $0xa8] sm:$0xff] %vm236, %v7310
        %7343 = vst.msk [vmem:[%s234 + $0xb0] sm:$0xff] %vm236, %v7311
        %7344 = vst.msk [vmem:[%s234 + $0xb8] sm:$0xff] %vm236, %v7312
        %7345 = vst.msk [vmem:[%s234 + $0xc0] sm:$0xff] %vm236, %v7313
        %7346 = vst.msk [vmem:[%s234 + $0xc8] sm:$0xff] %vm236, %v7314
        %7347 = vst.msk [vmem:[%s234 + $0xd0] sm:$0xff] %vm236, %v7315
        %7348 = vst.msk [vmem:[%s234 + $0xd8] sm:$0xff] %vm236, %v7316
        %7349 = vst.msk [vmem:[%s234 + $0xe0] sm:$0xff] %vm236, %v7317
        %7350 = vst.msk [vmem:[%s234 + $0xe8] sm:$0xff] %vm236, %v7318
        %7351 = vst.msk [vmem:[%s234 + $0xf0] sm:$0xff] %vm236, %v7319
        %7352 = vst.msk [vmem:[%s234 + $0xf8] sm:$0xff] %vm236, %v7320
        %s7353 = sand.u32 %s119, 1
        %s7354 = scalar_lea.sflag [#allocation5], %s7353
        %s7355 = sand.u32 %s119, 1
        %s7356 = smul.addr %s7355, 256
        %s7357 = scalar_lea.vmem [#allocation8], %s7356
        // Predicated region
        $region45: #{recurrent_block_nchw.1} parent=35 // pred_check
          %p7358 = pneg %p129
        $region46: #{recurrent_block_nchw.1} parent=35 // pred_check_branch
          %7360 = sbr.rel (%p7358) target = $region48
        $region47: #{recurrent_block_nchw.1} parent=35 // pred_region
          %7362 = vsyncadd %s7354, 0
          %s7363 = smul.addr %s22, 32
          %s7364 = smul.addr %s7363, 8
          %s7365 = scalar_lea.hbm %s4, %s7364
          %s7366 = sshll.u32 %s7357, 4
          %s7367 = int_to_ptr.vmem [resolvable:$true] %s7366
          %s7368 = sshll.u32 %s7365, 4
          %s7369 = int_to_ptr.hbm [resolvable:$true] %s7368
          %7374 = dma.vmem_to_hbm [thread:$0]  %s7367, 4096, %s7369, %s7354, 128, 128, 8
        $region48: #{recurrent_block_nchw.1} parent=35 // pred_fallthru
          _
      $region36: #{recurrent_block_nchw.1} parent=5 // pred_fallthru
        _
      %p7375 = scmp.le.s32.totalorder 2, %s17
      // Predicated region
      $region49: #{recurrent_block_nchw.1} parent=5 // pred_check
        %p7376 = pneg %p7375
      $region50: #{recurrent_block_nchw.1} parent=5 // pred_check_branch
        %7378 = sbr.rel (%p7376) target = $region52
      $region51: #{recurrent_block_nchw.1} parent=5 // pred_region
        %s7379 = ssub.s32 %s17, 2
        // Predicated region
        $region53: #{recurrent_block_nchw.1} parent=51 // pred_check
          %p7380 = pneg %p135
        $region54: #{recurrent_block_nchw.1} parent=51 // pred_check_branch
          %7382 = sbr.rel (%p7380) target = $region56
        $region55: #{recurrent_block_nchw.1} parent=51 // pred_region
          %s7383 = sand.u32 %s120, 1
          %s7384 = scalar_lea.sflag [#allocation5], %s7383
          %s7385 = sand.u32 %s120, 1
          %s7386 = smul.addr %s7385, 256
          %s7387 = scalar_lea.vmem [#allocation8], %s7386
          %7389 = dma.done %s7384, 4096
        $region56: #{recurrent_block_nchw.1} parent=51 // pred_fallthru
          _
      $region52: #{recurrent_block_nchw.1} parent=5 // pred_fallthru
        _
    $region6: #{recurrent_block_nchw.1} parent=1 // loop_footer
      %s21 = sadd.s32 1, %s17
    $region7: #{recurrent_block_nchw.1} parent=1 // loop_footer_branch
      %16 = sbr.rel target = $region3
    $region8: #{recurrent_block_nchw.1} parent=1 // loop_exit
      _
    %7390 = vsyncpa [#allocation4], 1
    %s7391 = scalar_lea.sflag [#allocation4], 1
    %7392 = vsyncpa %s7391, 1
    %7393 = vsyncpa [#allocation7], 1
    %7394 = vsyncpa [#allocation5], 1
    %s7395 = scalar_lea.sflag [#allocation5], 1
    %7396 = vsyncpa %s7395, 1

</llo_original>
